<compile_context>
chip_gen: v6e
topology: v6e:2x2x1
jax: 0.10.0
libtpu: 0.0.40
codegen_flags: <defaults>
</compile_context>

<pallas_src>
import jax
import jax.numpy as jnp
from jax import lax
from jax.experimental import pallas as pl
from jax.experimental.pallas import tpu as pltpu


def _resblock_kernel(x_ref, w1_ref, b1_ref, w2_ref, b2_ref, out_ref, pad_ref):
    """Whole-batch residual block.

    x_ref   : (N, H, W, C)      unpadded NHWC input
    w1_ref  : (9*C, C)          conv1 weight, im2col layout (kh, kw, cin) x cout
    b1_ref  : (1, C)            conv1 bias
    w2_ref  : (9*C, C)          conv2 weight
    b2_ref  : (1, C)            conv2 bias
    out_ref : (N, H, W, C)      output
    pad_ref : (N, H+2, W+2, C)  persistent VMEM halo scratch (zero border)
    """
    N, H, W, C = x_ref.shape
    M = N * H * W

    w1 = w1_ref[...]                      # (9C, C)
    w2 = w2_ref[...]
    b1 = b1_ref[...]                      # (1, C) -> broadcasts over M rows
    b2 = b2_ref[...]

    # In-kernel zero padding: zero the halo scratch once (single grid step),
    # then overwrite only the interior.  The border stays zero for both convs.
    pad_ref[...] = jnp.zeros(pad_ref.shape, pad_ref.dtype)
    pad_ref[:, 1:H + 1, 1:W + 1, :] = x_ref[...]

    def conv3x3(w_flat):
        # im2col: one (M, 9C) x (9C, C) MXU matmul per conv.  Taps are static
        # ref slices of the halo scratch, so only the needed (N, H, W, C)
        # window is loaded for each of the 9 shifts.
        taps = [
            pad_ref[:, kh:kh + H, kw:kw + W, :].reshape(M, C)
            for kh in range(3) for kw in range(3)
        ]
        patches = jnp.concatenate(taps, axis=-1)       # (M, 9C)
        return jnp.dot(patches, w_flat, preferred_element_type=jnp.float32)

    # conv1 -> bias -> ReLU
    y1 = jnp.maximum(conv3x3(w1) + b1, 0.0)            # (M, C)

    # Reuse the same halo scratch as conv2's padded input (border still zero).
    pad_ref[:, 1:H + 1, 1:W + 1, :] = y1.reshape(N, H, W, C)

    # conv2 -> bias -> residual add -> ReLU  (identity = original input,
    # reloaded from VMEM near its use to keep the live range short).
    y2 = conv3x3(w2) + b2
    identity = x_ref[...].reshape(M, C)
    out = jnp.maximum(y2 + identity, 0.0)
    out_ref[...] = out.reshape(N, H, W, C).astype(out_ref.dtype)


def resblock_pallas(x_nchw, w1_oihw, b1, w2_oihw, b2):
    """x_nchw: (N, C, H, W) float32.  Returns (N, C, H, W)."""
    N, C, H, W = x_nchw.shape

    # Boundary layout change only — no padded HBM copy of the activation.
    x_nhwc = jnp.transpose(x_nchw, (0, 2, 3, 1))                  # (N, H, W, C)
    # OIHW -> (kh, kw, cin, cout) -> (9*cin, cout)  (im2col weight layout)
    w1f = jnp.transpose(w1_oihw, (2, 3, 1, 0)).reshape(9 * C, C)
    w2f = jnp.transpose(w2_oihw, (2, 3, 1, 0)).reshape(9 * C, C)
    b1r = b1.reshape(1, C)
    b2r = b2.reshape(1, C)

    out_nhwc = pl.pallas_call(
        _resblock_kernel,
        out_shape=jax.ShapeDtypeStruct((N, H, W, C), x_nchw.dtype),
        grid_spec=pltpu.PrefetchScalarGridSpec(
            num_scalar_prefetch=0,
            grid=(1,),
            in_specs=[
                pl.BlockSpec((N, H, W, C), lambda i: (0, 0, 0, 0)),
                pl.BlockSpec((9 * C, C), lambda i: (0, 0)),
                pl.BlockSpec((1, C), lambda i: (0, 0)),
                pl.BlockSpec((9 * C, C), lambda i: (0, 0)),
                pl.BlockSpec((1, C), lambda i: (0, 0)),
            ],
            out_specs=pl.BlockSpec((N, H, W, C), lambda i: (0, 0, 0, 0)),
            scratch_shapes=[pltpu.VMEM((N, H + 2, W + 2, C), jnp.float32)],
        ),
        compiler_params=pltpu.CompilerParams(
            dimension_semantics=("arbitrary",)),
    )(x_nhwc, w1f, b1r, w2f, b2r)

    return jnp.transpose(out_nhwc, (0, 3, 1, 2))


def resblock_reference(x_nchw, w1_oihw, b1, w2_oihw, b2):
    """Pure-JAX reference mirroring the PyTorch forward (NCHW)."""
    dn = ("NCHW", "OIHW", "NCHW")
    y = lax.conv_general_dilated(x_nchw, w1_oihw, (1, 1), "SAME",
                                 dimension_numbers=dn)
    y = jnp.maximum(y + b1.reshape(1, -1, 1, 1), 0.0)
    y = lax.conv_general_dilated(y, w2_oihw, (1, 1), "SAME",
                                 dimension_numbers=dn)
    y = y + b2.reshape(1, -1, 1, 1)
    return jnp.maximum(y + x_nchw, 0.0)


if __name__ == "__main__":
    # Module default width nf=64; small batch / spatial dims.
    N, C, H, W = 2, 64, 16, 16

    key = jax.random.PRNGKey(0)
    kx, k1, kb1, k2, kb2 = jax.random.split(key, 5)

    x = jax.random.normal(kx, (N, C, H, W), dtype=jnp.float32)
    # Deterministic, Kaiming-ish scaled init for conv weights (OIHW) + biases.
    fan_in = C * 3 * 3
    w1 = jax.random.normal(k1, (C, C, 3, 3), dtype=jnp.float32) / jnp.sqrt(fan_in)
    b1 = jax.random.normal(kb1, (C,), dtype=jnp.float32) * 0.01
    w2 = jax.random.normal(k2, (C, C, 3, 3), dtype=jnp.float32) / jnp.sqrt(fan_in)
    b2 = jax.random.normal(kb2, (C,), dtype=jnp.float32) * 0.01

    run = jax.jit(resblock_pallas)
    out = run(x, w1, b1, w2, b2)
    jax.block_until_ready(out)

    ref = resblock_reference(x, w1, b1, w2, b2)
    assert out.shape == (N, C, H, W)
    assert jnp.allclose(out, ref, atol=2e-4, rtol=2e-4), "mismatch vs reference"

    print("KERNEL_OK")
</pallas_src>

<mosaic_0001>
module attributes {stable_mosaic.version = 11 : i64} {
  func.func @_resblock_kernel(%arg0: i32, %arg1: memref<2x16x16x64xf32, #tpu.memory_space<vmem>>, %arg2: memref<576x64xf32, #tpu.memory_space<vmem>>, %arg3: memref<1x64xf32, #tpu.memory_space<vmem>>, %arg4: memref<576x64xf32, #tpu.memory_space<vmem>>, %arg5: memref<1x64xf32, #tpu.memory_space<vmem>>, %arg6: memref<2x16x16x64xf32, #tpu.memory_space<vmem>>, %arg7: memref<2x18x18x64xf32, #tpu.memory_space<vmem>>) attributes {dimension_semantics = [#tpu.dimension_semantics<arbitrary>], iteration_bounds = array<i64: 1>, scalar_prefetch = 0 : i64, scratch_operands = 1 : i64, tpu.core_type = #tpu.core_type<tc>, window_params = [{pipeline_mode = #tpu.pipeline_mode<synchronous>, transform_indices = @transform_0, window_bounds = array<i64: 2, 16, 16, 64>}, {pipeline_mode = #tpu.pipeline_mode<synchronous>, transform_indices = @transform_1, window_bounds = array<i64: 576, 64>}, {pipeline_mode = #tpu.pipeline_mode<synchronous>, transform_indices = @transform_2, window_bounds = array<i64: 1, 64>}, {pipeline_mode = #tpu.pipeline_mode<synchronous>, transform_indices = @transform_3, window_bounds = array<i64: 576, 64>}, {pipeline_mode = #tpu.pipeline_mode<synchronous>, transform_indices = @transform_4, window_bounds = array<i64: 1, 64>}, {pipeline_mode = #tpu.pipeline_mode<synchronous>, transform_indices = @transform_5, window_bounds = array<i64: 2, 16, 16, 64>}]} {
    %c0 = arith.constant 0 : index
    %c0_0 = arith.constant 0 : index
    %0 = vector.load %arg2[%c0, %c0_0] : memref<576x64xf32, #tpu.memory_space<vmem>>, vector<576x64xf32>
    %c0_1 = arith.constant 0 : index
    %c0_2 = arith.constant 0 : index
    %1 = vector.load %arg4[%c0_1, %c0_2] : memref<576x64xf32, #tpu.memory_space<vmem>>, vector<576x64xf32>
    %c0_3 = arith.constant 0 : index
    %c0_4 = arith.constant 0 : index
    %2 = vector.load %arg3[%c0_3, %c0_4] : memref<1x64xf32, #tpu.memory_space<vmem>>, vector<1x64xf32>
    %c0_5 = arith.constant 0 : index
    %c0_6 = arith.constant 0 : index
    %3 = vector.load %arg5[%c0_5, %c0_6] : memref<1x64xf32, #tpu.memory_space<vmem>>, vector<1x64xf32>
    %cst = arith.constant 0.000000e+00 : f32
    %4 = vector.broadcast %cst : f32 to vector<2x18x18x64xf32>
    %c0_7 = arith.constant 0 : index
    %c0_8 = arith.constant 0 : index
    %c0_9 = arith.constant 0 : index
    %c0_10 = arith.constant 0 : index
    %5 = vector.load %arg7[%c0_7, %c0_8, %c0_9, %c0_10] : memref<2x18x18x64xf32, #tpu.memory_space<vmem>>, vector<2x18x18x64xf32>
    tpu.vector_store %arg7[%c0_7, %c0_8, %c0_9, %c0_10], %4 {strides = array<i32>} : memref<2x18x18x64xf32, #tpu.memory_space<vmem>>, vector<2x18x18x64xf32>,
    %c0_11 = arith.constant 0 : index
    %c0_12 = arith.constant 0 : index
    %c0_13 = arith.constant 0 : index
    %c0_14 = arith.constant 0 : index
    %6 = vector.load %arg1[%c0_11, %c0_12, %c0_13, %c0_14] : memref<2x16x16x64xf32, #tpu.memory_space<vmem>>, vector<2x16x16x64xf32>
    %c0_15 = arith.constant 0 : index
    %c1 = arith.constant 1 : index
    %c1_16 = arith.constant 1 : index
    %c0_17 = arith.constant 0 : index
    %7 = vector.load %arg7[%c0_15, %c1, %c1_16, %c0_17] : memref<2x18x18x64xf32, #tpu.memory_space<vmem>>, vector<2x16x16x64xf32>
    tpu.vector_store %arg7[%c0_15, %c1, %c1_16, %c0_17], %6 {strides = array<i32>} : memref<2x18x18x64xf32, #tpu.memory_space<vmem>>, vector<2x16x16x64xf32>,
    %c0_18 = arith.constant 0 : index
    %c0_19 = arith.constant 0 : index
    %c0_20 = arith.constant 0 : index
    %c0_21 = arith.constant 0 : index
    %8 = vector.load %arg7[%c0_18, %c0_19, %c0_20, %c0_21] : memref<2x18x18x64xf32, #tpu.memory_space<vmem>>, vector<2x16x16x64xf32>
    %9 = vector.shape_cast %8 : vector<2x16x16x64xf32> to vector<512x64xf32>
    %c0_22 = arith.constant 0 : index
    %c0_23 = arith.constant 0 : index
    %c1_24 = arith.constant 1 : index
    %c0_25 = arith.constant 0 : index
    %10 = vector.load %arg7[%c0_22, %c0_23, %c1_24, %c0_25] : memref<2x18x18x64xf32, #tpu.memory_space<vmem>>, vector<2x16x16x64xf32>
    %11 = vector.shape_cast %10 : vector<2x16x16x64xf32> to vector<512x64xf32>
    %c0_26 = arith.constant 0 : index
    %c0_27 = arith.constant 0 : index
    %c2 = arith.constant 2 : index
    %c0_28 = arith.constant 0 : index
    %12 = vector.load %arg7[%c0_26, %c0_27, %c2, %c0_28] : memref<2x18x18x64xf32, #tpu.memory_space<vmem>>, vector<2x16x16x64xf32>
    %13 = vector.shape_cast %12 : vector<2x16x16x64xf32> to vector<512x64xf32>
    %c0_29 = arith.constant 0 : index
    %c1_30 = arith.constant 1 : index
    %c0_31 = arith.constant 0 : index
    %c0_32 = arith.constant 0 : index
    %14 = vector.load %arg7[%c0_29, %c1_30, %c0_31, %c0_32] : memref<2x18x18x64xf32, #tpu.memory_space<vmem>>, vector<2x16x16x64xf32>
    %15 = vector.shape_cast %14 : vector<2x16x16x64xf32> to vector<512x64xf32>
    %c0_33 = arith.constant 0 : index
    %c1_34 = arith.constant 1 : index
    %c1_35 = arith.constant 1 : index
    %c0_36 = arith.constant 0 : index
    %16 = vector.load %arg7[%c0_33, %c1_34, %c1_35, %c0_36] : memref<2x18x18x64xf32, #tpu.memory_space<vmem>>, vector<2x16x16x64xf32>
    %17 = vector.shape_cast %16 : vector<2x16x16x64xf32> to vector<512x64xf32>
    %c0_37 = arith.constant 0 : index
    %c1_38 = arith.constant 1 : index
    %c2_39 = arith.constant 2 : index
    %c0_40 = arith.constant 0 : index
    %18 = vector.load %arg7[%c0_37, %c1_38, %c2_39, %c0_40] : memref<2x18x18x64xf32, #tpu.memory_space<vmem>>, vector<2x16x16x64xf32>
    %19 = vector.shape_cast %18 : vector<2x16x16x64xf32> to vector<512x64xf32>
    %c0_41 = arith.constant 0 : index
    %c2_42 = arith.constant 2 : index
    %c0_43 = arith.constant 0 : index
    %c0_44 = arith.constant 0 : index
    %20 = vector.load %arg7[%c0_41, %c2_42, %c0_43, %c0_44] : memref<2x18x18x64xf32, #tpu.memory_space<vmem>>, vector<2x16x16x64xf32>
    %21 = vector.shape_cast %20 : vector<2x16x16x64xf32> to vector<512x64xf32>
    %c0_45 = arith.constant 0 : index
    %c2_46 = arith.constant 2 : index
    %c1_47 = arith.constant 1 : index
    %c0_48 = arith.constant 0 : index
    %22 = vector.load %arg7[%c0_45, %c2_46, %c1_47, %c0_48] : memref<2x18x18x64xf32, #tpu.memory_space<vmem>>, vector<2x16x16x64xf32>
    %23 = vector.shape_cast %22 : vector<2x16x16x64xf32> to vector<512x64xf32>
    %c0_49 = arith.constant 0 : index
    %c2_50 = arith.constant 2 : index
    %c2_51 = arith.constant 2 : index
    %c0_52 = arith.constant 0 : index
    %24 = vector.load %arg7[%c0_49, %c2_50, %c2_51, %c0_52] : memref<2x18x18x64xf32, #tpu.memory_space<vmem>>, vector<2x16x16x64xf32>
    %25 = vector.shape_cast %24 : vector<2x16x16x64xf32> to vector<512x64xf32>
    %26 = tpu.concatenate %9, %11, %13, %15, %17, %19, %21, %23, %25 in 1 : vector<512x64xf32>, vector<512x64xf32>, vector<512x64xf32>, vector<512x64xf32>, vector<512x64xf32>, vector<512x64xf32>, vector<512x64xf32>, vector<512x64xf32>, vector<512x64xf32> -> vector<512x576xf32>
    %cst_53 = arith.constant dense<0.000000e+00> : vector<512x64xf32>
    %27 = tpu.matmul %26, %0, %cst_53 {dimension_numbers = #tpu.dot_dimension_numbers<[1], [0], [0], [1], [0, 0, 1, 1], [], []>} : vector<512x576xf32>, vector<576x64xf32>, vector<512x64xf32> -> vector<512x64xf32>
    %28 = vector.broadcast %2 : vector<1x64xf32> to vector<512x64xf32>
    %29 = arith.addf %27, %28 : vector<512x64xf32>
    %cst_54 = arith.constant 0.000000e+00 : f32
    %30 = vector.broadcast %cst_54 : f32 to vector<512x64xf32>
    %31 = arith.maximumf %29, %30 : vector<512x64xf32>
    %32 = vector.shape_cast %31 : vector<512x64xf32> to vector<2x16x16x64xf32>
    %c0_55 = arith.constant 0 : index
    %c1_56 = arith.constant 1 : index
    %c1_57 = arith.constant 1 : index
    %c0_58 = arith.constant 0 : index
    %33 = vector.load %arg7[%c0_55, %c1_56, %c1_57, %c0_58] : memref<2x18x18x64xf32, #tpu.memory_space<vmem>>, vector<2x16x16x64xf32>
    tpu.vector_store %arg7[%c0_55, %c1_56, %c1_57, %c0_58], %32 {strides = array<i32>} : memref<2x18x18x64xf32, #tpu.memory_space<vmem>>, vector<2x16x16x64xf32>,
    %c0_59 = arith.constant 0 : index
    %c0_60 = arith.constant 0 : index
    %c0_61 = arith.constant 0 : index
    %c0_62 = arith.constant 0 : index
    %34 = vector.load %arg7[%c0_59, %c0_60, %c0_61, %c0_62] : memref<2x18x18x64xf32, #tpu.memory_space<vmem>>, vector<2x16x16x64xf32>
    %35 = vector.shape_cast %34 : vector<2x16x16x64xf32> to vector<512x64xf32>
    %c0_63 = arith.constant 0 : index
    %c0_64 = arith.constant 0 : index
    %c1_65 = arith.constant 1 : index
    %c0_66 = arith.constant 0 : index
    %36 = vector.load %arg7[%c0_63, %c0_64, %c1_65, %c0_66] : memref<2x18x18x64xf32, #tpu.memory_space<vmem>>, vector<2x16x16x64xf32>
    %37 = vector.shape_cast %36 : vector<2x16x16x64xf32> to vector<512x64xf32>
    %c0_67 = arith.constant 0 : index
    %c0_68 = arith.constant 0 : index
    %c2_69 = arith.constant 2 : index
    %c0_70 = arith.constant 0 : index
    %38 = vector.load %arg7[%c0_67, %c0_68, %c2_69, %c0_70] : memref<2x18x18x64xf32, #tpu.memory_space<vmem>>, vector<2x16x16x64xf32>
    %39 = vector.shape_cast %38 : vector<2x16x16x64xf32> to vector<512x64xf32>
    %c0_71 = arith.constant 0 : index
    %c1_72 = arith.constant 1 : index
    %c0_73 = arith.constant 0 : index
    %c0_74 = arith.constant 0 : index
    %40 = vector.load %arg7[%c0_71, %c1_72, %c0_73, %c0_74] : memref<2x18x18x64xf32, #tpu.memory_space<vmem>>, vector<2x16x16x64xf32>
    %41 = vector.shape_cast %40 : vector<2x16x16x64xf32> to vector<512x64xf32>
    %c0_75 = arith.constant 0 : index
    %c1_76 = arith.constant 1 : index
    %c1_77 = arith.constant 1 : index
    %c0_78 = arith.constant 0 : index
    %42 = vector.load %arg7[%c0_75, %c1_76, %c1_77, %c0_78] : memref<2x18x18x64xf32, #tpu.memory_space<vmem>>, vector<2x16x16x64xf32>
    %43 = vector.shape_cast %42 : vector<2x16x16x64xf32> to vector<512x64xf32>
    %c0_79 = arith.constant 0 : index
    %c1_80 = arith.constant 1 : index
    %c2_81 = arith.constant 2 : index
    %c0_82 = arith.constant 0 : index
    %44 = vector.load %arg7[%c0_79, %c1_80, %c2_81, %c0_82] : memref<2x18x18x64xf32, #tpu.memory_space<vmem>>, vector<2x16x16x64xf32>
    %45 = vector.shape_cast %44 : vector<2x16x16x64xf32> to vector<512x64xf32>
    %c0_83 = arith.constant 0 : index
    %c2_84 = arith.constant 2 : index
    %c0_85 = arith.constant 0 : index
    %c0_86 = arith.constant 0 : index
    %46 = vector.load %arg7[%c0_83, %c2_84, %c0_85, %c0_86] : memref<2x18x18x64xf32, #tpu.memory_space<vmem>>, vector<2x16x16x64xf32>
    %47 = vector.shape_cast %46 : vector<2x16x16x64xf32> to vector<512x64xf32>
    %c0_87 = arith.constant 0 : index
    %c2_88 = arith.constant 2 : index
    %c1_89 = arith.constant 1 : index
    %c0_90 = arith.constant 0 : index
    %48 = vector.load %arg7[%c0_87, %c2_88, %c1_89, %c0_90] : memref<2x18x18x64xf32, #tpu.memory_space<vmem>>, vector<2x16x16x64xf32>
    %49 = vector.shape_cast %48 : vector<2x16x16x64xf32> to vector<512x64xf32>
    %c0_91 = arith.constant 0 : index
    %c2_92 = arith.constant 2 : index
    %c2_93 = arith.constant 2 : index
    %c0_94 = arith.constant 0 : index
    %50 = vector.load %arg7[%c0_91, %c2_92, %c2_93, %c0_94] : memref<2x18x18x64xf32, #tpu.memory_space<vmem>>, vector<2x16x16x64xf32>
    %51 = vector.shape_cast %50 : vector<2x16x16x64xf32> to vector<512x64xf32>
    %52 = tpu.concatenate %35, %37, %39, %41, %43, %45, %47, %49, %51 in 1 : vector<512x64xf32>, vector<512x64xf32>, vector<512x64xf32>, vector<512x64xf32>, vector<512x64xf32>, vector<512x64xf32>, vector<512x64xf32>, vector<512x64xf32>, vector<512x64xf32> -> vector<512x576xf32>
    %cst_95 = arith.constant dense<0.000000e+00> : vector<512x64xf32>
    %53 = tpu.matmul %52, %1, %cst_95 {dimension_numbers = #tpu.dot_dimension_numbers<[1], [0], [0], [1], [0, 0, 1, 1], [], []>} : vector<512x576xf32>, vector<576x64xf32>, vector<512x64xf32> -> vector<512x64xf32>
    %54 = vector.broadcast %3 : vector<1x64xf32> to vector<512x64xf32>
    %55 = arith.addf %53, %54 : vector<512x64xf32>
    %c0_96 = arith.constant 0 : index
    %c0_97 = arith.constant 0 : index
    %c0_98 = arith.constant 0 : index
    %c0_99 = arith.constant 0 : index
    %56 = vector.load %arg1[%c0_96, %c0_97, %c0_98, %c0_99] : memref<2x16x16x64xf32, #tpu.memory_space<vmem>>, vector<2x16x16x64xf32>
    %57 = vector.shape_cast %56 : vector<2x16x16x64xf32> to vector<512x64xf32>
    %58 = arith.addf %55, %57 : vector<512x64xf32>
    %cst_100 = arith.constant 0.000000e+00 : f32
    %59 = vector.broadcast %cst_100 : f32 to vector<512x64xf32>
    %60 = arith.maximumf %58, %59 : vector<512x64xf32>
    %61 = vector.shape_cast %60 : vector<512x64xf32> to vector<2x16x16x64xf32>
    %c0_101 = arith.constant 0 : index
    %c0_102 = arith.constant 0 : index
    %c0_103 = arith.constant 0 : index
    %c0_104 = arith.constant 0 : index
    %62 = vector.load %arg6[%c0_101, %c0_102, %c0_103, %c0_104] : memref<2x16x16x64xf32, #tpu.memory_space<vmem>>, vector<2x16x16x64xf32>
    tpu.vector_store %arg6[%c0_101, %c0_102, %c0_103, %c0_104], %61 {strides = array<i32>} : memref<2x16x16x64xf32, #tpu.memory_space<vmem>>, vector<2x16x16x64xf32>,
    return
  }
  func.func @transform_0(%arg0: i32) -> (i32, i32, i32, i32) {
    %c0_i32 = arith.constant 0 : i32
    %c0_i32_0 = arith.constant 0 : i32
    %c0_i32_1 = arith.constant 0 : i32
    %c0_i32_2 = arith.constant 0 : i32
    %c0_i32_3 = arith.constant 0 : i32
    return %c0_i32, %c0_i32_0, %c0_i32_1, %c0_i32_2 : i32, i32, i32, i32
  }
  func.func @transform_1(%arg0: i32) -> (i32, i32) {
    %c0_i32 = arith.constant 0 : i32
    %c0_i32_0 = arith.constant 0 : i32
    %c0_i32_1 = arith.constant 0 : i32
    return %c0_i32, %c0_i32_0 : i32, i32
  }
  func.func @transform_2(%arg0: i32) -> (i32, i32) {
    %c0_i32 = arith.constant 0 : i32
    %c0_i32_0 = arith.constant 0 : i32
    %c0_i32_1 = arith.constant 0 : i32
    return %c0_i32, %c0_i32_0 : i32, i32
  }
  func.func @transform_3(%arg0: i32) -> (i32, i32) {
    %c0_i32 = arith.constant 0 : i32
    %c0_i32_0 = arith.constant 0 : i32
    %c0_i32_1 = arith.constant 0 : i32
    return %c0_i32, %c0_i32_0 : i32, i32
  }
  func.func @transform_4(%arg0: i32) -> (i32, i32) {
    %c0_i32 = arith.constant 0 : i32
    %c0_i32_0 = arith.constant 0 : i32
    %c0_i32_1 = arith.constant 0 : i32
    return %c0_i32, %c0_i32_0 : i32, i32
  }
  func.func @transform_5(%arg0: i32) -> (i32, i32, i32, i32) {
    %c0_i32 = arith.constant 0 : i32
    %c0_i32_0 = arith.constant 0 : i32
    %c0_i32_1 = arith.constant 0 : i32
    %c0_i32_2 = arith.constant 0 : i32
    %c0_i32_3 = arith.constant 0 : i32
    return %c0_i32, %c0_i32_0, %c0_i32_1, %c0_i32_2 : i32, i32, i32, i32
  }
}

</mosaic_0001>

<llo_original>
// kernel: resblock_pallas.1
$region0: #{resblock_pallas.1}
  #allocation0 [shape = 'u32[]', space=smem, size = 0x4, offset = 0x4, fixed_abs, tag = 'smem constant byte address 0x4 - core index']
  #allocation1 [shape = 'u32[144,128]{1,0:T(1,128)}', space=vmem, size = 0x12000, scoped, tag = 'internal scratch']
  #allocation2 [shape = 'f32[2,18,18,64]{3,2,1,0:T(8,128)}', space=vmem, size = 0x6c000, scoped, tag = 'scratch operand']
  %s0 = inlined_call_operand.vmem [shape: f32[2,16,16,64], index: 0, kind: input, shape index: {}]
  %s1 = inlined_call_operand.vmem [shape: f32[576,64], index: 1, kind: input, shape index: {}]
  %s2 = inlined_call_operand.vmem [shape: f32[1,64], index: 2, kind: input, shape index: {}]
  %s3 = inlined_call_operand.vmem [shape: f32[576,64], index: 3, kind: input, shape index: {}]
  %s4 = inlined_call_operand.vmem [shape: f32[1,64], index: 4, kind: input, shape index: {}]
  %s5 = inlined_call_operand.hbm [shape: f32[2,16,16,64], index: 5, kind: output, shape index: {}]
  %s6 = sld [smem:[#allocation0]]
  $region30: #{resblock_pallas.1} parent=0
    _
  %s8 = ssub.s32 1, %s6
  %s9 = scalar_select 0, %s8, %s6
  $region1: #{resblock_pallas.1} parent=0
    #allocation3 [shape = 'u8[262144]{0}', space=vmem, size = 0x40000, scoped, tag = 'output window, operand 0, single buffered']
    #allocation4 [shape = 's32[1]{0}', space=sflag, size = 0x4, scoped, tag = 'scoped memory for resblock_pallas.1']
    %10 = vsyncpa [#allocation4], 0
    // Predicated region
    $region2: #{resblock_pallas.1} parent=1 // pred_check
      _
    $region3: #{resblock_pallas.1} parent=1 // pred_check_branch
      %12 = sbr.rel (0) target = $region5
    $region4: #{resblock_pallas.1} parent=1 // pred_region
      _
    $region5: #{resblock_pallas.1} parent=1 // pred_fallthru
      _
    // Predicated region
    $region6: #{resblock_pallas.1} parent=1 // pred_check
      _
    $region7: #{resblock_pallas.1} parent=1 // pred_check_branch
      %14 = sbr.rel (0) target = $region9
    $region8: #{resblock_pallas.1} parent=1 // pred_region
      _
    $region9: #{resblock_pallas.1} parent=1 // pred_fallthru
      _
    // Predicated region
    $region10: #{resblock_pallas.1} parent=1 // pred_check
      _
    $region11: #{resblock_pallas.1} parent=1 // pred_check_branch
      %16 = sbr.rel (0) target = $region13
    $region12: #{resblock_pallas.1} parent=1 // pred_region
      _
    $region13: #{resblock_pallas.1} parent=1 // pred_fallthru
      _
    // Predicated region
    $region14: #{resblock_pallas.1} parent=1 // pred_check
      _
    $region15: #{resblock_pallas.1} parent=1 // pred_check_branch
      %18 = sbr.rel (0) target = $region17
    $region16: #{resblock_pallas.1} parent=1 // pred_region
      _
    $region17: #{resblock_pallas.1} parent=1 // pred_fallthru
      _
    // Predicated region
    $region18: #{resblock_pallas.1} parent=1 // pred_check
      _
    $region19: #{resblock_pallas.1} parent=1 // pred_check_branch
      %20 = sbr.rel (0) target = $region21
    $region20: #{resblock_pallas.1} parent=1 // pred_region
      _
    $region21: #{resblock_pallas.1} parent=1 // pred_fallthru
      _
    %v21 = vld [vmem:[%s1] sm:$0xff]
    %v22 = vld [vmem:[%s1 + $0x8] sm:$0xff]
    %v23 = vld [vmem:[%s1 + $0x10] sm:$0xff]
    %v24 = vld [vmem:[%s1 + $0x18] sm:$0xff]
    %v25 = vld [vmem:[%s1 + $0x20] sm:$0xff]
    %v26 = vld [vmem:[%s1 + $0x28] sm:$0xff]
    %v27 = vld [vmem:[%s1 + $0x30] sm:$0xff]
    %v28 = vld [vmem:[%s1 + $0x38] sm:$0xff]
    %v29 = vld [vmem:[%s1 + $0x40] sm:$0xff]
    %v30 = vld [vmem:[%s1 + $0x48] sm:$0xff]
    %v31 = vld [vmem:[%s1 + $0x50] sm:$0xff]
    %v32 = vld [vmem:[%s1 + $0x58] sm:$0xff]
    %v33 = vld [vmem:[%s1 + $0x60] sm:$0xff]
    %v34 = vld [vmem:[%s1 + $0x68] sm:$0xff]
    %v35 = vld [vmem:[%s1 + $0x70] sm:$0xff]
    %v36 = vld [vmem:[%s1 + $0x78] sm:$0xff]
    %v37 = vld [vmem:[%s1 + $0x80] sm:$0xff]
    %v38 = vld [vmem:[%s1 + $0x88] sm:$0xff]
    %v39 = vld [vmem:[%s1 + $0x90] sm:$0xff]
    %v40 = vld [vmem:[%s1 + $0x98] sm:$0xff]
    %v41 = vld [vmem:[%s1 + $0xa0] sm:$0xff]
    %v42 = vld [vmem:[%s1 + $0xa8] sm:$0xff]
    %v43 = vld [vmem:[%s1 + $0xb0] sm:$0xff]
    %v44 = vld [vmem:[%s1 + $0xb8] sm:$0xff]
    %v45 = vld [vmem:[%s1 + $0xc0] sm:$0xff]
    %v46 = vld [vmem:[%s1 + $0xc8] sm:$0xff]
    %v47 = vld [vmem:[%s1 + $0xd0] sm:$0xff]
    %v48 = vld [vmem:[%s1 + $0xd8] sm:$0xff]
    %v49 = vld [vmem:[%s1 + $0xe0] sm:$0xff]
    %v50 = vld [vmem:[%s1 + $0xe8] sm:$0xff]
    %v51 = vld [vmem:[%s1 + $0xf0] sm:$0xff]
    %v52 = vld [vmem:[%s1 + $0xf8] sm:$0xff]
    %v53 = vld [vmem:[%s1 + $0x100] sm:$0xff]
    %v54 = vld [vmem:[%s1 + $0x108] sm:$0xff]
    %v55 = vld [vmem:[%s1 + $0x110] sm:$0xff]
    %v56 = vld [vmem:[%s1 + $0x118] sm:$0xff]
    %v57 = vld [vmem:[%s1 + $0x120] sm:$0xff]
    %v58 = vld [vmem:[%s1 + $0x128] sm:$0xff]
    %v59 = vld [vmem:[%s1 + $0x130] sm:$0xff]
    %v60 = vld [vmem:[%s1 + $0x138] sm:$0xff]
    %v61 = vld [vmem:[%s1 + $0x140] sm:$0xff]
    %v62 = vld [vmem:[%s1 + $0x148] sm:$0xff]
    %v63 = vld [vmem:[%s1 + $0x150] sm:$0xff]
    %v64 = vld [vmem:[%s1 + $0x158] sm:$0xff]
    %v65 = vld [vmem:[%s1 + $0x160] sm:$0xff]
    %v66 = vld [vmem:[%s1 + $0x168] sm:$0xff]
    %v67 = vld [vmem:[%s1 + $0x170] sm:$0xff]
    %v68 = vld [vmem:[%s1 + $0x178] sm:$0xff]
    %v69 = vld [vmem:[%s1 + $0x180] sm:$0xff]
    %v70 = vld [vmem:[%s1 + $0x188] sm:$0xff]
    %v71 = vld [vmem:[%s1 + $0x190] sm:$0xff]
    %v72 = vld [vmem:[%s1 + $0x198] sm:$0xff]
    %v73 = vld [vmem:[%s1 + $0x1a0] sm:$0xff]
    %v74 = vld [vmem:[%s1 + $0x1a8] sm:$0xff]
    %v75 = vld [vmem:[%s1 + $0x1b0] sm:$0xff]
    %v76 = vld [vmem:[%s1 + $0x1b8] sm:$0xff]
    %v77 = vld [vmem:[%s1 + $0x1c0] sm:$0xff]
    %v78 = vld [vmem:[%s1 + $0x1c8] sm:$0xff]
    %v79 = vld [vmem:[%s1 + $0x1d0] sm:$0xff]
    %v80 = vld [vmem:[%s1 + $0x1d8] sm:$0xff]
    %v81 = vld [vmem:[%s1 + $0x1e0] sm:$0xff]
    %v82 = vld [vmem:[%s1 + $0x1e8] sm:$0xff]
    %v83 = vld [vmem:[%s1 + $0x1f0] sm:$0xff]
    %v84 = vld [vmem:[%s1 + $0x1f8] sm:$0xff]
    %v85 = vld [vmem:[%s1 + $0x200] sm:$0xff]
    %v86 = vld [vmem:[%s1 + $0x208] sm:$0xff]
    %v87 = vld [vmem:[%s1 + $0x210] sm:$0xff]
    %v88 = vld [vmem:[%s1 + $0x218] sm:$0xff]
    %v89 = vld [vmem:[%s1 + $0x220] sm:$0xff]
    %v90 = vld [vmem:[%s1 + $0x228] sm:$0xff]
    %v91 = vld [vmem:[%s1 + $0x230] sm:$0xff]
    %v92 = vld [vmem:[%s1 + $0x238] sm:$0xff]
    %v93 = vld [vmem:[%s3] sm:$0xff]
    %v94 = vld [vmem:[%s3 + $0x8] sm:$0xff]
    %v95 = vld [vmem:[%s3 + $0x10] sm:$0xff]
    %v96 = vld [vmem:[%s3 + $0x18] sm:$0xff]
    %v97 = vld [vmem:[%s3 + $0x20] sm:$0xff]
    %v98 = vld [vmem:[%s3 + $0x28] sm:$0xff]
    %v99 = vld [vmem:[%s3 + $0x30] sm:$0xff]
    %v100 = vld [vmem:[%s3 + $0x38] sm:$0xff]
    %v101 = vld [vmem:[%s3 + $0x40] sm:$0xff]
    %v102 = vld [vmem:[%s3 + $0x48] sm:$0xff]
    %v103 = vld [vmem:[%s3 + $0x50] sm:$0xff]
    %v104 = vld [vmem:[%s3 + $0x58] sm:$0xff]
    %v105 = vld [vmem:[%s3 + $0x60] sm:$0xff]
    %v106 = vld [vmem:[%s3 + $0x68] sm:$0xff]
    %v107 = vld [vmem:[%s3 + $0x70] sm:$0xff]
    %v108 = vld [vmem:[%s3 + $0x78] sm:$0xff]
    %v109 = vld [vmem:[%s3 + $0x80] sm:$0xff]
    %v110 = vld [vmem:[%s3 + $0x88] sm:$0xff]
    %v111 = vld [vmem:[%s3 + $0x90] sm:$0xff]
    %v112 = vld [vmem:[%s3 + $0x98] sm:$0xff]
    %v113 = vld [vmem:[%s3 + $0xa0] sm:$0xff]
    %v114 = vld [vmem:[%s3 + $0xa8] sm:$0xff]
    %v115 = vld [vmem:[%s3 + $0xb0] sm:$0xff]
    %v116 = vld [vmem:[%s3 + $0xb8] sm:$0xff]
    %v117 = vld [vmem:[%s3 + $0xc0] sm:$0xff]
    %v118 = vld [vmem:[%s3 + $0xc8] sm:$0xff]
    %v119 = vld [vmem:[%s3 + $0xd0] sm:$0xff]
    %v120 = vld [vmem:[%s3 + $0xd8] sm:$0xff]
    %v121 = vld [vmem:[%s3 + $0xe0] sm:$0xff]
    %v122 = vld [vmem:[%s3 + $0xe8] sm:$0xff]
    %v123 = vld [vmem:[%s3 + $0xf0] sm:$0xff]
    %v124 = vld [vmem:[%s3 + $0xf8] sm:$0xff]
    %v125 = vld [vmem:[%s3 + $0x100] sm:$0xff]
    %v126 = vld [vmem:[%s3 + $0x108] sm:$0xff]
    %v127 = vld [vmem:[%s3 + $0x110] sm:$0xff]
    %v128 = vld [vmem:[%s3 + $0x118] sm:$0xff]
    %v129 = vld [vmem:[%s3 + $0x120] sm:$0xff]
    %v130 = vld [vmem:[%s3 + $0x128] sm:$0xff]
    %v131 = vld [vmem:[%s3 + $0x130] sm:$0xff]
    %v132 = vld [vmem:[%s3 + $0x138] sm:$0xff]
    %v133 = vld [vmem:[%s3 + $0x140] sm:$0xff]
    %v134 = vld [vmem:[%s3 + $0x148] sm:$0xff]
    %v135 = vld [vmem:[%s3 + $0x150] sm:$0xff]
    %v136 = vld [vmem:[%s3 + $0x158] sm:$0xff]
    %v137 = vld [vmem:[%s3 + $0x160] sm:$0xff]
    %v138 = vld [vmem:[%s3 + $0x168] sm:$0xff]
    %v139 = vld [vmem:[%s3 + $0x170] sm:$0xff]
    %v140 = vld [vmem:[%s3 + $0x178] sm:$0xff]
    %v141 = vld [vmem:[%s3 + $0x180] sm:$0xff]
    %v142 = vld [vmem:[%s3 + $0x188] sm:$0xff]
    %v143 = vld [vmem:[%s3 + $0x190] sm:$0xff]
    %v144 = vld [vmem:[%s3 + $0x198] sm:$0xff]
    %v145 = vld [vmem:[%s3 + $0x1a0] sm:$0xff]
    %v146 = vld [vmem:[%s3 + $0x1a8] sm:$0xff]
    %v147 = vld [vmem:[%s3 + $0x1b0] sm:$0xff]
    %v148 = vld [vmem:[%s3 + $0x1b8] sm:$0xff]
    %v149 = vld [vmem:[%s3 + $0x1c0] sm:$0xff]
    %v150 = vld [vmem:[%s3 + $0x1c8] sm:$0xff]
    %v151 = vld [vmem:[%s3 + $0x1d0] sm:$0xff]
    %v152 = vld [vmem:[%s3 + $0x1d8] sm:$0xff]
    %v153 = vld [vmem:[%s3 + $0x1e0] sm:$0xff]
    %v154 = vld [vmem:[%s3 + $0x1e8] sm:$0xff]
    %v155 = vld [vmem:[%s3 + $0x1f0] sm:$0xff]
    %v156 = vld [vmem:[%s3 + $0x1f8] sm:$0xff]
    %v157 = vld [vmem:[%s3 + $0x200] sm:$0xff]
    %v158 = vld [vmem:[%s3 + $0x208] sm:$0xff]
    %v159 = vld [vmem:[%s3 + $0x210] sm:$0xff]
    %v160 = vld [vmem:[%s3 + $0x218] sm:$0xff]
    %v161 = vld [vmem:[%s3 + $0x220] sm:$0xff]
    %v162 = vld [vmem:[%s3 + $0x228] sm:$0xff]
    %v163 = vld [vmem:[%s3 + $0x230] sm:$0xff]
    %v164 = vld [vmem:[%s3 + $0x238] sm:$0xff]
    %v165 = vld [vmem:[%s2] sm:$0x1]
    %v166 = vld [vmem:[%s4] sm:$0x1]
    %vm167 = vcmask 523264
    %168 = vst.msk [vmem:[#allocation2] sm:$0xff] %vm167, 0.0
    %169 = vst.msk [vmem:[#allocation2 + $0x8] sm:$0xff] %vm167, 0.0
    %vm170 = vcmask 517120
    %171 = vst.msk [vmem:[#allocation2 + $0x10] sm:$0x3] %vm170, 0.0
    %172 = vst.msk [vmem:[#allocation2 + $0x18] sm:$0xff] %vm167, 0.0
    %173 = vst.msk [vmem:[#allocation2 + $0x20] sm:$0xff] %vm167, 0.0
    %174 = vst.msk [vmem:[#allocation2 + $0x28] sm:$0x3] %vm170, 0.0
    %175 = vst.msk [vmem:[#allocation2 + $0x30] sm:$0xff] %vm167, 0.0
    %176 = vst.msk [vmem:[#allocation2 + $0x38] sm:$0xff] %vm167, 0.0
    %177 = vst.msk [vmem:[#allocation2 + $0x40] sm:$0x3] %vm170, 0.0
    %178 = vst.msk [vmem:[#allocation2 + $0x48] sm:$0xff] %vm167, 0.0
    %179 = vst.msk [vmem:[#allocation2 + $0x50] sm:$0xff] %vm167, 0.0
    %180 = vst.msk [vmem:[#allocation2 + $0x58] sm:$0x3] %vm170, 0.0
    %181 = vst.msk [vmem:[#allocation2 + $0x60] sm:$0xff] %vm167, 0.0
    %182 = vst.msk [vmem:[#allocation2 + $0x68] sm:$0xff] %vm167, 0.0
    %183 = vst.msk [vmem:[#allocation2 + $0x70] sm:$0x3] %vm170, 0.0
    %184 = vst.msk [vmem:[#allocation2 + $0x78] sm:$0xff] %vm167, 0.0
    %185 = vst.msk [vmem:[#allocation2 + $0x80] sm:$0xff] %vm167, 0.0
    %186 = vst.msk [vmem:[#allocation2 + $0x88] sm:$0x3] %vm170, 0.0
    %187 = vst.msk [vmem:[#allocation2 + $0x90] sm:$0xff] %vm167, 0.0
    %188 = vst.msk [vmem:[#allocation2 + $0x98] sm:$0xff] %vm167, 0.0
    %189 = vst.msk [vmem:[#allocation2 + $0xa0] sm:$0x3] %vm170, 0.0
    %190 = vst.msk [vmem:[#allocation2 + $0xa8] sm:$0xff] %vm167, 0.0
    %191 = vst.msk [vmem:[#allocation2 + $0xb0] sm:$0xff] %vm167, 0.0
    %192 = vst.msk [vmem:[#allocation2 + $0xb8] sm:$0x3] %vm170, 0.0
    %193 = vst.msk [vmem:[#allocation2 + $0xc0] sm:$0xff] %vm167, 0.0
    %194 = vst.msk [vmem:[#allocation2 + $0xc8] sm:$0xff] %vm167, 0.0
    %195 = vst.msk [vmem:[#allocation2 + $0xd0] sm:$0x3] %vm170, 0.0
    %196 = vst.msk [vmem:[#allocation2 + $0xd8] sm:$0xff] %vm167, 0.0
    %197 = vst.msk [vmem:[#allocation2 + $0xe0] sm:$0xff] %vm167, 0.0
    %198 = vst.msk [vmem:[#allocation2 + $0xe8] sm:$0x3] %vm170, 0.0
    %199 = vst.msk [vmem:[#allocation2 + $0xf0] sm:$0xff] %vm167, 0.0
    %200 = vst.msk [vmem:[#allocation2 + $0xf8] sm:$0xff] %vm167, 0.0
    %201 = vst.msk [vmem:[#allocation2 + $0x100] sm:$0x3] %vm170, 0.0
    %202 = vst.msk [vmem:[#allocation2 + $0x108] sm:$0xff] %vm167, 0.0
    %203 = vst.msk [vmem:[#allocation2 + $0x110] sm:$0xff] %vm167, 0.0
    %204 = vst.msk [vmem:[#allocation2 + $0x118] sm:$0x3] %vm170, 0.0
    %205 = vst.msk [vmem:[#allocation2 + $0x120] sm:$0xff] %vm167, 0.0
    %206 = vst.msk [vmem:[#allocation2 + $0x128] sm:$0xff] %vm167, 0.0
    %207 = vst.msk [vmem:[#allocation2 + $0x130] sm:$0x3] %vm170, 0.0
    %208 = vst.msk [vmem:[#allocation2 + $0x138] sm:$0xff] %vm167, 0.0
    %209 = vst.msk [vmem:[#allocation2 + $0x140] sm:$0xff] %vm167, 0.0
    %210 = vst.msk [vmem:[#allocation2 + $0x148] sm:$0x3] %vm170, 0.0
    %211 = vst.msk [vmem:[#allocation2 + $0x150] sm:$0xff] %vm167, 0.0
    %212 = vst.msk [vmem:[#allocation2 + $0x158] sm:$0xff] %vm167, 0.0
    %213 = vst.msk [vmem:[#allocation2 + $0x160] sm:$0x3] %vm170, 0.0
    %214 = vst.msk [vmem:[#allocation2 + $0x168] sm:$0xff] %vm167, 0.0
    %215 = vst.msk [vmem:[#allocation2 + $0x170] sm:$0xff] %vm167, 0.0
    %216 = vst.msk [vmem:[#allocation2 + $0x178] sm:$0x3] %vm170, 0.0
    %217 = vst.msk [vmem:[#allocation2 + $0x180] sm:$0xff] %vm167, 0.0
    %218 = vst.msk [vmem:[#allocation2 + $0x188] sm:$0xff] %vm167, 0.0
    %219 = vst.msk [vmem:[#allocation2 + $0x190] sm:$0x3] %vm170, 0.0
    %220 = vst.msk [vmem:[#allocation2 + $0x198] sm:$0xff] %vm167, 0.0
    %221 = vst.msk [vmem:[#allocation2 + $0x1a0] sm:$0xff] %vm167, 0.0
    %222 = vst.msk [vmem:[#allocation2 + $0x1a8] sm:$0x3] %vm170, 0.0
    %223 = vst.msk [vmem:[#allocation2 + $0x1b0] sm:$0xff] %vm167, 0.0
    %224 = vst.msk [vmem:[#allocation2 + $0x1b8] sm:$0xff] %vm167, 0.0
    %225 = vst.msk [vmem:[#allocation2 + $0x1c0] sm:$0x3] %vm170, 0.0
    %226 = vst.msk [vmem:[#allocation2 + $0x1c8] sm:$0xff] %vm167, 0.0
    %227 = vst.msk [vmem:[#allocation2 + $0x1d0] sm:$0xff] %vm167, 0.0
    %228 = vst.msk [vmem:[#allocation2 + $0x1d8] sm:$0x3] %vm170, 0.0
    %229 = vst.msk [vmem:[#allocation2 + $0x1e0] sm:$0xff] %vm167, 0.0
    %230 = vst.msk [vmem:[#allocation2 + $0x1e8] sm:$0xff] %vm167, 0.0
    %231 = vst.msk [vmem:[#allocation2 + $0x1f0] sm:$0x3] %vm170, 0.0
    %232 = vst.msk [vmem:[#allocation2 + $0x1f8] sm:$0xff] %vm167, 0.0
    %233 = vst.msk [vmem:[#allocation2 + $0x200] sm:$0xff] %vm167, 0.0
    %234 = vst.msk [vmem:[#allocation2 + $0x208] sm:$0x3] %vm170, 0.0
    %235 = vst.msk [vmem:[#allocation2 + $0x210] sm:$0xff] %vm167, 0.0
    %236 = vst.msk [vmem:[#allocation2 + $0x218] sm:$0xff] %vm167, 0.0
    %237 = vst.msk [vmem:[#allocation2 + $0x220] sm:$0x3] %vm170, 0.0
    %238 = vst.msk [vmem:[#allocation2 + $0x228] sm:$0xff] %vm167, 0.0
    %239 = vst.msk [vmem:[#allocation2 + $0x230] sm:$0xff] %vm167, 0.0
    %240 = vst.msk [vmem:[#allocation2 + $0x238] sm:$0x3] %vm170, 0.0
    %241 = vst.msk [vmem:[#allocation2 + $0x240] sm:$0xff] %vm167, 0.0
    %242 = vst.msk [vmem:[#allocation2 + $0x248] sm:$0xff] %vm167, 0.0
    %243 = vst.msk [vmem:[#allocation2 + $0x250] sm:$0x3] %vm170, 0.0
    %244 = vst.msk [vmem:[#allocation2 + $0x258] sm:$0xff] %vm167, 0.0
    %245 = vst.msk [vmem:[#allocation2 + $0x260] sm:$0xff] %vm167, 0.0
    %246 = vst.msk [vmem:[#allocation2 + $0x268] sm:$0x3] %vm170, 0.0
    %247 = vst.msk [vmem:[#allocation2 + $0x270] sm:$0xff] %vm167, 0.0
    %248 = vst.msk [vmem:[#allocation2 + $0x278] sm:$0xff] %vm167, 0.0
    %249 = vst.msk [vmem:[#allocation2 + $0x280] sm:$0x3] %vm170, 0.0
    %250 = vst.msk [vmem:[#allocation2 + $0x288] sm:$0xff] %vm167, 0.0
    %251 = vst.msk [vmem:[#allocation2 + $0x290] sm:$0xff] %vm167, 0.0
    %252 = vst.msk [vmem:[#allocation2 + $0x298] sm:$0x3] %vm170, 0.0
    %253 = vst.msk [vmem:[#allocation2 + $0x2a0] sm:$0xff] %vm167, 0.0
    %254 = vst.msk [vmem:[#allocation2 + $0x2a8] sm:$0xff] %vm167, 0.0
    %255 = vst.msk [vmem:[#allocation2 + $0x2b0] sm:$0x3] %vm170, 0.0
    %256 = vst.msk [vmem:[#allocation2 + $0x2b8] sm:$0xff] %vm167, 0.0
    %257 = vst.msk [vmem:[#allocation2 + $0x2c0] sm:$0xff] %vm167, 0.0
    %258 = vst.msk [vmem:[#allocation2 + $0x2c8] sm:$0x3] %vm170, 0.0
    %259 = vst.msk [vmem:[#allocation2 + $0x2d0] sm:$0xff] %vm167, 0.0
    %260 = vst.msk [vmem:[#allocation2 + $0x2d8] sm:$0xff] %vm167, 0.0
    %261 = vst.msk [vmem:[#allocation2 + $0x2e0] sm:$0x3] %vm170, 0.0
    %262 = vst.msk [vmem:[#allocation2 + $0x2e8] sm:$0xff] %vm167, 0.0
    %263 = vst.msk [vmem:[#allocation2 + $0x2f0] sm:$0xff] %vm167, 0.0
    %264 = vst.msk [vmem:[#allocation2 + $0x2f8] sm:$0x3] %vm170, 0.0
    %265 = vst.msk [vmem:[#allocation2 + $0x300] sm:$0xff] %vm167, 0.0
    %266 = vst.msk [vmem:[#allocation2 + $0x308] sm:$0xff] %vm167, 0.0
    %267 = vst.msk [vmem:[#allocation2 + $0x310] sm:$0x3] %vm170, 0.0
    %268 = vst.msk [vmem:[#allocation2 + $0x318] sm:$0xff] %vm167, 0.0
    %269 = vst.msk [vmem:[#allocation2 + $0x320] sm:$0xff] %vm167, 0.0
    %270 = vst.msk [vmem:[#allocation2 + $0x328] sm:$0x3] %vm170, 0.0
    %271 = vst.msk [vmem:[#allocation2 + $0x330] sm:$0xff] %vm167, 0.0
    %272 = vst.msk [vmem:[#allocation2 + $0x338] sm:$0xff] %vm167, 0.0
    %273 = vst.msk [vmem:[#allocation2 + $0x340] sm:$0x3] %vm170, 0.0
    %274 = vst.msk [vmem:[#allocation2 + $0x348] sm:$0xff] %vm167, 0.0
    %275 = vst.msk [vmem:[#allocation2 + $0x350] sm:$0xff] %vm167, 0.0
    %276 = vst.msk [vmem:[#allocation2 + $0x358] sm:$0x3] %vm170, 0.0
    %v277 = vld [vmem:[%s0] sm:$0xff]
    %v278 = vld [vmem:[%s0 + $0x8] sm:$0xff]
    %v279 = vld [vmem:[%s0 + $0x10] sm:$0xff]
    %v280 = vld [vmem:[%s0 + $0x18] sm:$0xff]
    %v281 = vld [vmem:[%s0 + $0x20] sm:$0xff]
    %v282 = vld [vmem:[%s0 + $0x28] sm:$0xff]
    %v283 = vld [vmem:[%s0 + $0x30] sm:$0xff]
    %v284 = vld [vmem:[%s0 + $0x38] sm:$0xff]
    %v285 = vld [vmem:[%s0 + $0x40] sm:$0xff]
    %v286 = vld [vmem:[%s0 + $0x48] sm:$0xff]
    %v287 = vld [vmem:[%s0 + $0x50] sm:$0xff]
    %v288 = vld [vmem:[%s0 + $0x58] sm:$0xff]
    %v289 = vld [vmem:[%s0 + $0x60] sm:$0xff]
    %v290 = vld [vmem:[%s0 + $0x68] sm:$0xff]
    %v291 = vld [vmem:[%s0 + $0x70] sm:$0xff]
    %v292 = vld [vmem:[%s0 + $0x78] sm:$0xff]
    %v293 = vld [vmem:[%s0 + $0x80] sm:$0xff]
    %v294 = vld [vmem:[%s0 + $0x88] sm:$0xff]
    %v295 = vld [vmem:[%s0 + $0x90] sm:$0xff]
    %v296 = vld [vmem:[%s0 + $0x98] sm:$0xff]
    %v297 = vld [vmem:[%s0 + $0xa0] sm:$0xff]
    %v298 = vld [vmem:[%s0 + $0xa8] sm:$0xff]
    %v299 = vld [vmem:[%s0 + $0xb0] sm:$0xff]
    %v300 = vld [vmem:[%s0 + $0xb8] sm:$0xff]
    %v301 = vld [vmem:[%s0 + $0xc0] sm:$0xff]
    %v302 = vld [vmem:[%s0 + $0xc8] sm:$0xff]
    %v303 = vld [vmem:[%s0 + $0xd0] sm:$0xff]
    %v304 = vld [vmem:[%s0 + $0xd8] sm:$0xff]
    %v305 = vld [vmem:[%s0 + $0xe0] sm:$0xff]
    %v306 = vld [vmem:[%s0 + $0xe8] sm:$0xff]
    %v307 = vld [vmem:[%s0 + $0xf0] sm:$0xff]
    %v308 = vld [vmem:[%s0 + $0xf8] sm:$0xff]
    %v309 = vld [vmem:[%s0 + $0x100] sm:$0xff]
    %v310 = vld [vmem:[%s0 + $0x108] sm:$0xff]
    %v311 = vld [vmem:[%s0 + $0x110] sm:$0xff]
    %v312 = vld [vmem:[%s0 + $0x118] sm:$0xff]
    %v313 = vld [vmem:[%s0 + $0x120] sm:$0xff]
    %v314 = vld [vmem:[%s0 + $0x128] sm:$0xff]
    %v315 = vld [vmem:[%s0 + $0x130] sm:$0xff]
    %v316 = vld [vmem:[%s0 + $0x138] sm:$0xff]
    %v317 = vld [vmem:[%s0 + $0x140] sm:$0xff]
    %v318 = vld [vmem:[%s0 + $0x148] sm:$0xff]
    %v319 = vld [vmem:[%s0 + $0x150] sm:$0xff]
    %v320 = vld [vmem:[%s0 + $0x158] sm:$0xff]
    %v321 = vld [vmem:[%s0 + $0x160] sm:$0xff]
    %v322 = vld [vmem:[%s0 + $0x168] sm:$0xff]
    %v323 = vld [vmem:[%s0 + $0x170] sm:$0xff]
    %v324 = vld [vmem:[%s0 + $0x178] sm:$0xff]
    %v325 = vld [vmem:[%s0 + $0x180] sm:$0xff]
    %v326 = vld [vmem:[%s0 + $0x188] sm:$0xff]
    %v327 = vld [vmem:[%s0 + $0x190] sm:$0xff]
    %v328 = vld [vmem:[%s0 + $0x198] sm:$0xff]
    %v329 = vld [vmem:[%s0 + $0x1a0] sm:$0xff]
    %v330 = vld [vmem:[%s0 + $0x1a8] sm:$0xff]
    %v331 = vld [vmem:[%s0 + $0x1b0] sm:$0xff]
    %v332 = vld [vmem:[%s0 + $0x1b8] sm:$0xff]
    %v333 = vld [vmem:[%s0 + $0x1c0] sm:$0xff]
    %v334 = vld [vmem:[%s0 + $0x1c8] sm:$0xff]
    %v335 = vld [vmem:[%s0 + $0x1d0] sm:$0xff]
    %v336 = vld [vmem:[%s0 + $0x1d8] sm:$0xff]
    %v337 = vld [vmem:[%s0 + $0x1e0] sm:$0xff]
    %v338 = vld [vmem:[%s0 + $0x1e8] sm:$0xff]
    %v339 = vld [vmem:[%s0 + $0x1f0] sm:$0xff]
    %v340 = vld [vmem:[%s0 + $0x1f8] sm:$0xff]
    %s341 = scalar_lea.vmem [#allocation2], 24
    %342 = vst.msk [vmem:[%s341 + $0x1] sm:$0xff] %vm167, %v277
    %343 = vst.msk [vmem:[%s341 + $0x9] sm:$0xff] %vm167, %v278
    %344 = vst.msk [vmem:[%s341 + $0x19] sm:$0xff] %vm167, %v279
    %345 = vst.msk [vmem:[%s341 + $0x21] sm:$0xff] %vm167, %v280
    %346 = vst.msk [vmem:[%s341 + $0x31] sm:$0xff] %vm167, %v281
    %347 = vst.msk [vmem:[%s341 + $0x39] sm:$0xff] %vm167, %v282
    %348 = vst.msk [vmem:[%s341 + $0x49] sm:$0xff] %vm167, %v283
    %349 = vst.msk [vmem:[%s341 + $0x51] sm:$0xff] %vm167, %v284
    %350 = vst.msk [vmem:[%s341 + $0x61] sm:$0xff] %vm167, %v285
    %351 = vst.msk [vmem:[%s341 + $0x69] sm:$0xff] %vm167, %v286
    %352 = vst.msk [vmem:[%s341 + $0x79] sm:$0xff] %vm167, %v287
    %353 = vst.msk [vmem:[%s341 + $0x81] sm:$0xff] %vm167, %v288
    %354 = vst.msk [vmem:[%s341 + $0x91] sm:$0xff] %vm167, %v289
    %355 = vst.msk [vmem:[%s341 + $0x99] sm:$0xff] %vm167, %v290
    %356 = vst.msk [vmem:[%s341 + $0xa9] sm:$0xff] %vm167, %v291
    %357 = vst.msk [vmem:[%s341 + $0xb1] sm:$0xff] %vm167, %v292
    %358 = vst.msk [vmem:[%s341 + $0xc1] sm:$0xff] %vm167, %v293
    %359 = vst.msk [vmem:[%s341 + $0xc9] sm:$0xff] %vm167, %v294
    %360 = vst.msk [vmem:[%s341 + $0xd9] sm:$0xff] %vm167, %v295
    %361 = vst.msk [vmem:[%s341 + $0xe1] sm:$0xff] %vm167, %v296
    %362 = vst.msk [vmem:[%s341 + $0xf1] sm:$0xff] %vm167, %v297
    %363 = vst.msk [vmem:[%s341 + $0xf9] sm:$0xff] %vm167, %v298
    %364 = vst.msk [vmem:[%s341 + $0x109] sm:$0xff] %vm167, %v299
    %365 = vst.msk [vmem:[%s341 + $0x111] sm:$0xff] %vm167, %v300
    %366 = vst.msk [vmem:[%s341 + $0x121] sm:$0xff] %vm167, %v301
    %367 = vst.msk [vmem:[%s341 + $0x129] sm:$0xff] %vm167, %v302
    %368 = vst.msk [vmem:[%s341 + $0x139] sm:$0xff] %vm167, %v303
    %369 = vst.msk [vmem:[%s341 + $0x141] sm:$0xff] %vm167, %v304
    %370 = vst.msk [vmem:[%s341 + $0x151] sm:$0xff] %vm167, %v305
    %371 = vst.msk [vmem:[%s341 + $0x159] sm:$0xff] %vm167, %v306
    %372 = vst.msk [vmem:[%s341 + $0x169] sm:$0xff] %vm167, %v307
    %373 = vst.msk [vmem:[%s341 + $0x171] sm:$0xff] %vm167, %v308
    %374 = vst.msk [vmem:[%s341 + $0x1b1] sm:$0xff] %vm167, %v309
    %375 = vst.msk [vmem:[%s341 + $0x1b9] sm:$0xff] %vm167, %v310
    %376 = vst.msk [vmem:[%s341 + $0x1c9] sm:$0xff] %vm167, %v311
    %377 = vst.msk [vmem:[%s341 + $0x1d1] sm:$0xff] %vm167, %v312
    %378 = vst.msk [vmem:[%s341 + $0x1e1] sm:$0xff] %vm167, %v313
    %379 = vst.msk [vmem:[%s341 + $0x1e9] sm:$0xff] %vm167, %v314
    %380 = vst.msk [vmem:[%s341 + $0x1f9] sm:$0xff] %vm167, %v315
    %381 = vst.msk [vmem:[%s341 + $0x201] sm:$0xff] %vm167, %v316
    %382 = vst.msk [vmem:[%s341 + $0x211] sm:$0xff] %vm167, %v317
    %383 = vst.msk [vmem:[%s341 + $0x219] sm:$0xff] %vm167, %v318
    %384 = vst.msk [vmem:[%s341 + $0x229] sm:$0xff] %vm167, %v319
    %385 = vst.msk [vmem:[%s341 + $0x231] sm:$0xff] %vm167, %v320
    %386 = vst.msk [vmem:[%s341 + $0x241] sm:$0xff] %vm167, %v321
    %387 = vst.msk [vmem:[%s341 + $0x249] sm:$0xff] %vm167, %v322
    %388 = vst.msk [vmem:[%s341 + $0x259] sm:$0xff] %vm167, %v323
    %389 = vst.msk [vmem:[%s341 + $0x261] sm:$0xff] %vm167, %v324
    %390 = vst.msk [vmem:[%s341 + $0x271] sm:$0xff] %vm167, %v325
    %391 = vst.msk [vmem:[%s341 + $0x279] sm:$0xff] %vm167, %v326
    %392 = vst.msk [vmem:[%s341 + $0x289] sm:$0xff] %vm167, %v327
    %393 = vst.msk [vmem:[%s341 + $0x291] sm:$0xff] %vm167, %v328
    %394 = vst.msk [vmem:[%s341 + $0x2a1] sm:$0xff] %vm167, %v329
    %395 = vst.msk [vmem:[%s341 + $0x2a9] sm:$0xff] %vm167, %v330
    %396 = vst.msk [vmem:[%s341 + $0x2b9] sm:$0xff] %vm167, %v331
    %397 = vst.msk [vmem:[%s341 + $0x2c1] sm:$0xff] %vm167, %v332
    %398 = vst.msk [vmem:[%s341 + $0x2d1] sm:$0xff] %vm167, %v333
    %399 = vst.msk [vmem:[%s341 + $0x2d9] sm:$0xff] %vm167, %v334
    %400 = vst.msk [vmem:[%s341 + $0x2e9] sm:$0xff] %vm167, %v335
    %401 = vst.msk [vmem:[%s341 + $0x2f1] sm:$0xff] %vm167, %v336
    %402 = vst.msk [vmem:[%s341 + $0x301] sm:$0xff] %vm167, %v337
    %403 = vst.msk [vmem:[%s341 + $0x309] sm:$0xff] %vm167, %v338
    %404 = vst.msk [vmem:[%s341 + $0x319] sm:$0xff] %vm167, %v339
    %405 = vst.msk [vmem:[%s341 + $0x321] sm:$0xff] %vm167, %v340
    %v406 = vld [vmem:[#allocation2] sm:$0xff]
    %v407 = vld [vmem:[#allocation2 + $0x8] sm:$0xff]
    %v408 = vld [vmem:[#allocation2 + $0x18] sm:$0xff]
    %v409 = vld [vmem:[#allocation2 + $0x20] sm:$0xff]
    %v410 = vld [vmem:[#allocation2 + $0x30] sm:$0xff]
    %v411 = vld [vmem:[#allocation2 + $0x38] sm:$0xff]
    %v412 = vld [vmem:[#allocation2 + $0x48] sm:$0xff]
    %v413 = vld [vmem:[#allocation2 + $0x50] sm:$0xff]
    %v414 = vld [vmem:[#allocation2 + $0x60] sm:$0xff]
    %v415 = vld [vmem:[#allocation2 + $0x68] sm:$0xff]
    %v416 = vld [vmem:[#allocation2 + $0x78] sm:$0xff]
    %v417 = vld [vmem:[#allocation2 + $0x80] sm:$0xff]
    %v418 = vld [vmem:[#allocation2 + $0x90] sm:$0xff]
    %v419 = vld [vmem:[#allocation2 + $0x98] sm:$0xff]
    %v420 = vld [vmem:[#allocation2 + $0xa8] sm:$0xff]
    %v421 = vld [vmem:[#allocation2 + $0xb0] sm:$0xff]
    %v422 = vld [vmem:[#allocation2 + $0xc0] sm:$0xff]
    %v423 = vld [vmem:[#allocation2 + $0xc8] sm:$0xff]
    %v424 = vld [vmem:[#allocation2 + $0xd8] sm:$0xff]
    %v425 = vld [vmem:[#allocation2 + $0xe0] sm:$0xff]
    %v426 = vld [vmem:[#allocation2 + $0xf0] sm:$0xff]
    %v427 = vld [vmem:[#allocation2 + $0xf8] sm:$0xff]
    %v428 = vld [vmem:[#allocation2 + $0x108] sm:$0xff]
    %v429 = vld [vmem:[#allocation2 + $0x110] sm:$0xff]
    %v430 = vld [vmem:[#allocation2 + $0x120] sm:$0xff]
    %v431 = vld [vmem:[#allocation2 + $0x128] sm:$0xff]
    %v432 = vld [vmem:[#allocation2 + $0x138] sm:$0xff]
    %v433 = vld [vmem:[#allocation2 + $0x140] sm:$0xff]
    %v434 = vld [vmem:[#allocation2 + $0x150] sm:$0xff]
    %v435 = vld [vmem:[#allocation2 + $0x158] sm:$0xff]
    %v436 = vld [vmem:[#allocation2 + $0x168] sm:$0xff]
    %v437 = vld [vmem:[#allocation2 + $0x170] sm:$0xff]
    %v438 = vld [vmem:[#allocation2 + $0x1b0] sm:$0xff]
    %v439 = vld [vmem:[#allocation2 + $0x1b8] sm:$0xff]
    %v440 = vld [vmem:[#allocation2 + $0x1c8] sm:$0xff]
    %v441 = vld [vmem:[#allocation2 + $0x1d0] sm:$0xff]
    %v442 = vld [vmem:[#allocation2 + $0x1e0] sm:$0xff]
    %v443 = vld [vmem:[#allocation2 + $0x1e8] sm:$0xff]
    %v444 = vld [vmem:[#allocation2 + $0x1f8] sm:$0xff]
    %v445 = vld [vmem:[#allocation2 + $0x200] sm:$0xff]
    %v446 = vld [vmem:[#allocation2 + $0x210] sm:$0xff]
    %v447 = vld [vmem:[#allocation2 + $0x218] sm:$0xff]
    %v448 = vld [vmem:[#allocation2 + $0x228] sm:$0xff]
    %v449 = vld [vmem:[#allocation2 + $0x230] sm:$0xff]
    %v450 = vld [vmem:[#allocation2 + $0x240] sm:$0xff]
    %v451 = vld [vmem:[#allocation2 + $0x248] sm:$0xff]
    %v452 = vld [vmem:[#allocation2 + $0x258] sm:$0xff]
    %v453 = vld [vmem:[#allocation2 + $0x260] sm:$0xff]
    %v454 = vld [vmem:[#allocation2 + $0x270] sm:$0xff]
    %v455 = vld [vmem:[#allocation2 + $0x278] sm:$0xff]
    %v456 = vld [vmem:[#allocation2 + $0x288] sm:$0xff]
    %v457 = vld [vmem:[#allocation2 + $0x290] sm:$0xff]
    %v458 = vld [vmem:[#allocation2 + $0x2a0] sm:$0xff]
    %v459 = vld [vmem:[#allocation2 + $0x2a8] sm:$0xff]
    %v460 = vld [vmem:[#allocation2 + $0x2b8] sm:$0xff]
    %v461 = vld [vmem:[#allocation2 + $0x2c0] sm:$0xff]
    %v462 = vld [vmem:[#allocation2 + $0x2d0] sm:$0xff]
    %v463 = vld [vmem:[#allocation2 + $0x2d8] sm:$0xff]
    %v464 = vld [vmem:[#allocation2 + $0x2e8] sm:$0xff]
    %v465 = vld [vmem:[#allocation2 + $0x2f0] sm:$0xff]
    %v466 = vld [vmem:[#allocation2 + $0x300] sm:$0xff]
    %v467 = vld [vmem:[#allocation2 + $0x308] sm:$0xff]
    %v468 = vld [vmem:[#allocation2 + $0x318] sm:$0xff]
    %v469 = vld [vmem:[#allocation2 + $0x320] sm:$0xff]
    %v470 = vld [vmem:[#allocation2 + $0x1] sm:$0xff]
    %v471 = vld [vmem:[#allocation2 + $0x9] sm:$0xff]
    %v472 = vld [vmem:[#allocation2 + $0x19] sm:$0xff]
    %v473 = vld [vmem:[#allocation2 + $0x21] sm:$0xff]
    %v474 = vld [vmem:[#allocation2 + $0x31] sm:$0xff]
    %v475 = vld [vmem:[#allocation2 + $0x39] sm:$0xff]
    %v476 = vld [vmem:[#allocation2 + $0x49] sm:$0xff]
    %v477 = vld [vmem:[#allocation2 + $0x51] sm:$0xff]
    %v478 = vld [vmem:[#allocation2 + $0x61] sm:$0xff]
    %v479 = vld [vmem:[#allocation2 + $0x69] sm:$0xff]
    %v480 = vld [vmem:[#allocation2 + $0x79] sm:$0xff]
    %v481 = vld [vmem:[#allocation2 + $0x81] sm:$0xff]
    %v482 = vld [vmem:[#allocation2 + $0x91] sm:$0xff]
    %v483 = vld [vmem:[#allocation2 + $0x99] sm:$0xff]
    %v484 = vld [vmem:[#allocation2 + $0xa9] sm:$0xff]
    %v485 = vld [vmem:[#allocation2 + $0xb1] sm:$0xff]
    %v486 = vld [vmem:[#allocation2 + $0xc1] sm:$0xff]
    %v487 = vld [vmem:[#allocation2 + $0xc9] sm:$0xff]
    %v488 = vld [vmem:[#allocation2 + $0xd9] sm:$0xff]
    %v489 = vld [vmem:[#allocation2 + $0xe1] sm:$0xff]
    %v490 = vld [vmem:[#allocation2 + $0xf1] sm:$0xff]
    %v491 = vld [vmem:[#allocation2 + $0xf9] sm:$0xff]
    %v492 = vld [vmem:[#allocation2 + $0x109] sm:$0xff]
    %v493 = vld [vmem:[#allocation2 + $0x111] sm:$0xff]
    %v494 = vld [vmem:[#allocation2 + $0x121] sm:$0xff]
    %v495 = vld [vmem:[#allocation2 + $0x129] sm:$0xff]
    %v496 = vld [vmem:[#allocation2 + $0x139] sm:$0xff]
    %v497 = vld [vmem:[#allocation2 + $0x141] sm:$0xff]
    %v498 = vld [vmem:[#allocation2 + $0x151] sm:$0xff]
    %v499 = vld [vmem:[#allocation2 + $0x159] sm:$0xff]
    %v500 = vld [vmem:[#allocation2 + $0x169] sm:$0xff]
    %v501 = vld [vmem:[#allocation2 + $0x171] sm:$0xff]
    %v502 = vld [vmem:[#allocation2 + $0x1b1] sm:$0xff]
    %v503 = vld [vmem:[#allocation2 + $0x1b9] sm:$0xff]
    %v504 = vld [vmem:[#allocation2 + $0x1c9] sm:$0xff]
    %v505 = vld [vmem:[#allocation2 + $0x1d1] sm:$0xff]
    %v506 = vld [vmem:[#allocation2 + $0x1e1] sm:$0xff]
    %v507 = vld [vmem:[#allocation2 + $0x1e9] sm:$0xff]
    %v508 = vld [vmem:[#allocation2 + $0x1f9] sm:$0xff]
    %v509 = vld [vmem:[#allocation2 + $0x201] sm:$0xff]
    %v510 = vld [vmem:[#allocation2 + $0x211] sm:$0xff]
    %v511 = vld [vmem:[#allocation2 + $0x219] sm:$0xff]
    %v512 = vld [vmem:[#allocation2 + $0x229] sm:$0xff]
    %v513 = vld [vmem:[#allocation2 + $0x231] sm:$0xff]
    %v514 = vld [vmem:[#allocation2 + $0x241] sm:$0xff]
    %v515 = vld [vmem:[#allocation2 + $0x249] sm:$0xff]
    %v516 = vld [vmem:[#allocation2 + $0x259] sm:$0xff]
    %v517 = vld [vmem:[#allocation2 + $0x261] sm:$0xff]
    %v518 = vld [vmem:[#allocation2 + $0x271] sm:$0xff]
    %v519 = vld [vmem:[#allocation2 + $0x279] sm:$0xff]
    %v520 = vld [vmem:[#allocation2 + $0x289] sm:$0xff]
    %v521 = vld [vmem:[#allocation2 + $0x291] sm:$0xff]
    %v522 = vld [vmem:[#allocation2 + $0x2a1] sm:$0xff]
    %v523 = vld [vmem:[#allocation2 + $0x2a9] sm:$0xff]
    %v524 = vld [vmem:[#allocation2 + $0x2b9] sm:$0xff]
    %v525 = vld [vmem:[#allocation2 + $0x2c1] sm:$0xff]
    %v526 = vld [vmem:[#allocation2 + $0x2d1] sm:$0xff]
    %v527 = vld [vmem:[#allocation2 + $0x2d9] sm:$0xff]
    %v528 = vld [vmem:[#allocation2 + $0x2e9] sm:$0xff]
    %v529 = vld [vmem:[#allocation2 + $0x2f1] sm:$0xff]
    %v530 = vld [vmem:[#allocation2 + $0x301] sm:$0xff]
    %v531 = vld [vmem:[#allocation2 + $0x309] sm:$0xff]
    %v532 = vld [vmem:[#allocation2 + $0x319] sm:$0xff]
    %v533 = vld [vmem:[#allocation2 + $0x321] sm:$0xff]
    %v534 = vld [vmem:[#allocation2 + $0x2] sm:$0xff]
    %v535 = vld [vmem:[#allocation2 + $0xa] sm:$0xff]
    %v536 = vld [vmem:[#allocation2 + $0x1a] sm:$0xff]
    %v537 = vld [vmem:[#allocation2 + $0x22] sm:$0xff]
    %v538 = vld [vmem:[#allocation2 + $0x32] sm:$0xff]
    %v539 = vld [vmem:[#allocation2 + $0x3a] sm:$0xff]
    %v540 = vld [vmem:[#allocation2 + $0x4a] sm:$0xff]
    %v541 = vld [vmem:[#allocation2 + $0x52] sm:$0xff]
    %v542 = vld [vmem:[#allocation2 + $0x62] sm:$0xff]
    %v543 = vld [vmem:[#allocation2 + $0x6a] sm:$0xff]
    %v544 = vld [vmem:[#allocation2 + $0x7a] sm:$0xff]
    %v545 = vld [vmem:[#allocation2 + $0x82] sm:$0xff]
    %v546 = vld [vmem:[#allocation2 + $0x92] sm:$0xff]
    %v547 = vld [vmem:[#allocation2 + $0x9a] sm:$0xff]
    %v548 = vld [vmem:[#allocation2 + $0xaa] sm:$0xff]
    %v549 = vld [vmem:[#allocation2 + $0xb2] sm:$0xff]
    %v550 = vld [vmem:[#allocation2 + $0xc2] sm:$0xff]
    %v551 = vld [vmem:[#allocation2 + $0xca] sm:$0xff]
    %v552 = vld [vmem:[#allocation2 + $0xda] sm:$0xff]
    %v553 = vld [vmem:[#allocation2 + $0xe2] sm:$0xff]
    %v554 = vld [vmem:[#allocation2 + $0xf2] sm:$0xff]
    %v555 = vld [vmem:[#allocation2 + $0xfa] sm:$0xff]
    %v556 = vld [vmem:[#allocation2 + $0x10a] sm:$0xff]
    %v557 = vld [vmem:[#allocation2 + $0x112] sm:$0xff]
    %v558 = vld [vmem:[#allocation2 + $0x122] sm:$0xff]
    %v559 = vld [vmem:[#allocation2 + $0x12a] sm:$0xff]
    %v560 = vld [vmem:[#allocation2 + $0x13a] sm:$0xff]
    %v561 = vld [vmem:[#allocation2 + $0x142] sm:$0xff]
    %v562 = vld [vmem:[#allocation2 + $0x152] sm:$0xff]
    %v563 = vld [vmem:[#allocation2 + $0x15a] sm:$0xff]
    %v564 = vld [vmem:[#allocation2 + $0x16a] sm:$0xff]
    %v565 = vld [vmem:[#allocation2 + $0x172] sm:$0xff]
    %v566 = vld [vmem:[#allocation2 + $0x1b2] sm:$0xff]
    %v567 = vld [vmem:[#allocation2 + $0x1ba] sm:$0xff]
    %v568 = vld [vmem:[#allocation2 + $0x1ca] sm:$0xff]
    %v569 = vld [vmem:[#allocation2 + $0x1d2] sm:$0xff]
    %v570 = vld [vmem:[#allocation2 + $0x1e2] sm:$0xff]
    %v571 = vld [vmem:[#allocation2 + $0x1ea] sm:$0xff]
    %v572 = vld [vmem:[#allocation2 + $0x1fa] sm:$0xff]
    %v573 = vld [vmem:[#allocation2 + $0x202] sm:$0xff]
    %v574 = vld [vmem:[#allocation2 + $0x212] sm:$0xff]
    %v575 = vld [vmem:[#allocation2 + $0x21a] sm:$0xff]
    %v576 = vld [vmem:[#allocation2 + $0x22a] sm:$0xff]
    %v577 = vld [vmem:[#allocation2 + $0x232] sm:$0xff]
    %v578 = vld [vmem:[#allocation2 + $0x242] sm:$0xff]
    %v579 = vld [vmem:[#allocation2 + $0x24a] sm:$0xff]
    %v580 = vld [vmem:[#allocation2 + $0x25a] sm:$0xff]
    %v581 = vld [vmem:[#allocation2 + $0x262] sm:$0xff]
    %v582 = vld [vmem:[#allocation2 + $0x272] sm:$0xff]
    %v583 = vld [vmem:[#allocation2 + $0x27a] sm:$0xff]
    %v584 = vld [vmem:[#allocation2 + $0x28a] sm:$0xff]
    %v585 = vld [vmem:[#allocation2 + $0x292] sm:$0xff]
    %v586 = vld [vmem:[#allocation2 + $0x2a2] sm:$0xff]
    %v587 = vld [vmem:[#allocation2 + $0x2aa] sm:$0xff]
    %v588 = vld [vmem:[#allocation2 + $0x2ba] sm:$0xff]
    %v589 = vld [vmem:[#allocation2 + $0x2c2] sm:$0xff]
    %v590 = vld [vmem:[#allocation2 + $0x2d2] sm:$0xff]
    %v591 = vld [vmem:[#allocation2 + $0x2da] sm:$0xff]
    %v592 = vld [vmem:[#allocation2 + $0x2ea] sm:$0xff]
    %v593 = vld [vmem:[#allocation2 + $0x2f2] sm:$0xff]
    %v594 = vld [vmem:[#allocation2 + $0x302] sm:$0xff]
    %v595 = vld [vmem:[#allocation2 + $0x30a] sm:$0xff]
    %v596 = vld [vmem:[#allocation2 + $0x31a] sm:$0xff]
    %v597 = vld [vmem:[#allocation2 + $0x322] sm:$0xff]
    %v598 = vld [vmem:[%s341] sm:$0xff]
    %v599 = vld [vmem:[%s341 + $0x8] sm:$0xff]
    %v600 = vld [vmem:[%s341 + $0x18] sm:$0xff]
    %v601 = vld [vmem:[%s341 + $0x20] sm:$0xff]
    %v602 = vld [vmem:[%s341 + $0x30] sm:$0xff]
    %v603 = vld [vmem:[%s341 + $0x38] sm:$0xff]
    %v604 = vld [vmem:[%s341 + $0x48] sm:$0xff]
    %v605 = vld [vmem:[%s341 + $0x50] sm:$0xff]
    %v606 = vld [vmem:[%s341 + $0x60] sm:$0xff]
    %v607 = vld [vmem:[%s341 + $0x68] sm:$0xff]
    %v608 = vld [vmem:[%s341 + $0x78] sm:$0xff]
    %v609 = vld [vmem:[%s341 + $0x80] sm:$0xff]
    %v610 = vld [vmem:[%s341 + $0x90] sm:$0xff]
    %v611 = vld [vmem:[%s341 + $0x98] sm:$0xff]
    %v612 = vld [vmem:[%s341 + $0xa8] sm:$0xff]
    %v613 = vld [vmem:[%s341 + $0xb0] sm:$0xff]
    %v614 = vld [vmem:[%s341 + $0xc0] sm:$0xff]
    %v615 = vld [vmem:[%s341 + $0xc8] sm:$0xff]
    %v616 = vld [vmem:[%s341 + $0xd8] sm:$0xff]
    %v617 = vld [vmem:[%s341 + $0xe0] sm:$0xff]
    %v618 = vld [vmem:[%s341 + $0xf0] sm:$0xff]
    %v619 = vld [vmem:[%s341 + $0xf8] sm:$0xff]
    %v620 = vld [vmem:[%s341 + $0x108] sm:$0xff]
    %v621 = vld [vmem:[%s341 + $0x110] sm:$0xff]
    %v622 = vld [vmem:[%s341 + $0x120] sm:$0xff]
    %v623 = vld [vmem:[%s341 + $0x128] sm:$0xff]
    %v624 = vld [vmem:[%s341 + $0x138] sm:$0xff]
    %v625 = vld [vmem:[%s341 + $0x140] sm:$0xff]
    %v626 = vld [vmem:[%s341 + $0x150] sm:$0xff]
    %v627 = vld [vmem:[%s341 + $0x158] sm:$0xff]
    %v628 = vld [vmem:[%s341 + $0x168] sm:$0xff]
    %v629 = vld [vmem:[%s341 + $0x170] sm:$0xff]
    %v630 = vld [vmem:[%s341 + $0x1b0] sm:$0xff]
    %v631 = vld [vmem:[%s341 + $0x1b8] sm:$0xff]
    %v632 = vld [vmem:[%s341 + $0x1c8] sm:$0xff]
    %v633 = vld [vmem:[%s341 + $0x1d0] sm:$0xff]
    %v634 = vld [vmem:[%s341 + $0x1e0] sm:$0xff]
    %v635 = vld [vmem:[%s341 + $0x1e8] sm:$0xff]
    %v636 = vld [vmem:[%s341 + $0x1f8] sm:$0xff]
    %v637 = vld [vmem:[%s341 + $0x200] sm:$0xff]
    %v638 = vld [vmem:[%s341 + $0x210] sm:$0xff]
    %v639 = vld [vmem:[%s341 + $0x218] sm:$0xff]
    %v640 = vld [vmem:[%s341 + $0x228] sm:$0xff]
    %v641 = vld [vmem:[%s341 + $0x230] sm:$0xff]
    %v642 = vld [vmem:[%s341 + $0x240] sm:$0xff]
    %v643 = vld [vmem:[%s341 + $0x248] sm:$0xff]
    %v644 = vld [vmem:[%s341 + $0x258] sm:$0xff]
    %v645 = vld [vmem:[%s341 + $0x260] sm:$0xff]
    %v646 = vld [vmem:[%s341 + $0x270] sm:$0xff]
    %v647 = vld [vmem:[%s341 + $0x278] sm:$0xff]
    %v648 = vld [vmem:[%s341 + $0x288] sm:$0xff]
    %v649 = vld [vmem:[%s341 + $0x290] sm:$0xff]
    %v650 = vld [vmem:[%s341 + $0x2a0] sm:$0xff]
    %v651 = vld [vmem:[%s341 + $0x2a8] sm:$0xff]
    %v652 = vld [vmem:[%s341 + $0x2b8] sm:$0xff]
    %v653 = vld [vmem:[%s341 + $0x2c0] sm:$0xff]
    %v654 = vld [vmem:[%s341 + $0x2d0] sm:$0xff]
    %v655 = vld [vmem:[%s341 + $0x2d8] sm:$0xff]
    %v656 = vld [vmem:[%s341 + $0x2e8] sm:$0xff]
    %v657 = vld [vmem:[%s341 + $0x2f0] sm:$0xff]
    %v658 = vld [vmem:[%s341 + $0x300] sm:$0xff]
    %v659 = vld [vmem:[%s341 + $0x308] sm:$0xff]
    %v660 = vld [vmem:[%s341 + $0x318] sm:$0xff]
    %v661 = vld [vmem:[%s341 + $0x320] sm:$0xff]
    %v662 = vld [vmem:[%s341 + $0x1] sm:$0xff]
    %v663 = vld [vmem:[%s341 + $0x9] sm:$0xff]
    %v664 = vld [vmem:[%s341 + $0x19] sm:$0xff]
    %v665 = vld [vmem:[%s341 + $0x21] sm:$0xff]
    %v666 = vld [vmem:[%s341 + $0x31] sm:$0xff]
    %v667 = vld [vmem:[%s341 + $0x39] sm:$0xff]
    %v668 = vld [vmem:[%s341 + $0x49] sm:$0xff]
    %v669 = vld [vmem:[%s341 + $0x51] sm:$0xff]
    %v670 = vld [vmem:[%s341 + $0x61] sm:$0xff]
    %v671 = vld [vmem:[%s341 + $0x69] sm:$0xff]
    %v672 = vld [vmem:[%s341 + $0x79] sm:$0xff]
    %v673 = vld [vmem:[%s341 + $0x81] sm:$0xff]
    %v674 = vld [vmem:[%s341 + $0x91] sm:$0xff]
    %v675 = vld [vmem:[%s341 + $0x99] sm:$0xff]
    %v676 = vld [vmem:[%s341 + $0xa9] sm:$0xff]
    %v677 = vld [vmem:[%s341 + $0xb1] sm:$0xff]
    %v678 = vld [vmem:[%s341 + $0xc1] sm:$0xff]
    %v679 = vld [vmem:[%s341 + $0xc9] sm:$0xff]
    %v680 = vld [vmem:[%s341 + $0xd9] sm:$0xff]
    %v681 = vld [vmem:[%s341 + $0xe1] sm:$0xff]
    %v682 = vld [vmem:[%s341 + $0xf1] sm:$0xff]
    %v683 = vld [vmem:[%s341 + $0xf9] sm:$0xff]
    %v684 = vld [vmem:[%s341 + $0x109] sm:$0xff]
    %v685 = vld [vmem:[%s341 + $0x111] sm:$0xff]
    %v686 = vld [vmem:[%s341 + $0x121] sm:$0xff]
    %v687 = vld [vmem:[%s341 + $0x129] sm:$0xff]
    %v688 = vld [vmem:[%s341 + $0x139] sm:$0xff]
    %v689 = vld [vmem:[%s341 + $0x141] sm:$0xff]
    %v690 = vld [vmem:[%s341 + $0x151] sm:$0xff]
    %v691 = vld [vmem:[%s341 + $0x159] sm:$0xff]
    %v692 = vld [vmem:[%s341 + $0x169] sm:$0xff]
    %v693 = vld [vmem:[%s341 + $0x171] sm:$0xff]
    %v694 = vld [vmem:[%s341 + $0x1b1] sm:$0xff]
    %v695 = vld [vmem:[%s341 + $0x1b9] sm:$0xff]
    %v696 = vld [vmem:[%s341 + $0x1c9] sm:$0xff]
    %v697 = vld [vmem:[%s341 + $0x1d1] sm:$0xff]
    %v698 = vld [vmem:[%s341 + $0x1e1] sm:$0xff]
    %v699 = vld [vmem:[%s341 + $0x1e9] sm:$0xff]
    %v700 = vld [vmem:[%s341 + $0x1f9] sm:$0xff]
    %v701 = vld [vmem:[%s341 + $0x201] sm:$0xff]
    %v702 = vld [vmem:[%s341 + $0x211] sm:$0xff]
    %v703 = vld [vmem:[%s341 + $0x219] sm:$0xff]
    %v704 = vld [vmem:[%s341 + $0x229] sm:$0xff]
    %v705 = vld [vmem:[%s341 + $0x231] sm:$0xff]
    %v706 = vld [vmem:[%s341 + $0x241] sm:$0xff]
    %v707 = vld [vmem:[%s341 + $0x249] sm:$0xff]
    %v708 = vld [vmem:[%s341 + $0x259] sm:$0xff]
    %v709 = vld [vmem:[%s341 + $0x261] sm:$0xff]
    %v710 = vld [vmem:[%s341 + $0x271] sm:$0xff]
    %v711 = vld [vmem:[%s341 + $0x279] sm:$0xff]
    %v712 = vld [vmem:[%s341 + $0x289] sm:$0xff]
    %v713 = vld [vmem:[%s341 + $0x291] sm:$0xff]
    %v714 = vld [vmem:[%s341 + $0x2a1] sm:$0xff]
    %v715 = vld [vmem:[%s341 + $0x2a9] sm:$0xff]
    %v716 = vld [vmem:[%s341 + $0x2b9] sm:$0xff]
    %v717 = vld [vmem:[%s341 + $0x2c1] sm:$0xff]
    %v718 = vld [vmem:[%s341 + $0x2d1] sm:$0xff]
    %v719 = vld [vmem:[%s341 + $0x2d9] sm:$0xff]
    %v720 = vld [vmem:[%s341 + $0x2e9] sm:$0xff]
    %v721 = vld [vmem:[%s341 + $0x2f1] sm:$0xff]
    %v722 = vld [vmem:[%s341 + $0x301] sm:$0xff]
    %v723 = vld [vmem:[%s341 + $0x309] sm:$0xff]
    %v724 = vld [vmem:[%s341 + $0x319] sm:$0xff]
    %v725 = vld [vmem:[%s341 + $0x321] sm:$0xff]
    %v726 = vld [vmem:[%s341 + $0x2] sm:$0xff]
    %v727 = vld [vmem:[%s341 + $0xa] sm:$0xff]
    %v728 = vld [vmem:[%s341 + $0x1a] sm:$0xff]
    %v729 = vld [vmem:[%s341 + $0x22] sm:$0xff]
    %v730 = vld [vmem:[%s341 + $0x32] sm:$0xff]
    %v731 = vld [vmem:[%s341 + $0x3a] sm:$0xff]
    %v732 = vld [vmem:[%s341 + $0x4a] sm:$0xff]
    %v733 = vld [vmem:[%s341 + $0x52] sm:$0xff]
    %v734 = vld [vmem:[%s341 + $0x62] sm:$0xff]
    %v735 = vld [vmem:[%s341 + $0x6a] sm:$0xff]
    %v736 = vld [vmem:[%s341 + $0x7a] sm:$0xff]
    %v737 = vld [vmem:[%s341 + $0x82] sm:$0xff]
    %v738 = vld [vmem:[%s341 + $0x92] sm:$0xff]
    %v739 = vld [vmem:[%s341 + $0x9a] sm:$0xff]
    %v740 = vld [vmem:[%s341 + $0xaa] sm:$0xff]
    %v741 = vld [vmem:[%s341 + $0xb2] sm:$0xff]
    %v742 = vld [vmem:[%s341 + $0xc2] sm:$0xff]
    %v743 = vld [vmem:[%s341 + $0xca] sm:$0xff]
    %v744 = vld [vmem:[%s341 + $0xda] sm:$0xff]
    %v745 = vld [vmem:[%s341 + $0xe2] sm:$0xff]
    %v746 = vld [vmem:[%s341 + $0xf2] sm:$0xff]
    %v747 = vld [vmem:[%s341 + $0xfa] sm:$0xff]
    %v748 = vld [vmem:[%s341 + $0x10a] sm:$0xff]
    %v749 = vld [vmem:[%s341 + $0x112] sm:$0xff]
    %v750 = vld [vmem:[%s341 + $0x122] sm:$0xff]
    %v751 = vld [vmem:[%s341 + $0x12a] sm:$0xff]
    %v752 = vld [vmem:[%s341 + $0x13a] sm:$0xff]
    %v753 = vld [vmem:[%s341 + $0x142] sm:$0xff]
    %v754 = vld [vmem:[%s341 + $0x152] sm:$0xff]
    %v755 = vld [vmem:[%s341 + $0x15a] sm:$0xff]
    %v756 = vld [vmem:[%s341 + $0x16a] sm:$0xff]
    %v757 = vld [vmem:[%s341 + $0x172] sm:$0xff]
    %v758 = vld [vmem:[%s341 + $0x1b2] sm:$0xff]
    %v759 = vld [vmem:[%s341 + $0x1ba] sm:$0xff]
    %v760 = vld [vmem:[%s341 + $0x1ca] sm:$0xff]
    %v761 = vld [vmem:[%s341 + $0x1d2] sm:$0xff]
    %v762 = vld [vmem:[%s341 + $0x1e2] sm:$0xff]
    %v763 = vld [vmem:[%s341 + $0x1ea] sm:$0xff]
    %v764 = vld [vmem:[%s341 + $0x1fa] sm:$0xff]
    %v765 = vld [vmem:[%s341 + $0x202] sm:$0xff]
    %v766 = vld [vmem:[%s341 + $0x212] sm:$0xff]
    %v767 = vld [vmem:[%s341 + $0x21a] sm:$0xff]
    %v768 = vld [vmem:[%s341 + $0x22a] sm:$0xff]
    %v769 = vld [vmem:[%s341 + $0x232] sm:$0xff]
    %v770 = vld [vmem:[%s341 + $0x242] sm:$0xff]
    %v771 = vld [vmem:[%s341 + $0x24a] sm:$0xff]
    %v772 = vld [vmem:[%s341 + $0x25a] sm:$0xff]
    %v773 = vld [vmem:[%s341 + $0x262] sm:$0xff]
    %v774 = vld [vmem:[%s341 + $0x272] sm:$0xff]
    %v775 = vld [vmem:[%s341 + $0x27a] sm:$0xff]
    %v776 = vld [vmem:[%s341 + $0x28a] sm:$0xff]
    %v777 = vld [vmem:[%s341 + $0x292] sm:$0xff]
    %v778 = vld [vmem:[%s341 + $0x2a2] sm:$0xff]
    %v779 = vld [vmem:[%s341 + $0x2aa] sm:$0xff]
    %v780 = vld [vmem:[%s341 + $0x2ba] sm:$0xff]
    %v781 = vld [vmem:[%s341 + $0x2c2] sm:$0xff]
    %v782 = vld [vmem:[%s341 + $0x2d2] sm:$0xff]
    %v783 = vld [vmem:[%s341 + $0x2da] sm:$0xff]
    %v784 = vld [vmem:[%s341 + $0x2ea] sm:$0xff]
    %v785 = vld [vmem:[%s341 + $0x2f2] sm:$0xff]
    %v786 = vld [vmem:[%s341 + $0x302] sm:$0xff]
    %v787 = vld [vmem:[%s341 + $0x30a] sm:$0xff]
    %v788 = vld [vmem:[%s341 + $0x31a] sm:$0xff]
    %v789 = vld [vmem:[%s341 + $0x322] sm:$0xff]
    %s790 = scalar_lea.vmem [#allocation2], 48
    %v791 = vld [vmem:[%s790] sm:$0xff]
    %v792 = vld [vmem:[%s790 + $0x8] sm:$0xff]
    %v793 = vld [vmem:[%s790 + $0x18] sm:$0xff]
    %v794 = vld [vmem:[%s790 + $0x20] sm:$0xff]
    %v795 = vld [vmem:[%s790 + $0x30] sm:$0xff]
    %v796 = vld [vmem:[%s790 + $0x38] sm:$0xff]
    %v797 = vld [vmem:[%s790 + $0x48] sm:$0xff]
    %v798 = vld [vmem:[%s790 + $0x50] sm:$0xff]
    %v799 = vld [vmem:[%s790 + $0x60] sm:$0xff]
    %v800 = vld [vmem:[%s790 + $0x68] sm:$0xff]
    %v801 = vld [vmem:[%s790 + $0x78] sm:$0xff]
    %v802 = vld [vmem:[%s790 + $0x80] sm:$0xff]
    %v803 = vld [vmem:[%s790 + $0x90] sm:$0xff]
    %v804 = vld [vmem:[%s790 + $0x98] sm:$0xff]
    %v805 = vld [vmem:[%s790 + $0xa8] sm:$0xff]
    %v806 = vld [vmem:[%s790 + $0xb0] sm:$0xff]
    %v807 = vld [vmem:[%s790 + $0xc0] sm:$0xff]
    %v808 = vld [vmem:[%s790 + $0xc8] sm:$0xff]
    %v809 = vld [vmem:[%s790 + $0xd8] sm:$0xff]
    %v810 = vld [vmem:[%s790 + $0xe0] sm:$0xff]
    %v811 = vld [vmem:[%s790 + $0xf0] sm:$0xff]
    %v812 = vld [vmem:[%s790 + $0xf8] sm:$0xff]
    %v813 = vld [vmem:[%s790 + $0x108] sm:$0xff]
    %v814 = vld [vmem:[%s790 + $0x110] sm:$0xff]
    %v815 = vld [vmem:[%s790 + $0x120] sm:$0xff]
    %v816 = vld [vmem:[%s790 + $0x128] sm:$0xff]
    %v817 = vld [vmem:[%s790 + $0x138] sm:$0xff]
    %v818 = vld [vmem:[%s790 + $0x140] sm:$0xff]
    %v819 = vld [vmem:[%s790 + $0x150] sm:$0xff]
    %v820 = vld [vmem:[%s790 + $0x158] sm:$0xff]
    %v821 = vld [vmem:[%s790 + $0x168] sm:$0xff]
    %v822 = vld [vmem:[%s790 + $0x170] sm:$0xff]
    %v823 = vld [vmem:[%s790 + $0x1b0] sm:$0xff]
    %v824 = vld [vmem:[%s790 + $0x1b8] sm:$0xff]
    %v825 = vld [vmem:[%s790 + $0x1c8] sm:$0xff]
    %v826 = vld [vmem:[%s790 + $0x1d0] sm:$0xff]
    %v827 = vld [vmem:[%s790 + $0x1e0] sm:$0xff]
    %v828 = vld [vmem:[%s790 + $0x1e8] sm:$0xff]
    %v829 = vld [vmem:[%s790 + $0x1f8] sm:$0xff]
    %v830 = vld [vmem:[%s790 + $0x200] sm:$0xff]
    %v831 = vld [vmem:[%s790 + $0x210] sm:$0xff]
    %v832 = vld [vmem:[%s790 + $0x218] sm:$0xff]
    %v833 = vld [vmem:[%s790 + $0x228] sm:$0xff]
    %v834 = vld [vmem:[%s790 + $0x230] sm:$0xff]
    %v835 = vld [vmem:[%s790 + $0x240] sm:$0xff]
    %v836 = vld [vmem:[%s790 + $0x248] sm:$0xff]
    %v837 = vld [vmem:[%s790 + $0x258] sm:$0xff]
    %v838 = vld [vmem:[%s790 + $0x260] sm:$0xff]
    %v839 = vld [vmem:[%s790 + $0x270] sm:$0xff]
    %v840 = vld [vmem:[%s790 + $0x278] sm:$0xff]
    %v841 = vld [vmem:[%s790 + $0x288] sm:$0xff]
    %v842 = vld [vmem:[%s790 + $0x290] sm:$0xff]
    %v843 = vld [vmem:[%s790 + $0x2a0] sm:$0xff]
    %v844 = vld [vmem:[%s790 + $0x2a8] sm:$0xff]
    %v845 = vld [vmem:[%s790 + $0x2b8] sm:$0xff]
    %v846 = vld [vmem:[%s790 + $0x2c0] sm:$0xff]
    %v847 = vld [vmem:[%s790 + $0x2d0] sm:$0xff]
    %v848 = vld [vmem:[%s790 + $0x2d8] sm:$0xff]
    %v849 = vld [vmem:[%s790 + $0x2e8] sm:$0xff]
    %v850 = vld [vmem:[%s790 + $0x2f0] sm:$0xff]
    %v851 = vld [vmem:[%s790 + $0x300] sm:$0xff]
    %v852 = vld [vmem:[%s790 + $0x308] sm:$0xff]
    %v853 = vld [vmem:[%s790 + $0x318] sm:$0xff]
    %v854 = vld [vmem:[%s790 + $0x320] sm:$0xff]
    %v855 = vld [vmem:[%s790 + $0x1] sm:$0xff]
    %v856 = vld [vmem:[%s790 + $0x9] sm:$0xff]
    %v857 = vld [vmem:[%s790 + $0x19] sm:$0xff]
    %v858 = vld [vmem:[%s790 + $0x21] sm:$0xff]
    %v859 = vld [vmem:[%s790 + $0x31] sm:$0xff]
    %v860 = vld [vmem:[%s790 + $0x39] sm:$0xff]
    %v861 = vld [vmem:[%s790 + $0x49] sm:$0xff]
    %v862 = vld [vmem:[%s790 + $0x51] sm:$0xff]
    %v863 = vld [vmem:[%s790 + $0x61] sm:$0xff]
    %v864 = vld [vmem:[%s790 + $0x69] sm:$0xff]
    %v865 = vld [vmem:[%s790 + $0x79] sm:$0xff]
    %v866 = vld [vmem:[%s790 + $0x81] sm:$0xff]
    %v867 = vld [vmem:[%s790 + $0x91] sm:$0xff]
    %v868 = vld [vmem:[%s790 + $0x99] sm:$0xff]
    %v869 = vld [vmem:[%s790 + $0xa9] sm:$0xff]
    %v870 = vld [vmem:[%s790 + $0xb1] sm:$0xff]
    %v871 = vld [vmem:[%s790 + $0xc1] sm:$0xff]
    %v872 = vld [vmem:[%s790 + $0xc9] sm:$0xff]
    %v873 = vld [vmem:[%s790 + $0xd9] sm:$0xff]
    %v874 = vld [vmem:[%s790 + $0xe1] sm:$0xff]
    %v875 = vld [vmem:[%s790 + $0xf1] sm:$0xff]
    %v876 = vld [vmem:[%s790 + $0xf9] sm:$0xff]
    %v877 = vld [vmem:[%s790 + $0x109] sm:$0xff]
    %v878 = vld [vmem:[%s790 + $0x111] sm:$0xff]
    %v879 = vld [vmem:[%s790 + $0x121] sm:$0xff]
    %v880 = vld [vmem:[%s790 + $0x129] sm:$0xff]
    %v881 = vld [vmem:[%s790 + $0x139] sm:$0xff]
    %v882 = vld [vmem:[%s790 + $0x141] sm:$0xff]
    %v883 = vld [vmem:[%s790 + $0x151] sm:$0xff]
    %v884 = vld [vmem:[%s790 + $0x159] sm:$0xff]
    %v885 = vld [vmem:[%s790 + $0x169] sm:$0xff]
    %v886 = vld [vmem:[%s790 + $0x171] sm:$0xff]
    %v887 = vld [vmem:[%s790 + $0x1b1] sm:$0xff]
    %v888 = vld [vmem:[%s790 + $0x1b9] sm:$0xff]
    %v889 = vld [vmem:[%s790 + $0x1c9] sm:$0xff]
    %v890 = vld [vmem:[%s790 + $0x1d1] sm:$0xff]
    %v891 = vld [vmem:[%s790 + $0x1e1] sm:$0xff]
    %v892 = vld [vmem:[%s790 + $0x1e9] sm:$0xff]
    %v893 = vld [vmem:[%s790 + $0x1f9] sm:$0xff]
    %v894 = vld [vmem:[%s790 + $0x201] sm:$0xff]
    %v895 = vld [vmem:[%s790 + $0x211] sm:$0xff]
    %v896 = vld [vmem:[%s790 + $0x219] sm:$0xff]
    %v897 = vld [vmem:[%s790 + $0x229] sm:$0xff]
    %v898 = vld [vmem:[%s790 + $0x231] sm:$0xff]
    %v899 = vld [vmem:[%s790 + $0x241] sm:$0xff]
    %v900 = vld [vmem:[%s790 + $0x249] sm:$0xff]
    %v901 = vld [vmem:[%s790 + $0x259] sm:$0xff]
    %v902 = vld [vmem:[%s790 + $0x261] sm:$0xff]
    %v903 = vld [vmem:[%s790 + $0x271] sm:$0xff]
    %v904 = vld [vmem:[%s790 + $0x279] sm:$0xff]
    %v905 = vld [vmem:[%s790 + $0x289] sm:$0xff]
    %v906 = vld [vmem:[%s790 + $0x291] sm:$0xff]
    %v907 = vld [vmem:[%s790 + $0x2a1] sm:$0xff]
    %v908 = vld [vmem:[%s790 + $0x2a9] sm:$0xff]
    %v909 = vld [vmem:[%s790 + $0x2b9] sm:$0xff]
    %v910 = vld [vmem:[%s790 + $0x2c1] sm:$0xff]
    %v911 = vld [vmem:[%s790 + $0x2d1] sm:$0xff]
    %v912 = vld [vmem:[%s790 + $0x2d9] sm:$0xff]
    %v913 = vld [vmem:[%s790 + $0x2e9] sm:$0xff]
    %v914 = vld [vmem:[%s790 + $0x2f1] sm:$0xff]
    %v915 = vld [vmem:[%s790 + $0x301] sm:$0xff]
    %v916 = vld [vmem:[%s790 + $0x309] sm:$0xff]
    %v917 = vld [vmem:[%s790 + $0x319] sm:$0xff]
    %v918 = vld [vmem:[%s790 + $0x321] sm:$0xff]
    %v919 = vld [vmem:[%s790 + $0x2] sm:$0xff]
    %v920 = vld [vmem:[%s790 + $0xa] sm:$0xff]
    %v921 = vld [vmem:[%s790 + $0x1a] sm:$0xff]
    %v922 = vld [vmem:[%s790 + $0x22] sm:$0xff]
    %v923 = vld [vmem:[%s790 + $0x32] sm:$0xff]
    %v924 = vld [vmem:[%s790 + $0x3a] sm:$0xff]
    %v925 = vld [vmem:[%s790 + $0x4a] sm:$0xff]
    %v926 = vld [vmem:[%s790 + $0x52] sm:$0xff]
    %v927 = vld [vmem:[%s790 + $0x62] sm:$0xff]
    %v928 = vld [vmem:[%s790 + $0x6a] sm:$0xff]
    %v929 = vld [vmem:[%s790 + $0x7a] sm:$0xff]
    %v930 = vld [vmem:[%s790 + $0x82] sm:$0xff]
    %v931 = vld [vmem:[%s790 + $0x92] sm:$0xff]
    %v932 = vld [vmem:[%s790 + $0x9a] sm:$0xff]
    %v933 = vld [vmem:[%s790 + $0xaa] sm:$0xff]
    %v934 = vld [vmem:[%s790 + $0xb2] sm:$0xff]
    %v935 = vld [vmem:[%s790 + $0xc2] sm:$0xff]
    %v936 = vld [vmem:[%s790 + $0xca] sm:$0xff]
    %v937 = vld [vmem:[%s790 + $0xda] sm:$0xff]
    %v938 = vld [vmem:[%s790 + $0xe2] sm:$0xff]
    %v939 = vld [vmem:[%s790 + $0xf2] sm:$0xff]
    %v940 = vld [vmem:[%s790 + $0xfa] sm:$0xff]
    %v941 = vld [vmem:[%s790 + $0x10a] sm:$0xff]
    %v942 = vld [vmem:[%s790 + $0x112] sm:$0xff]
    %v943 = vld [vmem:[%s790 + $0x122] sm:$0xff]
    %v944 = vld [vmem:[%s790 + $0x12a] sm:$0xff]
    %v945 = vld [vmem:[%s790 + $0x13a] sm:$0xff]
    %v946 = vld [vmem:[%s790 + $0x142] sm:$0xff]
    %v947 = vld [vmem:[%s790 + $0x152] sm:$0xff]
    %v948 = vld [vmem:[%s790 + $0x15a] sm:$0xff]
    %v949 = vld [vmem:[%s790 + $0x16a] sm:$0xff]
    %v950 = vld [vmem:[%s790 + $0x172] sm:$0xff]
    %v951 = vld [vmem:[%s790 + $0x1b2] sm:$0xff]
    %v952 = vld [vmem:[%s790 + $0x1ba] sm:$0xff]
    %v953 = vld [vmem:[%s790 + $0x1ca] sm:$0xff]
    %v954 = vld [vmem:[%s790 + $0x1d2] sm:$0xff]
    %v955 = vld [vmem:[%s790 + $0x1e2] sm:$0xff]
    %v956 = vld [vmem:[%s790 + $0x1ea] sm:$0xff]
    %v957 = vld [vmem:[%s790 + $0x1fa] sm:$0xff]
    %v958 = vld [vmem:[%s790 + $0x202] sm:$0xff]
    %v959 = vld [vmem:[%s790 + $0x212] sm:$0xff]
    %v960 = vld [vmem:[%s790 + $0x21a] sm:$0xff]
    %v961 = vld [vmem:[%s790 + $0x22a] sm:$0xff]
    %v962 = vld [vmem:[%s790 + $0x232] sm:$0xff]
    %v963 = vld [vmem:[%s790 + $0x242] sm:$0xff]
    %v964 = vld [vmem:[%s790 + $0x24a] sm:$0xff]
    %v965 = vld [vmem:[%s790 + $0x25a] sm:$0xff]
    %v966 = vld [vmem:[%s790 + $0x262] sm:$0xff]
    %v967 = vld [vmem:[%s790 + $0x272] sm:$0xff]
    %v968 = vld [vmem:[%s790 + $0x27a] sm:$0xff]
    %v969 = vld [vmem:[%s790 + $0x28a] sm:$0xff]
    %v970 = vld [vmem:[%s790 + $0x292] sm:$0xff]
    %v971 = vld [vmem:[%s790 + $0x2a2] sm:$0xff]
    %v972 = vld [vmem:[%s790 + $0x2aa] sm:$0xff]
    %v973 = vld [vmem:[%s790 + $0x2ba] sm:$0xff]
    %v974 = vld [vmem:[%s790 + $0x2c2] sm:$0xff]
    %v975 = vld [vmem:[%s790 + $0x2d2] sm:$0xff]
    %v976 = vld [vmem:[%s790 + $0x2da] sm:$0xff]
    %v977 = vld [vmem:[%s790 + $0x2ea] sm:$0xff]
    %v978 = vld [vmem:[%s790 + $0x2f2] sm:$0xff]
    %v979 = vld [vmem:[%s790 + $0x302] sm:$0xff]
    %v980 = vld [vmem:[%s790 + $0x30a] sm:$0xff]
    %v981 = vld [vmem:[%s790 + $0x31a] sm:$0xff]
    %v982 = vld [vmem:[%s790 + $0x322] sm:$0xff]
    %1047 = vrot.lane.b32.xlu0 %v470, 64
    %v1048 = vpop.permute.xlu0 %1047
    %1049 = vrot.lane.b32.xlu0 %v471, 64
    %v1050 = vpop.permute.xlu0 %1049
    %1051 = vrot.lane.b32.xlu0 %v472, 64
    %v1052 = vpop.permute.xlu0 %1051
    %1053 = vrot.lane.b32.xlu0 %v473, 64
    %v1054 = vpop.permute.xlu0 %1053
    %1055 = vrot.lane.b32.xlu0 %v474, 64
    %v1056 = vpop.permute.xlu0 %1055
    %1057 = vrot.lane.b32.xlu0 %v475, 64
    %v1058 = vpop.permute.xlu0 %1057
    %1059 = vrot.lane.b32.xlu0 %v476, 64
    %v1060 = vpop.permute.xlu0 %1059
    %1061 = vrot.lane.b32.xlu0 %v477, 64
    %v1062 = vpop.permute.xlu0 %1061
    %1063 = vrot.lane.b32.xlu0 %v478, 64
    %v1064 = vpop.permute.xlu0 %1063
    %1065 = vrot.lane.b32.xlu0 %v479, 64
    %v1066 = vpop.permute.xlu0 %1065
    %1067 = vrot.lane.b32.xlu0 %v480, 64
    %v1068 = vpop.permute.xlu0 %1067
    %1069 = vrot.lane.b32.xlu0 %v481, 64
    %v1070 = vpop.permute.xlu0 %1069
    %1071 = vrot.lane.b32.xlu0 %v482, 64
    %v1072 = vpop.permute.xlu0 %1071
    %1073 = vrot.lane.b32.xlu0 %v483, 64
    %v1074 = vpop.permute.xlu0 %1073
    %1075 = vrot.lane.b32.xlu0 %v484, 64
    %v1076 = vpop.permute.xlu0 %1075
    %1077 = vrot.lane.b32.xlu0 %v485, 64
    %v1078 = vpop.permute.xlu0 %1077
    %1079 = vrot.lane.b32.xlu0 %v486, 64
    %v1080 = vpop.permute.xlu0 %1079
    %1081 = vrot.lane.b32.xlu0 %v487, 64
    %v1082 = vpop.permute.xlu0 %1081
    %1083 = vrot.lane.b32.xlu0 %v488, 64
    %v1084 = vpop.permute.xlu0 %1083
    %1085 = vrot.lane.b32.xlu0 %v489, 64
    %v1086 = vpop.permute.xlu0 %1085
    %1087 = vrot.lane.b32.xlu0 %v490, 64
    %v1088 = vpop.permute.xlu0 %1087
    %1089 = vrot.lane.b32.xlu0 %v491, 64
    %v1090 = vpop.permute.xlu0 %1089
    %1091 = vrot.lane.b32.xlu0 %v492, 64
    %v1092 = vpop.permute.xlu0 %1091
    %1093 = vrot.lane.b32.xlu0 %v493, 64
    %v1094 = vpop.permute.xlu0 %1093
    %1095 = vrot.lane.b32.xlu0 %v494, 64
    %v1096 = vpop.permute.xlu0 %1095
    %1097 = vrot.lane.b32.xlu0 %v495, 64
    %v1098 = vpop.permute.xlu0 %1097
    %1099 = vrot.lane.b32.xlu0 %v496, 64
    %v1100 = vpop.permute.xlu0 %1099
    %1101 = vrot.lane.b32.xlu0 %v497, 64
    %v1102 = vpop.permute.xlu0 %1101
    %1103 = vrot.lane.b32.xlu0 %v498, 64
    %v1104 = vpop.permute.xlu0 %1103
    %1105 = vrot.lane.b32.xlu0 %v499, 64
    %v1106 = vpop.permute.xlu0 %1105
    %1107 = vrot.lane.b32.xlu0 %v500, 64
    %v1108 = vpop.permute.xlu0 %1107
    %1109 = vrot.lane.b32.xlu0 %v501, 64
    %v1110 = vpop.permute.xlu0 %1109
    %1111 = vrot.lane.b32.xlu0 %v502, 64
    %v1112 = vpop.permute.xlu0 %1111
    %1113 = vrot.lane.b32.xlu0 %v503, 64
    %v1114 = vpop.permute.xlu0 %1113
    %1115 = vrot.lane.b32.xlu0 %v504, 64
    %v1116 = vpop.permute.xlu0 %1115
    %1117 = vrot.lane.b32.xlu0 %v505, 64
    %v1118 = vpop.permute.xlu0 %1117
    %1119 = vrot.lane.b32.xlu0 %v506, 64
    %v1120 = vpop.permute.xlu0 %1119
    %1121 = vrot.lane.b32.xlu0 %v507, 64
    %v1122 = vpop.permute.xlu0 %1121
    %1123 = vrot.lane.b32.xlu0 %v508, 64
    %v1124 = vpop.permute.xlu0 %1123
    %1125 = vrot.lane.b32.xlu0 %v509, 64
    %v1126 = vpop.permute.xlu0 %1125
    %1127 = vrot.lane.b32.xlu0 %v510, 64
    %v1128 = vpop.permute.xlu0 %1127
    %1129 = vrot.lane.b32.xlu0 %v511, 64
    %v1130 = vpop.permute.xlu0 %1129
    %1131 = vrot.lane.b32.xlu0 %v512, 64
    %v1132 = vpop.permute.xlu0 %1131
    %1133 = vrot.lane.b32.xlu0 %v513, 64
    %v1134 = vpop.permute.xlu0 %1133
    %1135 = vrot.lane.b32.xlu0 %v514, 64
    %v1136 = vpop.permute.xlu0 %1135
    %1137 = vrot.lane.b32.xlu0 %v515, 64
    %v1138 = vpop.permute.xlu0 %1137
    %1139 = vrot.lane.b32.xlu0 %v516, 64
    %v1140 = vpop.permute.xlu0 %1139
    %1141 = vrot.lane.b32.xlu0 %v517, 64
    %v1142 = vpop.permute.xlu0 %1141
    %1143 = vrot.lane.b32.xlu0 %v518, 64
    %v1144 = vpop.permute.xlu0 %1143
    %1145 = vrot.lane.b32.xlu0 %v519, 64
    %v1146 = vpop.permute.xlu0 %1145
    %1147 = vrot.lane.b32.xlu0 %v520, 64
    %v1148 = vpop.permute.xlu0 %1147
    %1149 = vrot.lane.b32.xlu0 %v521, 64
    %v1150 = vpop.permute.xlu0 %1149
    %1151 = vrot.lane.b32.xlu0 %v522, 64
    %v1152 = vpop.permute.xlu0 %1151
    %1153 = vrot.lane.b32.xlu0 %v523, 64
    %v1154 = vpop.permute.xlu0 %1153
    %1155 = vrot.lane.b32.xlu0 %v524, 64
    %v1156 = vpop.permute.xlu0 %1155
    %1157 = vrot.lane.b32.xlu0 %v525, 64
    %v1158 = vpop.permute.xlu0 %1157
    %1159 = vrot.lane.b32.xlu0 %v526, 64
    %v1160 = vpop.permute.xlu0 %1159
    %1161 = vrot.lane.b32.xlu0 %v527, 64
    %v1162 = vpop.permute.xlu0 %1161
    %1163 = vrot.lane.b32.xlu0 %v528, 64
    %v1164 = vpop.permute.xlu0 %1163
    %1165 = vrot.lane.b32.xlu0 %v529, 64
    %v1166 = vpop.permute.xlu0 %1165
    %1167 = vrot.lane.b32.xlu0 %v530, 64
    %v1168 = vpop.permute.xlu0 %1167
    %1169 = vrot.lane.b32.xlu0 %v531, 64
    %v1170 = vpop.permute.xlu0 %1169
    %1171 = vrot.lane.b32.xlu0 %v532, 64
    %v1172 = vpop.permute.xlu0 %1171
    %1173 = vrot.lane.b32.xlu0 %v533, 64
    %v1174 = vpop.permute.xlu0 %1173
    %1303 = vrot.lane.b32.xlu0 %v598, 64
    %v1304 = vpop.permute.xlu0 %1303
    %1305 = vrot.lane.b32.xlu0 %v599, 64
    %v1306 = vpop.permute.xlu0 %1305
    %1307 = vrot.lane.b32.xlu0 %v600, 64
    %v1308 = vpop.permute.xlu0 %1307
    %1309 = vrot.lane.b32.xlu0 %v601, 64
    %v1310 = vpop.permute.xlu0 %1309
    %1311 = vrot.lane.b32.xlu0 %v602, 64
    %v1312 = vpop.permute.xlu0 %1311
    %1313 = vrot.lane.b32.xlu0 %v603, 64
    %v1314 = vpop.permute.xlu0 %1313
    %1315 = vrot.lane.b32.xlu0 %v604, 64
    %v1316 = vpop.permute.xlu0 %1315
    %1317 = vrot.lane.b32.xlu0 %v605, 64
    %v1318 = vpop.permute.xlu0 %1317
    %1319 = vrot.lane.b32.xlu0 %v606, 64
    %v1320 = vpop.permute.xlu0 %1319
    %1321 = vrot.lane.b32.xlu0 %v607, 64
    %v1322 = vpop.permute.xlu0 %1321
    %1323 = vrot.lane.b32.xlu0 %v608, 64
    %v1324 = vpop.permute.xlu0 %1323
    %1325 = vrot.lane.b32.xlu0 %v609, 64
    %v1326 = vpop.permute.xlu0 %1325
    %1327 = vrot.lane.b32.xlu0 %v610, 64
    %v1328 = vpop.permute.xlu0 %1327
    %1329 = vrot.lane.b32.xlu0 %v611, 64
    %v1330 = vpop.permute.xlu0 %1329
    %1331 = vrot.lane.b32.xlu0 %v612, 64
    %v1332 = vpop.permute.xlu0 %1331
    %1333 = vrot.lane.b32.xlu0 %v613, 64
    %v1334 = vpop.permute.xlu0 %1333
    %1335 = vrot.lane.b32.xlu0 %v614, 64
    %v1336 = vpop.permute.xlu0 %1335
    %1337 = vrot.lane.b32.xlu0 %v615, 64
    %v1338 = vpop.permute.xlu0 %1337
    %1339 = vrot.lane.b32.xlu0 %v616, 64
    %v1340 = vpop.permute.xlu0 %1339
    %1341 = vrot.lane.b32.xlu0 %v617, 64
    %v1342 = vpop.permute.xlu0 %1341
    %1343 = vrot.lane.b32.xlu0 %v618, 64
    %v1344 = vpop.permute.xlu0 %1343
    %1345 = vrot.lane.b32.xlu0 %v619, 64
    %v1346 = vpop.permute.xlu0 %1345
    %1347 = vrot.lane.b32.xlu0 %v620, 64
    %v1348 = vpop.permute.xlu0 %1347
    %1349 = vrot.lane.b32.xlu0 %v621, 64
    %v1350 = vpop.permute.xlu0 %1349
    %1351 = vrot.lane.b32.xlu0 %v622, 64
    %v1352 = vpop.permute.xlu0 %1351
    %1353 = vrot.lane.b32.xlu0 %v623, 64
    %v1354 = vpop.permute.xlu0 %1353
    %1355 = vrot.lane.b32.xlu0 %v624, 64
    %v1356 = vpop.permute.xlu0 %1355
    %1357 = vrot.lane.b32.xlu0 %v625, 64
    %v1358 = vpop.permute.xlu0 %1357
    %1359 = vrot.lane.b32.xlu0 %v626, 64
    %v1360 = vpop.permute.xlu0 %1359
    %1361 = vrot.lane.b32.xlu0 %v627, 64
    %v1362 = vpop.permute.xlu0 %1361
    %1363 = vrot.lane.b32.xlu0 %v628, 64
    %v1364 = vpop.permute.xlu0 %1363
    %1365 = vrot.lane.b32.xlu0 %v629, 64
    %v1366 = vpop.permute.xlu0 %1365
    %1367 = vrot.lane.b32.xlu0 %v630, 64
    %v1368 = vpop.permute.xlu0 %1367
    %1369 = vrot.lane.b32.xlu0 %v631, 64
    %v1370 = vpop.permute.xlu0 %1369
    %1371 = vrot.lane.b32.xlu0 %v632, 64
    %v1372 = vpop.permute.xlu0 %1371
    %1373 = vrot.lane.b32.xlu0 %v633, 64
    %v1374 = vpop.permute.xlu0 %1373
    %1375 = vrot.lane.b32.xlu0 %v634, 64
    %v1376 = vpop.permute.xlu0 %1375
    %1377 = vrot.lane.b32.xlu0 %v635, 64
    %v1378 = vpop.permute.xlu0 %1377
    %1379 = vrot.lane.b32.xlu0 %v636, 64
    %v1380 = vpop.permute.xlu0 %1379
    %1381 = vrot.lane.b32.xlu0 %v637, 64
    %v1382 = vpop.permute.xlu0 %1381
    %1383 = vrot.lane.b32.xlu0 %v638, 64
    %v1384 = vpop.permute.xlu0 %1383
    %1385 = vrot.lane.b32.xlu0 %v639, 64
    %v1386 = vpop.permute.xlu0 %1385
    %1387 = vrot.lane.b32.xlu0 %v640, 64
    %v1388 = vpop.permute.xlu0 %1387
    %1389 = vrot.lane.b32.xlu0 %v641, 64
    %v1390 = vpop.permute.xlu0 %1389
    %1391 = vrot.lane.b32.xlu0 %v642, 64
    %v1392 = vpop.permute.xlu0 %1391
    %1393 = vrot.lane.b32.xlu0 %v643, 64
    %v1394 = vpop.permute.xlu0 %1393
    %1395 = vrot.lane.b32.xlu0 %v644, 64
    %v1396 = vpop.permute.xlu0 %1395
    %1397 = vrot.lane.b32.xlu0 %v645, 64
    %v1398 = vpop.permute.xlu0 %1397
    %1399 = vrot.lane.b32.xlu0 %v646, 64
    %v1400 = vpop.permute.xlu0 %1399
    %1401 = vrot.lane.b32.xlu0 %v647, 64
    %v1402 = vpop.permute.xlu0 %1401
    %1403 = vrot.lane.b32.xlu0 %v648, 64
    %v1404 = vpop.permute.xlu0 %1403
    %1405 = vrot.lane.b32.xlu0 %v649, 64
    %v1406 = vpop.permute.xlu0 %1405
    %1407 = vrot.lane.b32.xlu0 %v650, 64
    %v1408 = vpop.permute.xlu0 %1407
    %1409 = vrot.lane.b32.xlu0 %v651, 64
    %v1410 = vpop.permute.xlu0 %1409
    %1411 = vrot.lane.b32.xlu0 %v652, 64
    %v1412 = vpop.permute.xlu0 %1411
    %1413 = vrot.lane.b32.xlu0 %v653, 64
    %v1414 = vpop.permute.xlu0 %1413
    %1415 = vrot.lane.b32.xlu0 %v654, 64
    %v1416 = vpop.permute.xlu0 %1415
    %1417 = vrot.lane.b32.xlu0 %v655, 64
    %v1418 = vpop.permute.xlu0 %1417
    %1419 = vrot.lane.b32.xlu0 %v656, 64
    %v1420 = vpop.permute.xlu0 %1419
    %1421 = vrot.lane.b32.xlu0 %v657, 64
    %v1422 = vpop.permute.xlu0 %1421
    %1423 = vrot.lane.b32.xlu0 %v658, 64
    %v1424 = vpop.permute.xlu0 %1423
    %1425 = vrot.lane.b32.xlu0 %v659, 64
    %v1426 = vpop.permute.xlu0 %1425
    %1427 = vrot.lane.b32.xlu0 %v660, 64
    %v1428 = vpop.permute.xlu0 %1427
    %1429 = vrot.lane.b32.xlu0 %v661, 64
    %v1430 = vpop.permute.xlu0 %1429
    %1559 = vrot.lane.b32.xlu0 %v726, 64
    %v1560 = vpop.permute.xlu0 %1559
    %1561 = vrot.lane.b32.xlu0 %v727, 64
    %v1562 = vpop.permute.xlu0 %1561
    %1563 = vrot.lane.b32.xlu0 %v728, 64
    %v1564 = vpop.permute.xlu0 %1563
    %1565 = vrot.lane.b32.xlu0 %v729, 64
    %v1566 = vpop.permute.xlu0 %1565
    %1567 = vrot.lane.b32.xlu0 %v730, 64
    %v1568 = vpop.permute.xlu0 %1567
    %1569 = vrot.lane.b32.xlu0 %v731, 64
    %v1570 = vpop.permute.xlu0 %1569
    %1571 = vrot.lane.b32.xlu0 %v732, 64
    %v1572 = vpop.permute.xlu0 %1571
    %1573 = vrot.lane.b32.xlu0 %v733, 64
    %v1574 = vpop.permute.xlu0 %1573
    %1575 = vrot.lane.b32.xlu0 %v734, 64
    %v1576 = vpop.permute.xlu0 %1575
    %1577 = vrot.lane.b32.xlu0 %v735, 64
    %v1578 = vpop.permute.xlu0 %1577
    %1579 = vrot.lane.b32.xlu0 %v736, 64
    %v1580 = vpop.permute.xlu0 %1579
    %1581 = vrot.lane.b32.xlu0 %v737, 64
    %v1582 = vpop.permute.xlu0 %1581
    %1583 = vrot.lane.b32.xlu0 %v738, 64
    %v1584 = vpop.permute.xlu0 %1583
    %1585 = vrot.lane.b32.xlu0 %v739, 64
    %v1586 = vpop.permute.xlu0 %1585
    %1587 = vrot.lane.b32.xlu0 %v740, 64
    %v1588 = vpop.permute.xlu0 %1587
    %1589 = vrot.lane.b32.xlu0 %v741, 64
    %v1590 = vpop.permute.xlu0 %1589
    %1591 = vrot.lane.b32.xlu0 %v742, 64
    %v1592 = vpop.permute.xlu0 %1591
    %1593 = vrot.lane.b32.xlu0 %v743, 64
    %v1594 = vpop.permute.xlu0 %1593
    %1595 = vrot.lane.b32.xlu0 %v744, 64
    %v1596 = vpop.permute.xlu0 %1595
    %1597 = vrot.lane.b32.xlu0 %v745, 64
    %v1598 = vpop.permute.xlu0 %1597
    %1599 = vrot.lane.b32.xlu0 %v746, 64
    %v1600 = vpop.permute.xlu0 %1599
    %1601 = vrot.lane.b32.xlu0 %v747, 64
    %v1602 = vpop.permute.xlu0 %1601
    %1603 = vrot.lane.b32.xlu0 %v748, 64
    %v1604 = vpop.permute.xlu0 %1603
    %1605 = vrot.lane.b32.xlu0 %v749, 64
    %v1606 = vpop.permute.xlu0 %1605
    %1607 = vrot.lane.b32.xlu0 %v750, 64
    %v1608 = vpop.permute.xlu0 %1607
    %1609 = vrot.lane.b32.xlu0 %v751, 64
    %v1610 = vpop.permute.xlu0 %1609
    %1611 = vrot.lane.b32.xlu0 %v752, 64
    %v1612 = vpop.permute.xlu0 %1611
    %1613 = vrot.lane.b32.xlu0 %v753, 64
    %v1614 = vpop.permute.xlu0 %1613
    %1615 = vrot.lane.b32.xlu0 %v754, 64
    %v1616 = vpop.permute.xlu0 %1615
    %1617 = vrot.lane.b32.xlu0 %v755, 64
    %v1618 = vpop.permute.xlu0 %1617
    %1619 = vrot.lane.b32.xlu0 %v756, 64
    %v1620 = vpop.permute.xlu0 %1619
    %1621 = vrot.lane.b32.xlu0 %v757, 64
    %v1622 = vpop.permute.xlu0 %1621
    %1623 = vrot.lane.b32.xlu0 %v758, 64
    %v1624 = vpop.permute.xlu0 %1623
    %1625 = vrot.lane.b32.xlu0 %v759, 64
    %v1626 = vpop.permute.xlu0 %1625
    %1627 = vrot.lane.b32.xlu0 %v760, 64
    %v1628 = vpop.permute.xlu0 %1627
    %1629 = vrot.lane.b32.xlu0 %v761, 64
    %v1630 = vpop.permute.xlu0 %1629
    %1631 = vrot.lane.b32.xlu0 %v762, 64
    %v1632 = vpop.permute.xlu0 %1631
    %1633 = vrot.lane.b32.xlu0 %v763, 64
    %v1634 = vpop.permute.xlu0 %1633
    %1635 = vrot.lane.b32.xlu0 %v764, 64
    %v1636 = vpop.permute.xlu0 %1635
    %1637 = vrot.lane.b32.xlu0 %v765, 64
    %v1638 = vpop.permute.xlu0 %1637
    %1639 = vrot.lane.b32.xlu0 %v766, 64
    %v1640 = vpop.permute.xlu0 %1639
    %1641 = vrot.lane.b32.xlu0 %v767, 64
    %v1642 = vpop.permute.xlu0 %1641
    %1643 = vrot.lane.b32.xlu0 %v768, 64
    %v1644 = vpop.permute.xlu0 %1643
    %1645 = vrot.lane.b32.xlu0 %v769, 64
    %v1646 = vpop.permute.xlu0 %1645
    %1647 = vrot.lane.b32.xlu0 %v770, 64
    %v1648 = vpop.permute.xlu0 %1647
    %1649 = vrot.lane.b32.xlu0 %v771, 64
    %v1650 = vpop.permute.xlu0 %1649
    %1651 = vrot.lane.b32.xlu0 %v772, 64
    %v1652 = vpop.permute.xlu0 %1651
    %1653 = vrot.lane.b32.xlu0 %v773, 64
    %v1654 = vpop.permute.xlu0 %1653
    %1655 = vrot.lane.b32.xlu0 %v774, 64
    %v1656 = vpop.permute.xlu0 %1655
    %1657 = vrot.lane.b32.xlu0 %v775, 64
    %v1658 = vpop.permute.xlu0 %1657
    %1659 = vrot.lane.b32.xlu0 %v776, 64
    %v1660 = vpop.permute.xlu0 %1659
    %1661 = vrot.lane.b32.xlu0 %v777, 64
    %v1662 = vpop.permute.xlu0 %1661
    %1663 = vrot.lane.b32.xlu0 %v778, 64
    %v1664 = vpop.permute.xlu0 %1663
    %1665 = vrot.lane.b32.xlu0 %v779, 64
    %v1666 = vpop.permute.xlu0 %1665
    %1667 = vrot.lane.b32.xlu0 %v780, 64
    %v1668 = vpop.permute.xlu0 %1667
    %1669 = vrot.lane.b32.xlu0 %v781, 64
    %v1670 = vpop.permute.xlu0 %1669
    %1671 = vrot.lane.b32.xlu0 %v782, 64
    %v1672 = vpop.permute.xlu0 %1671
    %1673 = vrot.lane.b32.xlu0 %v783, 64
    %v1674 = vpop.permute.xlu0 %1673
    %1675 = vrot.lane.b32.xlu0 %v784, 64
    %v1676 = vpop.permute.xlu0 %1675
    %1677 = vrot.lane.b32.xlu0 %v785, 64
    %v1678 = vpop.permute.xlu0 %1677
    %1679 = vrot.lane.b32.xlu0 %v786, 64
    %v1680 = vpop.permute.xlu0 %1679
    %1681 = vrot.lane.b32.xlu0 %v787, 64
    %v1682 = vpop.permute.xlu0 %1681
    %1683 = vrot.lane.b32.xlu0 %v788, 64
    %v1684 = vpop.permute.xlu0 %1683
    %1685 = vrot.lane.b32.xlu0 %v789, 64
    %v1686 = vpop.permute.xlu0 %1685
    %1815 = vrot.lane.b32.xlu0 %v855, 64
    %v1816 = vpop.permute.xlu0 %1815
    %1817 = vrot.lane.b32.xlu0 %v856, 64
    %v1818 = vpop.permute.xlu0 %1817
    %1819 = vrot.lane.b32.xlu0 %v857, 64
    %v1820 = vpop.permute.xlu0 %1819
    %1821 = vrot.lane.b32.xlu0 %v858, 64
    %v1822 = vpop.permute.xlu0 %1821
    %1823 = vrot.lane.b32.xlu0 %v859, 64
    %v1824 = vpop.permute.xlu0 %1823
    %1825 = vrot.lane.b32.xlu0 %v860, 64
    %v1826 = vpop.permute.xlu0 %1825
    %1827 = vrot.lane.b32.xlu0 %v861, 64
    %v1828 = vpop.permute.xlu0 %1827
    %1829 = vrot.lane.b32.xlu0 %v862, 64
    %v1830 = vpop.permute.xlu0 %1829
    %1831 = vrot.lane.b32.xlu0 %v863, 64
    %v1832 = vpop.permute.xlu0 %1831
    %1833 = vrot.lane.b32.xlu0 %v864, 64
    %v1834 = vpop.permute.xlu0 %1833
    %1835 = vrot.lane.b32.xlu0 %v865, 64
    %v1836 = vpop.permute.xlu0 %1835
    %1837 = vrot.lane.b32.xlu0 %v866, 64
    %v1838 = vpop.permute.xlu0 %1837
    %1839 = vrot.lane.b32.xlu0 %v867, 64
    %v1840 = vpop.permute.xlu0 %1839
    %1841 = vrot.lane.b32.xlu0 %v868, 64
    %v1842 = vpop.permute.xlu0 %1841
    %1843 = vrot.lane.b32.xlu0 %v869, 64
    %v1844 = vpop.permute.xlu0 %1843
    %1845 = vrot.lane.b32.xlu0 %v870, 64
    %v1846 = vpop.permute.xlu0 %1845
    %1847 = vrot.lane.b32.xlu0 %v871, 64
    %v1848 = vpop.permute.xlu0 %1847
    %1849 = vrot.lane.b32.xlu0 %v872, 64
    %v1850 = vpop.permute.xlu0 %1849
    %1851 = vrot.lane.b32.xlu0 %v873, 64
    %v1852 = vpop.permute.xlu0 %1851
    %1853 = vrot.lane.b32.xlu0 %v874, 64
    %v1854 = vpop.permute.xlu0 %1853
    %1855 = vrot.lane.b32.xlu0 %v875, 64
    %v1856 = vpop.permute.xlu0 %1855
    %1857 = vrot.lane.b32.xlu0 %v876, 64
    %v1858 = vpop.permute.xlu0 %1857
    %1859 = vrot.lane.b32.xlu0 %v877, 64
    %v1860 = vpop.permute.xlu0 %1859
    %1861 = vrot.lane.b32.xlu0 %v878, 64
    %v1862 = vpop.permute.xlu0 %1861
    %1863 = vrot.lane.b32.xlu0 %v879, 64
    %v1864 = vpop.permute.xlu0 %1863
    %1865 = vrot.lane.b32.xlu0 %v880, 64
    %v1866 = vpop.permute.xlu0 %1865
    %1867 = vrot.lane.b32.xlu0 %v881, 64
    %v1868 = vpop.permute.xlu0 %1867
    %1869 = vrot.lane.b32.xlu0 %v882, 64
    %v1870 = vpop.permute.xlu0 %1869
    %1871 = vrot.lane.b32.xlu0 %v883, 64
    %v1872 = vpop.permute.xlu0 %1871
    %1873 = vrot.lane.b32.xlu0 %v884, 64
    %v1874 = vpop.permute.xlu0 %1873
    %1875 = vrot.lane.b32.xlu0 %v885, 64
    %v1876 = vpop.permute.xlu0 %1875
    %1877 = vrot.lane.b32.xlu0 %v886, 64
    %v1878 = vpop.permute.xlu0 %1877
    %1879 = vrot.lane.b32.xlu0 %v887, 64
    %v1880 = vpop.permute.xlu0 %1879
    %1881 = vrot.lane.b32.xlu0 %v888, 64
    %v1882 = vpop.permute.xlu0 %1881
    %1883 = vrot.lane.b32.xlu0 %v889, 64
    %v1884 = vpop.permute.xlu0 %1883
    %1885 = vrot.lane.b32.xlu0 %v890, 64
    %v1886 = vpop.permute.xlu0 %1885
    %1887 = vrot.lane.b32.xlu0 %v891, 64
    %v1888 = vpop.permute.xlu0 %1887
    %1889 = vrot.lane.b32.xlu0 %v892, 64
    %v1890 = vpop.permute.xlu0 %1889
    %1891 = vrot.lane.b32.xlu0 %v893, 64
    %v1892 = vpop.permute.xlu0 %1891
    %1893 = vrot.lane.b32.xlu0 %v894, 64
    %v1894 = vpop.permute.xlu0 %1893
    %1895 = vrot.lane.b32.xlu0 %v895, 64
    %v1896 = vpop.permute.xlu0 %1895
    %1897 = vrot.lane.b32.xlu0 %v896, 64
    %v1898 = vpop.permute.xlu0 %1897
    %1899 = vrot.lane.b32.xlu0 %v897, 64
    %v1900 = vpop.permute.xlu0 %1899
    %1901 = vrot.lane.b32.xlu0 %v898, 64
    %v1902 = vpop.permute.xlu0 %1901
    %1903 = vrot.lane.b32.xlu0 %v899, 64
    %v1904 = vpop.permute.xlu0 %1903
    %1905 = vrot.lane.b32.xlu0 %v900, 64
    %v1906 = vpop.permute.xlu0 %1905
    %1907 = vrot.lane.b32.xlu0 %v901, 64
    %v1908 = vpop.permute.xlu0 %1907
    %1909 = vrot.lane.b32.xlu0 %v902, 64
    %v1910 = vpop.permute.xlu0 %1909
    %1911 = vrot.lane.b32.xlu0 %v903, 64
    %v1912 = vpop.permute.xlu0 %1911
    %1913 = vrot.lane.b32.xlu0 %v904, 64
    %v1914 = vpop.permute.xlu0 %1913
    %1915 = vrot.lane.b32.xlu0 %v905, 64
    %v1916 = vpop.permute.xlu0 %1915
    %1917 = vrot.lane.b32.xlu0 %v906, 64
    %v1918 = vpop.permute.xlu0 %1917
    %1919 = vrot.lane.b32.xlu0 %v907, 64
    %v1920 = vpop.permute.xlu0 %1919
    %1921 = vrot.lane.b32.xlu0 %v908, 64
    %v1922 = vpop.permute.xlu0 %1921
    %1923 = vrot.lane.b32.xlu0 %v909, 64
    %v1924 = vpop.permute.xlu0 %1923
    %1925 = vrot.lane.b32.xlu0 %v910, 64
    %v1926 = vpop.permute.xlu0 %1925
    %1927 = vrot.lane.b32.xlu0 %v911, 64
    %v1928 = vpop.permute.xlu0 %1927
    %1929 = vrot.lane.b32.xlu0 %v912, 64
    %v1930 = vpop.permute.xlu0 %1929
    %1931 = vrot.lane.b32.xlu0 %v913, 64
    %v1932 = vpop.permute.xlu0 %1931
    %1933 = vrot.lane.b32.xlu0 %v914, 64
    %v1934 = vpop.permute.xlu0 %1933
    %1935 = vrot.lane.b32.xlu0 %v915, 64
    %v1936 = vpop.permute.xlu0 %1935
    %1937 = vrot.lane.b32.xlu0 %v916, 64
    %v1938 = vpop.permute.xlu0 %1937
    %1939 = vrot.lane.b32.xlu0 %v917, 64
    %v1940 = vpop.permute.xlu0 %1939
    %1941 = vrot.lane.b32.xlu0 %v918, 64
    %v1942 = vpop.permute.xlu0 %1941
    %v2007 = vsel %vm167, %v406, %v1048
    %v2008 = vsel %vm167, %v407, %v1050
    %v2009 = vsel %vm167, %v408, %v1052
    %v2010 = vsel %vm167, %v409, %v1054
    %v2011 = vsel %vm167, %v410, %v1056
    %v2012 = vsel %vm167, %v411, %v1058
    %v2013 = vsel %vm167, %v412, %v1060
    %v2014 = vsel %vm167, %v413, %v1062
    %v2015 = vsel %vm167, %v414, %v1064
    %v2016 = vsel %vm167, %v415, %v1066
    %v2017 = vsel %vm167, %v416, %v1068
    %v2018 = vsel %vm167, %v417, %v1070
    %v2019 = vsel %vm167, %v418, %v1072
    %v2020 = vsel %vm167, %v419, %v1074
    %v2021 = vsel %vm167, %v420, %v1076
    %v2022 = vsel %vm167, %v421, %v1078
    %v2023 = vsel %vm167, %v422, %v1080
    %v2024 = vsel %vm167, %v423, %v1082
    %v2025 = vsel %vm167, %v424, %v1084
    %v2026 = vsel %vm167, %v425, %v1086
    %v2027 = vsel %vm167, %v426, %v1088
    %v2028 = vsel %vm167, %v427, %v1090
    %v2029 = vsel %vm167, %v428, %v1092
    %v2030 = vsel %vm167, %v429, %v1094
    %v2031 = vsel %vm167, %v430, %v1096
    %v2032 = vsel %vm167, %v431, %v1098
    %v2033 = vsel %vm167, %v432, %v1100
    %v2034 = vsel %vm167, %v433, %v1102
    %v2035 = vsel %vm167, %v434, %v1104
    %v2036 = vsel %vm167, %v435, %v1106
    %v2037 = vsel %vm167, %v436, %v1108
    %v2038 = vsel %vm167, %v437, %v1110
    %v2039 = vsel %vm167, %v438, %v1112
    %v2040 = vsel %vm167, %v439, %v1114
    %v2041 = vsel %vm167, %v440, %v1116
    %v2042 = vsel %vm167, %v441, %v1118
    %v2043 = vsel %vm167, %v442, %v1120
    %v2044 = vsel %vm167, %v443, %v1122
    %v2045 = vsel %vm167, %v444, %v1124
    %v2046 = vsel %vm167, %v445, %v1126
    %v2047 = vsel %vm167, %v446, %v1128
    %v2048 = vsel %vm167, %v447, %v1130
    %v2049 = vsel %vm167, %v448, %v1132
    %v2050 = vsel %vm167, %v449, %v1134
    %v2051 = vsel %vm167, %v450, %v1136
    %v2052 = vsel %vm167, %v451, %v1138
    %v2053 = vsel %vm167, %v452, %v1140
    %v2054 = vsel %vm167, %v453, %v1142
    %v2055 = vsel %vm167, %v454, %v1144
    %v2056 = vsel %vm167, %v455, %v1146
    %v2057 = vsel %vm167, %v456, %v1148
    %v2058 = vsel %vm167, %v457, %v1150
    %v2059 = vsel %vm167, %v458, %v1152
    %v2060 = vsel %vm167, %v459, %v1154
    %v2061 = vsel %vm167, %v460, %v1156
    %v2062 = vsel %vm167, %v461, %v1158
    %v2063 = vsel %vm167, %v462, %v1160
    %v2064 = vsel %vm167, %v463, %v1162
    %v2065 = vsel %vm167, %v464, %v1164
    %v2066 = vsel %vm167, %v465, %v1166
    %v2067 = vsel %vm167, %v466, %v1168
    %v2068 = vsel %vm167, %v467, %v1170
    %v2069 = vsel %vm167, %v468, %v1172
    %v2070 = vsel %vm167, %v469, %v1174
    %v2071 = vsel %vm167, %v534, %v1304
    %v2072 = vsel %vm167, %v535, %v1306
    %v2073 = vsel %vm167, %v536, %v1308
    %v2074 = vsel %vm167, %v537, %v1310
    %v2075 = vsel %vm167, %v538, %v1312
    %v2076 = vsel %vm167, %v539, %v1314
    %v2077 = vsel %vm167, %v540, %v1316
    %v2078 = vsel %vm167, %v541, %v1318
    %v2079 = vsel %vm167, %v542, %v1320
    %v2080 = vsel %vm167, %v543, %v1322
    %v2081 = vsel %vm167, %v544, %v1324
    %v2082 = vsel %vm167, %v545, %v1326
    %v2083 = vsel %vm167, %v546, %v1328
    %v2084 = vsel %vm167, %v547, %v1330
    %v2085 = vsel %vm167, %v548, %v1332
    %v2086 = vsel %vm167, %v549, %v1334
    %v2087 = vsel %vm167, %v550, %v1336
    %v2088 = vsel %vm167, %v551, %v1338
    %v2089 = vsel %vm167, %v552, %v1340
    %v2090 = vsel %vm167, %v553, %v1342
    %v2091 = vsel %vm167, %v554, %v1344
    %v2092 = vsel %vm167, %v555, %v1346
    %v2093 = vsel %vm167, %v556, %v1348
    %v2094 = vsel %vm167, %v557, %v1350
    %v2095 = vsel %vm167, %v558, %v1352
    %v2096 = vsel %vm167, %v559, %v1354
    %v2097 = vsel %vm167, %v560, %v1356
    %v2098 = vsel %vm167, %v561, %v1358
    %v2099 = vsel %vm167, %v562, %v1360
    %v2100 = vsel %vm167, %v563, %v1362
    %v2101 = vsel %vm167, %v564, %v1364
    %v2102 = vsel %vm167, %v565, %v1366
    %v2103 = vsel %vm167, %v566, %v1368
    %v2104 = vsel %vm167, %v567, %v1370
    %v2105 = vsel %vm167, %v568, %v1372
    %v2106 = vsel %vm167, %v569, %v1374
    %v2107 = vsel %vm167, %v570, %v1376
    %v2108 = vsel %vm167, %v571, %v1378
    %v2109 = vsel %vm167, %v572, %v1380
    %v2110 = vsel %vm167, %v573, %v1382
    %v2111 = vsel %vm167, %v574, %v1384
    %v2112 = vsel %vm167, %v575, %v1386
    %v2113 = vsel %vm167, %v576, %v1388
    %v2114 = vsel %vm167, %v577, %v1390
    %v2115 = vsel %vm167, %v578, %v1392
    %v2116 = vsel %vm167, %v579, %v1394
    %v2117 = vsel %vm167, %v580, %v1396
    %v2118 = vsel %vm167, %v581, %v1398
    %v2119 = vsel %vm167, %v582, %v1400
    %v2120 = vsel %vm167, %v583, %v1402
    %v2121 = vsel %vm167, %v584, %v1404
    %v2122 = vsel %vm167, %v585, %v1406
    %v2123 = vsel %vm167, %v586, %v1408
    %v2124 = vsel %vm167, %v587, %v1410
    %v2125 = vsel %vm167, %v588, %v1412
    %v2126 = vsel %vm167, %v589, %v1414
    %v2127 = vsel %vm167, %v590, %v1416
    %v2128 = vsel %vm167, %v591, %v1418
    %v2129 = vsel %vm167, %v592, %v1420
    %v2130 = vsel %vm167, %v593, %v1422
    %v2131 = vsel %vm167, %v594, %v1424
    %v2132 = vsel %vm167, %v595, %v1426
    %v2133 = vsel %vm167, %v596, %v1428
    %v2134 = vsel %vm167, %v597, %v1430
    %v2135 = vsel %vm167, %v662, %v1560
    %v2136 = vsel %vm167, %v663, %v1562
    %v2137 = vsel %vm167, %v664, %v1564
    %v2138 = vsel %vm167, %v665, %v1566
    %v2139 = vsel %vm167, %v666, %v1568
    %v2140 = vsel %vm167, %v667, %v1570
    %v2141 = vsel %vm167, %v668, %v1572
    %v2142 = vsel %vm167, %v669, %v1574
    %v2143 = vsel %vm167, %v670, %v1576
    %v2144 = vsel %vm167, %v671, %v1578
    %v2145 = vsel %vm167, %v672, %v1580
    %v2146 = vsel %vm167, %v673, %v1582
    %v2147 = vsel %vm167, %v674, %v1584
    %v2148 = vsel %vm167, %v675, %v1586
    %v2149 = vsel %vm167, %v676, %v1588
    %v2150 = vsel %vm167, %v677, %v1590
    %v2151 = vsel %vm167, %v678, %v1592
    %v2152 = vsel %vm167, %v679, %v1594
    %v2153 = vsel %vm167, %v680, %v1596
    %v2154 = vsel %vm167, %v681, %v1598
    %v2155 = vsel %vm167, %v682, %v1600
    %v2156 = vsel %vm167, %v683, %v1602
    %v2157 = vsel %vm167, %v684, %v1604
    %v2158 = vsel %vm167, %v685, %v1606
    %v2159 = vsel %vm167, %v686, %v1608
    %v2160 = vsel %vm167, %v687, %v1610
    %v2161 = vsel %vm167, %v688, %v1612
    %v2162 = vsel %vm167, %v689, %v1614
    %v2163 = vsel %vm167, %v690, %v1616
    %v2164 = vsel %vm167, %v691, %v1618
    %v2165 = vsel %vm167, %v692, %v1620
    %v2166 = vsel %vm167, %v693, %v1622
    %v2167 = vsel %vm167, %v694, %v1624
    %v2168 = vsel %vm167, %v695, %v1626
    %v2169 = vsel %vm167, %v696, %v1628
    %v2170 = vsel %vm167, %v697, %v1630
    %v2171 = vsel %vm167, %v698, %v1632
    %v2172 = vsel %vm167, %v699, %v1634
    %v2173 = vsel %vm167, %v700, %v1636
    %v2174 = vsel %vm167, %v701, %v1638
    %v2175 = vsel %vm167, %v702, %v1640
    %v2176 = vsel %vm167, %v703, %v1642
    %v2177 = vsel %vm167, %v704, %v1644
    %v2178 = vsel %vm167, %v705, %v1646
    %v2179 = vsel %vm167, %v706, %v1648
    %v2180 = vsel %vm167, %v707, %v1650
    %v2181 = vsel %vm167, %v708, %v1652
    %v2182 = vsel %vm167, %v709, %v1654
    %v2183 = vsel %vm167, %v710, %v1656
    %v2184 = vsel %vm167, %v711, %v1658
    %v2185 = vsel %vm167, %v712, %v1660
    %v2186 = vsel %vm167, %v713, %v1662
    %v2187 = vsel %vm167, %v714, %v1664
    %v2188 = vsel %vm167, %v715, %v1666
    %v2189 = vsel %vm167, %v716, %v1668
    %v2190 = vsel %vm167, %v717, %v1670
    %v2191 = vsel %vm167, %v718, %v1672
    %v2192 = vsel %vm167, %v719, %v1674
    %v2193 = vsel %vm167, %v720, %v1676
    %v2194 = vsel %vm167, %v721, %v1678
    %v2195 = vsel %vm167, %v722, %v1680
    %v2196 = vsel %vm167, %v723, %v1682
    %v2197 = vsel %vm167, %v724, %v1684
    %v2198 = vsel %vm167, %v725, %v1686
    %v2199 = vsel %vm167, %v791, %v1816
    %v2200 = vsel %vm167, %v792, %v1818
    %v2201 = vsel %vm167, %v793, %v1820
    %v2202 = vsel %vm167, %v794, %v1822
    %v2203 = vsel %vm167, %v795, %v1824
    %v2204 = vsel %vm167, %v796, %v1826
    %v2205 = vsel %vm167, %v797, %v1828
    %v2206 = vsel %vm167, %v798, %v1830
    %v2207 = vsel %vm167, %v799, %v1832
    %v2208 = vsel %vm167, %v800, %v1834
    %v2209 = vsel %vm167, %v801, %v1836
    %v2210 = vsel %vm167, %v802, %v1838
    %v2211 = vsel %vm167, %v803, %v1840
    %v2212 = vsel %vm167, %v804, %v1842
    %v2213 = vsel %vm167, %v805, %v1844
    %v2214 = vsel %vm167, %v806, %v1846
    %v2215 = vsel %vm167, %v807, %v1848
    %v2216 = vsel %vm167, %v808, %v1850
    %v2217 = vsel %vm167, %v809, %v1852
    %v2218 = vsel %vm167, %v810, %v1854
    %v2219 = vsel %vm167, %v811, %v1856
    %v2220 = vsel %vm167, %v812, %v1858
    %v2221 = vsel %vm167, %v813, %v1860
    %v2222 = vsel %vm167, %v814, %v1862
    %v2223 = vsel %vm167, %v815, %v1864
    %v2224 = vsel %vm167, %v816, %v1866
    %v2225 = vsel %vm167, %v817, %v1868
    %v2226 = vsel %vm167, %v818, %v1870
    %v2227 = vsel %vm167, %v819, %v1872
    %v2228 = vsel %vm167, %v820, %v1874
    %v2229 = vsel %vm167, %v821, %v1876
    %v2230 = vsel %vm167, %v822, %v1878
    %v2231 = vsel %vm167, %v823, %v1880
    %v2232 = vsel %vm167, %v824, %v1882
    %v2233 = vsel %vm167, %v825, %v1884
    %v2234 = vsel %vm167, %v826, %v1886
    %v2235 = vsel %vm167, %v827, %v1888
    %v2236 = vsel %vm167, %v828, %v1890
    %v2237 = vsel %vm167, %v829, %v1892
    %v2238 = vsel %vm167, %v830, %v1894
    %v2239 = vsel %vm167, %v831, %v1896
    %v2240 = vsel %vm167, %v832, %v1898
    %v2241 = vsel %vm167, %v833, %v1900
    %v2242 = vsel %vm167, %v834, %v1902
    %v2243 = vsel %vm167, %v835, %v1904
    %v2244 = vsel %vm167, %v836, %v1906
    %v2245 = vsel %vm167, %v837, %v1908
    %v2246 = vsel %vm167, %v838, %v1910
    %v2247 = vsel %vm167, %v839, %v1912
    %v2248 = vsel %vm167, %v840, %v1914
    %v2249 = vsel %vm167, %v841, %v1916
    %v2250 = vsel %vm167, %v842, %v1918
    %v2251 = vsel %vm167, %v843, %v1920
    %v2252 = vsel %vm167, %v844, %v1922
    %v2253 = vsel %vm167, %v845, %v1924
    %v2254 = vsel %vm167, %v846, %v1926
    %v2255 = vsel %vm167, %v847, %v1928
    %v2256 = vsel %vm167, %v848, %v1930
    %v2257 = vsel %vm167, %v849, %v1932
    %v2258 = vsel %vm167, %v850, %v1934
    %v2259 = vsel %vm167, %v851, %v1936
    %v2260 = vsel %vm167, %v852, %v1938
    %v2261 = vsel %vm167, %v853, %v1940
    %v2262 = vsel %vm167, %v854, %v1942
    %v2264 = vlaneseq
    %v2265 = vshrl.u32 %v2264, 7
    %v2266 = vsub.s32 0, %v2265
    %v2267 = vrot.slane %v165, %v2266
    %v2270 = vsel %vm167, %v919, 0
    %v2273 = vsel %vm167, %v920, 0
    %v2276 = vsel %vm167, %v921, 0
    %v2279 = vsel %vm167, %v922, 0
    %v2282 = vsel %vm167, %v923, 0
    %v2285 = vsel %vm167, %v924, 0
    %v2288 = vsel %vm167, %v925, 0
    %v2291 = vsel %vm167, %v926, 0
    %v2294 = vsel %vm167, %v927, 0
    %v2297 = vsel %vm167, %v928, 0
    %v2300 = vsel %vm167, %v929, 0
    %v2303 = vsel %vm167, %v930, 0
    %v2306 = vsel %vm167, %v931, 0
    %v2309 = vsel %vm167, %v932, 0
    %v2312 = vsel %vm167, %v933, 0
    %v2315 = vsel %vm167, %v934, 0
    %v2318 = vsel %vm167, %v935, 0
    %v2321 = vsel %vm167, %v936, 0
    %v2324 = vsel %vm167, %v937, 0
    %v2327 = vsel %vm167, %v938, 0
    %v2330 = vsel %vm167, %v939, 0
    %v2333 = vsel %vm167, %v940, 0
    %v2336 = vsel %vm167, %v941, 0
    %v2339 = vsel %vm167, %v942, 0
    %v2342 = vsel %vm167, %v943, 0
    %v2345 = vsel %vm167, %v944, 0
    %v2348 = vsel %vm167, %v945, 0
    %v2351 = vsel %vm167, %v946, 0
    %v2354 = vsel %vm167, %v947, 0
    %v2357 = vsel %vm167, %v948, 0
    %v2360 = vsel %vm167, %v949, 0
    %v2363 = vsel %vm167, %v950, 0
    %v2366 = vsel %vm167, %v951, 0
    %v2369 = vsel %vm167, %v952, 0
    %v2372 = vsel %vm167, %v953, 0
    %v2375 = vsel %vm167, %v954, 0
    %v2378 = vsel %vm167, %v955, 0
    %v2381 = vsel %vm167, %v956, 0
    %v2384 = vsel %vm167, %v957, 0
    %v2387 = vsel %vm167, %v958, 0
    %v2390 = vsel %vm167, %v959, 0
    %v2393 = vsel %vm167, %v960, 0
    %v2396 = vsel %vm167, %v961, 0
    %v2399 = vsel %vm167, %v962, 0
    %v2402 = vsel %vm167, %v963, 0
    %v2405 = vsel %vm167, %v964, 0
    %v2408 = vsel %vm167, %v965, 0
    %v2411 = vsel %vm167, %v966, 0
    %v2414 = vsel %vm167, %v967, 0
    %v2417 = vsel %vm167, %v968, 0
    %v2420 = vsel %vm167, %v969, 0
    %v2423 = vsel %vm167, %v970, 0
    %v2426 = vsel %vm167, %v971, 0
    %v2429 = vsel %vm167, %v972, 0
    %v2432 = vsel %vm167, %v973, 0
    %v2435 = vsel %vm167, %v974, 0
    %v2438 = vsel %vm167, %v975, 0
    %v2441 = vsel %vm167, %v976, 0
    %v2444 = vsel %vm167, %v977, 0
    %v2447 = vsel %vm167, %v978, 0
    %v2450 = vsel %vm167, %v979, 0
    %v2453 = vsel %vm167, %v980, 0
    %v2456 = vsel %vm167, %v981, 0
    %v2459 = vsel %vm167, %v982, 0
    %2461 = vmatprep.subr.mxu0 0.0
    %2462 = vmatpush1.msra.mxu0 %v36
    %2463 = vmatprep.subr.mxu0 0.0
    %2464 = vmatpush1.msra.mxu0 %v35
    %2465 = vmatprep.subr.mxu0 0.0
    %2466 = vmatpush1.msra.mxu0 %v34
    %2467 = vmatprep.subr.mxu0 0.0
    %2468 = vmatpush1.msra.mxu0 %v33
    %2469 = vmatprep.subr.mxu0 0.0
    %2470 = vmatpush1.msra.mxu0 %v32
    %2471 = vmatprep.subr.mxu0 0.0
    %2472 = vmatpush1.msra.mxu0 %v31
    %2473 = vmatprep.subr.mxu0 0.0
    %2474 = vmatpush1.msra.mxu0 %v30
    %2475 = vmatprep.subr.mxu0 0.0
    %2476 = vmatpush1.msra.mxu0 %v29
    %2477 = vmatprep.subr.mxu0 0.0
    %2478 = vmatpush1.msra.mxu0 %v28
    %2479 = vmatprep.subr.mxu0 0.0
    %2480 = vmatpush1.msra.mxu0 %v27
    %2481 = vmatprep.subr.mxu0 0.0
    %2482 = vmatpush1.msra.mxu0 %v26
    %2483 = vmatprep.subr.mxu0 0.0
    %2484 = vmatpush1.msra.mxu0 %v25
    %2485 = vmatprep.subr.mxu0 0.0
    %2486 = vmatpush1.msra.mxu0 %v24
    %2487 = vmatprep.subr.mxu0 0.0
    %2488 = vmatpush1.msra.mxu0 %v23
    %2489 = vmatprep.subr.mxu0 0.0
    %2490 = vmatpush1.msra.mxu0 %v22
    %2491 = vmatprep.subr.mxu0 0.0
    %2492 = vmatpush1.msra.mxu0 %v21
    %2493 = vmatprep.subr.mxu0 0.0
    %2494 = vmatpush2.msra.mxu0 %v52
    %2495 = vmatprep.subr.mxu0 0.0
    %2496 = vmatpush2.msra.mxu0 %v51
    %2497 = vmatprep.subr.mxu0 0.0
    %2498 = vmatpush2.msra.mxu0 %v50
    %2499 = vmatprep.subr.mxu0 0.0
    %2500 = vmatpush2.msra.mxu0 %v49
    %2501 = vmatprep.subr.mxu0 0.0
    %2502 = vmatpush2.msra.mxu0 %v48
    %2503 = vmatprep.subr.mxu0 0.0
    %2504 = vmatpush2.msra.mxu0 %v47
    %2505 = vmatprep.subr.mxu0 0.0
    %2506 = vmatpush2.msra.mxu0 %v46
    %2507 = vmatprep.subr.mxu0 0.0
    %2508 = vmatpush2.msra.mxu0 %v45
    %2509 = vmatprep.subr.mxu0 0.0
    %2510 = vmatpush2.msra.mxu0 %v44
    %2511 = vmatprep.subr.mxu0 0.0
    %2512 = vmatpush2.msra.mxu0 %v43
    %2513 = vmatprep.subr.mxu0 0.0
    %2514 = vmatpush2.msra.mxu0 %v42
    %2515 = vmatprep.subr.mxu0 0.0
    %2516 = vmatpush2.msra.mxu0 %v41
    %2517 = vmatprep.subr.mxu0 0.0
    %2518 = vmatpush2.msra.mxu0 %v40
    %2519 = vmatprep.subr.mxu0 0.0
    %2520 = vmatpush2.msra.mxu0 %v39
    %2521 = vmatprep.subr.mxu0 0.0
    %2522 = vmatpush2.msra.mxu0 %v38
    %2523 = vmatprep.subr.mxu0 0.0
    %2524 = vmatpush2.msra.mxu0 %v37
    %2525 = vmatprep.mubr.f32.mxu0 %v2071
    %2526 = vmatmul.mubr.f32.gmra.mxu0 %v2007
    %v2527 = vpop.f32.mrf.mxu0
    %v2528 = vadd.f32 %v2267, %v2527
    %v2529 = vpop.f32.mrf.mxu0
    %2530 = vmatprep.mubr.f32.mxu0 %v2072
    %2531 = vmatmul.mubr.f32.gmra.mxu0 %v2008
    %v2532 = vpop.f32.mrf.mxu0
    %v2533 = vadd.f32 %v2267, %v2532
    %v2534 = vpop.f32.mrf.mxu0
    %2535 = vmatprep.mubr.f32.mxu0 %v2073
    %2536 = vmatmul.mubr.f32.gmra.mxu0 %v2009
    %v2537 = vpop.f32.mrf.mxu0
    %v2538 = vadd.f32 %v2267, %v2537
    %v2539 = vpop.f32.mrf.mxu0
    %2540 = vmatprep.mubr.f32.mxu0 %v2074
    %2541 = vmatmul.mubr.f32.gmra.mxu0 %v2010
    %v2542 = vpop.f32.mrf.mxu0
    %v2543 = vadd.f32 %v2267, %v2542
    %v2544 = vpop.f32.mrf.mxu0
    %2545 = vmatprep.mubr.f32.mxu0 %v2075
    %2546 = vmatmul.mubr.f32.gmra.mxu0 %v2011
    %v2547 = vpop.f32.mrf.mxu0
    %v2548 = vadd.f32 %v2267, %v2547
    %v2549 = vpop.f32.mrf.mxu0
    %2550 = vmatprep.mubr.f32.mxu0 %v2076
    %2551 = vmatmul.mubr.f32.gmra.mxu0 %v2012
    %v2552 = vpop.f32.mrf.mxu0
    %v2553 = vadd.f32 %v2267, %v2552
    %v2554 = vpop.f32.mrf.mxu0
    %2555 = vmatprep.mubr.f32.mxu0 %v2077
    %2556 = vmatmul.mubr.f32.gmra.mxu0 %v2013
    %v2557 = vpop.f32.mrf.mxu0
    %v2558 = vadd.f32 %v2267, %v2557
    %v2559 = vpop.f32.mrf.mxu0
    %2560 = vmatprep.mubr.f32.mxu0 %v2078
    %2561 = vmatmul.mubr.f32.gmra.mxu0 %v2014
    %v2562 = vpop.f32.mrf.mxu0
    %v2563 = vadd.f32 %v2267, %v2562
    %v2564 = vpop.f32.mrf.mxu0
    %2565 = vmatprep.mubr.f32.mxu0 %v2079
    %2566 = vmatmul.mubr.f32.gmra.mxu0 %v2015
    %v2567 = vpop.f32.mrf.mxu0
    %v2568 = vadd.f32 %v2267, %v2567
    %v2569 = vpop.f32.mrf.mxu0
    %2570 = vmatprep.mubr.f32.mxu0 %v2080
    %2571 = vmatmul.mubr.f32.gmra.mxu0 %v2016
    %v2572 = vpop.f32.mrf.mxu0
    %v2573 = vadd.f32 %v2267, %v2572
    %v2574 = vpop.f32.mrf.mxu0
    %2575 = vmatprep.mubr.f32.mxu0 %v2081
    %2576 = vmatmul.mubr.f32.gmra.mxu0 %v2017
    %v2577 = vpop.f32.mrf.mxu0
    %v2578 = vadd.f32 %v2267, %v2577
    %v2579 = vpop.f32.mrf.mxu0
    %2580 = vmatprep.mubr.f32.mxu0 %v2082
    %2581 = vmatmul.mubr.f32.gmra.mxu0 %v2018
    %v2582 = vpop.f32.mrf.mxu0
    %v2583 = vadd.f32 %v2267, %v2582
    %v2584 = vpop.f32.mrf.mxu0
    %2585 = vmatprep.mubr.f32.mxu0 %v2083
    %2586 = vmatmul.mubr.f32.gmra.mxu0 %v2019
    %v2587 = vpop.f32.mrf.mxu0
    %v2588 = vadd.f32 %v2267, %v2587
    %v2589 = vpop.f32.mrf.mxu0
    %2590 = vmatprep.mubr.f32.mxu0 %v2084
    %2591 = vmatmul.mubr.f32.gmra.mxu0 %v2020
    %v2592 = vpop.f32.mrf.mxu0
    %v2593 = vadd.f32 %v2267, %v2592
    %v2594 = vpop.f32.mrf.mxu0
    %2595 = vmatprep.mubr.f32.mxu0 %v2085
    %2596 = vmatmul.mubr.f32.gmra.mxu0 %v2021
    %v2597 = vpop.f32.mrf.mxu0
    %v2598 = vadd.f32 %v2267, %v2597
    %v2599 = vpop.f32.mrf.mxu0
    %2600 = vmatprep.mubr.f32.mxu0 %v2086
    %2601 = vmatmul.mubr.f32.gmra.mxu0 %v2022
    %v2602 = vpop.f32.mrf.mxu0
    %v2603 = vadd.f32 %v2267, %v2602
    %v2604 = vpop.f32.mrf.mxu0
    %2605 = vmatprep.mubr.f32.mxu0 %v2087
    %2606 = vmatmul.mubr.f32.gmra.mxu0 %v2023
    %v2607 = vpop.f32.mrf.mxu0
    %v2608 = vadd.f32 %v2267, %v2607
    %v2609 = vpop.f32.mrf.mxu0
    %2610 = vmatprep.mubr.f32.mxu0 %v2088
    %2611 = vmatmul.mubr.f32.gmra.mxu0 %v2024
    %v2612 = vpop.f32.mrf.mxu0
    %v2613 = vadd.f32 %v2267, %v2612
    %v2614 = vpop.f32.mrf.mxu0
    %2615 = vmatprep.mubr.f32.mxu0 %v2089
    %2616 = vmatmul.mubr.f32.gmra.mxu0 %v2025
    %v2617 = vpop.f32.mrf.mxu0
    %v2618 = vadd.f32 %v2267, %v2617
    %v2619 = vpop.f32.mrf.mxu0
    %2620 = vmatprep.mubr.f32.mxu0 %v2090
    %2621 = vmatmul.mubr.f32.gmra.mxu0 %v2026
    %v2622 = vpop.f32.mrf.mxu0
    %v2623 = vadd.f32 %v2267, %v2622
    %v2624 = vpop.f32.mrf.mxu0
    %2625 = vmatprep.mubr.f32.mxu0 %v2091
    %2626 = vmatmul.mubr.f32.gmra.mxu0 %v2027
    %v2627 = vpop.f32.mrf.mxu0
    %v2628 = vadd.f32 %v2267, %v2627
    %v2629 = vpop.f32.mrf.mxu0
    %2630 = vmatprep.mubr.f32.mxu0 %v2092
    %2631 = vmatmul.mubr.f32.gmra.mxu0 %v2028
    %v2632 = vpop.f32.mrf.mxu0
    %v2633 = vadd.f32 %v2267, %v2632
    %v2634 = vpop.f32.mrf.mxu0
    %2635 = vmatprep.mubr.f32.mxu0 %v2093
    %2636 = vmatmul.mubr.f32.gmra.mxu0 %v2029
    %v2637 = vpop.f32.mrf.mxu0
    %v2638 = vadd.f32 %v2267, %v2637
    %v2639 = vpop.f32.mrf.mxu0
    %2640 = vmatprep.mubr.f32.mxu0 %v2094
    %2641 = vmatmul.mubr.f32.gmra.mxu0 %v2030
    %v2642 = vpop.f32.mrf.mxu0
    %v2643 = vadd.f32 %v2267, %v2642
    %v2644 = vpop.f32.mrf.mxu0
    %2645 = vmatprep.mubr.f32.mxu0 %v2095
    %2646 = vmatmul.mubr.f32.gmra.mxu0 %v2031
    %v2647 = vpop.f32.mrf.mxu0
    %v2648 = vadd.f32 %v2267, %v2647
    %v2649 = vpop.f32.mrf.mxu0
    %2650 = vmatprep.mubr.f32.mxu0 %v2096
    %2651 = vmatmul.mubr.f32.gmra.mxu0 %v2032
    %v2652 = vpop.f32.mrf.mxu0
    %v2653 = vadd.f32 %v2267, %v2652
    %v2654 = vpop.f32.mrf.mxu0
    %2655 = vmatprep.mubr.f32.mxu0 %v2097
    %2656 = vmatmul.mubr.f32.gmra.mxu0 %v2033
    %v2657 = vpop.f32.mrf.mxu0
    %v2658 = vadd.f32 %v2267, %v2657
    %v2659 = vpop.f32.mrf.mxu0
    %2660 = vmatprep.mubr.f32.mxu0 %v2098
    %2661 = vmatmul.mubr.f32.gmra.mxu0 %v2034
    %v2662 = vpop.f32.mrf.mxu0
    %v2663 = vadd.f32 %v2267, %v2662
    %v2664 = vpop.f32.mrf.mxu0
    %2665 = vmatprep.mubr.f32.mxu0 %v2099
    %2666 = vmatmul.mubr.f32.gmra.mxu0 %v2035
    %v2667 = vpop.f32.mrf.mxu0
    %v2668 = vadd.f32 %v2267, %v2667
    %v2669 = vpop.f32.mrf.mxu0
    %2670 = vmatprep.mubr.f32.mxu0 %v2100
    %2671 = vmatmul.mubr.f32.gmra.mxu0 %v2036
    %v2672 = vpop.f32.mrf.mxu0
    %v2673 = vadd.f32 %v2267, %v2672
    %v2674 = vpop.f32.mrf.mxu0
    %2675 = vmatprep.mubr.f32.mxu0 %v2101
    %2676 = vmatmul.mubr.f32.gmra.mxu0 %v2037
    %v2677 = vpop.f32.mrf.mxu0
    %v2678 = vadd.f32 %v2267, %v2677
    %v2679 = vpop.f32.mrf.mxu0
    %2680 = vmatprep.mubr.f32.mxu0 %v2102
    %2681 = vmatmul.mubr.f32.gmra.mxu0 %v2038
    %v2682 = vpop.f32.mrf.mxu0
    %v2683 = vadd.f32 %v2267, %v2682
    %v2684 = vpop.f32.mrf.mxu0
    %2685 = vmatprep.mubr.f32.mxu0 %v2103
    %2686 = vmatmul.mubr.f32.gmra.mxu0 %v2039
    %v2687 = vpop.f32.mrf.mxu0
    %v2688 = vadd.f32 %v2267, %v2687
    %v2689 = vpop.f32.mrf.mxu0
    %2690 = vmatprep.mubr.f32.mxu0 %v2104
    %2691 = vmatmul.mubr.f32.gmra.mxu0 %v2040
    %v2692 = vpop.f32.mrf.mxu0
    %v2693 = vadd.f32 %v2267, %v2692
    %v2694 = vpop.f32.mrf.mxu0
    %2695 = vmatprep.mubr.f32.mxu0 %v2105
    %2696 = vmatmul.mubr.f32.gmra.mxu0 %v2041
    %v2697 = vpop.f32.mrf.mxu0
    %v2698 = vadd.f32 %v2267, %v2697
    %v2699 = vpop.f32.mrf.mxu0
    %2700 = vmatprep.mubr.f32.mxu0 %v2106
    %2701 = vmatmul.mubr.f32.gmra.mxu0 %v2042
    %v2702 = vpop.f32.mrf.mxu0
    %v2703 = vadd.f32 %v2267, %v2702
    %v2704 = vpop.f32.mrf.mxu0
    %2705 = vmatprep.mubr.f32.mxu0 %v2107
    %2706 = vmatmul.mubr.f32.gmra.mxu0 %v2043
    %v2707 = vpop.f32.mrf.mxu0
    %v2708 = vadd.f32 %v2267, %v2707
    %v2709 = vpop.f32.mrf.mxu0
    %2710 = vmatprep.mubr.f32.mxu0 %v2108
    %2711 = vmatmul.mubr.f32.gmra.mxu0 %v2044
    %v2712 = vpop.f32.mrf.mxu0
    %v2713 = vadd.f32 %v2267, %v2712
    %v2714 = vpop.f32.mrf.mxu0
    %2715 = vmatprep.mubr.f32.mxu0 %v2109
    %2716 = vmatmul.mubr.f32.gmra.mxu0 %v2045
    %v2717 = vpop.f32.mrf.mxu0
    %v2718 = vadd.f32 %v2267, %v2717
    %v2719 = vpop.f32.mrf.mxu0
    %2720 = vmatprep.mubr.f32.mxu0 %v2110
    %2721 = vmatmul.mubr.f32.gmra.mxu0 %v2046
    %v2722 = vpop.f32.mrf.mxu0
    %v2723 = vadd.f32 %v2267, %v2722
    %v2724 = vpop.f32.mrf.mxu0
    %2725 = vmatprep.mubr.f32.mxu0 %v2111
    %2726 = vmatmul.mubr.f32.gmra.mxu0 %v2047
    %v2727 = vpop.f32.mrf.mxu0
    %v2728 = vadd.f32 %v2267, %v2727
    %v2729 = vpop.f32.mrf.mxu0
    %2730 = vmatprep.mubr.f32.mxu0 %v2112
    %2731 = vmatmul.mubr.f32.gmra.mxu0 %v2048
    %v2732 = vpop.f32.mrf.mxu0
    %v2733 = vadd.f32 %v2267, %v2732
    %v2734 = vpop.f32.mrf.mxu0
    %2735 = vmatprep.mubr.f32.mxu0 %v2113
    %2736 = vmatmul.mubr.f32.gmra.mxu0 %v2049
    %v2737 = vpop.f32.mrf.mxu0
    %v2738 = vadd.f32 %v2267, %v2737
    %v2739 = vpop.f32.mrf.mxu0
    %2740 = vmatprep.mubr.f32.mxu0 %v2114
    %2741 = vmatmul.mubr.f32.gmra.mxu0 %v2050
    %v2742 = vpop.f32.mrf.mxu0
    %v2743 = vadd.f32 %v2267, %v2742
    %v2744 = vpop.f32.mrf.mxu0
    %2745 = vmatprep.mubr.f32.mxu0 %v2115
    %2746 = vmatmul.mubr.f32.gmra.mxu0 %v2051
    %v2747 = vpop.f32.mrf.mxu0
    %v2748 = vadd.f32 %v2267, %v2747
    %v2749 = vpop.f32.mrf.mxu0
    %2750 = vmatprep.mubr.f32.mxu0 %v2116
    %2751 = vmatmul.mubr.f32.gmra.mxu0 %v2052
    %v2752 = vpop.f32.mrf.mxu0
    %v2753 = vadd.f32 %v2267, %v2752
    %v2754 = vpop.f32.mrf.mxu0
    %2755 = vmatprep.mubr.f32.mxu0 %v2117
    %2756 = vmatmul.mubr.f32.gmra.mxu0 %v2053
    %v2757 = vpop.f32.mrf.mxu0
    %v2758 = vadd.f32 %v2267, %v2757
    %v2759 = vpop.f32.mrf.mxu0
    %2760 = vmatprep.mubr.f32.mxu0 %v2118
    %2761 = vmatmul.mubr.f32.gmra.mxu0 %v2054
    %v2762 = vpop.f32.mrf.mxu0
    %v2763 = vadd.f32 %v2267, %v2762
    %v2764 = vpop.f32.mrf.mxu0
    %2765 = vmatprep.mubr.f32.mxu0 %v2119
    %2766 = vmatmul.mubr.f32.gmra.mxu0 %v2055
    %v2767 = vpop.f32.mrf.mxu0
    %v2768 = vadd.f32 %v2267, %v2767
    %v2769 = vpop.f32.mrf.mxu0
    %2770 = vmatprep.mubr.f32.mxu0 %v2120
    %2771 = vmatmul.mubr.f32.gmra.mxu0 %v2056
    %v2772 = vpop.f32.mrf.mxu0
    %v2773 = vadd.f32 %v2267, %v2772
    %v2774 = vpop.f32.mrf.mxu0
    %2775 = vmatprep.mubr.f32.mxu0 %v2121
    %2776 = vmatmul.mubr.f32.gmra.mxu0 %v2057
    %v2777 = vpop.f32.mrf.mxu0
    %v2778 = vadd.f32 %v2267, %v2777
    %v2779 = vpop.f32.mrf.mxu0
    %2780 = vmatprep.mubr.f32.mxu0 %v2122
    %2781 = vmatmul.mubr.f32.gmra.mxu0 %v2058
    %v2782 = vpop.f32.mrf.mxu0
    %v2783 = vadd.f32 %v2267, %v2782
    %v2784 = vpop.f32.mrf.mxu0
    %2785 = vmatprep.mubr.f32.mxu0 %v2123
    %2786 = vmatmul.mubr.f32.gmra.mxu0 %v2059
    %v2787 = vpop.f32.mrf.mxu0
    %v2788 = vadd.f32 %v2267, %v2787
    %v2789 = vpop.f32.mrf.mxu0
    %2790 = vmatprep.mubr.f32.mxu0 %v2124
    %2791 = vmatmul.mubr.f32.gmra.mxu0 %v2060
    %v2792 = vpop.f32.mrf.mxu0
    %v2793 = vadd.f32 %v2267, %v2792
    %v2794 = vpop.f32.mrf.mxu0
    %2795 = vmatprep.mubr.f32.mxu0 %v2125
    %2796 = vmatmul.mubr.f32.gmra.mxu0 %v2061
    %v2797 = vpop.f32.mrf.mxu0
    %v2798 = vadd.f32 %v2267, %v2797
    %v2799 = vpop.f32.mrf.mxu0
    %2800 = vmatprep.mubr.f32.mxu0 %v2126
    %2801 = vmatmul.mubr.f32.gmra.mxu0 %v2062
    %v2802 = vpop.f32.mrf.mxu0
    %v2803 = vadd.f32 %v2267, %v2802
    %v2804 = vpop.f32.mrf.mxu0
    %2805 = vmatprep.mubr.f32.mxu0 %v2127
    %2806 = vmatmul.mubr.f32.gmra.mxu0 %v2063
    %v2807 = vpop.f32.mrf.mxu0
    %v2808 = vadd.f32 %v2267, %v2807
    %v2809 = vpop.f32.mrf.mxu0
    %2810 = vmatprep.mubr.f32.mxu0 %v2128
    %2811 = vmatmul.mubr.f32.gmra.mxu0 %v2064
    %v2812 = vpop.f32.mrf.mxu0
    %v2813 = vadd.f32 %v2267, %v2812
    %v2814 = vpop.f32.mrf.mxu0
    %2815 = vmatprep.mubr.f32.mxu0 %v2129
    %2816 = vmatmul.mubr.f32.gmra.mxu0 %v2065
    %v2817 = vpop.f32.mrf.mxu0
    %v2818 = vadd.f32 %v2267, %v2817
    %v2819 = vpop.f32.mrf.mxu0
    %2820 = vmatprep.mubr.f32.mxu0 %v2130
    %2821 = vmatmul.mubr.f32.gmra.mxu0 %v2066
    %v2822 = vpop.f32.mrf.mxu0
    %v2823 = vadd.f32 %v2267, %v2822
    %v2824 = vpop.f32.mrf.mxu0
    %2825 = vmatprep.mubr.f32.mxu0 %v2131
    %2826 = vmatmul.mubr.f32.gmra.mxu0 %v2067
    %v2827 = vpop.f32.mrf.mxu0
    %v2828 = vadd.f32 %v2267, %v2827
    %v2829 = vpop.f32.mrf.mxu0
    %2830 = vmatprep.mubr.f32.mxu0 %v2132
    %2831 = vmatmul.mubr.f32.gmra.mxu0 %v2068
    %v2832 = vpop.f32.mrf.mxu0
    %v2833 = vadd.f32 %v2267, %v2832
    %v2834 = vpop.f32.mrf.mxu0
    %2835 = vmatprep.mubr.f32.mxu0 %v2133
    %2836 = vmatmul.mubr.f32.gmra.mxu0 %v2069
    %v2837 = vpop.f32.mrf.mxu0
    %v2838 = vadd.f32 %v2267, %v2837
    %v2839 = vpop.f32.mrf.mxu0
    %2840 = vmatprep.mubr.f32.mxu0 %v2134
    %2841 = vmatmul.mubr.f32.gmra.mxu0 %v2070
    %v2842 = vpop.f32.mrf.mxu0
    %v2843 = vadd.f32 %v2267, %v2842
    %v2844 = vpop.f32.mrf.mxu0
    %2845 = vdwg.mxu0
    %2846 = vmatprep.subr.mxu0 0.0
    %2847 = vmatpush1.msra.mxu0 %v68
    %2848 = vmatprep.subr.mxu0 0.0
    %2849 = vmatpush1.msra.mxu0 %v67
    %2850 = vmatprep.subr.mxu0 0.0
    %2851 = vmatpush1.msra.mxu0 %v66
    %2852 = vmatprep.subr.mxu0 0.0
    %2853 = vmatpush1.msra.mxu0 %v65
    %2854 = vmatprep.subr.mxu0 0.0
    %2855 = vmatpush1.msra.mxu0 %v64
    %2856 = vmatprep.subr.mxu0 0.0
    %2857 = vmatpush1.msra.mxu0 %v63
    %2858 = vmatprep.subr.mxu0 0.0
    %2859 = vmatpush1.msra.mxu0 %v62
    %2860 = vmatprep.subr.mxu0 0.0
    %2861 = vmatpush1.msra.mxu0 %v61
    %2862 = vmatprep.subr.mxu0 0.0
    %2863 = vmatpush1.msra.mxu0 %v60
    %2864 = vmatprep.subr.mxu0 0.0
    %2865 = vmatpush1.msra.mxu0 %v59
    %2866 = vmatprep.subr.mxu0 0.0
    %2867 = vmatpush1.msra.mxu0 %v58
    %2868 = vmatprep.subr.mxu0 0.0
    %2869 = vmatpush1.msra.mxu0 %v57
    %2870 = vmatprep.subr.mxu0 0.0
    %2871 = vmatpush1.msra.mxu0 %v56
    %2872 = vmatprep.subr.mxu0 0.0
    %2873 = vmatpush1.msra.mxu0 %v55
    %2874 = vmatprep.subr.mxu0 0.0
    %2875 = vmatpush1.msra.mxu0 %v54
    %2876 = vmatprep.subr.mxu0 0.0
    %2877 = vmatpush1.msra.mxu0 %v53
    %2878 = vmatprep.subr.mxu0 0.0
    %2879 = vmatpush2.msra.mxu0 %v84
    %2880 = vmatprep.subr.mxu0 0.0
    %2881 = vmatpush2.msra.mxu0 %v83
    %2882 = vmatprep.subr.mxu0 0.0
    %2883 = vmatpush2.msra.mxu0 %v82
    %2884 = vmatprep.subr.mxu0 0.0
    %2885 = vmatpush2.msra.mxu0 %v81
    %2886 = vmatprep.subr.mxu0 0.0
    %2887 = vmatpush2.msra.mxu0 %v80
    %2888 = vmatprep.subr.mxu0 0.0
    %2889 = vmatpush2.msra.mxu0 %v79
    %2890 = vmatprep.subr.mxu0 0.0
    %2891 = vmatpush2.msra.mxu0 %v78
    %2892 = vmatprep.subr.mxu0 0.0
    %2893 = vmatpush2.msra.mxu0 %v77
    %2894 = vmatprep.subr.mxu0 0.0
    %2895 = vmatpush2.msra.mxu0 %v76
    %2896 = vmatprep.subr.mxu0 0.0
    %2897 = vmatpush2.msra.mxu0 %v75
    %2898 = vmatprep.subr.mxu0 0.0
    %2899 = vmatpush2.msra.mxu0 %v74
    %2900 = vmatprep.subr.mxu0 0.0
    %2901 = vmatpush2.msra.mxu0 %v73
    %2902 = vmatprep.subr.mxu0 0.0
    %2903 = vmatpush2.msra.mxu0 %v72
    %2904 = vmatprep.subr.mxu0 0.0
    %2905 = vmatpush2.msra.mxu0 %v71
    %2906 = vmatprep.subr.mxu0 0.0
    %2907 = vmatpush2.msra.mxu0 %v70
    %2908 = vmatprep.subr.mxu0 0.0
    %2909 = vmatpush2.msra.mxu0 %v69
    %2910 = vmatprep.mubr.f32.mxu0 %v2199
    %2911 = vmatmul.mubr.f32.gmra.mxu0 %v2135
    %v2912 = vpop.f32.mrf.mxu0
    %v2913 = vadd.f32 %v2528, %v2912
    %v2914 = vpop.f32.mrf.mxu0
    %2915 = vmatprep.mubr.f32.mxu0 %v2200
    %2916 = vmatmul.mubr.f32.gmra.mxu0 %v2136
    %v2917 = vpop.f32.mrf.mxu0
    %v2918 = vadd.f32 %v2533, %v2917
    %v2919 = vpop.f32.mrf.mxu0
    %2920 = vmatprep.mubr.f32.mxu0 %v2201
    %2921 = vmatmul.mubr.f32.gmra.mxu0 %v2137
    %v2922 = vpop.f32.mrf.mxu0
    %v2923 = vadd.f32 %v2538, %v2922
    %v2924 = vpop.f32.mrf.mxu0
    %2925 = vmatprep.mubr.f32.mxu0 %v2202
    %2926 = vmatmul.mubr.f32.gmra.mxu0 %v2138
    %v2927 = vpop.f32.mrf.mxu0
    %v2928 = vadd.f32 %v2543, %v2927
    %v2929 = vpop.f32.mrf.mxu0
    %2930 = vmatprep.mubr.f32.mxu0 %v2203
    %2931 = vmatmul.mubr.f32.gmra.mxu0 %v2139
    %v2932 = vpop.f32.mrf.mxu0
    %v2933 = vadd.f32 %v2548, %v2932
    %v2934 = vpop.f32.mrf.mxu0
    %2935 = vmatprep.mubr.f32.mxu0 %v2204
    %2936 = vmatmul.mubr.f32.gmra.mxu0 %v2140
    %v2937 = vpop.f32.mrf.mxu0
    %v2938 = vadd.f32 %v2553, %v2937
    %v2939 = vpop.f32.mrf.mxu0
    %2940 = vmatprep.mubr.f32.mxu0 %v2205
    %2941 = vmatmul.mubr.f32.gmra.mxu0 %v2141
    %v2942 = vpop.f32.mrf.mxu0
    %v2943 = vadd.f32 %v2558, %v2942
    %v2944 = vpop.f32.mrf.mxu0
    %2945 = vmatprep.mubr.f32.mxu0 %v2206
    %2946 = vmatmul.mubr.f32.gmra.mxu0 %v2142
    %v2947 = vpop.f32.mrf.mxu0
    %v2948 = vadd.f32 %v2563, %v2947
    %v2949 = vpop.f32.mrf.mxu0
    %2950 = vmatprep.mubr.f32.mxu0 %v2207
    %2951 = vmatmul.mubr.f32.gmra.mxu0 %v2143
    %v2952 = vpop.f32.mrf.mxu0
    %v2953 = vadd.f32 %v2568, %v2952
    %v2954 = vpop.f32.mrf.mxu0
    %2955 = vmatprep.mubr.f32.mxu0 %v2208
    %2956 = vmatmul.mubr.f32.gmra.mxu0 %v2144
    %v2957 = vpop.f32.mrf.mxu0
    %v2958 = vadd.f32 %v2573, %v2957
    %v2959 = vpop.f32.mrf.mxu0
    %2960 = vmatprep.mubr.f32.mxu0 %v2209
    %2961 = vmatmul.mubr.f32.gmra.mxu0 %v2145
    %v2962 = vpop.f32.mrf.mxu0
    %v2963 = vadd.f32 %v2578, %v2962
    %v2964 = vpop.f32.mrf.mxu0
    %2965 = vmatprep.mubr.f32.mxu0 %v2210
    %2966 = vmatmul.mubr.f32.gmra.mxu0 %v2146
    %v2967 = vpop.f32.mrf.mxu0
    %v2968 = vadd.f32 %v2583, %v2967
    %v2969 = vpop.f32.mrf.mxu0
    %2970 = vmatprep.mubr.f32.mxu0 %v2211
    %2971 = vmatmul.mubr.f32.gmra.mxu0 %v2147
    %v2972 = vpop.f32.mrf.mxu0
    %v2973 = vadd.f32 %v2588, %v2972
    %v2974 = vpop.f32.mrf.mxu0
    %2975 = vmatprep.mubr.f32.mxu0 %v2212
    %2976 = vmatmul.mubr.f32.gmra.mxu0 %v2148
    %v2977 = vpop.f32.mrf.mxu0
    %v2978 = vadd.f32 %v2593, %v2977
    %v2979 = vpop.f32.mrf.mxu0
    %2980 = vmatprep.mubr.f32.mxu0 %v2213
    %2981 = vmatmul.mubr.f32.gmra.mxu0 %v2149
    %v2982 = vpop.f32.mrf.mxu0
    %v2983 = vadd.f32 %v2598, %v2982
    %v2984 = vpop.f32.mrf.mxu0
    %2985 = vmatprep.mubr.f32.mxu0 %v2214
    %2986 = vmatmul.mubr.f32.gmra.mxu0 %v2150
    %v2987 = vpop.f32.mrf.mxu0
    %v2988 = vadd.f32 %v2603, %v2987
    %v2989 = vpop.f32.mrf.mxu0
    %2990 = vmatprep.mubr.f32.mxu0 %v2215
    %2991 = vmatmul.mubr.f32.gmra.mxu0 %v2151
    %v2992 = vpop.f32.mrf.mxu0
    %v2993 = vadd.f32 %v2608, %v2992
    %v2994 = vpop.f32.mrf.mxu0
    %2995 = vmatprep.mubr.f32.mxu0 %v2216
    %2996 = vmatmul.mubr.f32.gmra.mxu0 %v2152
    %v2997 = vpop.f32.mrf.mxu0
    %v2998 = vadd.f32 %v2613, %v2997
    %v2999 = vpop.f32.mrf.mxu0
    %3000 = vmatprep.mubr.f32.mxu0 %v2217
    %3001 = vmatmul.mubr.f32.gmra.mxu0 %v2153
    %v3002 = vpop.f32.mrf.mxu0
    %v3003 = vadd.f32 %v2618, %v3002
    %v3004 = vpop.f32.mrf.mxu0
    %3005 = vmatprep.mubr.f32.mxu0 %v2218
    %3006 = vmatmul.mubr.f32.gmra.mxu0 %v2154
    %v3007 = vpop.f32.mrf.mxu0
    %v3008 = vadd.f32 %v2623, %v3007
    %v3009 = vpop.f32.mrf.mxu0
    %3010 = vmatprep.mubr.f32.mxu0 %v2219
    %3011 = vmatmul.mubr.f32.gmra.mxu0 %v2155
    %v3012 = vpop.f32.mrf.mxu0
    %v3013 = vadd.f32 %v2628, %v3012
    %v3014 = vpop.f32.mrf.mxu0
    %3015 = vmatprep.mubr.f32.mxu0 %v2220
    %3016 = vmatmul.mubr.f32.gmra.mxu0 %v2156
    %v3017 = vpop.f32.mrf.mxu0
    %v3018 = vadd.f32 %v2633, %v3017
    %v3019 = vpop.f32.mrf.mxu0
    %3020 = vmatprep.mubr.f32.mxu0 %v2221
    %3021 = vmatmul.mubr.f32.gmra.mxu0 %v2157
    %v3022 = vpop.f32.mrf.mxu0
    %v3023 = vadd.f32 %v2638, %v3022
    %v3024 = vpop.f32.mrf.mxu0
    %3025 = vmatprep.mubr.f32.mxu0 %v2222
    %3026 = vmatmul.mubr.f32.gmra.mxu0 %v2158
    %v3027 = vpop.f32.mrf.mxu0
    %v3028 = vadd.f32 %v2643, %v3027
    %v3029 = vpop.f32.mrf.mxu0
    %3030 = vmatprep.mubr.f32.mxu0 %v2223
    %3031 = vmatmul.mubr.f32.gmra.mxu0 %v2159
    %v3032 = vpop.f32.mrf.mxu0
    %v3033 = vadd.f32 %v2648, %v3032
    %v3034 = vpop.f32.mrf.mxu0
    %3035 = vmatprep.mubr.f32.mxu0 %v2224
    %3036 = vmatmul.mubr.f32.gmra.mxu0 %v2160
    %v3037 = vpop.f32.mrf.mxu0
    %v3038 = vadd.f32 %v2653, %v3037
    %v3039 = vpop.f32.mrf.mxu0
    %3040 = vmatprep.mubr.f32.mxu0 %v2225
    %3041 = vmatmul.mubr.f32.gmra.mxu0 %v2161
    %v3042 = vpop.f32.mrf.mxu0
    %v3043 = vadd.f32 %v2658, %v3042
    %v3044 = vpop.f32.mrf.mxu0
    %3045 = vmatprep.mubr.f32.mxu0 %v2226
    %3046 = vmatmul.mubr.f32.gmra.mxu0 %v2162
    %v3047 = vpop.f32.mrf.mxu0
    %v3048 = vadd.f32 %v2663, %v3047
    %v3049 = vpop.f32.mrf.mxu0
    %3050 = vmatprep.mubr.f32.mxu0 %v2227
    %3051 = vmatmul.mubr.f32.gmra.mxu0 %v2163
    %v3052 = vpop.f32.mrf.mxu0
    %v3053 = vadd.f32 %v2668, %v3052
    %v3054 = vpop.f32.mrf.mxu0
    %3055 = vmatprep.mubr.f32.mxu0 %v2228
    %3056 = vmatmul.mubr.f32.gmra.mxu0 %v2164
    %v3057 = vpop.f32.mrf.mxu0
    %v3058 = vadd.f32 %v2673, %v3057
    %v3059 = vpop.f32.mrf.mxu0
    %3060 = vmatprep.mubr.f32.mxu0 %v2229
    %3061 = vmatmul.mubr.f32.gmra.mxu0 %v2165
    %v3062 = vpop.f32.mrf.mxu0
    %v3063 = vadd.f32 %v2678, %v3062
    %v3064 = vpop.f32.mrf.mxu0
    %3065 = vmatprep.mubr.f32.mxu0 %v2230
    %3066 = vmatmul.mubr.f32.gmra.mxu0 %v2166
    %v3067 = vpop.f32.mrf.mxu0
    %v3068 = vadd.f32 %v2683, %v3067
    %v3069 = vpop.f32.mrf.mxu0
    %3070 = vmatprep.mubr.f32.mxu0 %v2231
    %3071 = vmatmul.mubr.f32.gmra.mxu0 %v2167
    %v3072 = vpop.f32.mrf.mxu0
    %v3073 = vadd.f32 %v2688, %v3072
    %v3074 = vpop.f32.mrf.mxu0
    %3075 = vmatprep.mubr.f32.mxu0 %v2232
    %3076 = vmatmul.mubr.f32.gmra.mxu0 %v2168
    %v3077 = vpop.f32.mrf.mxu0
    %v3078 = vadd.f32 %v2693, %v3077
    %v3079 = vpop.f32.mrf.mxu0
    %3080 = vmatprep.mubr.f32.mxu0 %v2233
    %3081 = vmatmul.mubr.f32.gmra.mxu0 %v2169
    %v3082 = vpop.f32.mrf.mxu0
    %v3083 = vadd.f32 %v2698, %v3082
    %v3084 = vpop.f32.mrf.mxu0
    %3085 = vmatprep.mubr.f32.mxu0 %v2234
    %3086 = vmatmul.mubr.f32.gmra.mxu0 %v2170
    %v3087 = vpop.f32.mrf.mxu0
    %v3088 = vadd.f32 %v2703, %v3087
    %v3089 = vpop.f32.mrf.mxu0
    %3090 = vmatprep.mubr.f32.mxu0 %v2235
    %3091 = vmatmul.mubr.f32.gmra.mxu0 %v2171
    %v3092 = vpop.f32.mrf.mxu0
    %v3093 = vadd.f32 %v2708, %v3092
    %v3094 = vpop.f32.mrf.mxu0
    %3095 = vmatprep.mubr.f32.mxu0 %v2236
    %3096 = vmatmul.mubr.f32.gmra.mxu0 %v2172
    %v3097 = vpop.f32.mrf.mxu0
    %v3098 = vadd.f32 %v2713, %v3097
    %v3099 = vpop.f32.mrf.mxu0
    %3100 = vmatprep.mubr.f32.mxu0 %v2237
    %3101 = vmatmul.mubr.f32.gmra.mxu0 %v2173
    %v3102 = vpop.f32.mrf.mxu0
    %v3103 = vadd.f32 %v2718, %v3102
    %v3104 = vpop.f32.mrf.mxu0
    %3105 = vmatprep.mubr.f32.mxu0 %v2238
    %3106 = vmatmul.mubr.f32.gmra.mxu0 %v2174
    %v3107 = vpop.f32.mrf.mxu0
    %v3108 = vadd.f32 %v2723, %v3107
    %v3109 = vpop.f32.mrf.mxu0
    %3110 = vmatprep.mubr.f32.mxu0 %v2239
    %3111 = vmatmul.mubr.f32.gmra.mxu0 %v2175
    %v3112 = vpop.f32.mrf.mxu0
    %v3113 = vadd.f32 %v2728, %v3112
    %v3114 = vpop.f32.mrf.mxu0
    %3115 = vmatprep.mubr.f32.mxu0 %v2240
    %3116 = vmatmul.mubr.f32.gmra.mxu0 %v2176
    %v3117 = vpop.f32.mrf.mxu0
    %v3118 = vadd.f32 %v2733, %v3117
    %v3119 = vpop.f32.mrf.mxu0
    %3120 = vmatprep.mubr.f32.mxu0 %v2241
    %3121 = vmatmul.mubr.f32.gmra.mxu0 %v2177
    %v3122 = vpop.f32.mrf.mxu0
    %v3123 = vadd.f32 %v2738, %v3122
    %v3124 = vpop.f32.mrf.mxu0
    %3125 = vmatprep.mubr.f32.mxu0 %v2242
    %3126 = vmatmul.mubr.f32.gmra.mxu0 %v2178
    %v3127 = vpop.f32.mrf.mxu0
    %v3128 = vadd.f32 %v2743, %v3127
    %v3129 = vpop.f32.mrf.mxu0
    %3130 = vmatprep.mubr.f32.mxu0 %v2243
    %3131 = vmatmul.mubr.f32.gmra.mxu0 %v2179
    %v3132 = vpop.f32.mrf.mxu0
    %v3133 = vadd.f32 %v2748, %v3132
    %v3134 = vpop.f32.mrf.mxu0
    %3135 = vmatprep.mubr.f32.mxu0 %v2244
    %3136 = vmatmul.mubr.f32.gmra.mxu0 %v2180
    %v3137 = vpop.f32.mrf.mxu0
    %v3138 = vadd.f32 %v2753, %v3137
    %v3139 = vpop.f32.mrf.mxu0
    %3140 = vmatprep.mubr.f32.mxu0 %v2245
    %3141 = vmatmul.mubr.f32.gmra.mxu0 %v2181
    %v3142 = vpop.f32.mrf.mxu0
    %v3143 = vadd.f32 %v2758, %v3142
    %v3144 = vpop.f32.mrf.mxu0
    %3145 = vmatprep.mubr.f32.mxu0 %v2246
    %3146 = vmatmul.mubr.f32.gmra.mxu0 %v2182
    %v3147 = vpop.f32.mrf.mxu0
    %v3148 = vadd.f32 %v2763, %v3147
    %v3149 = vpop.f32.mrf.mxu0
    %3150 = vmatprep.mubr.f32.mxu0 %v2247
    %3151 = vmatmul.mubr.f32.gmra.mxu0 %v2183
    %v3152 = vpop.f32.mrf.mxu0
    %v3153 = vadd.f32 %v2768, %v3152
    %v3154 = vpop.f32.mrf.mxu0
    %3155 = vmatprep.mubr.f32.mxu0 %v2248
    %3156 = vmatmul.mubr.f32.gmra.mxu0 %v2184
    %v3157 = vpop.f32.mrf.mxu0
    %v3158 = vadd.f32 %v2773, %v3157
    %v3159 = vpop.f32.mrf.mxu0
    %3160 = vmatprep.mubr.f32.mxu0 %v2249
    %3161 = vmatmul.mubr.f32.gmra.mxu0 %v2185
    %v3162 = vpop.f32.mrf.mxu0
    %v3163 = vadd.f32 %v2778, %v3162
    %v3164 = vpop.f32.mrf.mxu0
    %3165 = vmatprep.mubr.f32.mxu0 %v2250
    %3166 = vmatmul.mubr.f32.gmra.mxu0 %v2186
    %v3167 = vpop.f32.mrf.mxu0
    %v3168 = vadd.f32 %v2783, %v3167
    %v3169 = vpop.f32.mrf.mxu0
    %3170 = vmatprep.mubr.f32.mxu0 %v2251
    %3171 = vmatmul.mubr.f32.gmra.mxu0 %v2187
    %v3172 = vpop.f32.mrf.mxu0
    %v3173 = vadd.f32 %v2788, %v3172
    %v3174 = vpop.f32.mrf.mxu0
    %3175 = vmatprep.mubr.f32.mxu0 %v2252
    %3176 = vmatmul.mubr.f32.gmra.mxu0 %v2188
    %v3177 = vpop.f32.mrf.mxu0
    %v3178 = vadd.f32 %v2793, %v3177
    %v3179 = vpop.f32.mrf.mxu0
    %3180 = vmatprep.mubr.f32.mxu0 %v2253
    %3181 = vmatmul.mubr.f32.gmra.mxu0 %v2189
    %v3182 = vpop.f32.mrf.mxu0
    %v3183 = vadd.f32 %v2798, %v3182
    %v3184 = vpop.f32.mrf.mxu0
    %3185 = vmatprep.mubr.f32.mxu0 %v2254
    %3186 = vmatmul.mubr.f32.gmra.mxu0 %v2190
    %v3187 = vpop.f32.mrf.mxu0
    %v3188 = vadd.f32 %v2803, %v3187
    %v3189 = vpop.f32.mrf.mxu0
    %3190 = vmatprep.mubr.f32.mxu0 %v2255
    %3191 = vmatmul.mubr.f32.gmra.mxu0 %v2191
    %v3192 = vpop.f32.mrf.mxu0
    %v3193 = vadd.f32 %v2808, %v3192
    %v3194 = vpop.f32.mrf.mxu0
    %3195 = vmatprep.mubr.f32.mxu0 %v2256
    %3196 = vmatmul.mubr.f32.gmra.mxu0 %v2192
    %v3197 = vpop.f32.mrf.mxu0
    %v3198 = vadd.f32 %v2813, %v3197
    %v3199 = vpop.f32.mrf.mxu0
    %3200 = vmatprep.mubr.f32.mxu0 %v2257
    %3201 = vmatmul.mubr.f32.gmra.mxu0 %v2193
    %v3202 = vpop.f32.mrf.mxu0
    %v3203 = vadd.f32 %v2818, %v3202
    %v3204 = vpop.f32.mrf.mxu0
    %3205 = vmatprep.mubr.f32.mxu0 %v2258
    %3206 = vmatmul.mubr.f32.gmra.mxu0 %v2194
    %v3207 = vpop.f32.mrf.mxu0
    %v3208 = vadd.f32 %v2823, %v3207
    %v3209 = vpop.f32.mrf.mxu0
    %3210 = vmatprep.mubr.f32.mxu0 %v2259
    %3211 = vmatmul.mubr.f32.gmra.mxu0 %v2195
    %v3212 = vpop.f32.mrf.mxu0
    %v3213 = vadd.f32 %v2828, %v3212
    %v3214 = vpop.f32.mrf.mxu0
    %3215 = vmatprep.mubr.f32.mxu0 %v2260
    %3216 = vmatmul.mubr.f32.gmra.mxu0 %v2196
    %v3217 = vpop.f32.mrf.mxu0
    %v3218 = vadd.f32 %v2833, %v3217
    %v3219 = vpop.f32.mrf.mxu0
    %3220 = vmatprep.mubr.f32.mxu0 %v2261
    %3221 = vmatmul.mubr.f32.gmra.mxu0 %v2197
    %v3222 = vpop.f32.mrf.mxu0
    %v3223 = vadd.f32 %v2838, %v3222
    %v3224 = vpop.f32.mrf.mxu0
    %3225 = vmatprep.mubr.f32.mxu0 %v2262
    %3226 = vmatmul.mubr.f32.gmra.mxu0 %v2198
    %v3227 = vpop.f32.mrf.mxu0
    %v3228 = vadd.f32 %v2843, %v3227
    %v3229 = vpop.f32.mrf.mxu0
    %3230 = vdwg.mxu0
    %3231 = vmatprep.subr.mxu0 0.0
    %3232 = vmatpush1.msra.mxu0 0.0
    %3233 = vmatprep.subr.mxu0 0.0
    %3234 = vmatpush1.msra.mxu0 0.0
    %3235 = vmatprep.subr.mxu0 0.0
    %3236 = vmatpush1.msra.mxu0 0.0
    %3237 = vmatprep.subr.mxu0 0.0
    %3238 = vmatpush1.msra.mxu0 0.0
    %3239 = vmatprep.subr.mxu0 0.0
    %3240 = vmatpush1.msra.mxu0 0.0
    %3241 = vmatprep.subr.mxu0 0.0
    %3242 = vmatpush1.msra.mxu0 0.0
    %3243 = vmatprep.subr.mxu0 0.0
    %3244 = vmatpush1.msra.mxu0 0.0
    %3245 = vmatprep.subr.mxu0 0.0
    %3246 = vmatpush1.msra.mxu0 0.0
    %3247 = vmatprep.subr.mxu0 0.0
    %3248 = vmatpush1.msra.mxu0 %v92
    %3249 = vmatprep.subr.mxu0 0.0
    %3250 = vmatpush1.msra.mxu0 %v91
    %3251 = vmatprep.subr.mxu0 0.0
    %3252 = vmatpush1.msra.mxu0 %v90
    %3253 = vmatprep.subr.mxu0 0.0
    %3254 = vmatpush1.msra.mxu0 %v89
    %3255 = vmatprep.subr.mxu0 0.0
    %3256 = vmatpush1.msra.mxu0 %v88
    %3257 = vmatprep.subr.mxu0 0.0
    %3258 = vmatpush1.msra.mxu0 %v87
    %3259 = vmatprep.subr.mxu0 0.0
    %3260 = vmatpush1.msra.mxu0 %v86
    %3261 = vmatprep.subr.mxu0 0.0
    %3262 = vmatpush1.msra.mxu0 %v85
    %3263 = vmatprep.subr.mxu0 0.0
    %3264 = vmatpush2.msra.mxu0 0.0
    %3265 = vmatprep.subr.mxu0 0.0
    %3266 = vmatpush2.msra.mxu0 0.0
    %3267 = vmatprep.subr.mxu0 0.0
    %3268 = vmatpush2.msra.mxu0 0.0
    %3269 = vmatprep.subr.mxu0 0.0
    %3270 = vmatpush2.msra.mxu0 0.0
    %3271 = vmatprep.subr.mxu0 0.0
    %3272 = vmatpush2.msra.mxu0 0.0
    %3273 = vmatprep.subr.mxu0 0.0
    %3274 = vmatpush2.msra.mxu0 0.0
    %3275 = vmatprep.subr.mxu0 0.0
    %3276 = vmatpush2.msra.mxu0 0.0
    %3277 = vmatprep.subr.mxu0 0.0
    %3278 = vmatpush2.msra.mxu0 0.0
    %3279 = vmatprep.subr.mxu0 0.0
    %3280 = vmatpush2.msra.mxu0 0.0
    %3281 = vmatprep.subr.mxu0 0.0
    %3282 = vmatpush2.msra.mxu0 0.0
    %3283 = vmatprep.subr.mxu0 0.0
    %3284 = vmatpush2.msra.mxu0 0.0
    %3285 = vmatprep.subr.mxu0 0.0
    %3286 = vmatpush2.msra.mxu0 0.0
    %3287 = vmatprep.subr.mxu0 0.0
    %3288 = vmatpush2.msra.mxu0 0.0
    %3289 = vmatprep.subr.mxu0 0.0
    %3290 = vmatpush2.msra.mxu0 0.0
    %3291 = vmatprep.subr.mxu0 0.0
    %3292 = vmatpush2.msra.mxu0 0.0
    %3293 = vmatprep.subr.mxu0 0.0
    %3294 = vmatpush2.msra.mxu0 0.0
    %3295 = vmatprep.mubr.f32.mxu0 0.0
    %3296 = vmatmul.mubr.f32.gmra.mxu0 %v2270
    %v3297 = vpop.f32.mrf.mxu0
    %v3298 = vadd.f32 %v2913, %v3297
    %v3299 = vpop.f32.mrf.mxu0
    %3300 = vmatprep.mubr.f32.mxu0 0.0
    %3301 = vmatmul.mubr.f32.gmra.mxu0 %v2273
    %v3302 = vpop.f32.mrf.mxu0
    %v3303 = vadd.f32 %v2918, %v3302
    %v3304 = vpop.f32.mrf.mxu0
    %3305 = vmatprep.mubr.f32.mxu0 0.0
    %3306 = vmatmul.mubr.f32.gmra.mxu0 %v2276
    %v3307 = vpop.f32.mrf.mxu0
    %v3308 = vadd.f32 %v2923, %v3307
    %v3309 = vpop.f32.mrf.mxu0
    %3310 = vmatprep.mubr.f32.mxu0 0.0
    %3311 = vmatmul.mubr.f32.gmra.mxu0 %v2279
    %v3312 = vpop.f32.mrf.mxu0
    %v3313 = vadd.f32 %v2928, %v3312
    %v3314 = vpop.f32.mrf.mxu0
    %3315 = vmatprep.mubr.f32.mxu0 0.0
    %3316 = vmatmul.mubr.f32.gmra.mxu0 %v2282
    %v3317 = vpop.f32.mrf.mxu0
    %v3318 = vadd.f32 %v2933, %v3317
    %v3319 = vpop.f32.mrf.mxu0
    %3320 = vmatprep.mubr.f32.mxu0 0.0
    %3321 = vmatmul.mubr.f32.gmra.mxu0 %v2285
    %v3322 = vpop.f32.mrf.mxu0
    %v3323 = vadd.f32 %v2938, %v3322
    %v3324 = vpop.f32.mrf.mxu0
    %3325 = vmatprep.mubr.f32.mxu0 0.0
    %3326 = vmatmul.mubr.f32.gmra.mxu0 %v2288
    %v3327 = vpop.f32.mrf.mxu0
    %v3328 = vadd.f32 %v2943, %v3327
    %v3329 = vpop.f32.mrf.mxu0
    %3330 = vmatprep.mubr.f32.mxu0 0.0
    %3331 = vmatmul.mubr.f32.gmra.mxu0 %v2291
    %v3332 = vpop.f32.mrf.mxu0
    %v3333 = vadd.f32 %v2948, %v3332
    %v3334 = vpop.f32.mrf.mxu0
    %3335 = vmatprep.mubr.f32.mxu0 0.0
    %3336 = vmatmul.mubr.f32.gmra.mxu0 %v2294
    %v3337 = vpop.f32.mrf.mxu0
    %v3338 = vadd.f32 %v2953, %v3337
    %v3339 = vpop.f32.mrf.mxu0
    %3340 = vmatprep.mubr.f32.mxu0 0.0
    %3341 = vmatmul.mubr.f32.gmra.mxu0 %v2297
    %v3342 = vpop.f32.mrf.mxu0
    %v3343 = vadd.f32 %v2958, %v3342
    %v3344 = vpop.f32.mrf.mxu0
    %3345 = vmatprep.mubr.f32.mxu0 0.0
    %3346 = vmatmul.mubr.f32.gmra.mxu0 %v2300
    %v3347 = vpop.f32.mrf.mxu0
    %v3348 = vadd.f32 %v2963, %v3347
    %v3349 = vpop.f32.mrf.mxu0
    %3350 = vmatprep.mubr.f32.mxu0 0.0
    %3351 = vmatmul.mubr.f32.gmra.mxu0 %v2303
    %v3352 = vpop.f32.mrf.mxu0
    %v3353 = vadd.f32 %v2968, %v3352
    %v3354 = vpop.f32.mrf.mxu0
    %3355 = vmatprep.mubr.f32.mxu0 0.0
    %3356 = vmatmul.mubr.f32.gmra.mxu0 %v2306
    %v3357 = vpop.f32.mrf.mxu0
    %v3358 = vadd.f32 %v2973, %v3357
    %v3359 = vpop.f32.mrf.mxu0
    %3360 = vmatprep.mubr.f32.mxu0 0.0
    %3361 = vmatmul.mubr.f32.gmra.mxu0 %v2309
    %v3362 = vpop.f32.mrf.mxu0
    %v3363 = vadd.f32 %v2978, %v3362
    %v3364 = vpop.f32.mrf.mxu0
    %3365 = vmatprep.mubr.f32.mxu0 0.0
    %3366 = vmatmul.mubr.f32.gmra.mxu0 %v2312
    %v3367 = vpop.f32.mrf.mxu0
    %v3368 = vadd.f32 %v2983, %v3367
    %v3369 = vpop.f32.mrf.mxu0
    %3370 = vmatprep.mubr.f32.mxu0 0.0
    %3371 = vmatmul.mubr.f32.gmra.mxu0 %v2315
    %v3372 = vpop.f32.mrf.mxu0
    %v3373 = vadd.f32 %v2988, %v3372
    %v3374 = vpop.f32.mrf.mxu0
    %3375 = vmatprep.mubr.f32.mxu0 0.0
    %3376 = vmatmul.mubr.f32.gmra.mxu0 %v2318
    %v3377 = vpop.f32.mrf.mxu0
    %v3378 = vadd.f32 %v2993, %v3377
    %v3379 = vpop.f32.mrf.mxu0
    %3380 = vmatprep.mubr.f32.mxu0 0.0
    %3381 = vmatmul.mubr.f32.gmra.mxu0 %v2321
    %v3382 = vpop.f32.mrf.mxu0
    %v3383 = vadd.f32 %v2998, %v3382
    %v3384 = vpop.f32.mrf.mxu0
    %3385 = vmatprep.mubr.f32.mxu0 0.0
    %3386 = vmatmul.mubr.f32.gmra.mxu0 %v2324
    %v3387 = vpop.f32.mrf.mxu0
    %v3388 = vadd.f32 %v3003, %v3387
    %v3389 = vpop.f32.mrf.mxu0
    %3390 = vmatprep.mubr.f32.mxu0 0.0
    %3391 = vmatmul.mubr.f32.gmra.mxu0 %v2327
    %v3392 = vpop.f32.mrf.mxu0
    %v3393 = vadd.f32 %v3008, %v3392
    %v3394 = vpop.f32.mrf.mxu0
    %3395 = vmatprep.mubr.f32.mxu0 0.0
    %3396 = vmatmul.mubr.f32.gmra.mxu0 %v2330
    %v3397 = vpop.f32.mrf.mxu0
    %v3398 = vadd.f32 %v3013, %v3397
    %v3399 = vpop.f32.mrf.mxu0
    %3400 = vmatprep.mubr.f32.mxu0 0.0
    %3401 = vmatmul.mubr.f32.gmra.mxu0 %v2333
    %v3402 = vpop.f32.mrf.mxu0
    %v3403 = vadd.f32 %v3018, %v3402
    %v3404 = vpop.f32.mrf.mxu0
    %3405 = vmatprep.mubr.f32.mxu0 0.0
    %3406 = vmatmul.mubr.f32.gmra.mxu0 %v2336
    %v3407 = vpop.f32.mrf.mxu0
    %v3408 = vadd.f32 %v3023, %v3407
    %v3409 = vpop.f32.mrf.mxu0
    %3410 = vmatprep.mubr.f32.mxu0 0.0
    %3411 = vmatmul.mubr.f32.gmra.mxu0 %v2339
    %v3412 = vpop.f32.mrf.mxu0
    %v3413 = vadd.f32 %v3028, %v3412
    %v3414 = vpop.f32.mrf.mxu0
    %3415 = vmatprep.mubr.f32.mxu0 0.0
    %3416 = vmatmul.mubr.f32.gmra.mxu0 %v2342
    %v3417 = vpop.f32.mrf.mxu0
    %v3418 = vadd.f32 %v3033, %v3417
    %v3419 = vpop.f32.mrf.mxu0
    %3420 = vmatprep.mubr.f32.mxu0 0.0
    %3421 = vmatmul.mubr.f32.gmra.mxu0 %v2345
    %v3422 = vpop.f32.mrf.mxu0
    %v3423 = vadd.f32 %v3038, %v3422
    %v3424 = vpop.f32.mrf.mxu0
    %3425 = vmatprep.mubr.f32.mxu0 0.0
    %3426 = vmatmul.mubr.f32.gmra.mxu0 %v2348
    %v3427 = vpop.f32.mrf.mxu0
    %v3428 = vadd.f32 %v3043, %v3427
    %v3429 = vpop.f32.mrf.mxu0
    %3430 = vmatprep.mubr.f32.mxu0 0.0
    %3431 = vmatmul.mubr.f32.gmra.mxu0 %v2351
    %v3432 = vpop.f32.mrf.mxu0
    %v3433 = vadd.f32 %v3048, %v3432
    %v3434 = vpop.f32.mrf.mxu0
    %3435 = vmatprep.mubr.f32.mxu0 0.0
    %3436 = vmatmul.mubr.f32.gmra.mxu0 %v2354
    %v3437 = vpop.f32.mrf.mxu0
    %v3438 = vadd.f32 %v3053, %v3437
    %v3439 = vpop.f32.mrf.mxu0
    %3440 = vmatprep.mubr.f32.mxu0 0.0
    %3441 = vmatmul.mubr.f32.gmra.mxu0 %v2357
    %v3442 = vpop.f32.mrf.mxu0
    %v3443 = vadd.f32 %v3058, %v3442
    %v3444 = vpop.f32.mrf.mxu0
    %3445 = vmatprep.mubr.f32.mxu0 0.0
    %3446 = vmatmul.mubr.f32.gmra.mxu0 %v2360
    %v3447 = vpop.f32.mrf.mxu0
    %v3448 = vadd.f32 %v3063, %v3447
    %v3449 = vpop.f32.mrf.mxu0
    %3450 = vmatprep.mubr.f32.mxu0 0.0
    %3451 = vmatmul.mubr.f32.gmra.mxu0 %v2363
    %v3452 = vpop.f32.mrf.mxu0
    %v3453 = vadd.f32 %v3068, %v3452
    %v3454 = vpop.f32.mrf.mxu0
    %3455 = vmatprep.mubr.f32.mxu0 0.0
    %3456 = vmatmul.mubr.f32.gmra.mxu0 %v2366
    %v3457 = vpop.f32.mrf.mxu0
    %v3458 = vadd.f32 %v3073, %v3457
    %v3459 = vpop.f32.mrf.mxu0
    %3460 = vmatprep.mubr.f32.mxu0 0.0
    %3461 = vmatmul.mubr.f32.gmra.mxu0 %v2369
    %v3462 = vpop.f32.mrf.mxu0
    %v3463 = vadd.f32 %v3078, %v3462
    %v3464 = vpop.f32.mrf.mxu0
    %3465 = vmatprep.mubr.f32.mxu0 0.0
    %3466 = vmatmul.mubr.f32.gmra.mxu0 %v2372
    %v3467 = vpop.f32.mrf.mxu0
    %v3468 = vadd.f32 %v3083, %v3467
    %v3469 = vpop.f32.mrf.mxu0
    %3470 = vmatprep.mubr.f32.mxu0 0.0
    %3471 = vmatmul.mubr.f32.gmra.mxu0 %v2375
    %v3472 = vpop.f32.mrf.mxu0
    %v3473 = vadd.f32 %v3088, %v3472
    %v3474 = vpop.f32.mrf.mxu0
    %3475 = vmatprep.mubr.f32.mxu0 0.0
    %3476 = vmatmul.mubr.f32.gmra.mxu0 %v2378
    %v3477 = vpop.f32.mrf.mxu0
    %v3478 = vadd.f32 %v3093, %v3477
    %v3479 = vpop.f32.mrf.mxu0
    %3480 = vmatprep.mubr.f32.mxu0 0.0
    %3481 = vmatmul.mubr.f32.gmra.mxu0 %v2381
    %v3482 = vpop.f32.mrf.mxu0
    %v3483 = vadd.f32 %v3098, %v3482
    %v3484 = vpop.f32.mrf.mxu0
    %3485 = vmatprep.mubr.f32.mxu0 0.0
    %3486 = vmatmul.mubr.f32.gmra.mxu0 %v2384
    %v3487 = vpop.f32.mrf.mxu0
    %v3488 = vadd.f32 %v3103, %v3487
    %v3489 = vpop.f32.mrf.mxu0
    %3490 = vmatprep.mubr.f32.mxu0 0.0
    %3491 = vmatmul.mubr.f32.gmra.mxu0 %v2387
    %v3492 = vpop.f32.mrf.mxu0
    %v3493 = vadd.f32 %v3108, %v3492
    %v3494 = vpop.f32.mrf.mxu0
    %3495 = vmatprep.mubr.f32.mxu0 0.0
    %3496 = vmatmul.mubr.f32.gmra.mxu0 %v2390
    %v3497 = vpop.f32.mrf.mxu0
    %v3498 = vadd.f32 %v3113, %v3497
    %v3499 = vpop.f32.mrf.mxu0
    %3500 = vmatprep.mubr.f32.mxu0 0.0
    %3501 = vmatmul.mubr.f32.gmra.mxu0 %v2393
    %v3502 = vpop.f32.mrf.mxu0
    %v3503 = vadd.f32 %v3118, %v3502
    %v3504 = vpop.f32.mrf.mxu0
    %3505 = vmatprep.mubr.f32.mxu0 0.0
    %3506 = vmatmul.mubr.f32.gmra.mxu0 %v2396
    %v3507 = vpop.f32.mrf.mxu0
    %v3508 = vadd.f32 %v3123, %v3507
    %v3509 = vpop.f32.mrf.mxu0
    %3510 = vmatprep.mubr.f32.mxu0 0.0
    %3511 = vmatmul.mubr.f32.gmra.mxu0 %v2399
    %v3512 = vpop.f32.mrf.mxu0
    %v3513 = vadd.f32 %v3128, %v3512
    %v3514 = vpop.f32.mrf.mxu0
    %3515 = vmatprep.mubr.f32.mxu0 0.0
    %3516 = vmatmul.mubr.f32.gmra.mxu0 %v2402
    %v3517 = vpop.f32.mrf.mxu0
    %v3518 = vadd.f32 %v3133, %v3517
    %v3519 = vpop.f32.mrf.mxu0
    %3520 = vmatprep.mubr.f32.mxu0 0.0
    %3521 = vmatmul.mubr.f32.gmra.mxu0 %v2405
    %v3522 = vpop.f32.mrf.mxu0
    %v3523 = vadd.f32 %v3138, %v3522
    %v3524 = vpop.f32.mrf.mxu0
    %3525 = vmatprep.mubr.f32.mxu0 0.0
    %3526 = vmatmul.mubr.f32.gmra.mxu0 %v2408
    %v3527 = vpop.f32.mrf.mxu0
    %v3528 = vadd.f32 %v3143, %v3527
    %v3529 = vpop.f32.mrf.mxu0
    %3530 = vmatprep.mubr.f32.mxu0 0.0
    %3531 = vmatmul.mubr.f32.gmra.mxu0 %v2411
    %v3532 = vpop.f32.mrf.mxu0
    %v3533 = vadd.f32 %v3148, %v3532
    %v3534 = vpop.f32.mrf.mxu0
    %3535 = vmatprep.mubr.f32.mxu0 0.0
    %3536 = vmatmul.mubr.f32.gmra.mxu0 %v2414
    %v3537 = vpop.f32.mrf.mxu0
    %v3538 = vadd.f32 %v3153, %v3537
    %v3539 = vpop.f32.mrf.mxu0
    %3540 = vmatprep.mubr.f32.mxu0 0.0
    %3541 = vmatmul.mubr.f32.gmra.mxu0 %v2417
    %v3542 = vpop.f32.mrf.mxu0
    %v3543 = vadd.f32 %v3158, %v3542
    %v3544 = vpop.f32.mrf.mxu0
    %3545 = vmatprep.mubr.f32.mxu0 0.0
    %3546 = vmatmul.mubr.f32.gmra.mxu0 %v2420
    %v3547 = vpop.f32.mrf.mxu0
    %v3548 = vadd.f32 %v3163, %v3547
    %v3549 = vpop.f32.mrf.mxu0
    %3550 = vmatprep.mubr.f32.mxu0 0.0
    %3551 = vmatmul.mubr.f32.gmra.mxu0 %v2423
    %v3552 = vpop.f32.mrf.mxu0
    %v3553 = vadd.f32 %v3168, %v3552
    %v3554 = vpop.f32.mrf.mxu0
    %3555 = vmatprep.mubr.f32.mxu0 0.0
    %3556 = vmatmul.mubr.f32.gmra.mxu0 %v2426
    %v3557 = vpop.f32.mrf.mxu0
    %v3558 = vadd.f32 %v3173, %v3557
    %v3559 = vpop.f32.mrf.mxu0
    %3560 = vmatprep.mubr.f32.mxu0 0.0
    %3561 = vmatmul.mubr.f32.gmra.mxu0 %v2429
    %v3562 = vpop.f32.mrf.mxu0
    %v3563 = vadd.f32 %v3178, %v3562
    %v3564 = vpop.f32.mrf.mxu0
    %3565 = vmatprep.mubr.f32.mxu0 0.0
    %3566 = vmatmul.mubr.f32.gmra.mxu0 %v2432
    %v3567 = vpop.f32.mrf.mxu0
    %v3568 = vadd.f32 %v3183, %v3567
    %v3569 = vpop.f32.mrf.mxu0
    %3570 = vmatprep.mubr.f32.mxu0 0.0
    %3571 = vmatmul.mubr.f32.gmra.mxu0 %v2435
    %v3572 = vpop.f32.mrf.mxu0
    %v3573 = vadd.f32 %v3188, %v3572
    %v3574 = vpop.f32.mrf.mxu0
    %3575 = vmatprep.mubr.f32.mxu0 0.0
    %3576 = vmatmul.mubr.f32.gmra.mxu0 %v2438
    %v3577 = vpop.f32.mrf.mxu0
    %v3578 = vadd.f32 %v3193, %v3577
    %v3579 = vpop.f32.mrf.mxu0
    %3580 = vmatprep.mubr.f32.mxu0 0.0
    %3581 = vmatmul.mubr.f32.gmra.mxu0 %v2441
    %v3582 = vpop.f32.mrf.mxu0
    %v3583 = vadd.f32 %v3198, %v3582
    %v3584 = vpop.f32.mrf.mxu0
    %3585 = vmatprep.mubr.f32.mxu0 0.0
    %3586 = vmatmul.mubr.f32.gmra.mxu0 %v2444
    %v3587 = vpop.f32.mrf.mxu0
    %v3588 = vadd.f32 %v3203, %v3587
    %v3589 = vpop.f32.mrf.mxu0
    %3590 = vmatprep.mubr.f32.mxu0 0.0
    %3591 = vmatmul.mubr.f32.gmra.mxu0 %v2447
    %v3592 = vpop.f32.mrf.mxu0
    %v3593 = vadd.f32 %v3208, %v3592
    %v3594 = vpop.f32.mrf.mxu0
    %3595 = vmatprep.mubr.f32.mxu0 0.0
    %3596 = vmatmul.mubr.f32.gmra.mxu0 %v2450
    %v3597 = vpop.f32.mrf.mxu0
    %v3598 = vadd.f32 %v3213, %v3597
    %v3599 = vpop.f32.mrf.mxu0
    %3600 = vmatprep.mubr.f32.mxu0 0.0
    %3601 = vmatmul.mubr.f32.gmra.mxu0 %v2453
    %v3602 = vpop.f32.mrf.mxu0
    %v3603 = vadd.f32 %v3218, %v3602
    %v3604 = vpop.f32.mrf.mxu0
    %3605 = vmatprep.mubr.f32.mxu0 0.0
    %3606 = vmatmul.mubr.f32.gmra.mxu0 %v2456
    %v3607 = vpop.f32.mrf.mxu0
    %v3608 = vadd.f32 %v3223, %v3607
    %v3609 = vpop.f32.mrf.mxu0
    %3610 = vmatprep.mubr.f32.mxu0 0.0
    %3611 = vmatmul.mubr.f32.gmra.mxu0 %v2459
    %v3612 = vpop.f32.mrf.mxu0
    %v3613 = vadd.f32 %v3228, %v3612
    %v3614 = vpop.f32.mrf.mxu0
    %3615 = vdwg.mxu0
    %v3616 = vmax.f32 %v3298, 0.0
    %v3617 = vmax.f32 %v3303, 0.0
    %v3618 = vmax.f32 %v3308, 0.0
    %v3619 = vmax.f32 %v3313, 0.0
    %v3620 = vmax.f32 %v3318, 0.0
    %v3621 = vmax.f32 %v3323, 0.0
    %v3622 = vmax.f32 %v3328, 0.0
    %v3623 = vmax.f32 %v3333, 0.0
    %v3624 = vmax.f32 %v3338, 0.0
    %v3625 = vmax.f32 %v3343, 0.0
    %v3626 = vmax.f32 %v3348, 0.0
    %v3627 = vmax.f32 %v3353, 0.0
    %v3628 = vmax.f32 %v3358, 0.0
    %v3629 = vmax.f32 %v3363, 0.0
    %v3630 = vmax.f32 %v3368, 0.0
    %v3631 = vmax.f32 %v3373, 0.0
    %v3632 = vmax.f32 %v3378, 0.0
    %v3633 = vmax.f32 %v3383, 0.0
    %v3634 = vmax.f32 %v3388, 0.0
    %v3635 = vmax.f32 %v3393, 0.0
    %v3636 = vmax.f32 %v3398, 0.0
    %v3637 = vmax.f32 %v3403, 0.0
    %v3638 = vmax.f32 %v3408, 0.0
    %v3639 = vmax.f32 %v3413, 0.0
    %v3640 = vmax.f32 %v3418, 0.0
    %v3641 = vmax.f32 %v3423, 0.0
    %v3642 = vmax.f32 %v3428, 0.0
    %v3643 = vmax.f32 %v3433, 0.0
    %v3644 = vmax.f32 %v3438, 0.0
    %v3645 = vmax.f32 %v3443, 0.0
    %v3646 = vmax.f32 %v3448, 0.0
    %v3647 = vmax.f32 %v3453, 0.0
    %v3648 = vmax.f32 %v3458, 0.0
    %v3649 = vmax.f32 %v3463, 0.0
    %v3650 = vmax.f32 %v3468, 0.0
    %v3651 = vmax.f32 %v3473, 0.0
    %v3652 = vmax.f32 %v3478, 0.0
    %v3653 = vmax.f32 %v3483, 0.0
    %v3654 = vmax.f32 %v3488, 0.0
    %v3655 = vmax.f32 %v3493, 0.0
    %v3656 = vmax.f32 %v3498, 0.0
    %v3657 = vmax.f32 %v3503, 0.0
    %v3658 = vmax.f32 %v3508, 0.0
    %v3659 = vmax.f32 %v3513, 0.0
    %v3660 = vmax.f32 %v3518, 0.0
    %v3661 = vmax.f32 %v3523, 0.0
    %v3662 = vmax.f32 %v3528, 0.0
    %v3663 = vmax.f32 %v3533, 0.0
    %v3664 = vmax.f32 %v3538, 0.0
    %v3665 = vmax.f32 %v3543, 0.0
    %v3666 = vmax.f32 %v3548, 0.0
    %v3667 = vmax.f32 %v3553, 0.0
    %v3668 = vmax.f32 %v3558, 0.0
    %v3669 = vmax.f32 %v3563, 0.0
    %v3670 = vmax.f32 %v3568, 0.0
    %v3671 = vmax.f32 %v3573, 0.0
    %v3672 = vmax.f32 %v3578, 0.0
    %v3673 = vmax.f32 %v3583, 0.0
    %v3674 = vmax.f32 %v3588, 0.0
    %v3675 = vmax.f32 %v3593, 0.0
    %v3676 = vmax.f32 %v3598, 0.0
    %v3677 = vmax.f32 %v3603, 0.0
    %v3678 = vmax.f32 %v3608, 0.0
    %v3679 = vmax.f32 %v3613, 0.0
    %3680 = vst.msk [vmem:[%s341 + $0x1] sm:$0xff] %vm167, %v3616
    %3681 = vst.msk [vmem:[%s341 + $0x9] sm:$0xff] %vm167, %v3617
    %3682 = vst.msk [vmem:[%s341 + $0x19] sm:$0xff] %vm167, %v3618
    %3683 = vst.msk [vmem:[%s341 + $0x21] sm:$0xff] %vm167, %v3619
    %3684 = vst.msk [vmem:[%s341 + $0x31] sm:$0xff] %vm167, %v3620
    %3685 = vst.msk [vmem:[%s341 + $0x39] sm:$0xff] %vm167, %v3621
    %3686 = vst.msk [vmem:[%s341 + $0x49] sm:$0xff] %vm167, %v3622
    %3687 = vst.msk [vmem:[%s341 + $0x51] sm:$0xff] %vm167, %v3623
    %3688 = vst.msk [vmem:[%s341 + $0x61] sm:$0xff] %vm167, %v3624
    %3689 = vst.msk [vmem:[%s341 + $0x69] sm:$0xff] %vm167, %v3625
    %3690 = vst.msk [vmem:[%s341 + $0x79] sm:$0xff] %vm167, %v3626
    %3691 = vst.msk [vmem:[%s341 + $0x81] sm:$0xff] %vm167, %v3627
    %3692 = vst.msk [vmem:[%s341 + $0x91] sm:$0xff] %vm167, %v3628
    %3693 = vst.msk [vmem:[%s341 + $0x99] sm:$0xff] %vm167, %v3629
    %3694 = vst.msk [vmem:[%s341 + $0xa9] sm:$0xff] %vm167, %v3630
    %3695 = vst.msk [vmem:[%s341 + $0xb1] sm:$0xff] %vm167, %v3631
    %3696 = vst.msk [vmem:[%s341 + $0xc1] sm:$0xff] %vm167, %v3632
    %3697 = vst.msk [vmem:[%s341 + $0xc9] sm:$0xff] %vm167, %v3633
    %3698 = vst.msk [vmem:[%s341 + $0xd9] sm:$0xff] %vm167, %v3634
    %3699 = vst.msk [vmem:[%s341 + $0xe1] sm:$0xff] %vm167, %v3635
    %3700 = vst.msk [vmem:[%s341 + $0xf1] sm:$0xff] %vm167, %v3636
    %3701 = vst.msk [vmem:[%s341 + $0xf9] sm:$0xff] %vm167, %v3637
    %3702 = vst.msk [vmem:[%s341 + $0x109] sm:$0xff] %vm167, %v3638
    %3703 = vst.msk [vmem:[%s341 + $0x111] sm:$0xff] %vm167, %v3639
    %3704 = vst.msk [vmem:[%s341 + $0x121] sm:$0xff] %vm167, %v3640
    %3705 = vst.msk [vmem:[%s341 + $0x129] sm:$0xff] %vm167, %v3641
    %3706 = vst.msk [vmem:[%s341 + $0x139] sm:$0xff] %vm167, %v3642
    %3707 = vst.msk [vmem:[%s341 + $0x141] sm:$0xff] %vm167, %v3643
    %3708 = vst.msk [vmem:[%s341 + $0x151] sm:$0xff] %vm167, %v3644
    %3709 = vst.msk [vmem:[%s341 + $0x159] sm:$0xff] %vm167, %v3645
    %3710 = vst.msk [vmem:[%s341 + $0x169] sm:$0xff] %vm167, %v3646
    %3711 = vst.msk [vmem:[%s341 + $0x171] sm:$0xff] %vm167, %v3647
    %3712 = vst.msk [vmem:[%s341 + $0x1b1] sm:$0xff] %vm167, %v3648
    %3713 = vst.msk [vmem:[%s341 + $0x1b9] sm:$0xff] %vm167, %v3649
    %3714 = vst.msk [vmem:[%s341 + $0x1c9] sm:$0xff] %vm167, %v3650
    %3715 = vst.msk [vmem:[%s341 + $0x1d1] sm:$0xff] %vm167, %v3651
    %3716 = vst.msk [vmem:[%s341 + $0x1e1] sm:$0xff] %vm167, %v3652
    %3717 = vst.msk [vmem:[%s341 + $0x1e9] sm:$0xff] %vm167, %v3653
    %3718 = vst.msk [vmem:[%s341 + $0x1f9] sm:$0xff] %vm167, %v3654
    %3719 = vst.msk [vmem:[%s341 + $0x201] sm:$0xff] %vm167, %v3655
    %3720 = vst.msk [vmem:[%s341 + $0x211] sm:$0xff] %vm167, %v3656
    %3721 = vst.msk [vmem:[%s341 + $0x219] sm:$0xff] %vm167, %v3657
    %3722 = vst.msk [vmem:[%s341 + $0x229] sm:$0xff] %vm167, %v3658
    %3723 = vst.msk [vmem:[%s341 + $0x231] sm:$0xff] %vm167, %v3659
    %3724 = vst.msk [vmem:[%s341 + $0x241] sm:$0xff] %vm167, %v3660
    %3725 = vst.msk [vmem:[%s341 + $0x249] sm:$0xff] %vm167, %v3661
    %3726 = vst.msk [vmem:[%s341 + $0x259] sm:$0xff] %vm167, %v3662
    %3727 = vst.msk [vmem:[%s341 + $0x261] sm:$0xff] %vm167, %v3663
    %3728 = vst.msk [vmem:[%s341 + $0x271] sm:$0xff] %vm167, %v3664
    %3729 = vst.msk [vmem:[%s341 + $0x279] sm:$0xff] %vm167, %v3665
    %3730 = vst.msk [vmem:[%s341 + $0x289] sm:$0xff] %vm167, %v3666
    %3731 = vst.msk [vmem:[%s341 + $0x291] sm:$0xff] %vm167, %v3667
    %3732 = vst.msk [vmem:[%s341 + $0x2a1] sm:$0xff] %vm167, %v3668
    %3733 = vst.msk [vmem:[%s341 + $0x2a9] sm:$0xff] %vm167, %v3669
    %3734 = vst.msk [vmem:[%s341 + $0x2b9] sm:$0xff] %vm167, %v3670
    %3735 = vst.msk [vmem:[%s341 + $0x2c1] sm:$0xff] %vm167, %v3671
    %3736 = vst.msk [vmem:[%s341 + $0x2d1] sm:$0xff] %vm167, %v3672
    %3737 = vst.msk [vmem:[%s341 + $0x2d9] sm:$0xff] %vm167, %v3673
    %3738 = vst.msk [vmem:[%s341 + $0x2e9] sm:$0xff] %vm167, %v3674
    %3739 = vst.msk [vmem:[%s341 + $0x2f1] sm:$0xff] %vm167, %v3675
    %3740 = vst.msk [vmem:[%s341 + $0x301] sm:$0xff] %vm167, %v3676
    %3741 = vst.msk [vmem:[%s341 + $0x309] sm:$0xff] %vm167, %v3677
    %3742 = vst.msk [vmem:[%s341 + $0x319] sm:$0xff] %vm167, %v3678
    %3743 = vst.msk [vmem:[%s341 + $0x321] sm:$0xff] %vm167, %v3679
    %v3744 = vld [vmem:[#allocation2] sm:$0xff]
    %v3745 = vld [vmem:[#allocation2 + $0x8] sm:$0xff]
    %v3746 = vld [vmem:[#allocation2 + $0x18] sm:$0xff]
    %v3747 = vld [vmem:[#allocation2 + $0x20] sm:$0xff]
    %v3748 = vld [vmem:[#allocation2 + $0x30] sm:$0xff]
    %v3749 = vld [vmem:[#allocation2 + $0x38] sm:$0xff]
    %v3750 = vld [vmem:[#allocation2 + $0x48] sm:$0xff]
    %v3751 = vld [vmem:[#allocation2 + $0x50] sm:$0xff]
    %v3752 = vld [vmem:[#allocation2 + $0x60] sm:$0xff]
    %v3753 = vld [vmem:[#allocation2 + $0x68] sm:$0xff]
    %v3754 = vld [vmem:[#allocation2 + $0x78] sm:$0xff]
    %v3755 = vld [vmem:[#allocation2 + $0x80] sm:$0xff]
    %v3756 = vld [vmem:[#allocation2 + $0x90] sm:$0xff]
    %v3757 = vld [vmem:[#allocation2 + $0x98] sm:$0xff]
    %v3758 = vld [vmem:[#allocation2 + $0xa8] sm:$0xff]
    %v3759 = vld [vmem:[#allocation2 + $0xb0] sm:$0xff]
    %v3760 = vld [vmem:[#allocation2 + $0xc0] sm:$0xff]
    %v3761 = vld [vmem:[#allocation2 + $0xc8] sm:$0xff]
    %v3762 = vld [vmem:[#allocation2 + $0xd8] sm:$0xff]
    %v3763 = vld [vmem:[#allocation2 + $0xe0] sm:$0xff]
    %v3764 = vld [vmem:[#allocation2 + $0xf0] sm:$0xff]
    %v3765 = vld [vmem:[#allocation2 + $0xf8] sm:$0xff]
    %v3766 = vld [vmem:[#allocation2 + $0x108] sm:$0xff]
    %v3767 = vld [vmem:[#allocation2 + $0x110] sm:$0xff]
    %v3768 = vld [vmem:[#allocation2 + $0x120] sm:$0xff]
    %v3769 = vld [vmem:[#allocation2 + $0x128] sm:$0xff]
    %v3770 = vld [vmem:[#allocation2 + $0x138] sm:$0xff]
    %v3771 = vld [vmem:[#allocation2 + $0x140] sm:$0xff]
    %v3772 = vld [vmem:[#allocation2 + $0x150] sm:$0xff]
    %v3773 = vld [vmem:[#allocation2 + $0x158] sm:$0xff]
    %v3774 = vld [vmem:[#allocation2 + $0x168] sm:$0xff]
    %v3775 = vld [vmem:[#allocation2 + $0x170] sm:$0xff]
    %v3776 = vld [vmem:[#allocation2 + $0x1b0] sm:$0xff]
    %v3777 = vld [vmem:[#allocation2 + $0x1b8] sm:$0xff]
    %v3778 = vld [vmem:[#allocation2 + $0x1c8] sm:$0xff]
    %v3779 = vld [vmem:[#allocation2 + $0x1d0] sm:$0xff]
    %v3780 = vld [vmem:[#allocation2 + $0x1e0] sm:$0xff]
    %v3781 = vld [vmem:[#allocation2 + $0x1e8] sm:$0xff]
    %v3782 = vld [vmem:[#allocation2 + $0x1f8] sm:$0xff]
    %v3783 = vld [vmem:[#allocation2 + $0x200] sm:$0xff]
    %v3784 = vld [vmem:[#allocation2 + $0x210] sm:$0xff]
    %v3785 = vld [vmem:[#allocation2 + $0x218] sm:$0xff]
    %v3786 = vld [vmem:[#allocation2 + $0x228] sm:$0xff]
    %v3787 = vld [vmem:[#allocation2 + $0x230] sm:$0xff]
    %v3788 = vld [vmem:[#allocation2 + $0x240] sm:$0xff]
    %v3789 = vld [vmem:[#allocation2 + $0x248] sm:$0xff]
    %v3790 = vld [vmem:[#allocation2 + $0x258] sm:$0xff]
    %v3791 = vld [vmem:[#allocation2 + $0x260] sm:$0xff]
    %v3792 = vld [vmem:[#allocation2 + $0x270] sm:$0xff]
    %v3793 = vld [vmem:[#allocation2 + $0x278] sm:$0xff]
    %v3794 = vld [vmem:[#allocation2 + $0x288] sm:$0xff]
    %v3795 = vld [vmem:[#allocation2 + $0x290] sm:$0xff]
    %v3796 = vld [vmem:[#allocation2 + $0x2a0] sm:$0xff]
    %v3797 = vld [vmem:[#allocation2 + $0x2a8] sm:$0xff]
    %v3798 = vld [vmem:[#allocation2 + $0x2b8] sm:$0xff]
    %v3799 = vld [vmem:[#allocation2 + $0x2c0] sm:$0xff]
    %v3800 = vld [vmem:[#allocation2 + $0x2d0] sm:$0xff]
    %v3801 = vld [vmem:[#allocation2 + $0x2d8] sm:$0xff]
    %v3802 = vld [vmem:[#allocation2 + $0x2e8] sm:$0xff]
    %v3803 = vld [vmem:[#allocation2 + $0x2f0] sm:$0xff]
    %v3804 = vld [vmem:[#allocation2 + $0x300] sm:$0xff]
    %v3805 = vld [vmem:[#allocation2 + $0x308] sm:$0xff]
    %v3806 = vld [vmem:[#allocation2 + $0x318] sm:$0xff]
    %v3807 = vld [vmem:[#allocation2 + $0x320] sm:$0xff]
    %v3808 = vld [vmem:[#allocation2 + $0x1] sm:$0xff]
    %v3809 = vld [vmem:[#allocation2 + $0x9] sm:$0xff]
    %v3810 = vld [vmem:[#allocation2 + $0x19] sm:$0xff]
    %v3811 = vld [vmem:[#allocation2 + $0x21] sm:$0xff]
    %v3812 = vld [vmem:[#allocation2 + $0x31] sm:$0xff]
    %v3813 = vld [vmem:[#allocation2 + $0x39] sm:$0xff]
    %v3814 = vld [vmem:[#allocation2 + $0x49] sm:$0xff]
    %v3815 = vld [vmem:[#allocation2 + $0x51] sm:$0xff]
    %v3816 = vld [vmem:[#allocation2 + $0x61] sm:$0xff]
    %v3817 = vld [vmem:[#allocation2 + $0x69] sm:$0xff]
    %v3818 = vld [vmem:[#allocation2 + $0x79] sm:$0xff]
    %v3819 = vld [vmem:[#allocation2 + $0x81] sm:$0xff]
    %v3820 = vld [vmem:[#allocation2 + $0x91] sm:$0xff]
    %v3821 = vld [vmem:[#allocation2 + $0x99] sm:$0xff]
    %v3822 = vld [vmem:[#allocation2 + $0xa9] sm:$0xff]
    %v3823 = vld [vmem:[#allocation2 + $0xb1] sm:$0xff]
    %v3824 = vld [vmem:[#allocation2 + $0xc1] sm:$0xff]
    %v3825 = vld [vmem:[#allocation2 + $0xc9] sm:$0xff]
    %v3826 = vld [vmem:[#allocation2 + $0xd9] sm:$0xff]
    %v3827 = vld [vmem:[#allocation2 + $0xe1] sm:$0xff]
    %v3828 = vld [vmem:[#allocation2 + $0xf1] sm:$0xff]
    %v3829 = vld [vmem:[#allocation2 + $0xf9] sm:$0xff]
    %v3830 = vld [vmem:[#allocation2 + $0x109] sm:$0xff]
    %v3831 = vld [vmem:[#allocation2 + $0x111] sm:$0xff]
    %v3832 = vld [vmem:[#allocation2 + $0x121] sm:$0xff]
    %v3833 = vld [vmem:[#allocation2 + $0x129] sm:$0xff]
    %v3834 = vld [vmem:[#allocation2 + $0x139] sm:$0xff]
    %v3835 = vld [vmem:[#allocation2 + $0x141] sm:$0xff]
    %v3836 = vld [vmem:[#allocation2 + $0x151] sm:$0xff]
    %v3837 = vld [vmem:[#allocation2 + $0x159] sm:$0xff]
    %v3838 = vld [vmem:[#allocation2 + $0x169] sm:$0xff]
    %v3839 = vld [vmem:[#allocation2 + $0x171] sm:$0xff]
    %v3840 = vld [vmem:[#allocation2 + $0x1b1] sm:$0xff]
    %v3841 = vld [vmem:[#allocation2 + $0x1b9] sm:$0xff]
    %v3842 = vld [vmem:[#allocation2 + $0x1c9] sm:$0xff]
    %v3843 = vld [vmem:[#allocation2 + $0x1d1] sm:$0xff]
    %v3844 = vld [vmem:[#allocation2 + $0x1e1] sm:$0xff]
    %v3845 = vld [vmem:[#allocation2 + $0x1e9] sm:$0xff]
    %v3846 = vld [vmem:[#allocation2 + $0x1f9] sm:$0xff]
    %v3847 = vld [vmem:[#allocation2 + $0x201] sm:$0xff]
    %v3848 = vld [vmem:[#allocation2 + $0x211] sm:$0xff]
    %v3849 = vld [vmem:[#allocation2 + $0x219] sm:$0xff]
    %v3850 = vld [vmem:[#allocation2 + $0x229] sm:$0xff]
    %v3851 = vld [vmem:[#allocation2 + $0x231] sm:$0xff]
    %v3852 = vld [vmem:[#allocation2 + $0x241] sm:$0xff]
    %v3853 = vld [vmem:[#allocation2 + $0x249] sm:$0xff]
    %v3854 = vld [vmem:[#allocation2 + $0x259] sm:$0xff]
    %v3855 = vld [vmem:[#allocation2 + $0x261] sm:$0xff]
    %v3856 = vld [vmem:[#allocation2 + $0x271] sm:$0xff]
    %v3857 = vld [vmem:[#allocation2 + $0x279] sm:$0xff]
    %v3858 = vld [vmem:[#allocation2 + $0x289] sm:$0xff]
    %v3859 = vld [vmem:[#allocation2 + $0x291] sm:$0xff]
    %v3860 = vld [vmem:[#allocation2 + $0x2a1] sm:$0xff]
    %v3861 = vld [vmem:[#allocation2 + $0x2a9] sm:$0xff]
    %v3862 = vld [vmem:[#allocation2 + $0x2b9] sm:$0xff]
    %v3863 = vld [vmem:[#allocation2 + $0x2c1] sm:$0xff]
    %v3864 = vld [vmem:[#allocation2 + $0x2d1] sm:$0xff]
    %v3865 = vld [vmem:[#allocation2 + $0x2d9] sm:$0xff]
    %v3866 = vld [vmem:[#allocation2 + $0x2e9] sm:$0xff]
    %v3867 = vld [vmem:[#allocation2 + $0x2f1] sm:$0xff]
    %v3868 = vld [vmem:[#allocation2 + $0x301] sm:$0xff]
    %v3869 = vld [vmem:[#allocation2 + $0x309] sm:$0xff]
    %v3870 = vld [vmem:[#allocation2 + $0x319] sm:$0xff]
    %v3871 = vld [vmem:[#allocation2 + $0x321] sm:$0xff]
    %v3872 = vld [vmem:[#allocation2 + $0x2] sm:$0xff]
    %v3873 = vld [vmem:[#allocation2 + $0xa] sm:$0xff]
    %v3874 = vld [vmem:[#allocation2 + $0x1a] sm:$0xff]
    %v3875 = vld [vmem:[#allocation2 + $0x22] sm:$0xff]
    %v3876 = vld [vmem:[#allocation2 + $0x32] sm:$0xff]
    %v3877 = vld [vmem:[#allocation2 + $0x3a] sm:$0xff]
    %v3878 = vld [vmem:[#allocation2 + $0x4a] sm:$0xff]
    %v3879 = vld [vmem:[#allocation2 + $0x52] sm:$0xff]
    %v3880 = vld [vmem:[#allocation2 + $0x62] sm:$0xff]
    %v3881 = vld [vmem:[#allocation2 + $0x6a] sm:$0xff]
    %v3882 = vld [vmem:[#allocation2 + $0x7a] sm:$0xff]
    %v3883 = vld [vmem:[#allocation2 + $0x82] sm:$0xff]
    %v3884 = vld [vmem:[#allocation2 + $0x92] sm:$0xff]
    %v3885 = vld [vmem:[#allocation2 + $0x9a] sm:$0xff]
    %v3886 = vld [vmem:[#allocation2 + $0xaa] sm:$0xff]
    %v3887 = vld [vmem:[#allocation2 + $0xb2] sm:$0xff]
    %v3888 = vld [vmem:[#allocation2 + $0xc2] sm:$0xff]
    %v3889 = vld [vmem:[#allocation2 + $0xca] sm:$0xff]
    %v3890 = vld [vmem:[#allocation2 + $0xda] sm:$0xff]
    %v3891 = vld [vmem:[#allocation2 + $0xe2] sm:$0xff]
    %v3892 = vld [vmem:[#allocation2 + $0xf2] sm:$0xff]
    %v3893 = vld [vmem:[#allocation2 + $0xfa] sm:$0xff]
    %v3894 = vld [vmem:[#allocation2 + $0x10a] sm:$0xff]
    %v3895 = vld [vmem:[#allocation2 + $0x112] sm:$0xff]
    %v3896 = vld [vmem:[#allocation2 + $0x122] sm:$0xff]
    %v3897 = vld [vmem:[#allocation2 + $0x12a] sm:$0xff]
    %v3898 = vld [vmem:[#allocation2 + $0x13a] sm:$0xff]
    %v3899 = vld [vmem:[#allocation2 + $0x142] sm:$0xff]
    %v3900 = vld [vmem:[#allocation2 + $0x152] sm:$0xff]
    %v3901 = vld [vmem:[#allocation2 + $0x15a] sm:$0xff]
    %v3902 = vld [vmem:[#allocation2 + $0x16a] sm:$0xff]
    %v3903 = vld [vmem:[#allocation2 + $0x172] sm:$0xff]
    %v3904 = vld [vmem:[#allocation2 + $0x1b2] sm:$0xff]
    %v3905 = vld [vmem:[#allocation2 + $0x1ba] sm:$0xff]
    %v3906 = vld [vmem:[#allocation2 + $0x1ca] sm:$0xff]
    %v3907 = vld [vmem:[#allocation2 + $0x1d2] sm:$0xff]
    %v3908 = vld [vmem:[#allocation2 + $0x1e2] sm:$0xff]
    %v3909 = vld [vmem:[#allocation2 + $0x1ea] sm:$0xff]
    %v3910 = vld [vmem:[#allocation2 + $0x1fa] sm:$0xff]
    %v3911 = vld [vmem:[#allocation2 + $0x202] sm:$0xff]
    %v3912 = vld [vmem:[#allocation2 + $0x212] sm:$0xff]
    %v3913 = vld [vmem:[#allocation2 + $0x21a] sm:$0xff]
    %v3914 = vld [vmem:[#allocation2 + $0x22a] sm:$0xff]
    %v3915 = vld [vmem:[#allocation2 + $0x232] sm:$0xff]
    %v3916 = vld [vmem:[#allocation2 + $0x242] sm:$0xff]
    %v3917 = vld [vmem:[#allocation2 + $0x24a] sm:$0xff]
    %v3918 = vld [vmem:[#allocation2 + $0x25a] sm:$0xff]
    %v3919 = vld [vmem:[#allocation2 + $0x262] sm:$0xff]
    %v3920 = vld [vmem:[#allocation2 + $0x272] sm:$0xff]
    %v3921 = vld [vmem:[#allocation2 + $0x27a] sm:$0xff]
    %v3922 = vld [vmem:[#allocation2 + $0x28a] sm:$0xff]
    %v3923 = vld [vmem:[#allocation2 + $0x292] sm:$0xff]
    %v3924 = vld [vmem:[#allocation2 + $0x2a2] sm:$0xff]
    %v3925 = vld [vmem:[#allocation2 + $0x2aa] sm:$0xff]
    %v3926 = vld [vmem:[#allocation2 + $0x2ba] sm:$0xff]
    %v3927 = vld [vmem:[#allocation2 + $0x2c2] sm:$0xff]
    %v3928 = vld [vmem:[#allocation2 + $0x2d2] sm:$0xff]
    %v3929 = vld [vmem:[#allocation2 + $0x2da] sm:$0xff]
    %v3930 = vld [vmem:[#allocation2 + $0x2ea] sm:$0xff]
    %v3931 = vld [vmem:[#allocation2 + $0x2f2] sm:$0xff]
    %v3932 = vld [vmem:[#allocation2 + $0x302] sm:$0xff]
    %v3933 = vld [vmem:[#allocation2 + $0x30a] sm:$0xff]
    %v3934 = vld [vmem:[#allocation2 + $0x31a] sm:$0xff]
    %v3935 = vld [vmem:[#allocation2 + $0x322] sm:$0xff]
    %v3936 = vld [vmem:[%s341] sm:$0xff]
    %v3937 = vld [vmem:[%s341 + $0x8] sm:$0xff]
    %v3938 = vld [vmem:[%s341 + $0x18] sm:$0xff]
    %v3939 = vld [vmem:[%s341 + $0x20] sm:$0xff]
    %v3940 = vld [vmem:[%s341 + $0x30] sm:$0xff]
    %v3941 = vld [vmem:[%s341 + $0x38] sm:$0xff]
    %v3942 = vld [vmem:[%s341 + $0x48] sm:$0xff]
    %v3943 = vld [vmem:[%s341 + $0x50] sm:$0xff]
    %v3944 = vld [vmem:[%s341 + $0x60] sm:$0xff]
    %v3945 = vld [vmem:[%s341 + $0x68] sm:$0xff]
    %v3946 = vld [vmem:[%s341 + $0x78] sm:$0xff]
    %v3947 = vld [vmem:[%s341 + $0x80] sm:$0xff]
    %v3948 = vld [vmem:[%s341 + $0x90] sm:$0xff]
    %v3949 = vld [vmem:[%s341 + $0x98] sm:$0xff]
    %v3950 = vld [vmem:[%s341 + $0xa8] sm:$0xff]
    %v3951 = vld [vmem:[%s341 + $0xb0] sm:$0xff]
    %v3952 = vld [vmem:[%s341 + $0xc0] sm:$0xff]
    %v3953 = vld [vmem:[%s341 + $0xc8] sm:$0xff]
    %v3954 = vld [vmem:[%s341 + $0xd8] sm:$0xff]
    %v3955 = vld [vmem:[%s341 + $0xe0] sm:$0xff]
    %v3956 = vld [vmem:[%s341 + $0xf0] sm:$0xff]
    %v3957 = vld [vmem:[%s341 + $0xf8] sm:$0xff]
    %v3958 = vld [vmem:[%s341 + $0x108] sm:$0xff]
    %v3959 = vld [vmem:[%s341 + $0x110] sm:$0xff]
    %v3960 = vld [vmem:[%s341 + $0x120] sm:$0xff]
    %v3961 = vld [vmem:[%s341 + $0x128] sm:$0xff]
    %v3962 = vld [vmem:[%s341 + $0x138] sm:$0xff]
    %v3963 = vld [vmem:[%s341 + $0x140] sm:$0xff]
    %v3964 = vld [vmem:[%s341 + $0x150] sm:$0xff]
    %v3965 = vld [vmem:[%s341 + $0x158] sm:$0xff]
    %v3966 = vld [vmem:[%s341 + $0x168] sm:$0xff]
    %v3967 = vld [vmem:[%s341 + $0x170] sm:$0xff]
    %v3968 = vld [vmem:[%s341 + $0x1b0] sm:$0xff]
    %v3969 = vld [vmem:[%s341 + $0x1b8] sm:$0xff]
    %v3970 = vld [vmem:[%s341 + $0x1c8] sm:$0xff]
    %v3971 = vld [vmem:[%s341 + $0x1d0] sm:$0xff]
    %v3972 = vld [vmem:[%s341 + $0x1e0] sm:$0xff]
    %v3973 = vld [vmem:[%s341 + $0x1e8] sm:$0xff]
    %v3974 = vld [vmem:[%s341 + $0x1f8] sm:$0xff]
    %v3975 = vld [vmem:[%s341 + $0x200] sm:$0xff]
    %v3976 = vld [vmem:[%s341 + $0x210] sm:$0xff]
    %v3977 = vld [vmem:[%s341 + $0x218] sm:$0xff]
    %v3978 = vld [vmem:[%s341 + $0x228] sm:$0xff]
    %v3979 = vld [vmem:[%s341 + $0x230] sm:$0xff]
    %v3980 = vld [vmem:[%s341 + $0x240] sm:$0xff]
    %v3981 = vld [vmem:[%s341 + $0x248] sm:$0xff]
    %v3982 = vld [vmem:[%s341 + $0x258] sm:$0xff]
    %v3983 = vld [vmem:[%s341 + $0x260] sm:$0xff]
    %v3984 = vld [vmem:[%s341 + $0x270] sm:$0xff]
    %v3985 = vld [vmem:[%s341 + $0x278] sm:$0xff]
    %v3986 = vld [vmem:[%s341 + $0x288] sm:$0xff]
    %v3987 = vld [vmem:[%s341 + $0x290] sm:$0xff]
    %v3988 = vld [vmem:[%s341 + $0x2a0] sm:$0xff]
    %v3989 = vld [vmem:[%s341 + $0x2a8] sm:$0xff]
    %v3990 = vld [vmem:[%s341 + $0x2b8] sm:$0xff]
    %v3991 = vld [vmem:[%s341 + $0x2c0] sm:$0xff]
    %v3992 = vld [vmem:[%s341 + $0x2d0] sm:$0xff]
    %v3993 = vld [vmem:[%s341 + $0x2d8] sm:$0xff]
    %v3994 = vld [vmem:[%s341 + $0x2e8] sm:$0xff]
    %v3995 = vld [vmem:[%s341 + $0x2f0] sm:$0xff]
    %v3996 = vld [vmem:[%s341 + $0x300] sm:$0xff]
    %v3997 = vld [vmem:[%s341 + $0x308] sm:$0xff]
    %v3998 = vld [vmem:[%s341 + $0x318] sm:$0xff]
    %v3999 = vld [vmem:[%s341 + $0x320] sm:$0xff]
    %v4000 = vld [vmem:[%s341 + $0x1] sm:$0xff]
    %v4001 = vld [vmem:[%s341 + $0x9] sm:$0xff]
    %v4002 = vld [vmem:[%s341 + $0x19] sm:$0xff]
    %v4003 = vld [vmem:[%s341 + $0x21] sm:$0xff]
    %v4004 = vld [vmem:[%s341 + $0x31] sm:$0xff]
    %v4005 = vld [vmem:[%s341 + $0x39] sm:$0xff]
    %v4006 = vld [vmem:[%s341 + $0x49] sm:$0xff]
    %v4007 = vld [vmem:[%s341 + $0x51] sm:$0xff]
    %v4008 = vld [vmem:[%s341 + $0x61] sm:$0xff]
    %v4009 = vld [vmem:[%s341 + $0x69] sm:$0xff]
    %v4010 = vld [vmem:[%s341 + $0x79] sm:$0xff]
    %v4011 = vld [vmem:[%s341 + $0x81] sm:$0xff]
    %v4012 = vld [vmem:[%s341 + $0x91] sm:$0xff]
    %v4013 = vld [vmem:[%s341 + $0x99] sm:$0xff]
    %v4014 = vld [vmem:[%s341 + $0xa9] sm:$0xff]
    %v4015 = vld [vmem:[%s341 + $0xb1] sm:$0xff]
    %v4016 = vld [vmem:[%s341 + $0xc1] sm:$0xff]
    %v4017 = vld [vmem:[%s341 + $0xc9] sm:$0xff]
    %v4018 = vld [vmem:[%s341 + $0xd9] sm:$0xff]
    %v4019 = vld [vmem:[%s341 + $0xe1] sm:$0xff]
    %v4020 = vld [vmem:[%s341 + $0xf1] sm:$0xff]
    %v4021 = vld [vmem:[%s341 + $0xf9] sm:$0xff]
    %v4022 = vld [vmem:[%s341 + $0x109] sm:$0xff]
    %v4023 = vld [vmem:[%s341 + $0x111] sm:$0xff]
    %v4024 = vld [vmem:[%s341 + $0x121] sm:$0xff]
    %v4025 = vld [vmem:[%s341 + $0x129] sm:$0xff]
    %v4026 = vld [vmem:[%s341 + $0x139] sm:$0xff]
    %v4027 = vld [vmem:[%s341 + $0x141] sm:$0xff]
    %v4028 = vld [vmem:[%s341 + $0x151] sm:$0xff]
    %v4029 = vld [vmem:[%s341 + $0x159] sm:$0xff]
    %v4030 = vld [vmem:[%s341 + $0x169] sm:$0xff]
    %v4031 = vld [vmem:[%s341 + $0x171] sm:$0xff]
    %v4032 = vld [vmem:[%s341 + $0x1b1] sm:$0xff]
    %v4033 = vld [vmem:[%s341 + $0x1b9] sm:$0xff]
    %v4034 = vld [vmem:[%s341 + $0x1c9] sm:$0xff]
    %v4035 = vld [vmem:[%s341 + $0x1d1] sm:$0xff]
    %v4036 = vld [vmem:[%s341 + $0x1e1] sm:$0xff]
    %v4037 = vld [vmem:[%s341 + $0x1e9] sm:$0xff]
    %v4038 = vld [vmem:[%s341 + $0x1f9] sm:$0xff]
    %v4039 = vld [vmem:[%s341 + $0x201] sm:$0xff]
    %v4040 = vld [vmem:[%s341 + $0x211] sm:$0xff]
    %v4041 = vld [vmem:[%s341 + $0x219] sm:$0xff]
    %v4042 = vld [vmem:[%s341 + $0x229] sm:$0xff]
    %v4043 = vld [vmem:[%s341 + $0x231] sm:$0xff]
    %v4044 = vld [vmem:[%s341 + $0x241] sm:$0xff]
    %v4045 = vld [vmem:[%s341 + $0x249] sm:$0xff]
    %v4046 = vld [vmem:[%s341 + $0x259] sm:$0xff]
    %v4047 = vld [vmem:[%s341 + $0x261] sm:$0xff]
    %v4048 = vld [vmem:[%s341 + $0x271] sm:$0xff]
    %v4049 = vld [vmem:[%s341 + $0x279] sm:$0xff]
    %v4050 = vld [vmem:[%s341 + $0x289] sm:$0xff]
    %v4051 = vld [vmem:[%s341 + $0x291] sm:$0xff]
    %v4052 = vld [vmem:[%s341 + $0x2a1] sm:$0xff]
    %v4053 = vld [vmem:[%s341 + $0x2a9] sm:$0xff]
    %v4054 = vld [vmem:[%s341 + $0x2b9] sm:$0xff]
    %v4055 = vld [vmem:[%s341 + $0x2c1] sm:$0xff]
    %v4056 = vld [vmem:[%s341 + $0x2d1] sm:$0xff]
    %v4057 = vld [vmem:[%s341 + $0x2d9] sm:$0xff]
    %v4058 = vld [vmem:[%s341 + $0x2e9] sm:$0xff]
    %v4059 = vld [vmem:[%s341 + $0x2f1] sm:$0xff]
    %v4060 = vld [vmem:[%s341 + $0x301] sm:$0xff]
    %v4061 = vld [vmem:[%s341 + $0x309] sm:$0xff]
    %v4062 = vld [vmem:[%s341 + $0x319] sm:$0xff]
    %v4063 = vld [vmem:[%s341 + $0x321] sm:$0xff]
    %v4064 = vld [vmem:[%s341 + $0x2] sm:$0xff]
    %v4065 = vld [vmem:[%s341 + $0xa] sm:$0xff]
    %v4066 = vld [vmem:[%s341 + $0x1a] sm:$0xff]
    %v4067 = vld [vmem:[%s341 + $0x22] sm:$0xff]
    %v4068 = vld [vmem:[%s341 + $0x32] sm:$0xff]
    %v4069 = vld [vmem:[%s341 + $0x3a] sm:$0xff]
    %v4070 = vld [vmem:[%s341 + $0x4a] sm:$0xff]
    %v4071 = vld [vmem:[%s341 + $0x52] sm:$0xff]
    %v4072 = vld [vmem:[%s341 + $0x62] sm:$0xff]
    %v4073 = vld [vmem:[%s341 + $0x6a] sm:$0xff]
    %v4074 = vld [vmem:[%s341 + $0x7a] sm:$0xff]
    %v4075 = vld [vmem:[%s341 + $0x82] sm:$0xff]
    %v4076 = vld [vmem:[%s341 + $0x92] sm:$0xff]
    %v4077 = vld [vmem:[%s341 + $0x9a] sm:$0xff]
    %v4078 = vld [vmem:[%s341 + $0xaa] sm:$0xff]
    %v4079 = vld [vmem:[%s341 + $0xb2] sm:$0xff]
    %v4080 = vld [vmem:[%s341 + $0xc2] sm:$0xff]
    %v4081 = vld [vmem:[%s341 + $0xca] sm:$0xff]
    %v4082 = vld [vmem:[%s341 + $0xda] sm:$0xff]
    %v4083 = vld [vmem:[%s341 + $0xe2] sm:$0xff]
    %v4084 = vld [vmem:[%s341 + $0xf2] sm:$0xff]
    %v4085 = vld [vmem:[%s341 + $0xfa] sm:$0xff]
    %v4086 = vld [vmem:[%s341 + $0x10a] sm:$0xff]
    %v4087 = vld [vmem:[%s341 + $0x112] sm:$0xff]
    %v4088 = vld [vmem:[%s341 + $0x122] sm:$0xff]
    %v4089 = vld [vmem:[%s341 + $0x12a] sm:$0xff]
    %v4090 = vld [vmem:[%s341 + $0x13a] sm:$0xff]
    %v4091 = vld [vmem:[%s341 + $0x142] sm:$0xff]
    %v4092 = vld [vmem:[%s341 + $0x152] sm:$0xff]
    %v4093 = vld [vmem:[%s341 + $0x15a] sm:$0xff]
    %v4094 = vld [vmem:[%s341 + $0x16a] sm:$0xff]
    %v4095 = vld [vmem:[%s341 + $0x172] sm:$0xff]
    %v4096 = vld [vmem:[%s341 + $0x1b2] sm:$0xff]
    %v4097 = vld [vmem:[%s341 + $0x1ba] sm:$0xff]
    %v4098 = vld [vmem:[%s341 + $0x1ca] sm:$0xff]
    %v4099 = vld [vmem:[%s341 + $0x1d2] sm:$0xff]
    %v4100 = vld [vmem:[%s341 + $0x1e2] sm:$0xff]
    %v4101 = vld [vmem:[%s341 + $0x1ea] sm:$0xff]
    %v4102 = vld [vmem:[%s341 + $0x1fa] sm:$0xff]
    %v4103 = vld [vmem:[%s341 + $0x202] sm:$0xff]
    %v4104 = vld [vmem:[%s341 + $0x212] sm:$0xff]
    %v4105 = vld [vmem:[%s341 + $0x21a] sm:$0xff]
    %v4106 = vld [vmem:[%s341 + $0x22a] sm:$0xff]
    %v4107 = vld [vmem:[%s341 + $0x232] sm:$0xff]
    %v4108 = vld [vmem:[%s341 + $0x242] sm:$0xff]
    %v4109 = vld [vmem:[%s341 + $0x24a] sm:$0xff]
    %v4110 = vld [vmem:[%s341 + $0x25a] sm:$0xff]
    %v4111 = vld [vmem:[%s341 + $0x262] sm:$0xff]
    %v4112 = vld [vmem:[%s341 + $0x272] sm:$0xff]
    %v4113 = vld [vmem:[%s341 + $0x27a] sm:$0xff]
    %v4114 = vld [vmem:[%s341 + $0x28a] sm:$0xff]
    %v4115 = vld [vmem:[%s341 + $0x292] sm:$0xff]
    %v4116 = vld [vmem:[%s341 + $0x2a2] sm:$0xff]
    %v4117 = vld [vmem:[%s341 + $0x2aa] sm:$0xff]
    %v4118 = vld [vmem:[%s341 + $0x2ba] sm:$0xff]
    %v4119 = vld [vmem:[%s341 + $0x2c2] sm:$0xff]
    %v4120 = vld [vmem:[%s341 + $0x2d2] sm:$0xff]
    %v4121 = vld [vmem:[%s341 + $0x2da] sm:$0xff]
    %v4122 = vld [vmem:[%s341 + $0x2ea] sm:$0xff]
    %v4123 = vld [vmem:[%s341 + $0x2f2] sm:$0xff]
    %v4124 = vld [vmem:[%s341 + $0x302] sm:$0xff]
    %v4125 = vld [vmem:[%s341 + $0x30a] sm:$0xff]
    %v4126 = vld [vmem:[%s341 + $0x31a] sm:$0xff]
    %v4127 = vld [vmem:[%s341 + $0x322] sm:$0xff]
    %v4128 = vld [vmem:[%s790] sm:$0xff]
    %v4129 = vld [vmem:[%s790 + $0x8] sm:$0xff]
    %v4130 = vld [vmem:[%s790 + $0x18] sm:$0xff]
    %v4131 = vld [vmem:[%s790 + $0x20] sm:$0xff]
    %v4132 = vld [vmem:[%s790 + $0x30] sm:$0xff]
    %v4133 = vld [vmem:[%s790 + $0x38] sm:$0xff]
    %v4134 = vld [vmem:[%s790 + $0x48] sm:$0xff]
    %v4135 = vld [vmem:[%s790 + $0x50] sm:$0xff]
    %v4136 = vld [vmem:[%s790 + $0x60] sm:$0xff]
    %v4137 = vld [vmem:[%s790 + $0x68] sm:$0xff]
    %v4138 = vld [vmem:[%s790 + $0x78] sm:$0xff]
    %v4139 = vld [vmem:[%s790 + $0x80] sm:$0xff]
    %v4140 = vld [vmem:[%s790 + $0x90] sm:$0xff]
    %v4141 = vld [vmem:[%s790 + $0x98] sm:$0xff]
    %v4142 = vld [vmem:[%s790 + $0xa8] sm:$0xff]
    %v4143 = vld [vmem:[%s790 + $0xb0] sm:$0xff]
    %v4144 = vld [vmem:[%s790 + $0xc0] sm:$0xff]
    %v4145 = vld [vmem:[%s790 + $0xc8] sm:$0xff]
    %v4146 = vld [vmem:[%s790 + $0xd8] sm:$0xff]
    %v4147 = vld [vmem:[%s790 + $0xe0] sm:$0xff]
    %v4148 = vld [vmem:[%s790 + $0xf0] sm:$0xff]
    %v4149 = vld [vmem:[%s790 + $0xf8] sm:$0xff]
    %v4150 = vld [vmem:[%s790 + $0x108] sm:$0xff]
    %v4151 = vld [vmem:[%s790 + $0x110] sm:$0xff]
    %v4152 = vld [vmem:[%s790 + $0x120] sm:$0xff]
    %v4153 = vld [vmem:[%s790 + $0x128] sm:$0xff]
    %v4154 = vld [vmem:[%s790 + $0x138] sm:$0xff]
    %v4155 = vld [vmem:[%s790 + $0x140] sm:$0xff]
    %v4156 = vld [vmem:[%s790 + $0x150] sm:$0xff]
    %v4157 = vld [vmem:[%s790 + $0x158] sm:$0xff]
    %v4158 = vld [vmem:[%s790 + $0x168] sm:$0xff]
    %v4159 = vld [vmem:[%s790 + $0x170] sm:$0xff]
    %v4160 = vld [vmem:[%s790 + $0x1b0] sm:$0xff]
    %v4161 = vld [vmem:[%s790 + $0x1b8] sm:$0xff]
    %v4162 = vld [vmem:[%s790 + $0x1c8] sm:$0xff]
    %v4163 = vld [vmem:[%s790 + $0x1d0] sm:$0xff]
    %v4164 = vld [vmem:[%s790 + $0x1e0] sm:$0xff]
    %v4165 = vld [vmem:[%s790 + $0x1e8] sm:$0xff]
    %v4166 = vld [vmem:[%s790 + $0x1f8] sm:$0xff]
    %v4167 = vld [vmem:[%s790 + $0x200] sm:$0xff]
    %v4168 = vld [vmem:[%s790 + $0x210] sm:$0xff]
    %v4169 = vld [vmem:[%s790 + $0x218] sm:$0xff]
    %v4170 = vld [vmem:[%s790 + $0x228] sm:$0xff]
    %v4171 = vld [vmem:[%s790 + $0x230] sm:$0xff]
    %v4172 = vld [vmem:[%s790 + $0x240] sm:$0xff]
    %v4173 = vld [vmem:[%s790 + $0x248] sm:$0xff]
    %v4174 = vld [vmem:[%s790 + $0x258] sm:$0xff]
    %v4175 = vld [vmem:[%s790 + $0x260] sm:$0xff]
    %v4176 = vld [vmem:[%s790 + $0x270] sm:$0xff]
    %v4177 = vld [vmem:[%s790 + $0x278] sm:$0xff]
    %v4178 = vld [vmem:[%s790 + $0x288] sm:$0xff]
    %v4179 = vld [vmem:[%s790 + $0x290] sm:$0xff]
    %v4180 = vld [vmem:[%s790 + $0x2a0] sm:$0xff]
    %v4181 = vld [vmem:[%s790 + $0x2a8] sm:$0xff]
    %v4182 = vld [vmem:[%s790 + $0x2b8] sm:$0xff]
    %v4183 = vld [vmem:[%s790 + $0x2c0] sm:$0xff]
    %v4184 = vld [vmem:[%s790 + $0x2d0] sm:$0xff]
    %v4185 = vld [vmem:[%s790 + $0x2d8] sm:$0xff]
    %v4186 = vld [vmem:[%s790 + $0x2e8] sm:$0xff]
    %v4187 = vld [vmem:[%s790 + $0x2f0] sm:$0xff]
    %v4188 = vld [vmem:[%s790 + $0x300] sm:$0xff]
    %v4189 = vld [vmem:[%s790 + $0x308] sm:$0xff]
    %v4190 = vld [vmem:[%s790 + $0x318] sm:$0xff]
    %v4191 = vld [vmem:[%s790 + $0x320] sm:$0xff]
    %v4192 = vld [vmem:[%s790 + $0x1] sm:$0xff]
    %v4193 = vld [vmem:[%s790 + $0x9] sm:$0xff]
    %v4194 = vld [vmem:[%s790 + $0x19] sm:$0xff]
    %v4195 = vld [vmem:[%s790 + $0x21] sm:$0xff]
    %v4196 = vld [vmem:[%s790 + $0x31] sm:$0xff]
    %v4197 = vld [vmem:[%s790 + $0x39] sm:$0xff]
    %v4198 = vld [vmem:[%s790 + $0x49] sm:$0xff]
    %v4199 = vld [vmem:[%s790 + $0x51] sm:$0xff]
    %v4200 = vld [vmem:[%s790 + $0x61] sm:$0xff]
    %v4201 = vld [vmem:[%s790 + $0x69] sm:$0xff]
    %v4202 = vld [vmem:[%s790 + $0x79] sm:$0xff]
    %v4203 = vld [vmem:[%s790 + $0x81] sm:$0xff]
    %v4204 = vld [vmem:[%s790 + $0x91] sm:$0xff]
    %v4205 = vld [vmem:[%s790 + $0x99] sm:$0xff]
    %v4206 = vld [vmem:[%s790 + $0xa9] sm:$0xff]
    %v4207 = vld [vmem:[%s790 + $0xb1] sm:$0xff]
    %v4208 = vld [vmem:[%s790 + $0xc1] sm:$0xff]
    %v4209 = vld [vmem:[%s790 + $0xc9] sm:$0xff]
    %v4210 = vld [vmem:[%s790 + $0xd9] sm:$0xff]
    %v4211 = vld [vmem:[%s790 + $0xe1] sm:$0xff]
    %v4212 = vld [vmem:[%s790 + $0xf1] sm:$0xff]
    %v4213 = vld [vmem:[%s790 + $0xf9] sm:$0xff]
    %v4214 = vld [vmem:[%s790 + $0x109] sm:$0xff]
    %v4215 = vld [vmem:[%s790 + $0x111] sm:$0xff]
    %v4216 = vld [vmem:[%s790 + $0x121] sm:$0xff]
    %v4217 = vld [vmem:[%s790 + $0x129] sm:$0xff]
    %v4218 = vld [vmem:[%s790 + $0x139] sm:$0xff]
    %v4219 = vld [vmem:[%s790 + $0x141] sm:$0xff]
    %v4220 = vld [vmem:[%s790 + $0x151] sm:$0xff]
    %v4221 = vld [vmem:[%s790 + $0x159] sm:$0xff]
    %v4222 = vld [vmem:[%s790 + $0x169] sm:$0xff]
    %v4223 = vld [vmem:[%s790 + $0x171] sm:$0xff]
    %v4224 = vld [vmem:[%s790 + $0x1b1] sm:$0xff]
    %v4225 = vld [vmem:[%s790 + $0x1b9] sm:$0xff]
    %v4226 = vld [vmem:[%s790 + $0x1c9] sm:$0xff]
    %v4227 = vld [vmem:[%s790 + $0x1d1] sm:$0xff]
    %v4228 = vld [vmem:[%s790 + $0x1e1] sm:$0xff]
    %v4229 = vld [vmem:[%s790 + $0x1e9] sm:$0xff]
    %v4230 = vld [vmem:[%s790 + $0x1f9] sm:$0xff]
    %v4231 = vld [vmem:[%s790 + $0x201] sm:$0xff]
    %v4232 = vld [vmem:[%s790 + $0x211] sm:$0xff]
    %v4233 = vld [vmem:[%s790 + $0x219] sm:$0xff]
    %v4234 = vld [vmem:[%s790 + $0x229] sm:$0xff]
    %v4235 = vld [vmem:[%s790 + $0x231] sm:$0xff]
    %v4236 = vld [vmem:[%s790 + $0x241] sm:$0xff]
    %v4237 = vld [vmem:[%s790 + $0x249] sm:$0xff]
    %v4238 = vld [vmem:[%s790 + $0x259] sm:$0xff]
    %v4239 = vld [vmem:[%s790 + $0x261] sm:$0xff]
    %v4240 = vld [vmem:[%s790 + $0x271] sm:$0xff]
    %v4241 = vld [vmem:[%s790 + $0x279] sm:$0xff]
    %v4242 = vld [vmem:[%s790 + $0x289] sm:$0xff]
    %v4243 = vld [vmem:[%s790 + $0x291] sm:$0xff]
    %v4244 = vld [vmem:[%s790 + $0x2a1] sm:$0xff]
    %v4245 = vld [vmem:[%s790 + $0x2a9] sm:$0xff]
    %v4246 = vld [vmem:[%s790 + $0x2b9] sm:$0xff]
    %v4247 = vld [vmem:[%s790 + $0x2c1] sm:$0xff]
    %v4248 = vld [vmem:[%s790 + $0x2d1] sm:$0xff]
    %v4249 = vld [vmem:[%s790 + $0x2d9] sm:$0xff]
    %v4250 = vld [vmem:[%s790 + $0x2e9] sm:$0xff]
    %v4251 = vld [vmem:[%s790 + $0x2f1] sm:$0xff]
    %v4252 = vld [vmem:[%s790 + $0x301] sm:$0xff]
    %v4253 = vld [vmem:[%s790 + $0x309] sm:$0xff]
    %v4254 = vld [vmem:[%s790 + $0x319] sm:$0xff]
    %v4255 = vld [vmem:[%s790 + $0x321] sm:$0xff]
    %v4256 = vld [vmem:[%s790 + $0x2] sm:$0xff]
    %v4257 = vld [vmem:[%s790 + $0xa] sm:$0xff]
    %v4258 = vld [vmem:[%s790 + $0x1a] sm:$0xff]
    %v4259 = vld [vmem:[%s790 + $0x22] sm:$0xff]
    %v4260 = vld [vmem:[%s790 + $0x32] sm:$0xff]
    %v4261 = vld [vmem:[%s790 + $0x3a] sm:$0xff]
    %v4262 = vld [vmem:[%s790 + $0x4a] sm:$0xff]
    %v4263 = vld [vmem:[%s790 + $0x52] sm:$0xff]
    %v4264 = vld [vmem:[%s790 + $0x62] sm:$0xff]
    %v4265 = vld [vmem:[%s790 + $0x6a] sm:$0xff]
    %v4266 = vld [vmem:[%s790 + $0x7a] sm:$0xff]
    %v4267 = vld [vmem:[%s790 + $0x82] sm:$0xff]
    %v4268 = vld [vmem:[%s790 + $0x92] sm:$0xff]
    %v4269 = vld [vmem:[%s790 + $0x9a] sm:$0xff]
    %v4270 = vld [vmem:[%s790 + $0xaa] sm:$0xff]
    %v4271 = vld [vmem:[%s790 + $0xb2] sm:$0xff]
    %v4272 = vld [vmem:[%s790 + $0xc2] sm:$0xff]
    %v4273 = vld [vmem:[%s790 + $0xca] sm:$0xff]
    %v4274 = vld [vmem:[%s790 + $0xda] sm:$0xff]
    %v4275 = vld [vmem:[%s790 + $0xe2] sm:$0xff]
    %v4276 = vld [vmem:[%s790 + $0xf2] sm:$0xff]
    %v4277 = vld [vmem:[%s790 + $0xfa] sm:$0xff]
    %v4278 = vld [vmem:[%s790 + $0x10a] sm:$0xff]
    %v4279 = vld [vmem:[%s790 + $0x112] sm:$0xff]
    %v4280 = vld [vmem:[%s790 + $0x122] sm:$0xff]
    %v4281 = vld [vmem:[%s790 + $0x12a] sm:$0xff]
    %v4282 = vld [vmem:[%s790 + $0x13a] sm:$0xff]
    %v4283 = vld [vmem:[%s790 + $0x142] sm:$0xff]
    %v4284 = vld [vmem:[%s790 + $0x152] sm:$0xff]
    %v4285 = vld [vmem:[%s790 + $0x15a] sm:$0xff]
    %v4286 = vld [vmem:[%s790 + $0x16a] sm:$0xff]
    %v4287 = vld [vmem:[%s790 + $0x172] sm:$0xff]
    %v4288 = vld [vmem:[%s790 + $0x1b2] sm:$0xff]
    %v4289 = vld [vmem:[%s790 + $0x1ba] sm:$0xff]
    %v4290 = vld [vmem:[%s790 + $0x1ca] sm:$0xff]
    %v4291 = vld [vmem:[%s790 + $0x1d2] sm:$0xff]
    %v4292 = vld [vmem:[%s790 + $0x1e2] sm:$0xff]
    %v4293 = vld [vmem:[%s790 + $0x1ea] sm:$0xff]
    %v4294 = vld [vmem:[%s790 + $0x1fa] sm:$0xff]
    %v4295 = vld [vmem:[%s790 + $0x202] sm:$0xff]
    %v4296 = vld [vmem:[%s790 + $0x212] sm:$0xff]
    %v4297 = vld [vmem:[%s790 + $0x21a] sm:$0xff]
    %v4298 = vld [vmem:[%s790 + $0x22a] sm:$0xff]
    %v4299 = vld [vmem:[%s790 + $0x232] sm:$0xff]
    %v4300 = vld [vmem:[%s790 + $0x242] sm:$0xff]
    %v4301 = vld [vmem:[%s790 + $0x24a] sm:$0xff]
    %v4302 = vld [vmem:[%s790 + $0x25a] sm:$0xff]
    %v4303 = vld [vmem:[%s790 + $0x262] sm:$0xff]
    %v4304 = vld [vmem:[%s790 + $0x272] sm:$0xff]
    %v4305 = vld [vmem:[%s790 + $0x27a] sm:$0xff]
    %v4306 = vld [vmem:[%s790 + $0x28a] sm:$0xff]
    %v4307 = vld [vmem:[%s790 + $0x292] sm:$0xff]
    %v4308 = vld [vmem:[%s790 + $0x2a2] sm:$0xff]
    %v4309 = vld [vmem:[%s790 + $0x2aa] sm:$0xff]
    %v4310 = vld [vmem:[%s790 + $0x2ba] sm:$0xff]
    %v4311 = vld [vmem:[%s790 + $0x2c2] sm:$0xff]
    %v4312 = vld [vmem:[%s790 + $0x2d2] sm:$0xff]
    %v4313 = vld [vmem:[%s790 + $0x2da] sm:$0xff]
    %v4314 = vld [vmem:[%s790 + $0x2ea] sm:$0xff]
    %v4315 = vld [vmem:[%s790 + $0x2f2] sm:$0xff]
    %v4316 = vld [vmem:[%s790 + $0x302] sm:$0xff]
    %v4317 = vld [vmem:[%s790 + $0x30a] sm:$0xff]
    %v4318 = vld [vmem:[%s790 + $0x31a] sm:$0xff]
    %v4319 = vld [vmem:[%s790 + $0x322] sm:$0xff]
    %4384 = vrot.lane.b32.xlu0 %v3808, 64
    %v4385 = vpop.permute.xlu0 %4384
    %4386 = vrot.lane.b32.xlu0 %v3809, 64
    %v4387 = vpop.permute.xlu0 %4386
    %4388 = vrot.lane.b32.xlu0 %v3810, 64
    %v4389 = vpop.permute.xlu0 %4388
    %4390 = vrot.lane.b32.xlu0 %v3811, 64
    %v4391 = vpop.permute.xlu0 %4390
    %4392 = vrot.lane.b32.xlu0 %v3812, 64
    %v4393 = vpop.permute.xlu0 %4392
    %4394 = vrot.lane.b32.xlu0 %v3813, 64
    %v4395 = vpop.permute.xlu0 %4394
    %4396 = vrot.lane.b32.xlu0 %v3814, 64
    %v4397 = vpop.permute.xlu0 %4396
    %4398 = vrot.lane.b32.xlu0 %v3815, 64
    %v4399 = vpop.permute.xlu0 %4398
    %4400 = vrot.lane.b32.xlu0 %v3816, 64
    %v4401 = vpop.permute.xlu0 %4400
    %4402 = vrot.lane.b32.xlu0 %v3817, 64
    %v4403 = vpop.permute.xlu0 %4402
    %4404 = vrot.lane.b32.xlu0 %v3818, 64
    %v4405 = vpop.permute.xlu0 %4404
    %4406 = vrot.lane.b32.xlu0 %v3819, 64
    %v4407 = vpop.permute.xlu0 %4406
    %4408 = vrot.lane.b32.xlu0 %v3820, 64
    %v4409 = vpop.permute.xlu0 %4408
    %4410 = vrot.lane.b32.xlu0 %v3821, 64
    %v4411 = vpop.permute.xlu0 %4410
    %4412 = vrot.lane.b32.xlu0 %v3822, 64
    %v4413 = vpop.permute.xlu0 %4412
    %4414 = vrot.lane.b32.xlu0 %v3823, 64
    %v4415 = vpop.permute.xlu0 %4414
    %4416 = vrot.lane.b32.xlu0 %v3824, 64
    %v4417 = vpop.permute.xlu0 %4416
    %4418 = vrot.lane.b32.xlu0 %v3825, 64
    %v4419 = vpop.permute.xlu0 %4418
    %4420 = vrot.lane.b32.xlu0 %v3826, 64
    %v4421 = vpop.permute.xlu0 %4420
    %4422 = vrot.lane.b32.xlu0 %v3827, 64
    %v4423 = vpop.permute.xlu0 %4422
    %4424 = vrot.lane.b32.xlu0 %v3828, 64
    %v4425 = vpop.permute.xlu0 %4424
    %4426 = vrot.lane.b32.xlu0 %v3829, 64
    %v4427 = vpop.permute.xlu0 %4426
    %4428 = vrot.lane.b32.xlu0 %v3830, 64
    %v4429 = vpop.permute.xlu0 %4428
    %4430 = vrot.lane.b32.xlu0 %v3831, 64
    %v4431 = vpop.permute.xlu0 %4430
    %4432 = vrot.lane.b32.xlu0 %v3832, 64
    %v4433 = vpop.permute.xlu0 %4432
    %4434 = vrot.lane.b32.xlu0 %v3833, 64
    %v4435 = vpop.permute.xlu0 %4434
    %4436 = vrot.lane.b32.xlu0 %v3834, 64
    %v4437 = vpop.permute.xlu0 %4436
    %4438 = vrot.lane.b32.xlu0 %v3835, 64
    %v4439 = vpop.permute.xlu0 %4438
    %4440 = vrot.lane.b32.xlu0 %v3836, 64
    %v4441 = vpop.permute.xlu0 %4440
    %4442 = vrot.lane.b32.xlu0 %v3837, 64
    %v4443 = vpop.permute.xlu0 %4442
    %4444 = vrot.lane.b32.xlu0 %v3838, 64
    %v4445 = vpop.permute.xlu0 %4444
    %4446 = vrot.lane.b32.xlu0 %v3839, 64
    %v4447 = vpop.permute.xlu0 %4446
    %4448 = vrot.lane.b32.xlu0 %v3840, 64
    %v4449 = vpop.permute.xlu0 %4448
    %4450 = vrot.lane.b32.xlu0 %v3841, 64
    %v4451 = vpop.permute.xlu0 %4450
    %4452 = vrot.lane.b32.xlu0 %v3842, 64
    %v4453 = vpop.permute.xlu0 %4452
    %4454 = vrot.lane.b32.xlu0 %v3843, 64
    %v4455 = vpop.permute.xlu0 %4454
    %4456 = vrot.lane.b32.xlu0 %v3844, 64
    %v4457 = vpop.permute.xlu0 %4456
    %4458 = vrot.lane.b32.xlu0 %v3845, 64
    %v4459 = vpop.permute.xlu0 %4458
    %4460 = vrot.lane.b32.xlu0 %v3846, 64
    %v4461 = vpop.permute.xlu0 %4460
    %4462 = vrot.lane.b32.xlu0 %v3847, 64
    %v4463 = vpop.permute.xlu0 %4462
    %4464 = vrot.lane.b32.xlu0 %v3848, 64
    %v4465 = vpop.permute.xlu0 %4464
    %4466 = vrot.lane.b32.xlu0 %v3849, 64
    %v4467 = vpop.permute.xlu0 %4466
    %4468 = vrot.lane.b32.xlu0 %v3850, 64
    %v4469 = vpop.permute.xlu0 %4468
    %4470 = vrot.lane.b32.xlu0 %v3851, 64
    %v4471 = vpop.permute.xlu0 %4470
    %4472 = vrot.lane.b32.xlu0 %v3852, 64
    %v4473 = vpop.permute.xlu0 %4472
    %4474 = vrot.lane.b32.xlu0 %v3853, 64
    %v4475 = vpop.permute.xlu0 %4474
    %4476 = vrot.lane.b32.xlu0 %v3854, 64
    %v4477 = vpop.permute.xlu0 %4476
    %4478 = vrot.lane.b32.xlu0 %v3855, 64
    %v4479 = vpop.permute.xlu0 %4478
    %4480 = vrot.lane.b32.xlu0 %v3856, 64
    %v4481 = vpop.permute.xlu0 %4480
    %4482 = vrot.lane.b32.xlu0 %v3857, 64
    %v4483 = vpop.permute.xlu0 %4482
    %4484 = vrot.lane.b32.xlu0 %v3858, 64
    %v4485 = vpop.permute.xlu0 %4484
    %4486 = vrot.lane.b32.xlu0 %v3859, 64
    %v4487 = vpop.permute.xlu0 %4486
    %4488 = vrot.lane.b32.xlu0 %v3860, 64
    %v4489 = vpop.permute.xlu0 %4488
    %4490 = vrot.lane.b32.xlu0 %v3861, 64
    %v4491 = vpop.permute.xlu0 %4490
    %4492 = vrot.lane.b32.xlu0 %v3862, 64
    %v4493 = vpop.permute.xlu0 %4492
    %4494 = vrot.lane.b32.xlu0 %v3863, 64
    %v4495 = vpop.permute.xlu0 %4494
    %4496 = vrot.lane.b32.xlu0 %v3864, 64
    %v4497 = vpop.permute.xlu0 %4496
    %4498 = vrot.lane.b32.xlu0 %v3865, 64
    %v4499 = vpop.permute.xlu0 %4498
    %4500 = vrot.lane.b32.xlu0 %v3866, 64
    %v4501 = vpop.permute.xlu0 %4500
    %4502 = vrot.lane.b32.xlu0 %v3867, 64
    %v4503 = vpop.permute.xlu0 %4502
    %4504 = vrot.lane.b32.xlu0 %v3868, 64
    %v4505 = vpop.permute.xlu0 %4504
    %4506 = vrot.lane.b32.xlu0 %v3869, 64
    %v4507 = vpop.permute.xlu0 %4506
    %4508 = vrot.lane.b32.xlu0 %v3870, 64
    %v4509 = vpop.permute.xlu0 %4508
    %4510 = vrot.lane.b32.xlu0 %v3871, 64
    %v4511 = vpop.permute.xlu0 %4510
    %4640 = vrot.lane.b32.xlu0 %v3936, 64
    %v4641 = vpop.permute.xlu0 %4640
    %4642 = vrot.lane.b32.xlu0 %v3937, 64
    %v4643 = vpop.permute.xlu0 %4642
    %4644 = vrot.lane.b32.xlu0 %v3938, 64
    %v4645 = vpop.permute.xlu0 %4644
    %4646 = vrot.lane.b32.xlu0 %v3939, 64
    %v4647 = vpop.permute.xlu0 %4646
    %4648 = vrot.lane.b32.xlu0 %v3940, 64
    %v4649 = vpop.permute.xlu0 %4648
    %4650 = vrot.lane.b32.xlu0 %v3941, 64
    %v4651 = vpop.permute.xlu0 %4650
    %4652 = vrot.lane.b32.xlu0 %v3942, 64
    %v4653 = vpop.permute.xlu0 %4652
    %4654 = vrot.lane.b32.xlu0 %v3943, 64
    %v4655 = vpop.permute.xlu0 %4654
    %4656 = vrot.lane.b32.xlu0 %v3944, 64
    %v4657 = vpop.permute.xlu0 %4656
    %4658 = vrot.lane.b32.xlu0 %v3945, 64
    %v4659 = vpop.permute.xlu0 %4658
    %4660 = vrot.lane.b32.xlu0 %v3946, 64
    %v4661 = vpop.permute.xlu0 %4660
    %4662 = vrot.lane.b32.xlu0 %v3947, 64
    %v4663 = vpop.permute.xlu0 %4662
    %4664 = vrot.lane.b32.xlu0 %v3948, 64
    %v4665 = vpop.permute.xlu0 %4664
    %4666 = vrot.lane.b32.xlu0 %v3949, 64
    %v4667 = vpop.permute.xlu0 %4666
    %4668 = vrot.lane.b32.xlu0 %v3950, 64
    %v4669 = vpop.permute.xlu0 %4668
    %4670 = vrot.lane.b32.xlu0 %v3951, 64
    %v4671 = vpop.permute.xlu0 %4670
    %4672 = vrot.lane.b32.xlu0 %v3952, 64
    %v4673 = vpop.permute.xlu0 %4672
    %4674 = vrot.lane.b32.xlu0 %v3953, 64
    %v4675 = vpop.permute.xlu0 %4674
    %4676 = vrot.lane.b32.xlu0 %v3954, 64
    %v4677 = vpop.permute.xlu0 %4676
    %4678 = vrot.lane.b32.xlu0 %v3955, 64
    %v4679 = vpop.permute.xlu0 %4678
    %4680 = vrot.lane.b32.xlu0 %v3956, 64
    %v4681 = vpop.permute.xlu0 %4680
    %4682 = vrot.lane.b32.xlu0 %v3957, 64
    %v4683 = vpop.permute.xlu0 %4682
    %4684 = vrot.lane.b32.xlu0 %v3958, 64
    %v4685 = vpop.permute.xlu0 %4684
    %4686 = vrot.lane.b32.xlu0 %v3959, 64
    %v4687 = vpop.permute.xlu0 %4686
    %4688 = vrot.lane.b32.xlu0 %v3960, 64
    %v4689 = vpop.permute.xlu0 %4688
    %4690 = vrot.lane.b32.xlu0 %v3961, 64
    %v4691 = vpop.permute.xlu0 %4690
    %4692 = vrot.lane.b32.xlu0 %v3962, 64
    %v4693 = vpop.permute.xlu0 %4692
    %4694 = vrot.lane.b32.xlu0 %v3963, 64
    %v4695 = vpop.permute.xlu0 %4694
    %4696 = vrot.lane.b32.xlu0 %v3964, 64
    %v4697 = vpop.permute.xlu0 %4696
    %4698 = vrot.lane.b32.xlu0 %v3965, 64
    %v4699 = vpop.permute.xlu0 %4698
    %4700 = vrot.lane.b32.xlu0 %v3966, 64
    %v4701 = vpop.permute.xlu0 %4700
    %4702 = vrot.lane.b32.xlu0 %v3967, 64
    %v4703 = vpop.permute.xlu0 %4702
    %4704 = vrot.lane.b32.xlu0 %v3968, 64
    %v4705 = vpop.permute.xlu0 %4704
    %4706 = vrot.lane.b32.xlu0 %v3969, 64
    %v4707 = vpop.permute.xlu0 %4706
    %4708 = vrot.lane.b32.xlu0 %v3970, 64
    %v4709 = vpop.permute.xlu0 %4708
    %4710 = vrot.lane.b32.xlu0 %v3971, 64
    %v4711 = vpop.permute.xlu0 %4710
    %4712 = vrot.lane.b32.xlu0 %v3972, 64
    %v4713 = vpop.permute.xlu0 %4712
    %4714 = vrot.lane.b32.xlu0 %v3973, 64
    %v4715 = vpop.permute.xlu0 %4714
    %4716 = vrot.lane.b32.xlu0 %v3974, 64
    %v4717 = vpop.permute.xlu0 %4716
    %4718 = vrot.lane.b32.xlu0 %v3975, 64
    %v4719 = vpop.permute.xlu0 %4718
    %4720 = vrot.lane.b32.xlu0 %v3976, 64
    %v4721 = vpop.permute.xlu0 %4720
    %4722 = vrot.lane.b32.xlu0 %v3977, 64
    %v4723 = vpop.permute.xlu0 %4722
    %4724 = vrot.lane.b32.xlu0 %v3978, 64
    %v4725 = vpop.permute.xlu0 %4724
    %4726 = vrot.lane.b32.xlu0 %v3979, 64
    %v4727 = vpop.permute.xlu0 %4726
    %4728 = vrot.lane.b32.xlu0 %v3980, 64
    %v4729 = vpop.permute.xlu0 %4728
    %4730 = vrot.lane.b32.xlu0 %v3981, 64
    %v4731 = vpop.permute.xlu0 %4730
    %4732 = vrot.lane.b32.xlu0 %v3982, 64
    %v4733 = vpop.permute.xlu0 %4732
    %4734 = vrot.lane.b32.xlu0 %v3983, 64
    %v4735 = vpop.permute.xlu0 %4734
    %4736 = vrot.lane.b32.xlu0 %v3984, 64
    %v4737 = vpop.permute.xlu0 %4736
    %4738 = vrot.lane.b32.xlu0 %v3985, 64
    %v4739 = vpop.permute.xlu0 %4738
    %4740 = vrot.lane.b32.xlu0 %v3986, 64
    %v4741 = vpop.permute.xlu0 %4740
    %4742 = vrot.lane.b32.xlu0 %v3987, 64
    %v4743 = vpop.permute.xlu0 %4742
    %4744 = vrot.lane.b32.xlu0 %v3988, 64
    %v4745 = vpop.permute.xlu0 %4744
    %4746 = vrot.lane.b32.xlu0 %v3989, 64
    %v4747 = vpop.permute.xlu0 %4746
    %4748 = vrot.lane.b32.xlu0 %v3990, 64
    %v4749 = vpop.permute.xlu0 %4748
    %4750 = vrot.lane.b32.xlu0 %v3991, 64
    %v4751 = vpop.permute.xlu0 %4750
    %4752 = vrot.lane.b32.xlu0 %v3992, 64
    %v4753 = vpop.permute.xlu0 %4752
    %4754 = vrot.lane.b32.xlu0 %v3993, 64
    %v4755 = vpop.permute.xlu0 %4754
    %4756 = vrot.lane.b32.xlu0 %v3994, 64
    %v4757 = vpop.permute.xlu0 %4756
    %4758 = vrot.lane.b32.xlu0 %v3995, 64
    %v4759 = vpop.permute.xlu0 %4758
    %4760 = vrot.lane.b32.xlu0 %v3996, 64
    %v4761 = vpop.permute.xlu0 %4760
    %4762 = vrot.lane.b32.xlu0 %v3997, 64
    %v4763 = vpop.permute.xlu0 %4762
    %4764 = vrot.lane.b32.xlu0 %v3998, 64
    %v4765 = vpop.permute.xlu0 %4764
    %4766 = vrot.lane.b32.xlu0 %v3999, 64
    %v4767 = vpop.permute.xlu0 %4766
    %4896 = vrot.lane.b32.xlu0 %v4064, 64
    %v4897 = vpop.permute.xlu0 %4896
    %4898 = vrot.lane.b32.xlu0 %v4065, 64
    %v4899 = vpop.permute.xlu0 %4898
    %4900 = vrot.lane.b32.xlu0 %v4066, 64
    %v4901 = vpop.permute.xlu0 %4900
    %4902 = vrot.lane.b32.xlu0 %v4067, 64
    %v4903 = vpop.permute.xlu0 %4902
    %4904 = vrot.lane.b32.xlu0 %v4068, 64
    %v4905 = vpop.permute.xlu0 %4904
    %4906 = vrot.lane.b32.xlu0 %v4069, 64
    %v4907 = vpop.permute.xlu0 %4906
    %4908 = vrot.lane.b32.xlu0 %v4070, 64
    %v4909 = vpop.permute.xlu0 %4908
    %4910 = vrot.lane.b32.xlu0 %v4071, 64
    %v4911 = vpop.permute.xlu0 %4910
    %4912 = vrot.lane.b32.xlu0 %v4072, 64
    %v4913 = vpop.permute.xlu0 %4912
    %4914 = vrot.lane.b32.xlu0 %v4073, 64
    %v4915 = vpop.permute.xlu0 %4914
    %4916 = vrot.lane.b32.xlu0 %v4074, 64
    %v4917 = vpop.permute.xlu0 %4916
    %4918 = vrot.lane.b32.xlu0 %v4075, 64
    %v4919 = vpop.permute.xlu0 %4918
    %4920 = vrot.lane.b32.xlu0 %v4076, 64
    %v4921 = vpop.permute.xlu0 %4920
    %4922 = vrot.lane.b32.xlu0 %v4077, 64
    %v4923 = vpop.permute.xlu0 %4922
    %4924 = vrot.lane.b32.xlu0 %v4078, 64
    %v4925 = vpop.permute.xlu0 %4924
    %4926 = vrot.lane.b32.xlu0 %v4079, 64
    %v4927 = vpop.permute.xlu0 %4926
    %4928 = vrot.lane.b32.xlu0 %v4080, 64
    %v4929 = vpop.permute.xlu0 %4928
    %4930 = vrot.lane.b32.xlu0 %v4081, 64
    %v4931 = vpop.permute.xlu0 %4930
    %4932 = vrot.lane.b32.xlu0 %v4082, 64
    %v4933 = vpop.permute.xlu0 %4932
    %4934 = vrot.lane.b32.xlu0 %v4083, 64
    %v4935 = vpop.permute.xlu0 %4934
    %4936 = vrot.lane.b32.xlu0 %v4084, 64
    %v4937 = vpop.permute.xlu0 %4936
    %4938 = vrot.lane.b32.xlu0 %v4085, 64
    %v4939 = vpop.permute.xlu0 %4938
    %4940 = vrot.lane.b32.xlu0 %v4086, 64
    %v4941 = vpop.permute.xlu0 %4940
    %4942 = vrot.lane.b32.xlu0 %v4087, 64
    %v4943 = vpop.permute.xlu0 %4942
    %4944 = vrot.lane.b32.xlu0 %v4088, 64
    %v4945 = vpop.permute.xlu0 %4944
    %4946 = vrot.lane.b32.xlu0 %v4089, 64
    %v4947 = vpop.permute.xlu0 %4946
    %4948 = vrot.lane.b32.xlu0 %v4090, 64
    %v4949 = vpop.permute.xlu0 %4948
    %4950 = vrot.lane.b32.xlu0 %v4091, 64
    %v4951 = vpop.permute.xlu0 %4950
    %4952 = vrot.lane.b32.xlu0 %v4092, 64
    %v4953 = vpop.permute.xlu0 %4952
    %4954 = vrot.lane.b32.xlu0 %v4093, 64
    %v4955 = vpop.permute.xlu0 %4954
    %4956 = vrot.lane.b32.xlu0 %v4094, 64
    %v4957 = vpop.permute.xlu0 %4956
    %4958 = vrot.lane.b32.xlu0 %v4095, 64
    %v4959 = vpop.permute.xlu0 %4958
    %4960 = vrot.lane.b32.xlu0 %v4096, 64
    %v4961 = vpop.permute.xlu0 %4960
    %4962 = vrot.lane.b32.xlu0 %v4097, 64
    %v4963 = vpop.permute.xlu0 %4962
    %4964 = vrot.lane.b32.xlu0 %v4098, 64
    %v4965 = vpop.permute.xlu0 %4964
    %4966 = vrot.lane.b32.xlu0 %v4099, 64
    %v4967 = vpop.permute.xlu0 %4966
    %4968 = vrot.lane.b32.xlu0 %v4100, 64
    %v4969 = vpop.permute.xlu0 %4968
    %4970 = vrot.lane.b32.xlu0 %v4101, 64
    %v4971 = vpop.permute.xlu0 %4970
    %4972 = vrot.lane.b32.xlu0 %v4102, 64
    %v4973 = vpop.permute.xlu0 %4972
    %4974 = vrot.lane.b32.xlu0 %v4103, 64
    %v4975 = vpop.permute.xlu0 %4974
    %4976 = vrot.lane.b32.xlu0 %v4104, 64
    %v4977 = vpop.permute.xlu0 %4976
    %4978 = vrot.lane.b32.xlu0 %v4105, 64
    %v4979 = vpop.permute.xlu0 %4978
    %4980 = vrot.lane.b32.xlu0 %v4106, 64
    %v4981 = vpop.permute.xlu0 %4980
    %4982 = vrot.lane.b32.xlu0 %v4107, 64
    %v4983 = vpop.permute.xlu0 %4982
    %4984 = vrot.lane.b32.xlu0 %v4108, 64
    %v4985 = vpop.permute.xlu0 %4984
    %4986 = vrot.lane.b32.xlu0 %v4109, 64
    %v4987 = vpop.permute.xlu0 %4986
    %4988 = vrot.lane.b32.xlu0 %v4110, 64
    %v4989 = vpop.permute.xlu0 %4988
    %4990 = vrot.lane.b32.xlu0 %v4111, 64
    %v4991 = vpop.permute.xlu0 %4990
    %4992 = vrot.lane.b32.xlu0 %v4112, 64
    %v4993 = vpop.permute.xlu0 %4992
    %4994 = vrot.lane.b32.xlu0 %v4113, 64
    %v4995 = vpop.permute.xlu0 %4994
    %4996 = vrot.lane.b32.xlu0 %v4114, 64
    %v4997 = vpop.permute.xlu0 %4996
    %4998 = vrot.lane.b32.xlu0 %v4115, 64
    %v4999 = vpop.permute.xlu0 %4998
    %5000 = vrot.lane.b32.xlu0 %v4116, 64
    %v5001 = vpop.permute.xlu0 %5000
    %5002 = vrot.lane.b32.xlu0 %v4117, 64
    %v5003 = vpop.permute.xlu0 %5002
    %5004 = vrot.lane.b32.xlu0 %v4118, 64
    %v5005 = vpop.permute.xlu0 %5004
    %5006 = vrot.lane.b32.xlu0 %v4119, 64
    %v5007 = vpop.permute.xlu0 %5006
    %5008 = vrot.lane.b32.xlu0 %v4120, 64
    %v5009 = vpop.permute.xlu0 %5008
    %5010 = vrot.lane.b32.xlu0 %v4121, 64
    %v5011 = vpop.permute.xlu0 %5010
    %5012 = vrot.lane.b32.xlu0 %v4122, 64
    %v5013 = vpop.permute.xlu0 %5012
    %5014 = vrot.lane.b32.xlu0 %v4123, 64
    %v5015 = vpop.permute.xlu0 %5014
    %5016 = vrot.lane.b32.xlu0 %v4124, 64
    %v5017 = vpop.permute.xlu0 %5016
    %5018 = vrot.lane.b32.xlu0 %v4125, 64
    %v5019 = vpop.permute.xlu0 %5018
    %5020 = vrot.lane.b32.xlu0 %v4126, 64
    %v5021 = vpop.permute.xlu0 %5020
    %5022 = vrot.lane.b32.xlu0 %v4127, 64
    %v5023 = vpop.permute.xlu0 %5022
    %5152 = vrot.lane.b32.xlu0 %v4192, 64
    %v5153 = vpop.permute.xlu0 %5152
    %5154 = vrot.lane.b32.xlu0 %v4193, 64
    %v5155 = vpop.permute.xlu0 %5154
    %5156 = vrot.lane.b32.xlu0 %v4194, 64
    %v5157 = vpop.permute.xlu0 %5156
    %5158 = vrot.lane.b32.xlu0 %v4195, 64
    %v5159 = vpop.permute.xlu0 %5158
    %5160 = vrot.lane.b32.xlu0 %v4196, 64
    %v5161 = vpop.permute.xlu0 %5160
    %5162 = vrot.lane.b32.xlu0 %v4197, 64
    %v5163 = vpop.permute.xlu0 %5162
    %5164 = vrot.lane.b32.xlu0 %v4198, 64
    %v5165 = vpop.permute.xlu0 %5164
    %5166 = vrot.lane.b32.xlu0 %v4199, 64
    %v5167 = vpop.permute.xlu0 %5166
    %5168 = vrot.lane.b32.xlu0 %v4200, 64
    %v5169 = vpop.permute.xlu0 %5168
    %5170 = vrot.lane.b32.xlu0 %v4201, 64
    %v5171 = vpop.permute.xlu0 %5170
    %5172 = vrot.lane.b32.xlu0 %v4202, 64
    %v5173 = vpop.permute.xlu0 %5172
    %5174 = vrot.lane.b32.xlu0 %v4203, 64
    %v5175 = vpop.permute.xlu0 %5174
    %5176 = vrot.lane.b32.xlu0 %v4204, 64
    %v5177 = vpop.permute.xlu0 %5176
    %5178 = vrot.lane.b32.xlu0 %v4205, 64
    %v5179 = vpop.permute.xlu0 %5178
    %5180 = vrot.lane.b32.xlu0 %v4206, 64
    %v5181 = vpop.permute.xlu0 %5180
    %5182 = vrot.lane.b32.xlu0 %v4207, 64
    %v5183 = vpop.permute.xlu0 %5182
    %5184 = vrot.lane.b32.xlu0 %v4208, 64
    %v5185 = vpop.permute.xlu0 %5184
    %5186 = vrot.lane.b32.xlu0 %v4209, 64
    %v5187 = vpop.permute.xlu0 %5186
    %5188 = vrot.lane.b32.xlu0 %v4210, 64
    %v5189 = vpop.permute.xlu0 %5188
    %5190 = vrot.lane.b32.xlu0 %v4211, 64
    %v5191 = vpop.permute.xlu0 %5190
    %5192 = vrot.lane.b32.xlu0 %v4212, 64
    %v5193 = vpop.permute.xlu0 %5192
    %5194 = vrot.lane.b32.xlu0 %v4213, 64
    %v5195 = vpop.permute.xlu0 %5194
    %5196 = vrot.lane.b32.xlu0 %v4214, 64
    %v5197 = vpop.permute.xlu0 %5196
    %5198 = vrot.lane.b32.xlu0 %v4215, 64
    %v5199 = vpop.permute.xlu0 %5198
    %5200 = vrot.lane.b32.xlu0 %v4216, 64
    %v5201 = vpop.permute.xlu0 %5200
    %5202 = vrot.lane.b32.xlu0 %v4217, 64
    %v5203 = vpop.permute.xlu0 %5202
    %5204 = vrot.lane.b32.xlu0 %v4218, 64
    %v5205 = vpop.permute.xlu0 %5204
    %5206 = vrot.lane.b32.xlu0 %v4219, 64
    %v5207 = vpop.permute.xlu0 %5206
    %5208 = vrot.lane.b32.xlu0 %v4220, 64
    %v5209 = vpop.permute.xlu0 %5208
    %5210 = vrot.lane.b32.xlu0 %v4221, 64
    %v5211 = vpop.permute.xlu0 %5210
    %5212 = vrot.lane.b32.xlu0 %v4222, 64
    %v5213 = vpop.permute.xlu0 %5212
    %5214 = vrot.lane.b32.xlu0 %v4223, 64
    %v5215 = vpop.permute.xlu0 %5214
    %5216 = vrot.lane.b32.xlu0 %v4224, 64
    %v5217 = vpop.permute.xlu0 %5216
    %5218 = vrot.lane.b32.xlu0 %v4225, 64
    %v5219 = vpop.permute.xlu0 %5218
    %5220 = vrot.lane.b32.xlu0 %v4226, 64
    %v5221 = vpop.permute.xlu0 %5220
    %5222 = vrot.lane.b32.xlu0 %v4227, 64
    %v5223 = vpop.permute.xlu0 %5222
    %5224 = vrot.lane.b32.xlu0 %v4228, 64
    %v5225 = vpop.permute.xlu0 %5224
    %5226 = vrot.lane.b32.xlu0 %v4229, 64
    %v5227 = vpop.permute.xlu0 %5226
    %5228 = vrot.lane.b32.xlu0 %v4230, 64
    %v5229 = vpop.permute.xlu0 %5228
    %5230 = vrot.lane.b32.xlu0 %v4231, 64
    %v5231 = vpop.permute.xlu0 %5230
    %5232 = vrot.lane.b32.xlu0 %v4232, 64
    %v5233 = vpop.permute.xlu0 %5232
    %5234 = vrot.lane.b32.xlu0 %v4233, 64
    %v5235 = vpop.permute.xlu0 %5234
    %5236 = vrot.lane.b32.xlu0 %v4234, 64
    %v5237 = vpop.permute.xlu0 %5236
    %5238 = vrot.lane.b32.xlu0 %v4235, 64
    %v5239 = vpop.permute.xlu0 %5238
    %5240 = vrot.lane.b32.xlu0 %v4236, 64
    %v5241 = vpop.permute.xlu0 %5240
    %5242 = vrot.lane.b32.xlu0 %v4237, 64
    %v5243 = vpop.permute.xlu0 %5242
    %5244 = vrot.lane.b32.xlu0 %v4238, 64
    %v5245 = vpop.permute.xlu0 %5244
    %5246 = vrot.lane.b32.xlu0 %v4239, 64
    %v5247 = vpop.permute.xlu0 %5246
    %5248 = vrot.lane.b32.xlu0 %v4240, 64
    %v5249 = vpop.permute.xlu0 %5248
    %5250 = vrot.lane.b32.xlu0 %v4241, 64
    %v5251 = vpop.permute.xlu0 %5250
    %5252 = vrot.lane.b32.xlu0 %v4242, 64
    %v5253 = vpop.permute.xlu0 %5252
    %5254 = vrot.lane.b32.xlu0 %v4243, 64
    %v5255 = vpop.permute.xlu0 %5254
    %5256 = vrot.lane.b32.xlu0 %v4244, 64
    %v5257 = vpop.permute.xlu0 %5256
    %5258 = vrot.lane.b32.xlu0 %v4245, 64
    %v5259 = vpop.permute.xlu0 %5258
    %5260 = vrot.lane.b32.xlu0 %v4246, 64
    %v5261 = vpop.permute.xlu0 %5260
    %5262 = vrot.lane.b32.xlu0 %v4247, 64
    %v5263 = vpop.permute.xlu0 %5262
    %5264 = vrot.lane.b32.xlu0 %v4248, 64
    %v5265 = vpop.permute.xlu0 %5264
    %5266 = vrot.lane.b32.xlu0 %v4249, 64
    %v5267 = vpop.permute.xlu0 %5266
    %5268 = vrot.lane.b32.xlu0 %v4250, 64
    %v5269 = vpop.permute.xlu0 %5268
    %5270 = vrot.lane.b32.xlu0 %v4251, 64
    %v5271 = vpop.permute.xlu0 %5270
    %5272 = vrot.lane.b32.xlu0 %v4252, 64
    %v5273 = vpop.permute.xlu0 %5272
    %5274 = vrot.lane.b32.xlu0 %v4253, 64
    %v5275 = vpop.permute.xlu0 %5274
    %5276 = vrot.lane.b32.xlu0 %v4254, 64
    %v5277 = vpop.permute.xlu0 %5276
    %5278 = vrot.lane.b32.xlu0 %v4255, 64
    %v5279 = vpop.permute.xlu0 %5278
    %v5344 = vsel %vm167, %v3744, %v4385
    %v5345 = vsel %vm167, %v3745, %v4387
    %v5346 = vsel %vm167, %v3746, %v4389
    %v5347 = vsel %vm167, %v3747, %v4391
    %v5348 = vsel %vm167, %v3748, %v4393
    %v5349 = vsel %vm167, %v3749, %v4395
    %v5350 = vsel %vm167, %v3750, %v4397
    %v5351 = vsel %vm167, %v3751, %v4399
    %v5352 = vsel %vm167, %v3752, %v4401
    %v5353 = vsel %vm167, %v3753, %v4403
    %v5354 = vsel %vm167, %v3754, %v4405
    %v5355 = vsel %vm167, %v3755, %v4407
    %v5356 = vsel %vm167, %v3756, %v4409
    %v5357 = vsel %vm167, %v3757, %v4411
    %v5358 = vsel %vm167, %v3758, %v4413
    %v5359 = vsel %vm167, %v3759, %v4415
    %v5360 = vsel %vm167, %v3760, %v4417
    %v5361 = vsel %vm167, %v3761, %v4419
    %v5362 = vsel %vm167, %v3762, %v4421
    %v5363 = vsel %vm167, %v3763, %v4423
    %v5364 = vsel %vm167, %v3764, %v4425
    %v5365 = vsel %vm167, %v3765, %v4427
    %v5366 = vsel %vm167, %v3766, %v4429
    %v5367 = vsel %vm167, %v3767, %v4431
    %v5368 = vsel %vm167, %v3768, %v4433
    %v5369 = vsel %vm167, %v3769, %v4435
    %v5370 = vsel %vm167, %v3770, %v4437
    %v5371 = vsel %vm167, %v3771, %v4439
    %v5372 = vsel %vm167, %v3772, %v4441
    %v5373 = vsel %vm167, %v3773, %v4443
    %v5374 = vsel %vm167, %v3774, %v4445
    %v5375 = vsel %vm167, %v3775, %v4447
    %v5376 = vsel %vm167, %v3776, %v4449
    %v5377 = vsel %vm167, %v3777, %v4451
    %v5378 = vsel %vm167, %v3778, %v4453
    %v5379 = vsel %vm167, %v3779, %v4455
    %v5380 = vsel %vm167, %v3780, %v4457
    %v5381 = vsel %vm167, %v3781, %v4459
    %v5382 = vsel %vm167, %v3782, %v4461
    %v5383 = vsel %vm167, %v3783, %v4463
    %v5384 = vsel %vm167, %v3784, %v4465
    %v5385 = vsel %vm167, %v3785, %v4467
    %v5386 = vsel %vm167, %v3786, %v4469
    %v5387 = vsel %vm167, %v3787, %v4471
    %v5388 = vsel %vm167, %v3788, %v4473
    %v5389 = vsel %vm167, %v3789, %v4475
    %v5390 = vsel %vm167, %v3790, %v4477
    %v5391 = vsel %vm167, %v3791, %v4479
    %v5392 = vsel %vm167, %v3792, %v4481
    %v5393 = vsel %vm167, %v3793, %v4483
    %v5394 = vsel %vm167, %v3794, %v4485
    %v5395 = vsel %vm167, %v3795, %v4487
    %v5396 = vsel %vm167, %v3796, %v4489
    %v5397 = vsel %vm167, %v3797, %v4491
    %v5398 = vsel %vm167, %v3798, %v4493
    %v5399 = vsel %vm167, %v3799, %v4495
    %v5400 = vsel %vm167, %v3800, %v4497
    %v5401 = vsel %vm167, %v3801, %v4499
    %v5402 = vsel %vm167, %v3802, %v4501
    %v5403 = vsel %vm167, %v3803, %v4503
    %v5404 = vsel %vm167, %v3804, %v4505
    %v5405 = vsel %vm167, %v3805, %v4507
    %v5406 = vsel %vm167, %v3806, %v4509
    %v5407 = vsel %vm167, %v3807, %v4511
    %v5408 = vsel %vm167, %v3872, %v4641
    %v5409 = vsel %vm167, %v3873, %v4643
    %v5410 = vsel %vm167, %v3874, %v4645
    %v5411 = vsel %vm167, %v3875, %v4647
    %v5412 = vsel %vm167, %v3876, %v4649
    %v5413 = vsel %vm167, %v3877, %v4651
    %v5414 = vsel %vm167, %v3878, %v4653
    %v5415 = vsel %vm167, %v3879, %v4655
    %v5416 = vsel %vm167, %v3880, %v4657
    %v5417 = vsel %vm167, %v3881, %v4659
    %v5418 = vsel %vm167, %v3882, %v4661
    %v5419 = vsel %vm167, %v3883, %v4663
    %v5420 = vsel %vm167, %v3884, %v4665
    %v5421 = vsel %vm167, %v3885, %v4667
    %v5422 = vsel %vm167, %v3886, %v4669
    %v5423 = vsel %vm167, %v3887, %v4671
    %v5424 = vsel %vm167, %v3888, %v4673
    %v5425 = vsel %vm167, %v3889, %v4675
    %v5426 = vsel %vm167, %v3890, %v4677
    %v5427 = vsel %vm167, %v3891, %v4679
    %v5428 = vsel %vm167, %v3892, %v4681
    %v5429 = vsel %vm167, %v3893, %v4683
    %v5430 = vsel %vm167, %v3894, %v4685
    %v5431 = vsel %vm167, %v3895, %v4687
    %v5432 = vsel %vm167, %v3896, %v4689
    %v5433 = vsel %vm167, %v3897, %v4691
    %v5434 = vsel %vm167, %v3898, %v4693
    %v5435 = vsel %vm167, %v3899, %v4695
    %v5436 = vsel %vm167, %v3900, %v4697
    %v5437 = vsel %vm167, %v3901, %v4699
    %v5438 = vsel %vm167, %v3902, %v4701
    %v5439 = vsel %vm167, %v3903, %v4703
    %v5440 = vsel %vm167, %v3904, %v4705
    %v5441 = vsel %vm167, %v3905, %v4707
    %v5442 = vsel %vm167, %v3906, %v4709
    %v5443 = vsel %vm167, %v3907, %v4711
    %v5444 = vsel %vm167, %v3908, %v4713
    %v5445 = vsel %vm167, %v3909, %v4715
    %v5446 = vsel %vm167, %v3910, %v4717
    %v5447 = vsel %vm167, %v3911, %v4719
    %v5448 = vsel %vm167, %v3912, %v4721
    %v5449 = vsel %vm167, %v3913, %v4723
    %v5450 = vsel %vm167, %v3914, %v4725
    %v5451 = vsel %vm167, %v3915, %v4727
    %v5452 = vsel %vm167, %v3916, %v4729
    %v5453 = vsel %vm167, %v3917, %v4731
    %v5454 = vsel %vm167, %v3918, %v4733
    %v5455 = vsel %vm167, %v3919, %v4735
    %v5456 = vsel %vm167, %v3920, %v4737
    %v5457 = vsel %vm167, %v3921, %v4739
    %v5458 = vsel %vm167, %v3922, %v4741
    %v5459 = vsel %vm167, %v3923, %v4743
    %v5460 = vsel %vm167, %v3924, %v4745
    %v5461 = vsel %vm167, %v3925, %v4747
    %v5462 = vsel %vm167, %v3926, %v4749
    %v5463 = vsel %vm167, %v3927, %v4751
    %v5464 = vsel %vm167, %v3928, %v4753
    %v5465 = vsel %vm167, %v3929, %v4755
    %v5466 = vsel %vm167, %v3930, %v4757
    %v5467 = vsel %vm167, %v3931, %v4759
    %v5468 = vsel %vm167, %v3932, %v4761
    %v5469 = vsel %vm167, %v3933, %v4763
    %v5470 = vsel %vm167, %v3934, %v4765
    %v5471 = vsel %vm167, %v3935, %v4767
    %v5472 = vsel %vm167, %v4000, %v4897
    %v5473 = vsel %vm167, %v4001, %v4899
    %v5474 = vsel %vm167, %v4002, %v4901
    %v5475 = vsel %vm167, %v4003, %v4903
    %v5476 = vsel %vm167, %v4004, %v4905
    %v5477 = vsel %vm167, %v4005, %v4907
    %v5478 = vsel %vm167, %v4006, %v4909
    %v5479 = vsel %vm167, %v4007, %v4911
    %v5480 = vsel %vm167, %v4008, %v4913
    %v5481 = vsel %vm167, %v4009, %v4915
    %v5482 = vsel %vm167, %v4010, %v4917
    %v5483 = vsel %vm167, %v4011, %v4919
    %v5484 = vsel %vm167, %v4012, %v4921
    %v5485 = vsel %vm167, %v4013, %v4923
    %v5486 = vsel %vm167, %v4014, %v4925
    %v5487 = vsel %vm167, %v4015, %v4927
    %v5488 = vsel %vm167, %v4016, %v4929
    %v5489 = vsel %vm167, %v4017, %v4931
    %v5490 = vsel %vm167, %v4018, %v4933
    %v5491 = vsel %vm167, %v4019, %v4935
    %v5492 = vsel %vm167, %v4020, %v4937
    %v5493 = vsel %vm167, %v4021, %v4939
    %v5494 = vsel %vm167, %v4022, %v4941
    %v5495 = vsel %vm167, %v4023, %v4943
    %v5496 = vsel %vm167, %v4024, %v4945
    %v5497 = vsel %vm167, %v4025, %v4947
    %v5498 = vsel %vm167, %v4026, %v4949
    %v5499 = vsel %vm167, %v4027, %v4951
    %v5500 = vsel %vm167, %v4028, %v4953
    %v5501 = vsel %vm167, %v4029, %v4955
    %v5502 = vsel %vm167, %v4030, %v4957
    %v5503 = vsel %vm167, %v4031, %v4959
    %v5504 = vsel %vm167, %v4032, %v4961
    %v5505 = vsel %vm167, %v4033, %v4963
    %v5506 = vsel %vm167, %v4034, %v4965
    %v5507 = vsel %vm167, %v4035, %v4967
    %v5508 = vsel %vm167, %v4036, %v4969
    %v5509 = vsel %vm167, %v4037, %v4971
    %v5510 = vsel %vm167, %v4038, %v4973
    %v5511 = vsel %vm167, %v4039, %v4975
    %v5512 = vsel %vm167, %v4040, %v4977
    %v5513 = vsel %vm167, %v4041, %v4979
    %v5514 = vsel %vm167, %v4042, %v4981
    %v5515 = vsel %vm167, %v4043, %v4983
    %v5516 = vsel %vm167, %v4044, %v4985
    %v5517 = vsel %vm167, %v4045, %v4987
    %v5518 = vsel %vm167, %v4046, %v4989
    %v5519 = vsel %vm167, %v4047, %v4991
    %v5520 = vsel %vm167, %v4048, %v4993
    %v5521 = vsel %vm167, %v4049, %v4995
    %v5522 = vsel %vm167, %v4050, %v4997
    %v5523 = vsel %vm167, %v4051, %v4999
    %v5524 = vsel %vm167, %v4052, %v5001
    %v5525 = vsel %vm167, %v4053, %v5003
    %v5526 = vsel %vm167, %v4054, %v5005
    %v5527 = vsel %vm167, %v4055, %v5007
    %v5528 = vsel %vm167, %v4056, %v5009
    %v5529 = vsel %vm167, %v4057, %v5011
    %v5530 = vsel %vm167, %v4058, %v5013
    %v5531 = vsel %vm167, %v4059, %v5015
    %v5532 = vsel %vm167, %v4060, %v5017
    %v5533 = vsel %vm167, %v4061, %v5019
    %v5534 = vsel %vm167, %v4062, %v5021
    %v5535 = vsel %vm167, %v4063, %v5023
    %v5536 = vsel %vm167, %v4128, %v5153
    %v5537 = vsel %vm167, %v4129, %v5155
    %v5538 = vsel %vm167, %v4130, %v5157
    %v5539 = vsel %vm167, %v4131, %v5159
    %v5540 = vsel %vm167, %v4132, %v5161
    %v5541 = vsel %vm167, %v4133, %v5163
    %v5542 = vsel %vm167, %v4134, %v5165
    %v5543 = vsel %vm167, %v4135, %v5167
    %v5544 = vsel %vm167, %v4136, %v5169
    %v5545 = vsel %vm167, %v4137, %v5171
    %v5546 = vsel %vm167, %v4138, %v5173
    %v5547 = vsel %vm167, %v4139, %v5175
    %v5548 = vsel %vm167, %v4140, %v5177
    %v5549 = vsel %vm167, %v4141, %v5179
    %v5550 = vsel %vm167, %v4142, %v5181
    %v5551 = vsel %vm167, %v4143, %v5183
    %v5552 = vsel %vm167, %v4144, %v5185
    %v5553 = vsel %vm167, %v4145, %v5187
    %v5554 = vsel %vm167, %v4146, %v5189
    %v5555 = vsel %vm167, %v4147, %v5191
    %v5556 = vsel %vm167, %v4148, %v5193
    %v5557 = vsel %vm167, %v4149, %v5195
    %v5558 = vsel %vm167, %v4150, %v5197
    %v5559 = vsel %vm167, %v4151, %v5199
    %v5560 = vsel %vm167, %v4152, %v5201
    %v5561 = vsel %vm167, %v4153, %v5203
    %v5562 = vsel %vm167, %v4154, %v5205
    %v5563 = vsel %vm167, %v4155, %v5207
    %v5564 = vsel %vm167, %v4156, %v5209
    %v5565 = vsel %vm167, %v4157, %v5211
    %v5566 = vsel %vm167, %v4158, %v5213
    %v5567 = vsel %vm167, %v4159, %v5215
    %v5568 = vsel %vm167, %v4160, %v5217
    %v5569 = vsel %vm167, %v4161, %v5219
    %v5570 = vsel %vm167, %v4162, %v5221
    %v5571 = vsel %vm167, %v4163, %v5223
    %v5572 = vsel %vm167, %v4164, %v5225
    %v5573 = vsel %vm167, %v4165, %v5227
    %v5574 = vsel %vm167, %v4166, %v5229
    %v5575 = vsel %vm167, %v4167, %v5231
    %v5576 = vsel %vm167, %v4168, %v5233
    %v5577 = vsel %vm167, %v4169, %v5235
    %v5578 = vsel %vm167, %v4170, %v5237
    %v5579 = vsel %vm167, %v4171, %v5239
    %v5580 = vsel %vm167, %v4172, %v5241
    %v5581 = vsel %vm167, %v4173, %v5243
    %v5582 = vsel %vm167, %v4174, %v5245
    %v5583 = vsel %vm167, %v4175, %v5247
    %v5584 = vsel %vm167, %v4176, %v5249
    %v5585 = vsel %vm167, %v4177, %v5251
    %v5586 = vsel %vm167, %v4178, %v5253
    %v5587 = vsel %vm167, %v4179, %v5255
    %v5588 = vsel %vm167, %v4180, %v5257
    %v5589 = vsel %vm167, %v4181, %v5259
    %v5590 = vsel %vm167, %v4182, %v5261
    %v5591 = vsel %vm167, %v4183, %v5263
    %v5592 = vsel %vm167, %v4184, %v5265
    %v5593 = vsel %vm167, %v4185, %v5267
    %v5594 = vsel %vm167, %v4186, %v5269
    %v5595 = vsel %vm167, %v4187, %v5271
    %v5596 = vsel %vm167, %v4188, %v5273
    %v5597 = vsel %vm167, %v4189, %v5275
    %v5598 = vsel %vm167, %v4190, %v5277
    %v5599 = vsel %vm167, %v4191, %v5279
    %v5601 = vlaneseq
    %v5602 = vshrl.u32 %v5601, 7
    %v5603 = vsub.s32 0, %v5602
    %v5604 = vrot.slane %v166, %v5603
    %v5607 = vsel %vm167, %v4256, 0
    %v5610 = vsel %vm167, %v4257, 0
    %v5613 = vsel %vm167, %v4258, 0
    %v5616 = vsel %vm167, %v4259, 0
    %v5619 = vsel %vm167, %v4260, 0
    %v5622 = vsel %vm167, %v4261, 0
    %v5625 = vsel %vm167, %v4262, 0
    %v5628 = vsel %vm167, %v4263, 0
    %v5631 = vsel %vm167, %v4264, 0
    %v5634 = vsel %vm167, %v4265, 0
    %v5637 = vsel %vm167, %v4266, 0
    %v5640 = vsel %vm167, %v4267, 0
    %v5643 = vsel %vm167, %v4268, 0
    %v5646 = vsel %vm167, %v4269, 0
    %v5649 = vsel %vm167, %v4270, 0
    %v5652 = vsel %vm167, %v4271, 0
    %v5655 = vsel %vm167, %v4272, 0
    %v5658 = vsel %vm167, %v4273, 0
    %v5661 = vsel %vm167, %v4274, 0
    %v5664 = vsel %vm167, %v4275, 0
    %v5667 = vsel %vm167, %v4276, 0
    %v5670 = vsel %vm167, %v4277, 0
    %v5673 = vsel %vm167, %v4278, 0
    %v5676 = vsel %vm167, %v4279, 0
    %v5679 = vsel %vm167, %v4280, 0
    %v5682 = vsel %vm167, %v4281, 0
    %v5685 = vsel %vm167, %v4282, 0
    %v5688 = vsel %vm167, %v4283, 0
    %v5691 = vsel %vm167, %v4284, 0
    %v5694 = vsel %vm167, %v4285, 0
    %v5697 = vsel %vm167, %v4286, 0
    %v5700 = vsel %vm167, %v4287, 0
    %v5703 = vsel %vm167, %v4288, 0
    %v5706 = vsel %vm167, %v4289, 0
    %v5709 = vsel %vm167, %v4290, 0
    %v5712 = vsel %vm167, %v4291, 0
    %v5715 = vsel %vm167, %v4292, 0
    %v5718 = vsel %vm167, %v4293, 0
    %v5721 = vsel %vm167, %v4294, 0
    %v5724 = vsel %vm167, %v4295, 0
    %v5727 = vsel %vm167, %v4296, 0
    %v5730 = vsel %vm167, %v4297, 0
    %v5733 = vsel %vm167, %v4298, 0
    %v5736 = vsel %vm167, %v4299, 0
    %v5739 = vsel %vm167, %v4300, 0
    %v5742 = vsel %vm167, %v4301, 0
    %v5745 = vsel %vm167, %v4302, 0
    %v5748 = vsel %vm167, %v4303, 0
    %v5751 = vsel %vm167, %v4304, 0
    %v5754 = vsel %vm167, %v4305, 0
    %v5757 = vsel %vm167, %v4306, 0
    %v5760 = vsel %vm167, %v4307, 0
    %v5763 = vsel %vm167, %v4308, 0
    %v5766 = vsel %vm167, %v4309, 0
    %v5769 = vsel %vm167, %v4310, 0
    %v5772 = vsel %vm167, %v4311, 0
    %v5775 = vsel %vm167, %v4312, 0
    %v5778 = vsel %vm167, %v4313, 0
    %v5781 = vsel %vm167, %v4314, 0
    %v5784 = vsel %vm167, %v4315, 0
    %v5787 = vsel %vm167, %v4316, 0
    %v5790 = vsel %vm167, %v4317, 0
    %v5793 = vsel %vm167, %v4318, 0
    %v5796 = vsel %vm167, %v4319, 0
    %5798 = vmatprep.subr.mxu0 0.0
    %5799 = vmatpush1.msra.mxu0 %v108
    %5800 = vmatprep.subr.mxu0 0.0
    %5801 = vmatpush1.msra.mxu0 %v107
    %5802 = vmatprep.subr.mxu0 0.0
    %5803 = vmatpush1.msra.mxu0 %v106
    %5804 = vmatprep.subr.mxu0 0.0
    %5805 = vmatpush1.msra.mxu0 %v105
    %5806 = vmatprep.subr.mxu0 0.0
    %5807 = vmatpush1.msra.mxu0 %v104
    %5808 = vmatprep.subr.mxu0 0.0
    %5809 = vmatpush1.msra.mxu0 %v103
    %5810 = vmatprep.subr.mxu0 0.0
    %5811 = vmatpush1.msra.mxu0 %v102
    %5812 = vmatprep.subr.mxu0 0.0
    %5813 = vmatpush1.msra.mxu0 %v101
    %5814 = vmatprep.subr.mxu0 0.0
    %5815 = vmatpush1.msra.mxu0 %v100
    %5816 = vmatprep.subr.mxu0 0.0
    %5817 = vmatpush1.msra.mxu0 %v99
    %5818 = vmatprep.subr.mxu0 0.0
    %5819 = vmatpush1.msra.mxu0 %v98
    %5820 = vmatprep.subr.mxu0 0.0
    %5821 = vmatpush1.msra.mxu0 %v97
    %5822 = vmatprep.subr.mxu0 0.0
    %5823 = vmatpush1.msra.mxu0 %v96
    %5824 = vmatprep.subr.mxu0 0.0
    %5825 = vmatpush1.msra.mxu0 %v95
    %5826 = vmatprep.subr.mxu0 0.0
    %5827 = vmatpush1.msra.mxu0 %v94
    %5828 = vmatprep.subr.mxu0 0.0
    %5829 = vmatpush1.msra.mxu0 %v93
    %5830 = vmatprep.subr.mxu0 0.0
    %5831 = vmatpush2.msra.mxu0 %v124
    %5832 = vmatprep.subr.mxu0 0.0
    %5833 = vmatpush2.msra.mxu0 %v123
    %5834 = vmatprep.subr.mxu0 0.0
    %5835 = vmatpush2.msra.mxu0 %v122
    %5836 = vmatprep.subr.mxu0 0.0
    %5837 = vmatpush2.msra.mxu0 %v121
    %5838 = vmatprep.subr.mxu0 0.0
    %5839 = vmatpush2.msra.mxu0 %v120
    %5840 = vmatprep.subr.mxu0 0.0
    %5841 = vmatpush2.msra.mxu0 %v119
    %5842 = vmatprep.subr.mxu0 0.0
    %5843 = vmatpush2.msra.mxu0 %v118
    %5844 = vmatprep.subr.mxu0 0.0
    %5845 = vmatpush2.msra.mxu0 %v117
    %5846 = vmatprep.subr.mxu0 0.0
    %5847 = vmatpush2.msra.mxu0 %v116
    %5848 = vmatprep.subr.mxu0 0.0
    %5849 = vmatpush2.msra.mxu0 %v115
    %5850 = vmatprep.subr.mxu0 0.0
    %5851 = vmatpush2.msra.mxu0 %v114
    %5852 = vmatprep.subr.mxu0 0.0
    %5853 = vmatpush2.msra.mxu0 %v113
    %5854 = vmatprep.subr.mxu0 0.0
    %5855 = vmatpush2.msra.mxu0 %v112
    %5856 = vmatprep.subr.mxu0 0.0
    %5857 = vmatpush2.msra.mxu0 %v111
    %5858 = vmatprep.subr.mxu0 0.0
    %5859 = vmatpush2.msra.mxu0 %v110
    %5860 = vmatprep.subr.mxu0 0.0
    %5861 = vmatpush2.msra.mxu0 %v109
    %5862 = vmatprep.mubr.f32.mxu0 %v5408
    %5863 = vmatmul.mubr.f32.gmra.mxu0 %v5344
    %v5864 = vpop.f32.mrf.mxu0
    %v5865 = vadd.f32 %v5604, %v5864
    %v5866 = vpop.f32.mrf.mxu0
    %5867 = vmatprep.mubr.f32.mxu0 %v5409
    %5868 = vmatmul.mubr.f32.gmra.mxu0 %v5345
    %v5869 = vpop.f32.mrf.mxu0
    %v5870 = vadd.f32 %v5604, %v5869
    %v5871 = vpop.f32.mrf.mxu0
    %5872 = vmatprep.mubr.f32.mxu0 %v5410
    %5873 = vmatmul.mubr.f32.gmra.mxu0 %v5346
    %v5874 = vpop.f32.mrf.mxu0
    %v5875 = vadd.f32 %v5604, %v5874
    %v5876 = vpop.f32.mrf.mxu0
    %5877 = vmatprep.mubr.f32.mxu0 %v5411
    %5878 = vmatmul.mubr.f32.gmra.mxu0 %v5347
    %v5879 = vpop.f32.mrf.mxu0
    %v5880 = vadd.f32 %v5604, %v5879
    %v5881 = vpop.f32.mrf.mxu0
    %5882 = vmatprep.mubr.f32.mxu0 %v5412
    %5883 = vmatmul.mubr.f32.gmra.mxu0 %v5348
    %v5884 = vpop.f32.mrf.mxu0
    %v5885 = vadd.f32 %v5604, %v5884
    %v5886 = vpop.f32.mrf.mxu0
    %5887 = vmatprep.mubr.f32.mxu0 %v5413
    %5888 = vmatmul.mubr.f32.gmra.mxu0 %v5349
    %v5889 = vpop.f32.mrf.mxu0
    %v5890 = vadd.f32 %v5604, %v5889
    %v5891 = vpop.f32.mrf.mxu0
    %5892 = vmatprep.mubr.f32.mxu0 %v5414
    %5893 = vmatmul.mubr.f32.gmra.mxu0 %v5350
    %v5894 = vpop.f32.mrf.mxu0
    %v5895 = vadd.f32 %v5604, %v5894
    %v5896 = vpop.f32.mrf.mxu0
    %5897 = vmatprep.mubr.f32.mxu0 %v5415
    %5898 = vmatmul.mubr.f32.gmra.mxu0 %v5351
    %v5899 = vpop.f32.mrf.mxu0
    %v5900 = vadd.f32 %v5604, %v5899
    %v5901 = vpop.f32.mrf.mxu0
    %5902 = vmatprep.mubr.f32.mxu0 %v5416
    %5903 = vmatmul.mubr.f32.gmra.mxu0 %v5352
    %v5904 = vpop.f32.mrf.mxu0
    %v5905 = vadd.f32 %v5604, %v5904
    %v5906 = vpop.f32.mrf.mxu0
    %5907 = vmatprep.mubr.f32.mxu0 %v5417
    %5908 = vmatmul.mubr.f32.gmra.mxu0 %v5353
    %v5909 = vpop.f32.mrf.mxu0
    %v5910 = vadd.f32 %v5604, %v5909
    %v5911 = vpop.f32.mrf.mxu0
    %5912 = vmatprep.mubr.f32.mxu0 %v5418
    %5913 = vmatmul.mubr.f32.gmra.mxu0 %v5354
    %v5914 = vpop.f32.mrf.mxu0
    %v5915 = vadd.f32 %v5604, %v5914
    %v5916 = vpop.f32.mrf.mxu0
    %5917 = vmatprep.mubr.f32.mxu0 %v5419
    %5918 = vmatmul.mubr.f32.gmra.mxu0 %v5355
    %v5919 = vpop.f32.mrf.mxu0
    %v5920 = vadd.f32 %v5604, %v5919
    %v5921 = vpop.f32.mrf.mxu0
    %5922 = vmatprep.mubr.f32.mxu0 %v5420
    %5923 = vmatmul.mubr.f32.gmra.mxu0 %v5356
    %v5924 = vpop.f32.mrf.mxu0
    %v5925 = vadd.f32 %v5604, %v5924
    %v5926 = vpop.f32.mrf.mxu0
    %5927 = vmatprep.mubr.f32.mxu0 %v5421
    %5928 = vmatmul.mubr.f32.gmra.mxu0 %v5357
    %v5929 = vpop.f32.mrf.mxu0
    %v5930 = vadd.f32 %v5604, %v5929
    %v5931 = vpop.f32.mrf.mxu0
    %5932 = vmatprep.mubr.f32.mxu0 %v5422
    %5933 = vmatmul.mubr.f32.gmra.mxu0 %v5358
    %v5934 = vpop.f32.mrf.mxu0
    %v5935 = vadd.f32 %v5604, %v5934
    %v5936 = vpop.f32.mrf.mxu0
    %5937 = vmatprep.mubr.f32.mxu0 %v5423
    %5938 = vmatmul.mubr.f32.gmra.mxu0 %v5359
    %v5939 = vpop.f32.mrf.mxu0
    %v5940 = vadd.f32 %v5604, %v5939
    %v5941 = vpop.f32.mrf.mxu0
    %5942 = vmatprep.mubr.f32.mxu0 %v5424
    %5943 = vmatmul.mubr.f32.gmra.mxu0 %v5360
    %v5944 = vpop.f32.mrf.mxu0
    %v5945 = vadd.f32 %v5604, %v5944
    %v5946 = vpop.f32.mrf.mxu0
    %5947 = vmatprep.mubr.f32.mxu0 %v5425
    %5948 = vmatmul.mubr.f32.gmra.mxu0 %v5361
    %v5949 = vpop.f32.mrf.mxu0
    %v5950 = vadd.f32 %v5604, %v5949
    %v5951 = vpop.f32.mrf.mxu0
    %5952 = vmatprep.mubr.f32.mxu0 %v5426
    %5953 = vmatmul.mubr.f32.gmra.mxu0 %v5362
    %v5954 = vpop.f32.mrf.mxu0
    %v5955 = vadd.f32 %v5604, %v5954
    %v5956 = vpop.f32.mrf.mxu0
    %5957 = vmatprep.mubr.f32.mxu0 %v5427
    %5958 = vmatmul.mubr.f32.gmra.mxu0 %v5363
    %v5959 = vpop.f32.mrf.mxu0
    %v5960 = vadd.f32 %v5604, %v5959
    %v5961 = vpop.f32.mrf.mxu0
    %5962 = vmatprep.mubr.f32.mxu0 %v5428
    %5963 = vmatmul.mubr.f32.gmra.mxu0 %v5364
    %v5964 = vpop.f32.mrf.mxu0
    %v5965 = vadd.f32 %v5604, %v5964
    %v5966 = vpop.f32.mrf.mxu0
    %5967 = vmatprep.mubr.f32.mxu0 %v5429
    %5968 = vmatmul.mubr.f32.gmra.mxu0 %v5365
    %v5969 = vpop.f32.mrf.mxu0
    %v5970 = vadd.f32 %v5604, %v5969
    %v5971 = vpop.f32.mrf.mxu0
    %5972 = vmatprep.mubr.f32.mxu0 %v5430
    %5973 = vmatmul.mubr.f32.gmra.mxu0 %v5366
    %v5974 = vpop.f32.mrf.mxu0
    %v5975 = vadd.f32 %v5604, %v5974
    %v5976 = vpop.f32.mrf.mxu0
    %5977 = vmatprep.mubr.f32.mxu0 %v5431
    %5978 = vmatmul.mubr.f32.gmra.mxu0 %v5367
    %v5979 = vpop.f32.mrf.mxu0
    %v5980 = vadd.f32 %v5604, %v5979
    %v5981 = vpop.f32.mrf.mxu0
    %5982 = vmatprep.mubr.f32.mxu0 %v5432
    %5983 = vmatmul.mubr.f32.gmra.mxu0 %v5368
    %v5984 = vpop.f32.mrf.mxu0
    %v5985 = vadd.f32 %v5604, %v5984
    %v5986 = vpop.f32.mrf.mxu0
    %5987 = vmatprep.mubr.f32.mxu0 %v5433
    %5988 = vmatmul.mubr.f32.gmra.mxu0 %v5369
    %v5989 = vpop.f32.mrf.mxu0
    %v5990 = vadd.f32 %v5604, %v5989
    %v5991 = vpop.f32.mrf.mxu0
    %5992 = vmatprep.mubr.f32.mxu0 %v5434
    %5993 = vmatmul.mubr.f32.gmra.mxu0 %v5370
    %v5994 = vpop.f32.mrf.mxu0
    %v5995 = vadd.f32 %v5604, %v5994
    %v5996 = vpop.f32.mrf.mxu0
    %5997 = vmatprep.mubr.f32.mxu0 %v5435
    %5998 = vmatmul.mubr.f32.gmra.mxu0 %v5371
    %v5999 = vpop.f32.mrf.mxu0
    %v6000 = vadd.f32 %v5604, %v5999
    %v6001 = vpop.f32.mrf.mxu0
    %6002 = vmatprep.mubr.f32.mxu0 %v5436
    %6003 = vmatmul.mubr.f32.gmra.mxu0 %v5372
    %v6004 = vpop.f32.mrf.mxu0
    %v6005 = vadd.f32 %v5604, %v6004
    %v6006 = vpop.f32.mrf.mxu0
    %6007 = vmatprep.mubr.f32.mxu0 %v5437
    %6008 = vmatmul.mubr.f32.gmra.mxu0 %v5373
    %v6009 = vpop.f32.mrf.mxu0
    %v6010 = vadd.f32 %v5604, %v6009
    %v6011 = vpop.f32.mrf.mxu0
    %6012 = vmatprep.mubr.f32.mxu0 %v5438
    %6013 = vmatmul.mubr.f32.gmra.mxu0 %v5374
    %v6014 = vpop.f32.mrf.mxu0
    %v6015 = vadd.f32 %v5604, %v6014
    %v6016 = vpop.f32.mrf.mxu0
    %6017 = vmatprep.mubr.f32.mxu0 %v5439
    %6018 = vmatmul.mubr.f32.gmra.mxu0 %v5375
    %v6019 = vpop.f32.mrf.mxu0
    %v6020 = vadd.f32 %v5604, %v6019
    %v6021 = vpop.f32.mrf.mxu0
    %6022 = vmatprep.mubr.f32.mxu0 %v5440
    %6023 = vmatmul.mubr.f32.gmra.mxu0 %v5376
    %v6024 = vpop.f32.mrf.mxu0
    %v6025 = vadd.f32 %v5604, %v6024
    %v6026 = vpop.f32.mrf.mxu0
    %6027 = vmatprep.mubr.f32.mxu0 %v5441
    %6028 = vmatmul.mubr.f32.gmra.mxu0 %v5377
    %v6029 = vpop.f32.mrf.mxu0
    %v6030 = vadd.f32 %v5604, %v6029
    %v6031 = vpop.f32.mrf.mxu0
    %6032 = vmatprep.mubr.f32.mxu0 %v5442
    %6033 = vmatmul.mubr.f32.gmra.mxu0 %v5378
    %v6034 = vpop.f32.mrf.mxu0
    %v6035 = vadd.f32 %v5604, %v6034
    %v6036 = vpop.f32.mrf.mxu0
    %6037 = vmatprep.mubr.f32.mxu0 %v5443
    %6038 = vmatmul.mubr.f32.gmra.mxu0 %v5379
    %v6039 = vpop.f32.mrf.mxu0
    %v6040 = vadd.f32 %v5604, %v6039
    %v6041 = vpop.f32.mrf.mxu0
    %6042 = vmatprep.mubr.f32.mxu0 %v5444
    %6043 = vmatmul.mubr.f32.gmra.mxu0 %v5380
    %v6044 = vpop.f32.mrf.mxu0
    %v6045 = vadd.f32 %v5604, %v6044
    %v6046 = vpop.f32.mrf.mxu0
    %6047 = vmatprep.mubr.f32.mxu0 %v5445
    %6048 = vmatmul.mubr.f32.gmra.mxu0 %v5381
    %v6049 = vpop.f32.mrf.mxu0
    %v6050 = vadd.f32 %v5604, %v6049
    %v6051 = vpop.f32.mrf.mxu0
    %6052 = vmatprep.mubr.f32.mxu0 %v5446
    %6053 = vmatmul.mubr.f32.gmra.mxu0 %v5382
    %v6054 = vpop.f32.mrf.mxu0
    %v6055 = vadd.f32 %v5604, %v6054
    %v6056 = vpop.f32.mrf.mxu0
    %6057 = vmatprep.mubr.f32.mxu0 %v5447
    %6058 = vmatmul.mubr.f32.gmra.mxu0 %v5383
    %v6059 = vpop.f32.mrf.mxu0
    %v6060 = vadd.f32 %v5604, %v6059
    %v6061 = vpop.f32.mrf.mxu0
    %6062 = vmatprep.mubr.f32.mxu0 %v5448
    %6063 = vmatmul.mubr.f32.gmra.mxu0 %v5384
    %v6064 = vpop.f32.mrf.mxu0
    %v6065 = vadd.f32 %v5604, %v6064
    %v6066 = vpop.f32.mrf.mxu0
    %6067 = vmatprep.mubr.f32.mxu0 %v5449
    %6068 = vmatmul.mubr.f32.gmra.mxu0 %v5385
    %v6069 = vpop.f32.mrf.mxu0
    %v6070 = vadd.f32 %v5604, %v6069
    %v6071 = vpop.f32.mrf.mxu0
    %6072 = vmatprep.mubr.f32.mxu0 %v5450
    %6073 = vmatmul.mubr.f32.gmra.mxu0 %v5386
    %v6074 = vpop.f32.mrf.mxu0
    %v6075 = vadd.f32 %v5604, %v6074
    %v6076 = vpop.f32.mrf.mxu0
    %6077 = vmatprep.mubr.f32.mxu0 %v5451
    %6078 = vmatmul.mubr.f32.gmra.mxu0 %v5387
    %v6079 = vpop.f32.mrf.mxu0
    %v6080 = vadd.f32 %v5604, %v6079
    %v6081 = vpop.f32.mrf.mxu0
    %6082 = vmatprep.mubr.f32.mxu0 %v5452
    %6083 = vmatmul.mubr.f32.gmra.mxu0 %v5388
    %v6084 = vpop.f32.mrf.mxu0
    %v6085 = vadd.f32 %v5604, %v6084
    %v6086 = vpop.f32.mrf.mxu0
    %6087 = vmatprep.mubr.f32.mxu0 %v5453
    %6088 = vmatmul.mubr.f32.gmra.mxu0 %v5389
    %v6089 = vpop.f32.mrf.mxu0
    %v6090 = vadd.f32 %v5604, %v6089
    %v6091 = vpop.f32.mrf.mxu0
    %6092 = vmatprep.mubr.f32.mxu0 %v5454
    %6093 = vmatmul.mubr.f32.gmra.mxu0 %v5390
    %v6094 = vpop.f32.mrf.mxu0
    %v6095 = vadd.f32 %v5604, %v6094
    %v6096 = vpop.f32.mrf.mxu0
    %6097 = vmatprep.mubr.f32.mxu0 %v5455
    %6098 = vmatmul.mubr.f32.gmra.mxu0 %v5391
    %v6099 = vpop.f32.mrf.mxu0
    %v6100 = vadd.f32 %v5604, %v6099
    %v6101 = vpop.f32.mrf.mxu0
    %6102 = vmatprep.mubr.f32.mxu0 %v5456
    %6103 = vmatmul.mubr.f32.gmra.mxu0 %v5392
    %v6104 = vpop.f32.mrf.mxu0
    %v6105 = vadd.f32 %v5604, %v6104
    %v6106 = vpop.f32.mrf.mxu0
    %6107 = vmatprep.mubr.f32.mxu0 %v5457
    %6108 = vmatmul.mubr.f32.gmra.mxu0 %v5393
    %v6109 = vpop.f32.mrf.mxu0
    %v6110 = vadd.f32 %v5604, %v6109
    %v6111 = vpop.f32.mrf.mxu0
    %6112 = vmatprep.mubr.f32.mxu0 %v5458
    %6113 = vmatmul.mubr.f32.gmra.mxu0 %v5394
    %v6114 = vpop.f32.mrf.mxu0
    %v6115 = vadd.f32 %v5604, %v6114
    %v6116 = vpop.f32.mrf.mxu0
    %6117 = vmatprep.mubr.f32.mxu0 %v5459
    %6118 = vmatmul.mubr.f32.gmra.mxu0 %v5395
    %v6119 = vpop.f32.mrf.mxu0
    %v6120 = vadd.f32 %v5604, %v6119
    %v6121 = vpop.f32.mrf.mxu0
    %6122 = vmatprep.mubr.f32.mxu0 %v5460
    %6123 = vmatmul.mubr.f32.gmra.mxu0 %v5396
    %v6124 = vpop.f32.mrf.mxu0
    %v6125 = vadd.f32 %v5604, %v6124
    %v6126 = vpop.f32.mrf.mxu0
    %6127 = vmatprep.mubr.f32.mxu0 %v5461
    %6128 = vmatmul.mubr.f32.gmra.mxu0 %v5397
    %v6129 = vpop.f32.mrf.mxu0
    %v6130 = vadd.f32 %v5604, %v6129
    %v6131 = vpop.f32.mrf.mxu0
    %6132 = vmatprep.mubr.f32.mxu0 %v5462
    %6133 = vmatmul.mubr.f32.gmra.mxu0 %v5398
    %v6134 = vpop.f32.mrf.mxu0
    %v6135 = vadd.f32 %v5604, %v6134
    %v6136 = vpop.f32.mrf.mxu0
    %6137 = vmatprep.mubr.f32.mxu0 %v5463
    %6138 = vmatmul.mubr.f32.gmra.mxu0 %v5399
    %v6139 = vpop.f32.mrf.mxu0
    %v6140 = vadd.f32 %v5604, %v6139
    %v6141 = vpop.f32.mrf.mxu0
    %6142 = vmatprep.mubr.f32.mxu0 %v5464
    %6143 = vmatmul.mubr.f32.gmra.mxu0 %v5400
    %v6144 = vpop.f32.mrf.mxu0
    %v6145 = vadd.f32 %v5604, %v6144
    %v6146 = vpop.f32.mrf.mxu0
    %6147 = vmatprep.mubr.f32.mxu0 %v5465
    %6148 = vmatmul.mubr.f32.gmra.mxu0 %v5401
    %v6149 = vpop.f32.mrf.mxu0
    %v6150 = vadd.f32 %v5604, %v6149
    %v6151 = vpop.f32.mrf.mxu0
    %6152 = vmatprep.mubr.f32.mxu0 %v5466
    %6153 = vmatmul.mubr.f32.gmra.mxu0 %v5402
    %v6154 = vpop.f32.mrf.mxu0
    %v6155 = vadd.f32 %v5604, %v6154
    %v6156 = vpop.f32.mrf.mxu0
    %6157 = vmatprep.mubr.f32.mxu0 %v5467
    %6158 = vmatmul.mubr.f32.gmra.mxu0 %v5403
    %v6159 = vpop.f32.mrf.mxu0
    %v6160 = vadd.f32 %v5604, %v6159
    %v6161 = vpop.f32.mrf.mxu0
    %6162 = vmatprep.mubr.f32.mxu0 %v5468
    %6163 = vmatmul.mubr.f32.gmra.mxu0 %v5404
    %v6164 = vpop.f32.mrf.mxu0
    %v6165 = vadd.f32 %v5604, %v6164
    %v6166 = vpop.f32.mrf.mxu0
    %6167 = vmatprep.mubr.f32.mxu0 %v5469
    %6168 = vmatmul.mubr.f32.gmra.mxu0 %v5405
    %v6169 = vpop.f32.mrf.mxu0
    %v6170 = vadd.f32 %v5604, %v6169
    %v6171 = vpop.f32.mrf.mxu0
    %6172 = vmatprep.mubr.f32.mxu0 %v5470
    %6173 = vmatmul.mubr.f32.gmra.mxu0 %v5406
    %v6174 = vpop.f32.mrf.mxu0
    %v6175 = vadd.f32 %v5604, %v6174
    %v6176 = vpop.f32.mrf.mxu0
    %6177 = vmatprep.mubr.f32.mxu0 %v5471
    %6178 = vmatmul.mubr.f32.gmra.mxu0 %v5407
    %v6179 = vpop.f32.mrf.mxu0
    %v6180 = vadd.f32 %v5604, %v6179
    %v6181 = vpop.f32.mrf.mxu0
    %6182 = vdwg.mxu0
    %6183 = vmatprep.subr.mxu0 0.0
    %6184 = vmatpush1.msra.mxu0 %v140
    %6185 = vmatprep.subr.mxu0 0.0
    %6186 = vmatpush1.msra.mxu0 %v139
    %6187 = vmatprep.subr.mxu0 0.0
    %6188 = vmatpush1.msra.mxu0 %v138
    %6189 = vmatprep.subr.mxu0 0.0
    %6190 = vmatpush1.msra.mxu0 %v137
    %6191 = vmatprep.subr.mxu0 0.0
    %6192 = vmatpush1.msra.mxu0 %v136
    %6193 = vmatprep.subr.mxu0 0.0
    %6194 = vmatpush1.msra.mxu0 %v135
    %6195 = vmatprep.subr.mxu0 0.0
    %6196 = vmatpush1.msra.mxu0 %v134
    %6197 = vmatprep.subr.mxu0 0.0
    %6198 = vmatpush1.msra.mxu0 %v133
    %6199 = vmatprep.subr.mxu0 0.0
    %6200 = vmatpush1.msra.mxu0 %v132
    %6201 = vmatprep.subr.mxu0 0.0
    %6202 = vmatpush1.msra.mxu0 %v131
    %6203 = vmatprep.subr.mxu0 0.0
    %6204 = vmatpush1.msra.mxu0 %v130
    %6205 = vmatprep.subr.mxu0 0.0
    %6206 = vmatpush1.msra.mxu0 %v129
    %6207 = vmatprep.subr.mxu0 0.0
    %6208 = vmatpush1.msra.mxu0 %v128
    %6209 = vmatprep.subr.mxu0 0.0
    %6210 = vmatpush1.msra.mxu0 %v127
    %6211 = vmatprep.subr.mxu0 0.0
    %6212 = vmatpush1.msra.mxu0 %v126
    %6213 = vmatprep.subr.mxu0 0.0
    %6214 = vmatpush1.msra.mxu0 %v125
    %6215 = vmatprep.subr.mxu0 0.0
    %6216 = vmatpush2.msra.mxu0 %v156
    %6217 = vmatprep.subr.mxu0 0.0
    %6218 = vmatpush2.msra.mxu0 %v155
    %6219 = vmatprep.subr.mxu0 0.0
    %6220 = vmatpush2.msra.mxu0 %v154
    %6221 = vmatprep.subr.mxu0 0.0
    %6222 = vmatpush2.msra.mxu0 %v153
    %6223 = vmatprep.subr.mxu0 0.0
    %6224 = vmatpush2.msra.mxu0 %v152
    %6225 = vmatprep.subr.mxu0 0.0
    %6226 = vmatpush2.msra.mxu0 %v151
    %6227 = vmatprep.subr.mxu0 0.0
    %6228 = vmatpush2.msra.mxu0 %v150
    %6229 = vmatprep.subr.mxu0 0.0
    %6230 = vmatpush2.msra.mxu0 %v149
    %6231 = vmatprep.subr.mxu0 0.0
    %6232 = vmatpush2.msra.mxu0 %v148
    %6233 = vmatprep.subr.mxu0 0.0
    %6234 = vmatpush2.msra.mxu0 %v147
    %6235 = vmatprep.subr.mxu0 0.0
    %6236 = vmatpush2.msra.mxu0 %v146
    %6237 = vmatprep.subr.mxu0 0.0
    %6238 = vmatpush2.msra.mxu0 %v145
    %6239 = vmatprep.subr.mxu0 0.0
    %6240 = vmatpush2.msra.mxu0 %v144
    %6241 = vmatprep.subr.mxu0 0.0
    %6242 = vmatpush2.msra.mxu0 %v143
    %6243 = vmatprep.subr.mxu0 0.0
    %6244 = vmatpush2.msra.mxu0 %v142
    %6245 = vmatprep.subr.mxu0 0.0
    %6246 = vmatpush2.msra.mxu0 %v141
    %6247 = vmatprep.mubr.f32.mxu0 %v5536
    %6248 = vmatmul.mubr.f32.gmra.mxu0 %v5472
    %v6249 = vpop.f32.mrf.mxu0
    %v6250 = vadd.f32 %v5865, %v6249
    %v6251 = vpop.f32.mrf.mxu0
    %6252 = vmatprep.mubr.f32.mxu0 %v5537
    %6253 = vmatmul.mubr.f32.gmra.mxu0 %v5473
    %v6254 = vpop.f32.mrf.mxu0
    %v6255 = vadd.f32 %v5870, %v6254
    %v6256 = vpop.f32.mrf.mxu0
    %6257 = vmatprep.mubr.f32.mxu0 %v5538
    %6258 = vmatmul.mubr.f32.gmra.mxu0 %v5474
    %v6259 = vpop.f32.mrf.mxu0
    %v6260 = vadd.f32 %v5875, %v6259
    %v6261 = vpop.f32.mrf.mxu0
    %6262 = vmatprep.mubr.f32.mxu0 %v5539
    %6263 = vmatmul.mubr.f32.gmra.mxu0 %v5475
    %v6264 = vpop.f32.mrf.mxu0
    %v6265 = vadd.f32 %v5880, %v6264
    %v6266 = vpop.f32.mrf.mxu0
    %6267 = vmatprep.mubr.f32.mxu0 %v5540
    %6268 = vmatmul.mubr.f32.gmra.mxu0 %v5476
    %v6269 = vpop.f32.mrf.mxu0
    %v6270 = vadd.f32 %v5885, %v6269
    %v6271 = vpop.f32.mrf.mxu0
    %6272 = vmatprep.mubr.f32.mxu0 %v5541
    %6273 = vmatmul.mubr.f32.gmra.mxu0 %v5477
    %v6274 = vpop.f32.mrf.mxu0
    %v6275 = vadd.f32 %v5890, %v6274
    %v6276 = vpop.f32.mrf.mxu0
    %6277 = vmatprep.mubr.f32.mxu0 %v5542
    %6278 = vmatmul.mubr.f32.gmra.mxu0 %v5478
    %v6279 = vpop.f32.mrf.mxu0
    %v6280 = vadd.f32 %v5895, %v6279
    %v6281 = vpop.f32.mrf.mxu0
    %6282 = vmatprep.mubr.f32.mxu0 %v5543
    %6283 = vmatmul.mubr.f32.gmra.mxu0 %v5479
    %v6284 = vpop.f32.mrf.mxu0
    %v6285 = vadd.f32 %v5900, %v6284
    %v6286 = vpop.f32.mrf.mxu0
    %6287 = vmatprep.mubr.f32.mxu0 %v5544
    %6288 = vmatmul.mubr.f32.gmra.mxu0 %v5480
    %v6289 = vpop.f32.mrf.mxu0
    %v6290 = vadd.f32 %v5905, %v6289
    %v6291 = vpop.f32.mrf.mxu0
    %6292 = vmatprep.mubr.f32.mxu0 %v5545
    %6293 = vmatmul.mubr.f32.gmra.mxu0 %v5481
    %v6294 = vpop.f32.mrf.mxu0
    %v6295 = vadd.f32 %v5910, %v6294
    %v6296 = vpop.f32.mrf.mxu0
    %6297 = vmatprep.mubr.f32.mxu0 %v5546
    %6298 = vmatmul.mubr.f32.gmra.mxu0 %v5482
    %v6299 = vpop.f32.mrf.mxu0
    %v6300 = vadd.f32 %v5915, %v6299
    %v6301 = vpop.f32.mrf.mxu0
    %6302 = vmatprep.mubr.f32.mxu0 %v5547
    %6303 = vmatmul.mubr.f32.gmra.mxu0 %v5483
    %v6304 = vpop.f32.mrf.mxu0
    %v6305 = vadd.f32 %v5920, %v6304
    %v6306 = vpop.f32.mrf.mxu0
    %6307 = vmatprep.mubr.f32.mxu0 %v5548
    %6308 = vmatmul.mubr.f32.gmra.mxu0 %v5484
    %v6309 = vpop.f32.mrf.mxu0
    %v6310 = vadd.f32 %v5925, %v6309
    %v6311 = vpop.f32.mrf.mxu0
    %6312 = vmatprep.mubr.f32.mxu0 %v5549
    %6313 = vmatmul.mubr.f32.gmra.mxu0 %v5485
    %v6314 = vpop.f32.mrf.mxu0
    %v6315 = vadd.f32 %v5930, %v6314
    %v6316 = vpop.f32.mrf.mxu0
    %6317 = vmatprep.mubr.f32.mxu0 %v5550
    %6318 = vmatmul.mubr.f32.gmra.mxu0 %v5486
    %v6319 = vpop.f32.mrf.mxu0
    %v6320 = vadd.f32 %v5935, %v6319
    %v6321 = vpop.f32.mrf.mxu0
    %6322 = vmatprep.mubr.f32.mxu0 %v5551
    %6323 = vmatmul.mubr.f32.gmra.mxu0 %v5487
    %v6324 = vpop.f32.mrf.mxu0
    %v6325 = vadd.f32 %v5940, %v6324
    %v6326 = vpop.f32.mrf.mxu0
    %6327 = vmatprep.mubr.f32.mxu0 %v5552
    %6328 = vmatmul.mubr.f32.gmra.mxu0 %v5488
    %v6329 = vpop.f32.mrf.mxu0
    %v6330 = vadd.f32 %v5945, %v6329
    %v6331 = vpop.f32.mrf.mxu0
    %6332 = vmatprep.mubr.f32.mxu0 %v5553
    %6333 = vmatmul.mubr.f32.gmra.mxu0 %v5489
    %v6334 = vpop.f32.mrf.mxu0
    %v6335 = vadd.f32 %v5950, %v6334
    %v6336 = vpop.f32.mrf.mxu0
    %6337 = vmatprep.mubr.f32.mxu0 %v5554
    %6338 = vmatmul.mubr.f32.gmra.mxu0 %v5490
    %v6339 = vpop.f32.mrf.mxu0
    %v6340 = vadd.f32 %v5955, %v6339
    %v6341 = vpop.f32.mrf.mxu0
    %6342 = vmatprep.mubr.f32.mxu0 %v5555
    %6343 = vmatmul.mubr.f32.gmra.mxu0 %v5491
    %v6344 = vpop.f32.mrf.mxu0
    %v6345 = vadd.f32 %v5960, %v6344
    %v6346 = vpop.f32.mrf.mxu0
    %6347 = vmatprep.mubr.f32.mxu0 %v5556
    %6348 = vmatmul.mubr.f32.gmra.mxu0 %v5492
    %v6349 = vpop.f32.mrf.mxu0
    %v6350 = vadd.f32 %v5965, %v6349
    %v6351 = vpop.f32.mrf.mxu0
    %6352 = vmatprep.mubr.f32.mxu0 %v5557
    %6353 = vmatmul.mubr.f32.gmra.mxu0 %v5493
    %v6354 = vpop.f32.mrf.mxu0
    %v6355 = vadd.f32 %v5970, %v6354
    %v6356 = vpop.f32.mrf.mxu0
    %6357 = vmatprep.mubr.f32.mxu0 %v5558
    %6358 = vmatmul.mubr.f32.gmra.mxu0 %v5494
    %v6359 = vpop.f32.mrf.mxu0
    %v6360 = vadd.f32 %v5975, %v6359
    %v6361 = vpop.f32.mrf.mxu0
    %6362 = vmatprep.mubr.f32.mxu0 %v5559
    %6363 = vmatmul.mubr.f32.gmra.mxu0 %v5495
    %v6364 = vpop.f32.mrf.mxu0
    %v6365 = vadd.f32 %v5980, %v6364
    %v6366 = vpop.f32.mrf.mxu0
    %6367 = vmatprep.mubr.f32.mxu0 %v5560
    %6368 = vmatmul.mubr.f32.gmra.mxu0 %v5496
    %v6369 = vpop.f32.mrf.mxu0
    %v6370 = vadd.f32 %v5985, %v6369
    %v6371 = vpop.f32.mrf.mxu0
    %6372 = vmatprep.mubr.f32.mxu0 %v5561
    %6373 = vmatmul.mubr.f32.gmra.mxu0 %v5497
    %v6374 = vpop.f32.mrf.mxu0
    %v6375 = vadd.f32 %v5990, %v6374
    %v6376 = vpop.f32.mrf.mxu0
    %6377 = vmatprep.mubr.f32.mxu0 %v5562
    %6378 = vmatmul.mubr.f32.gmra.mxu0 %v5498
    %v6379 = vpop.f32.mrf.mxu0
    %v6380 = vadd.f32 %v5995, %v6379
    %v6381 = vpop.f32.mrf.mxu0
    %6382 = vmatprep.mubr.f32.mxu0 %v5563
    %6383 = vmatmul.mubr.f32.gmra.mxu0 %v5499
    %v6384 = vpop.f32.mrf.mxu0
    %v6385 = vadd.f32 %v6000, %v6384
    %v6386 = vpop.f32.mrf.mxu0
    %6387 = vmatprep.mubr.f32.mxu0 %v5564
    %6388 = vmatmul.mubr.f32.gmra.mxu0 %v5500
    %v6389 = vpop.f32.mrf.mxu0
    %v6390 = vadd.f32 %v6005, %v6389
    %v6391 = vpop.f32.mrf.mxu0
    %6392 = vmatprep.mubr.f32.mxu0 %v5565
    %6393 = vmatmul.mubr.f32.gmra.mxu0 %v5501
    %v6394 = vpop.f32.mrf.mxu0
    %v6395 = vadd.f32 %v6010, %v6394
    %v6396 = vpop.f32.mrf.mxu0
    %6397 = vmatprep.mubr.f32.mxu0 %v5566
    %6398 = vmatmul.mubr.f32.gmra.mxu0 %v5502
    %v6399 = vpop.f32.mrf.mxu0
    %v6400 = vadd.f32 %v6015, %v6399
    %v6401 = vpop.f32.mrf.mxu0
    %6402 = vmatprep.mubr.f32.mxu0 %v5567
    %6403 = vmatmul.mubr.f32.gmra.mxu0 %v5503
    %v6404 = vpop.f32.mrf.mxu0
    %v6405 = vadd.f32 %v6020, %v6404
    %v6406 = vpop.f32.mrf.mxu0
    %6407 = vmatprep.mubr.f32.mxu0 %v5568
    %6408 = vmatmul.mubr.f32.gmra.mxu0 %v5504
    %v6409 = vpop.f32.mrf.mxu0
    %v6410 = vadd.f32 %v6025, %v6409
    %v6411 = vpop.f32.mrf.mxu0
    %6412 = vmatprep.mubr.f32.mxu0 %v5569
    %6413 = vmatmul.mubr.f32.gmra.mxu0 %v5505
    %v6414 = vpop.f32.mrf.mxu0
    %v6415 = vadd.f32 %v6030, %v6414
    %v6416 = vpop.f32.mrf.mxu0
    %6417 = vmatprep.mubr.f32.mxu0 %v5570
    %6418 = vmatmul.mubr.f32.gmra.mxu0 %v5506
    %v6419 = vpop.f32.mrf.mxu0
    %v6420 = vadd.f32 %v6035, %v6419
    %v6421 = vpop.f32.mrf.mxu0
    %6422 = vmatprep.mubr.f32.mxu0 %v5571
    %6423 = vmatmul.mubr.f32.gmra.mxu0 %v5507
    %v6424 = vpop.f32.mrf.mxu0
    %v6425 = vadd.f32 %v6040, %v6424
    %v6426 = vpop.f32.mrf.mxu0
    %6427 = vmatprep.mubr.f32.mxu0 %v5572
    %6428 = vmatmul.mubr.f32.gmra.mxu0 %v5508
    %v6429 = vpop.f32.mrf.mxu0
    %v6430 = vadd.f32 %v6045, %v6429
    %v6431 = vpop.f32.mrf.mxu0
    %6432 = vmatprep.mubr.f32.mxu0 %v5573
    %6433 = vmatmul.mubr.f32.gmra.mxu0 %v5509
    %v6434 = vpop.f32.mrf.mxu0
    %v6435 = vadd.f32 %v6050, %v6434
    %v6436 = vpop.f32.mrf.mxu0
    %6437 = vmatprep.mubr.f32.mxu0 %v5574
    %6438 = vmatmul.mubr.f32.gmra.mxu0 %v5510
    %v6439 = vpop.f32.mrf.mxu0
    %v6440 = vadd.f32 %v6055, %v6439
    %v6441 = vpop.f32.mrf.mxu0
    %6442 = vmatprep.mubr.f32.mxu0 %v5575
    %6443 = vmatmul.mubr.f32.gmra.mxu0 %v5511
    %v6444 = vpop.f32.mrf.mxu0
    %v6445 = vadd.f32 %v6060, %v6444
    %v6446 = vpop.f32.mrf.mxu0
    %6447 = vmatprep.mubr.f32.mxu0 %v5576
    %6448 = vmatmul.mubr.f32.gmra.mxu0 %v5512
    %v6449 = vpop.f32.mrf.mxu0
    %v6450 = vadd.f32 %v6065, %v6449
    %v6451 = vpop.f32.mrf.mxu0
    %6452 = vmatprep.mubr.f32.mxu0 %v5577
    %6453 = vmatmul.mubr.f32.gmra.mxu0 %v5513
    %v6454 = vpop.f32.mrf.mxu0
    %v6455 = vadd.f32 %v6070, %v6454
    %v6456 = vpop.f32.mrf.mxu0
    %6457 = vmatprep.mubr.f32.mxu0 %v5578
    %6458 = vmatmul.mubr.f32.gmra.mxu0 %v5514
    %v6459 = vpop.f32.mrf.mxu0
    %v6460 = vadd.f32 %v6075, %v6459
    %v6461 = vpop.f32.mrf.mxu0
    %6462 = vmatprep.mubr.f32.mxu0 %v5579
    %6463 = vmatmul.mubr.f32.gmra.mxu0 %v5515
    %v6464 = vpop.f32.mrf.mxu0
    %v6465 = vadd.f32 %v6080, %v6464
    %v6466 = vpop.f32.mrf.mxu0
    %6467 = vmatprep.mubr.f32.mxu0 %v5580
    %6468 = vmatmul.mubr.f32.gmra.mxu0 %v5516
    %v6469 = vpop.f32.mrf.mxu0
    %v6470 = vadd.f32 %v6085, %v6469
    %v6471 = vpop.f32.mrf.mxu0
    %6472 = vmatprep.mubr.f32.mxu0 %v5581
    %6473 = vmatmul.mubr.f32.gmra.mxu0 %v5517
    %v6474 = vpop.f32.mrf.mxu0
    %v6475 = vadd.f32 %v6090, %v6474
    %v6476 = vpop.f32.mrf.mxu0
    %6477 = vmatprep.mubr.f32.mxu0 %v5582
    %6478 = vmatmul.mubr.f32.gmra.mxu0 %v5518
    %v6479 = vpop.f32.mrf.mxu0
    %v6480 = vadd.f32 %v6095, %v6479
    %v6481 = vpop.f32.mrf.mxu0
    %6482 = vmatprep.mubr.f32.mxu0 %v5583
    %6483 = vmatmul.mubr.f32.gmra.mxu0 %v5519
    %v6484 = vpop.f32.mrf.mxu0
    %v6485 = vadd.f32 %v6100, %v6484
    %v6486 = vpop.f32.mrf.mxu0
    %6487 = vmatprep.mubr.f32.mxu0 %v5584
    %6488 = vmatmul.mubr.f32.gmra.mxu0 %v5520
    %v6489 = vpop.f32.mrf.mxu0
    %v6490 = vadd.f32 %v6105, %v6489
    %v6491 = vpop.f32.mrf.mxu0
    %6492 = vmatprep.mubr.f32.mxu0 %v5585
    %6493 = vmatmul.mubr.f32.gmra.mxu0 %v5521
    %v6494 = vpop.f32.mrf.mxu0
    %v6495 = vadd.f32 %v6110, %v6494
    %v6496 = vpop.f32.mrf.mxu0
    %6497 = vmatprep.mubr.f32.mxu0 %v5586
    %6498 = vmatmul.mubr.f32.gmra.mxu0 %v5522
    %v6499 = vpop.f32.mrf.mxu0
    %v6500 = vadd.f32 %v6115, %v6499
    %v6501 = vpop.f32.mrf.mxu0
    %6502 = vmatprep.mubr.f32.mxu0 %v5587
    %6503 = vmatmul.mubr.f32.gmra.mxu0 %v5523
    %v6504 = vpop.f32.mrf.mxu0
    %v6505 = vadd.f32 %v6120, %v6504
    %v6506 = vpop.f32.mrf.mxu0
    %6507 = vmatprep.mubr.f32.mxu0 %v5588
    %6508 = vmatmul.mubr.f32.gmra.mxu0 %v5524
    %v6509 = vpop.f32.mrf.mxu0
    %v6510 = vadd.f32 %v6125, %v6509
    %v6511 = vpop.f32.mrf.mxu0
    %6512 = vmatprep.mubr.f32.mxu0 %v5589
    %6513 = vmatmul.mubr.f32.gmra.mxu0 %v5525
    %v6514 = vpop.f32.mrf.mxu0
    %v6515 = vadd.f32 %v6130, %v6514
    %v6516 = vpop.f32.mrf.mxu0
    %6517 = vmatprep.mubr.f32.mxu0 %v5590
    %6518 = vmatmul.mubr.f32.gmra.mxu0 %v5526
    %v6519 = vpop.f32.mrf.mxu0
    %v6520 = vadd.f32 %v6135, %v6519
    %v6521 = vpop.f32.mrf.mxu0
    %6522 = vmatprep.mubr.f32.mxu0 %v5591
    %6523 = vmatmul.mubr.f32.gmra.mxu0 %v5527
    %v6524 = vpop.f32.mrf.mxu0
    %v6525 = vadd.f32 %v6140, %v6524
    %v6526 = vpop.f32.mrf.mxu0
    %6527 = vmatprep.mubr.f32.mxu0 %v5592
    %6528 = vmatmul.mubr.f32.gmra.mxu0 %v5528
    %v6529 = vpop.f32.mrf.mxu0
    %v6530 = vadd.f32 %v6145, %v6529
    %v6531 = vpop.f32.mrf.mxu0
    %6532 = vmatprep.mubr.f32.mxu0 %v5593
    %6533 = vmatmul.mubr.f32.gmra.mxu0 %v5529
    %v6534 = vpop.f32.mrf.mxu0
    %v6535 = vadd.f32 %v6150, %v6534
    %v6536 = vpop.f32.mrf.mxu0
    %6537 = vmatprep.mubr.f32.mxu0 %v5594
    %6538 = vmatmul.mubr.f32.gmra.mxu0 %v5530
    %v6539 = vpop.f32.mrf.mxu0
    %v6540 = vadd.f32 %v6155, %v6539
    %v6541 = vpop.f32.mrf.mxu0
    %6542 = vmatprep.mubr.f32.mxu0 %v5595
    %6543 = vmatmul.mubr.f32.gmra.mxu0 %v5531
    %v6544 = vpop.f32.mrf.mxu0
    %v6545 = vadd.f32 %v6160, %v6544
    %v6546 = vpop.f32.mrf.mxu0
    %6547 = vmatprep.mubr.f32.mxu0 %v5596
    %6548 = vmatmul.mubr.f32.gmra.mxu0 %v5532
    %v6549 = vpop.f32.mrf.mxu0
    %v6550 = vadd.f32 %v6165, %v6549
    %v6551 = vpop.f32.mrf.mxu0
    %6552 = vmatprep.mubr.f32.mxu0 %v5597
    %6553 = vmatmul.mubr.f32.gmra.mxu0 %v5533
    %v6554 = vpop.f32.mrf.mxu0
    %v6555 = vadd.f32 %v6170, %v6554
    %v6556 = vpop.f32.mrf.mxu0
    %6557 = vmatprep.mubr.f32.mxu0 %v5598
    %6558 = vmatmul.mubr.f32.gmra.mxu0 %v5534
    %v6559 = vpop.f32.mrf.mxu0
    %v6560 = vadd.f32 %v6175, %v6559
    %v6561 = vpop.f32.mrf.mxu0
    %6562 = vmatprep.mubr.f32.mxu0 %v5599
    %6563 = vmatmul.mubr.f32.gmra.mxu0 %v5535
    %v6564 = vpop.f32.mrf.mxu0
    %v6565 = vadd.f32 %v6180, %v6564
    %v6566 = vpop.f32.mrf.mxu0
    %6567 = vdwg.mxu0
    %6568 = vmatprep.subr.mxu0 0.0
    %6569 = vmatpush1.msra.mxu0 0.0
    %6570 = vmatprep.subr.mxu0 0.0
    %6571 = vmatpush1.msra.mxu0 0.0
    %6572 = vmatprep.subr.mxu0 0.0
    %6573 = vmatpush1.msra.mxu0 0.0
    %6574 = vmatprep.subr.mxu0 0.0
    %6575 = vmatpush1.msra.mxu0 0.0
    %6576 = vmatprep.subr.mxu0 0.0
    %6577 = vmatpush1.msra.mxu0 0.0
    %6578 = vmatprep.subr.mxu0 0.0
    %6579 = vmatpush1.msra.mxu0 0.0
    %6580 = vmatprep.subr.mxu0 0.0
    %6581 = vmatpush1.msra.mxu0 0.0
    %6582 = vmatprep.subr.mxu0 0.0
    %6583 = vmatpush1.msra.mxu0 0.0
    %6584 = vmatprep.subr.mxu0 0.0
    %6585 = vmatpush1.msra.mxu0 %v164
    %6586 = vmatprep.subr.mxu0 0.0
    %6587 = vmatpush1.msra.mxu0 %v163
    %6588 = vmatprep.subr.mxu0 0.0
    %6589 = vmatpush1.msra.mxu0 %v162
    %6590 = vmatprep.subr.mxu0 0.0
    %6591 = vmatpush1.msra.mxu0 %v161
    %6592 = vmatprep.subr.mxu0 0.0
    %6593 = vmatpush1.msra.mxu0 %v160
    %6594 = vmatprep.subr.mxu0 0.0
    %6595 = vmatpush1.msra.mxu0 %v159
    %6596 = vmatprep.subr.mxu0 0.0
    %6597 = vmatpush1.msra.mxu0 %v158
    %6598 = vmatprep.subr.mxu0 0.0
    %6599 = vmatpush1.msra.mxu0 %v157
    %6600 = vmatprep.subr.mxu0 0.0
    %6601 = vmatpush2.msra.mxu0 0.0
    %6602 = vmatprep.subr.mxu0 0.0
    %6603 = vmatpush2.msra.mxu0 0.0
    %6604 = vmatprep.subr.mxu0 0.0
    %6605 = vmatpush2.msra.mxu0 0.0
    %6606 = vmatprep.subr.mxu0 0.0
    %6607 = vmatpush2.msra.mxu0 0.0
    %6608 = vmatprep.subr.mxu0 0.0
    %6609 = vmatpush2.msra.mxu0 0.0
    %6610 = vmatprep.subr.mxu0 0.0
    %6611 = vmatpush2.msra.mxu0 0.0
    %6612 = vmatprep.subr.mxu0 0.0
    %6613 = vmatpush2.msra.mxu0 0.0
    %6614 = vmatprep.subr.mxu0 0.0
    %6615 = vmatpush2.msra.mxu0 0.0
    %6616 = vmatprep.subr.mxu0 0.0
    %6617 = vmatpush2.msra.mxu0 0.0
    %6618 = vmatprep.subr.mxu0 0.0
    %6619 = vmatpush2.msra.mxu0 0.0
    %6620 = vmatprep.subr.mxu0 0.0
    %6621 = vmatpush2.msra.mxu0 0.0
    %6622 = vmatprep.subr.mxu0 0.0
    %6623 = vmatpush2.msra.mxu0 0.0
    %6624 = vmatprep.subr.mxu0 0.0
    %6625 = vmatpush2.msra.mxu0 0.0
    %6626 = vmatprep.subr.mxu0 0.0
    %6627 = vmatpush2.msra.mxu0 0.0
    %6628 = vmatprep.subr.mxu0 0.0
    %6629 = vmatpush2.msra.mxu0 0.0
    %6630 = vmatprep.subr.mxu0 0.0
    %6631 = vmatpush2.msra.mxu0 0.0
    %6632 = vmatprep.mubr.f32.mxu0 0.0
    %6633 = vmatmul.mubr.f32.gmra.mxu0 %v5607
    %v6634 = vpop.f32.mrf.mxu0
    %v6635 = vadd.f32 %v6250, %v6634
    %v6636 = vpop.f32.mrf.mxu0
    %6637 = vmatprep.mubr.f32.mxu0 0.0
    %6638 = vmatmul.mubr.f32.gmra.mxu0 %v5610
    %v6639 = vpop.f32.mrf.mxu0
    %v6640 = vadd.f32 %v6255, %v6639
    %v6641 = vpop.f32.mrf.mxu0
    %6642 = vmatprep.mubr.f32.mxu0 0.0
    %6643 = vmatmul.mubr.f32.gmra.mxu0 %v5613
    %v6644 = vpop.f32.mrf.mxu0
    %v6645 = vadd.f32 %v6260, %v6644
    %v6646 = vpop.f32.mrf.mxu0
    %6647 = vmatprep.mubr.f32.mxu0 0.0
    %6648 = vmatmul.mubr.f32.gmra.mxu0 %v5616
    %v6649 = vpop.f32.mrf.mxu0
    %v6650 = vadd.f32 %v6265, %v6649
    %v6651 = vpop.f32.mrf.mxu0
    %6652 = vmatprep.mubr.f32.mxu0 0.0
    %6653 = vmatmul.mubr.f32.gmra.mxu0 %v5619
    %v6654 = vpop.f32.mrf.mxu0
    %v6655 = vadd.f32 %v6270, %v6654
    %v6656 = vpop.f32.mrf.mxu0
    %6657 = vmatprep.mubr.f32.mxu0 0.0
    %6658 = vmatmul.mubr.f32.gmra.mxu0 %v5622
    %v6659 = vpop.f32.mrf.mxu0
    %v6660 = vadd.f32 %v6275, %v6659
    %v6661 = vpop.f32.mrf.mxu0
    %6662 = vmatprep.mubr.f32.mxu0 0.0
    %6663 = vmatmul.mubr.f32.gmra.mxu0 %v5625
    %v6664 = vpop.f32.mrf.mxu0
    %v6665 = vadd.f32 %v6280, %v6664
    %v6666 = vpop.f32.mrf.mxu0
    %6667 = vmatprep.mubr.f32.mxu0 0.0
    %6668 = vmatmul.mubr.f32.gmra.mxu0 %v5628
    %v6669 = vpop.f32.mrf.mxu0
    %v6670 = vadd.f32 %v6285, %v6669
    %v6671 = vpop.f32.mrf.mxu0
    %6672 = vmatprep.mubr.f32.mxu0 0.0
    %6673 = vmatmul.mubr.f32.gmra.mxu0 %v5631
    %v6674 = vpop.f32.mrf.mxu0
    %v6675 = vadd.f32 %v6290, %v6674
    %v6676 = vpop.f32.mrf.mxu0
    %6677 = vmatprep.mubr.f32.mxu0 0.0
    %6678 = vmatmul.mubr.f32.gmra.mxu0 %v5634
    %v6679 = vpop.f32.mrf.mxu0
    %v6680 = vadd.f32 %v6295, %v6679
    %v6681 = vpop.f32.mrf.mxu0
    %6682 = vmatprep.mubr.f32.mxu0 0.0
    %6683 = vmatmul.mubr.f32.gmra.mxu0 %v5637
    %v6684 = vpop.f32.mrf.mxu0
    %v6685 = vadd.f32 %v6300, %v6684
    %v6686 = vpop.f32.mrf.mxu0
    %6687 = vmatprep.mubr.f32.mxu0 0.0
    %6688 = vmatmul.mubr.f32.gmra.mxu0 %v5640
    %v6689 = vpop.f32.mrf.mxu0
    %v6690 = vadd.f32 %v6305, %v6689
    %v6691 = vpop.f32.mrf.mxu0
    %6692 = vmatprep.mubr.f32.mxu0 0.0
    %6693 = vmatmul.mubr.f32.gmra.mxu0 %v5643
    %v6694 = vpop.f32.mrf.mxu0
    %v6695 = vadd.f32 %v6310, %v6694
    %v6696 = vpop.f32.mrf.mxu0
    %6697 = vmatprep.mubr.f32.mxu0 0.0
    %6698 = vmatmul.mubr.f32.gmra.mxu0 %v5646
    %v6699 = vpop.f32.mrf.mxu0
    %v6700 = vadd.f32 %v6315, %v6699
    %v6701 = vpop.f32.mrf.mxu0
    %6702 = vmatprep.mubr.f32.mxu0 0.0
    %6703 = vmatmul.mubr.f32.gmra.mxu0 %v5649
    %v6704 = vpop.f32.mrf.mxu0
    %v6705 = vadd.f32 %v6320, %v6704
    %v6706 = vpop.f32.mrf.mxu0
    %6707 = vmatprep.mubr.f32.mxu0 0.0
    %6708 = vmatmul.mubr.f32.gmra.mxu0 %v5652
    %v6709 = vpop.f32.mrf.mxu0
    %v6710 = vadd.f32 %v6325, %v6709
    %v6711 = vpop.f32.mrf.mxu0
    %6712 = vmatprep.mubr.f32.mxu0 0.0
    %6713 = vmatmul.mubr.f32.gmra.mxu0 %v5655
    %v6714 = vpop.f32.mrf.mxu0
    %v6715 = vadd.f32 %v6330, %v6714
    %v6716 = vpop.f32.mrf.mxu0
    %6717 = vmatprep.mubr.f32.mxu0 0.0
    %6718 = vmatmul.mubr.f32.gmra.mxu0 %v5658
    %v6719 = vpop.f32.mrf.mxu0
    %v6720 = vadd.f32 %v6335, %v6719
    %v6721 = vpop.f32.mrf.mxu0
    %6722 = vmatprep.mubr.f32.mxu0 0.0
    %6723 = vmatmul.mubr.f32.gmra.mxu0 %v5661
    %v6724 = vpop.f32.mrf.mxu0
    %v6725 = vadd.f32 %v6340, %v6724
    %v6726 = vpop.f32.mrf.mxu0
    %6727 = vmatprep.mubr.f32.mxu0 0.0
    %6728 = vmatmul.mubr.f32.gmra.mxu0 %v5664
    %v6729 = vpop.f32.mrf.mxu0
    %v6730 = vadd.f32 %v6345, %v6729
    %v6731 = vpop.f32.mrf.mxu0
    %6732 = vmatprep.mubr.f32.mxu0 0.0
    %6733 = vmatmul.mubr.f32.gmra.mxu0 %v5667
    %v6734 = vpop.f32.mrf.mxu0
    %v6735 = vadd.f32 %v6350, %v6734
    %v6736 = vpop.f32.mrf.mxu0
    %6737 = vmatprep.mubr.f32.mxu0 0.0
    %6738 = vmatmul.mubr.f32.gmra.mxu0 %v5670
    %v6739 = vpop.f32.mrf.mxu0
    %v6740 = vadd.f32 %v6355, %v6739
    %v6741 = vpop.f32.mrf.mxu0
    %6742 = vmatprep.mubr.f32.mxu0 0.0
    %6743 = vmatmul.mubr.f32.gmra.mxu0 %v5673
    %v6744 = vpop.f32.mrf.mxu0
    %v6745 = vadd.f32 %v6360, %v6744
    %v6746 = vpop.f32.mrf.mxu0
    %6747 = vmatprep.mubr.f32.mxu0 0.0
    %6748 = vmatmul.mubr.f32.gmra.mxu0 %v5676
    %v6749 = vpop.f32.mrf.mxu0
    %v6750 = vadd.f32 %v6365, %v6749
    %v6751 = vpop.f32.mrf.mxu0
    %6752 = vmatprep.mubr.f32.mxu0 0.0
    %6753 = vmatmul.mubr.f32.gmra.mxu0 %v5679
    %v6754 = vpop.f32.mrf.mxu0
    %v6755 = vadd.f32 %v6370, %v6754
    %v6756 = vpop.f32.mrf.mxu0
    %6757 = vmatprep.mubr.f32.mxu0 0.0
    %6758 = vmatmul.mubr.f32.gmra.mxu0 %v5682
    %v6759 = vpop.f32.mrf.mxu0
    %v6760 = vadd.f32 %v6375, %v6759
    %v6761 = vpop.f32.mrf.mxu0
    %6762 = vmatprep.mubr.f32.mxu0 0.0
    %6763 = vmatmul.mubr.f32.gmra.mxu0 %v5685
    %v6764 = vpop.f32.mrf.mxu0
    %v6765 = vadd.f32 %v6380, %v6764
    %v6766 = vpop.f32.mrf.mxu0
    %6767 = vmatprep.mubr.f32.mxu0 0.0
    %6768 = vmatmul.mubr.f32.gmra.mxu0 %v5688
    %v6769 = vpop.f32.mrf.mxu0
    %v6770 = vadd.f32 %v6385, %v6769
    %v6771 = vpop.f32.mrf.mxu0
    %6772 = vmatprep.mubr.f32.mxu0 0.0
    %6773 = vmatmul.mubr.f32.gmra.mxu0 %v5691
    %v6774 = vpop.f32.mrf.mxu0
    %v6775 = vadd.f32 %v6390, %v6774
    %v6776 = vpop.f32.mrf.mxu0
    %6777 = vmatprep.mubr.f32.mxu0 0.0
    %6778 = vmatmul.mubr.f32.gmra.mxu0 %v5694
    %v6779 = vpop.f32.mrf.mxu0
    %v6780 = vadd.f32 %v6395, %v6779
    %v6781 = vpop.f32.mrf.mxu0
    %6782 = vmatprep.mubr.f32.mxu0 0.0
    %6783 = vmatmul.mubr.f32.gmra.mxu0 %v5697
    %v6784 = vpop.f32.mrf.mxu0
    %v6785 = vadd.f32 %v6400, %v6784
    %v6786 = vpop.f32.mrf.mxu0
    %6787 = vmatprep.mubr.f32.mxu0 0.0
    %6788 = vmatmul.mubr.f32.gmra.mxu0 %v5700
    %v6789 = vpop.f32.mrf.mxu0
    %v6790 = vadd.f32 %v6405, %v6789
    %v6791 = vpop.f32.mrf.mxu0
    %6792 = vmatprep.mubr.f32.mxu0 0.0
    %6793 = vmatmul.mubr.f32.gmra.mxu0 %v5703
    %v6794 = vpop.f32.mrf.mxu0
    %v6795 = vadd.f32 %v6410, %v6794
    %v6796 = vpop.f32.mrf.mxu0
    %6797 = vmatprep.mubr.f32.mxu0 0.0
    %6798 = vmatmul.mubr.f32.gmra.mxu0 %v5706
    %v6799 = vpop.f32.mrf.mxu0
    %v6800 = vadd.f32 %v6415, %v6799
    %v6801 = vpop.f32.mrf.mxu0
    %6802 = vmatprep.mubr.f32.mxu0 0.0
    %6803 = vmatmul.mubr.f32.gmra.mxu0 %v5709
    %v6804 = vpop.f32.mrf.mxu0
    %v6805 = vadd.f32 %v6420, %v6804
    %v6806 = vpop.f32.mrf.mxu0
    %6807 = vmatprep.mubr.f32.mxu0 0.0
    %6808 = vmatmul.mubr.f32.gmra.mxu0 %v5712
    %v6809 = vpop.f32.mrf.mxu0
    %v6810 = vadd.f32 %v6425, %v6809
    %v6811 = vpop.f32.mrf.mxu0
    %6812 = vmatprep.mubr.f32.mxu0 0.0
    %6813 = vmatmul.mubr.f32.gmra.mxu0 %v5715
    %v6814 = vpop.f32.mrf.mxu0
    %v6815 = vadd.f32 %v6430, %v6814
    %v6816 = vpop.f32.mrf.mxu0
    %6817 = vmatprep.mubr.f32.mxu0 0.0
    %6818 = vmatmul.mubr.f32.gmra.mxu0 %v5718
    %v6819 = vpop.f32.mrf.mxu0
    %v6820 = vadd.f32 %v6435, %v6819
    %v6821 = vpop.f32.mrf.mxu0
    %6822 = vmatprep.mubr.f32.mxu0 0.0
    %6823 = vmatmul.mubr.f32.gmra.mxu0 %v5721
    %v6824 = vpop.f32.mrf.mxu0
    %v6825 = vadd.f32 %v6440, %v6824
    %v6826 = vpop.f32.mrf.mxu0
    %6827 = vmatprep.mubr.f32.mxu0 0.0
    %6828 = vmatmul.mubr.f32.gmra.mxu0 %v5724
    %v6829 = vpop.f32.mrf.mxu0
    %v6830 = vadd.f32 %v6445, %v6829
    %v6831 = vpop.f32.mrf.mxu0
    %6832 = vmatprep.mubr.f32.mxu0 0.0
    %6833 = vmatmul.mubr.f32.gmra.mxu0 %v5727
    %v6834 = vpop.f32.mrf.mxu0
    %v6835 = vadd.f32 %v6450, %v6834
    %v6836 = vpop.f32.mrf.mxu0
    %6837 = vmatprep.mubr.f32.mxu0 0.0
    %6838 = vmatmul.mubr.f32.gmra.mxu0 %v5730
    %v6839 = vpop.f32.mrf.mxu0
    %v6840 = vadd.f32 %v6455, %v6839
    %v6841 = vpop.f32.mrf.mxu0
    %6842 = vmatprep.mubr.f32.mxu0 0.0
    %6843 = vmatmul.mubr.f32.gmra.mxu0 %v5733
    %v6844 = vpop.f32.mrf.mxu0
    %v6845 = vadd.f32 %v6460, %v6844
    %v6846 = vpop.f32.mrf.mxu0
    %6847 = vmatprep.mubr.f32.mxu0 0.0
    %6848 = vmatmul.mubr.f32.gmra.mxu0 %v5736
    %v6849 = vpop.f32.mrf.mxu0
    %v6850 = vadd.f32 %v6465, %v6849
    %v6851 = vpop.f32.mrf.mxu0
    %6852 = vmatprep.mubr.f32.mxu0 0.0
    %6853 = vmatmul.mubr.f32.gmra.mxu0 %v5739
    %v6854 = vpop.f32.mrf.mxu0
    %v6855 = vadd.f32 %v6470, %v6854
    %v6856 = vpop.f32.mrf.mxu0
    %6857 = vmatprep.mubr.f32.mxu0 0.0
    %6858 = vmatmul.mubr.f32.gmra.mxu0 %v5742
    %v6859 = vpop.f32.mrf.mxu0
    %v6860 = vadd.f32 %v6475, %v6859
    %v6861 = vpop.f32.mrf.mxu0
    %6862 = vmatprep.mubr.f32.mxu0 0.0
    %6863 = vmatmul.mubr.f32.gmra.mxu0 %v5745
    %v6864 = vpop.f32.mrf.mxu0
    %v6865 = vadd.f32 %v6480, %v6864
    %v6866 = vpop.f32.mrf.mxu0
    %6867 = vmatprep.mubr.f32.mxu0 0.0
    %6868 = vmatmul.mubr.f32.gmra.mxu0 %v5748
    %v6869 = vpop.f32.mrf.mxu0
    %v6870 = vadd.f32 %v6485, %v6869
    %v6871 = vpop.f32.mrf.mxu0
    %6872 = vmatprep.mubr.f32.mxu0 0.0
    %6873 = vmatmul.mubr.f32.gmra.mxu0 %v5751
    %v6874 = vpop.f32.mrf.mxu0
    %v6875 = vadd.f32 %v6490, %v6874
    %v6876 = vpop.f32.mrf.mxu0
    %6877 = vmatprep.mubr.f32.mxu0 0.0
    %6878 = vmatmul.mubr.f32.gmra.mxu0 %v5754
    %v6879 = vpop.f32.mrf.mxu0
    %v6880 = vadd.f32 %v6495, %v6879
    %v6881 = vpop.f32.mrf.mxu0
    %6882 = vmatprep.mubr.f32.mxu0 0.0
    %6883 = vmatmul.mubr.f32.gmra.mxu0 %v5757
    %v6884 = vpop.f32.mrf.mxu0
    %v6885 = vadd.f32 %v6500, %v6884
    %v6886 = vpop.f32.mrf.mxu0
    %6887 = vmatprep.mubr.f32.mxu0 0.0
    %6888 = vmatmul.mubr.f32.gmra.mxu0 %v5760
    %v6889 = vpop.f32.mrf.mxu0
    %v6890 = vadd.f32 %v6505, %v6889
    %v6891 = vpop.f32.mrf.mxu0
    %6892 = vmatprep.mubr.f32.mxu0 0.0
    %6893 = vmatmul.mubr.f32.gmra.mxu0 %v5763
    %v6894 = vpop.f32.mrf.mxu0
    %v6895 = vadd.f32 %v6510, %v6894
    %v6896 = vpop.f32.mrf.mxu0
    %6897 = vmatprep.mubr.f32.mxu0 0.0
    %6898 = vmatmul.mubr.f32.gmra.mxu0 %v5766
    %v6899 = vpop.f32.mrf.mxu0
    %v6900 = vadd.f32 %v6515, %v6899
    %v6901 = vpop.f32.mrf.mxu0
    %6902 = vmatprep.mubr.f32.mxu0 0.0
    %6903 = vmatmul.mubr.f32.gmra.mxu0 %v5769
    %v6904 = vpop.f32.mrf.mxu0
    %v6905 = vadd.f32 %v6520, %v6904
    %v6906 = vpop.f32.mrf.mxu0
    %6907 = vmatprep.mubr.f32.mxu0 0.0
    %6908 = vmatmul.mubr.f32.gmra.mxu0 %v5772
    %v6909 = vpop.f32.mrf.mxu0
    %v6910 = vadd.f32 %v6525, %v6909
    %v6911 = vpop.f32.mrf.mxu0
    %6912 = vmatprep.mubr.f32.mxu0 0.0
    %6913 = vmatmul.mubr.f32.gmra.mxu0 %v5775
    %v6914 = vpop.f32.mrf.mxu0
    %v6915 = vadd.f32 %v6530, %v6914
    %v6916 = vpop.f32.mrf.mxu0
    %6917 = vmatprep.mubr.f32.mxu0 0.0
    %6918 = vmatmul.mubr.f32.gmra.mxu0 %v5778
    %v6919 = vpop.f32.mrf.mxu0
    %v6920 = vadd.f32 %v6535, %v6919
    %v6921 = vpop.f32.mrf.mxu0
    %6922 = vmatprep.mubr.f32.mxu0 0.0
    %6923 = vmatmul.mubr.f32.gmra.mxu0 %v5781
    %v6924 = vpop.f32.mrf.mxu0
    %v6925 = vadd.f32 %v6540, %v6924
    %v6926 = vpop.f32.mrf.mxu0
    %6927 = vmatprep.mubr.f32.mxu0 0.0
    %6928 = vmatmul.mubr.f32.gmra.mxu0 %v5784
    %v6929 = vpop.f32.mrf.mxu0
    %v6930 = vadd.f32 %v6545, %v6929
    %v6931 = vpop.f32.mrf.mxu0
    %6932 = vmatprep.mubr.f32.mxu0 0.0
    %6933 = vmatmul.mubr.f32.gmra.mxu0 %v5787
    %v6934 = vpop.f32.mrf.mxu0
    %v6935 = vadd.f32 %v6550, %v6934
    %v6936 = vpop.f32.mrf.mxu0
    %6937 = vmatprep.mubr.f32.mxu0 0.0
    %6938 = vmatmul.mubr.f32.gmra.mxu0 %v5790
    %v6939 = vpop.f32.mrf.mxu0
    %v6940 = vadd.f32 %v6555, %v6939
    %v6941 = vpop.f32.mrf.mxu0
    %6942 = vmatprep.mubr.f32.mxu0 0.0
    %6943 = vmatmul.mubr.f32.gmra.mxu0 %v5793
    %v6944 = vpop.f32.mrf.mxu0
    %v6945 = vadd.f32 %v6560, %v6944
    %v6946 = vpop.f32.mrf.mxu0
    %6947 = vmatprep.mubr.f32.mxu0 0.0
    %6948 = vmatmul.mubr.f32.gmra.mxu0 %v5796
    %v6949 = vpop.f32.mrf.mxu0
    %v6950 = vadd.f32 %v6565, %v6949
    %v6951 = vpop.f32.mrf.mxu0
    %6952 = vdwg.mxu0
    %v6953 = vld [vmem:[%s0] sm:$0xff]
    %v6954 = vld [vmem:[%s0 + $0x8] sm:$0xff]
    %v6955 = vld [vmem:[%s0 + $0x10] sm:$0xff]
    %v6956 = vld [vmem:[%s0 + $0x18] sm:$0xff]
    %v6957 = vld [vmem:[%s0 + $0x20] sm:$0xff]
    %v6958 = vld [vmem:[%s0 + $0x28] sm:$0xff]
    %v6959 = vld [vmem:[%s0 + $0x30] sm:$0xff]
    %v6960 = vld [vmem:[%s0 + $0x38] sm:$0xff]
    %v6961 = vld [vmem:[%s0 + $0x40] sm:$0xff]
    %v6962 = vld [vmem:[%s0 + $0x48] sm:$0xff]
    %v6963 = vld [vmem:[%s0 + $0x50] sm:$0xff]
    %v6964 = vld [vmem:[%s0 + $0x58] sm:$0xff]
    %v6965 = vld [vmem:[%s0 + $0x60] sm:$0xff]
    %v6966 = vld [vmem:[%s0 + $0x68] sm:$0xff]
    %v6967 = vld [vmem:[%s0 + $0x70] sm:$0xff]
    %v6968 = vld [vmem:[%s0 + $0x78] sm:$0xff]
    %v6969 = vld [vmem:[%s0 + $0x80] sm:$0xff]
    %v6970 = vld [vmem:[%s0 + $0x88] sm:$0xff]
    %v6971 = vld [vmem:[%s0 + $0x90] sm:$0xff]
    %v6972 = vld [vmem:[%s0 + $0x98] sm:$0xff]
    %v6973 = vld [vmem:[%s0 + $0xa0] sm:$0xff]
    %v6974 = vld [vmem:[%s0 + $0xa8] sm:$0xff]
    %v6975 = vld [vmem:[%s0 + $0xb0] sm:$0xff]
    %v6976 = vld [vmem:[%s0 + $0xb8] sm:$0xff]
    %v6977 = vld [vmem:[%s0 + $0xc0] sm:$0xff]
    %v6978 = vld [vmem:[%s0 + $0xc8] sm:$0xff]
    %v6979 = vld [vmem:[%s0 + $0xd0] sm:$0xff]
    %v6980 = vld [vmem:[%s0 + $0xd8] sm:$0xff]
    %v6981 = vld [vmem:[%s0 + $0xe0] sm:$0xff]
    %v6982 = vld [vmem:[%s0 + $0xe8] sm:$0xff]
    %v6983 = vld [vmem:[%s0 + $0xf0] sm:$0xff]
    %v6984 = vld [vmem:[%s0 + $0xf8] sm:$0xff]
    %v6985 = vld [vmem:[%s0 + $0x100] sm:$0xff]
    %v6986 = vld [vmem:[%s0 + $0x108] sm:$0xff]
    %v6987 = vld [vmem:[%s0 + $0x110] sm:$0xff]
    %v6988 = vld [vmem:[%s0 + $0x118] sm:$0xff]
    %v6989 = vld [vmem:[%s0 + $0x120] sm:$0xff]
    %v6990 = vld [vmem:[%s0 + $0x128] sm:$0xff]
    %v6991 = vld [vmem:[%s0 + $0x130] sm:$0xff]
    %v6992 = vld [vmem:[%s0 + $0x138] sm:$0xff]
    %v6993 = vld [vmem:[%s0 + $0x140] sm:$0xff]
    %v6994 = vld [vmem:[%s0 + $0x148] sm:$0xff]
    %v6995 = vld [vmem:[%s0 + $0x150] sm:$0xff]
    %v6996 = vld [vmem:[%s0 + $0x158] sm:$0xff]
    %v6997 = vld [vmem:[%s0 + $0x160] sm:$0xff]
    %v6998 = vld [vmem:[%s0 + $0x168] sm:$0xff]
    %v6999 = vld [vmem:[%s0 + $0x170] sm:$0xff]
    %v7000 = vld [vmem:[%s0 + $0x178] sm:$0xff]
    %v7001 = vld [vmem:[%s0 + $0x180] sm:$0xff]
    %v7002 = vld [vmem:[%s0 + $0x188] sm:$0xff]
    %v7003 = vld [vmem:[%s0 + $0x190] sm:$0xff]
    %v7004 = vld [vmem:[%s0 + $0x198] sm:$0xff]
    %v7005 = vld [vmem:[%s0 + $0x1a0] sm:$0xff]
    %v7006 = vld [vmem:[%s0 + $0x1a8] sm:$0xff]
    %v7007 = vld [vmem:[%s0 + $0x1b0] sm:$0xff]
    %v7008 = vld [vmem:[%s0 + $0x1b8] sm:$0xff]
    %v7009 = vld [vmem:[%s0 + $0x1c0] sm:$0xff]
    %v7010 = vld [vmem:[%s0 + $0x1c8] sm:$0xff]
    %v7011 = vld [vmem:[%s0 + $0x1d0] sm:$0xff]
    %v7012 = vld [vmem:[%s0 + $0x1d8] sm:$0xff]
    %v7013 = vld [vmem:[%s0 + $0x1e0] sm:$0xff]
    %v7014 = vld [vmem:[%s0 + $0x1e8] sm:$0xff]
    %v7015 = vld [vmem:[%s0 + $0x1f0] sm:$0xff]
    %v7016 = vld [vmem:[%s0 + $0x1f8] sm:$0xff]
    %v7017 = vadd.f32 %v6635, %v6953
    %v7018 = vadd.f32 %v6640, %v6954
    %v7019 = vadd.f32 %v6645, %v6955
    %v7020 = vadd.f32 %v6650, %v6956
    %v7021 = vadd.f32 %v6655, %v6957
    %v7022 = vadd.f32 %v6660, %v6958
    %v7023 = vadd.f32 %v6665, %v6959
    %v7024 = vadd.f32 %v6670, %v6960
    %v7025 = vadd.f32 %v6675, %v6961
    %v7026 = vadd.f32 %v6680, %v6962
    %v7027 = vadd.f32 %v6685, %v6963
    %v7028 = vadd.f32 %v6690, %v6964
    %v7029 = vadd.f32 %v6695, %v6965
    %v7030 = vadd.f32 %v6700, %v6966
    %v7031 = vadd.f32 %v6705, %v6967
    %v7032 = vadd.f32 %v6710, %v6968
    %v7033 = vadd.f32 %v6715, %v6969
    %v7034 = vadd.f32 %v6720, %v6970
    %v7035 = vadd.f32 %v6725, %v6971
    %v7036 = vadd.f32 %v6730, %v6972
    %v7037 = vadd.f32 %v6735, %v6973
    %v7038 = vadd.f32 %v6740, %v6974
    %v7039 = vadd.f32 %v6745, %v6975
    %v7040 = vadd.f32 %v6750, %v6976
    %v7041 = vadd.f32 %v6755, %v6977
    %v7042 = vadd.f32 %v6760, %v6978
    %v7043 = vadd.f32 %v6765, %v6979
    %v7044 = vadd.f32 %v6770, %v6980
    %v7045 = vadd.f32 %v6775, %v6981
    %v7046 = vadd.f32 %v6780, %v6982
    %v7047 = vadd.f32 %v6785, %v6983
    %v7048 = vadd.f32 %v6790, %v6984
    %v7049 = vadd.f32 %v6795, %v6985
    %v7050 = vadd.f32 %v6800, %v6986
    %v7051 = vadd.f32 %v6805, %v6987
    %v7052 = vadd.f32 %v6810, %v6988
    %v7053 = vadd.f32 %v6815, %v6989
    %v7054 = vadd.f32 %v6820, %v6990
    %v7055 = vadd.f32 %v6825, %v6991
    %v7056 = vadd.f32 %v6830, %v6992
    %v7057 = vadd.f32 %v6835, %v6993
    %v7058 = vadd.f32 %v6840, %v6994
    %v7059 = vadd.f32 %v6845, %v6995
    %v7060 = vadd.f32 %v6850, %v6996
    %v7061 = vadd.f32 %v6855, %v6997
    %v7062 = vadd.f32 %v6860, %v6998
    %v7063 = vadd.f32 %v6865, %v6999
    %v7064 = vadd.f32 %v6870, %v7000
    %v7065 = vadd.f32 %v6875, %v7001
    %v7066 = vadd.f32 %v6880, %v7002
    %v7067 = vadd.f32 %v6885, %v7003
    %v7068 = vadd.f32 %v6890, %v7004
    %v7069 = vadd.f32 %v6895, %v7005
    %v7070 = vadd.f32 %v6900, %v7006
    %v7071 = vadd.f32 %v6905, %v7007
    %v7072 = vadd.f32 %v6910, %v7008
    %v7073 = vadd.f32 %v6915, %v7009
    %v7074 = vadd.f32 %v6920, %v7010
    %v7075 = vadd.f32 %v6925, %v7011
    %v7076 = vadd.f32 %v6930, %v7012
    %v7077 = vadd.f32 %v6935, %v7013
    %v7078 = vadd.f32 %v6940, %v7014
    %v7079 = vadd.f32 %v6945, %v7015
    %v7080 = vadd.f32 %v6950, %v7016
    %v7081 = vmax.f32 %v7017, 0.0
    %v7082 = vmax.f32 %v7018, 0.0
    %v7083 = vmax.f32 %v7019, 0.0
    %v7084 = vmax.f32 %v7020, 0.0
    %v7085 = vmax.f32 %v7021, 0.0
    %v7086 = vmax.f32 %v7022, 0.0
    %v7087 = vmax.f32 %v7023, 0.0
    %v7088 = vmax.f32 %v7024, 0.0
    %v7089 = vmax.f32 %v7025, 0.0
    %v7090 = vmax.f32 %v7026, 0.0
    %v7091 = vmax.f32 %v7027, 0.0
    %v7092 = vmax.f32 %v7028, 0.0
    %v7093 = vmax.f32 %v7029, 0.0
    %v7094 = vmax.f32 %v7030, 0.0
    %v7095 = vmax.f32 %v7031, 0.0
    %v7096 = vmax.f32 %v7032, 0.0
    %v7097 = vmax.f32 %v7033, 0.0
    %v7098 = vmax.f32 %v7034, 0.0
    %v7099 = vmax.f32 %v7035, 0.0
    %v7100 = vmax.f32 %v7036, 0.0
    %v7101 = vmax.f32 %v7037, 0.0
    %v7102 = vmax.f32 %v7038, 0.0
    %v7103 = vmax.f32 %v7039, 0.0
    %v7104 = vmax.f32 %v7040, 0.0
    %v7105 = vmax.f32 %v7041, 0.0
    %v7106 = vmax.f32 %v7042, 0.0
    %v7107 = vmax.f32 %v7043, 0.0
    %v7108 = vmax.f32 %v7044, 0.0
    %v7109 = vmax.f32 %v7045, 0.0
    %v7110 = vmax.f32 %v7046, 0.0
    %v7111 = vmax.f32 %v7047, 0.0
    %v7112 = vmax.f32 %v7048, 0.0
    %v7113 = vmax.f32 %v7049, 0.0
    %v7114 = vmax.f32 %v7050, 0.0
    %v7115 = vmax.f32 %v7051, 0.0
    %v7116 = vmax.f32 %v7052, 0.0
    %v7117 = vmax.f32 %v7053, 0.0
    %v7118 = vmax.f32 %v7054, 0.0
    %v7119 = vmax.f32 %v7055, 0.0
    %v7120 = vmax.f32 %v7056, 0.0
    %v7121 = vmax.f32 %v7057, 0.0
    %v7122 = vmax.f32 %v7058, 0.0
    %v7123 = vmax.f32 %v7059, 0.0
    %v7124 = vmax.f32 %v7060, 0.0
    %v7125 = vmax.f32 %v7061, 0.0
    %v7126 = vmax.f32 %v7062, 0.0
    %v7127 = vmax.f32 %v7063, 0.0
    %v7128 = vmax.f32 %v7064, 0.0
    %v7129 = vmax.f32 %v7065, 0.0
    %v7130 = vmax.f32 %v7066, 0.0
    %v7131 = vmax.f32 %v7067, 0.0
    %v7132 = vmax.f32 %v7068, 0.0
    %v7133 = vmax.f32 %v7069, 0.0
    %v7134 = vmax.f32 %v7070, 0.0
    %v7135 = vmax.f32 %v7071, 0.0
    %v7136 = vmax.f32 %v7072, 0.0
    %v7137 = vmax.f32 %v7073, 0.0
    %v7138 = vmax.f32 %v7074, 0.0
    %v7139 = vmax.f32 %v7075, 0.0
    %v7140 = vmax.f32 %v7076, 0.0
    %v7141 = vmax.f32 %v7077, 0.0
    %v7142 = vmax.f32 %v7078, 0.0
    %v7143 = vmax.f32 %v7079, 0.0
    %v7144 = vmax.f32 %v7080, 0.0
    %7145 = vst.msk [vmem:[#allocation3] sm:$0xff] %vm167, %v7081
    %7146 = vst.msk [vmem:[#allocation3 + $0x8] sm:$0xff] %vm167, %v7082
    %7147 = vst.msk [vmem:[#allocation3 + $0x10] sm:$0xff] %vm167, %v7083
    %7148 = vst.msk [vmem:[#allocation3 + $0x18] sm:$0xff] %vm167, %v7084
    %7149 = vst.msk [vmem:[#allocation3 + $0x20] sm:$0xff] %vm167, %v7085
    %7150 = vst.msk [vmem:[#allocation3 + $0x28] sm:$0xff] %vm167, %v7086
    %7151 = vst.msk [vmem:[#allocation3 + $0x30] sm:$0xff] %vm167, %v7087
    %7152 = vst.msk [vmem:[#allocation3 + $0x38] sm:$0xff] %vm167, %v7088
    %7153 = vst.msk [vmem:[#allocation3 + $0x40] sm:$0xff] %vm167, %v7089
    %7154 = vst.msk [vmem:[#allocation3 + $0x48] sm:$0xff] %vm167, %v7090
    %7155 = vst.msk [vmem:[#allocation3 + $0x50] sm:$0xff] %vm167, %v7091
    %7156 = vst.msk [vmem:[#allocation3 + $0x58] sm:$0xff] %vm167, %v7092
    %7157 = vst.msk [vmem:[#allocation3 + $0x60] sm:$0xff] %vm167, %v7093
    %7158 = vst.msk [vmem:[#allocation3 + $0x68] sm:$0xff] %vm167, %v7094
    %7159 = vst.msk [vmem:[#allocation3 + $0x70] sm:$0xff] %vm167, %v7095
    %7160 = vst.msk [vmem:[#allocation3 + $0x78] sm:$0xff] %vm167, %v7096
    %7161 = vst.msk [vmem:[#allocation3 + $0x80] sm:$0xff] %vm167, %v7097
    %7162 = vst.msk [vmem:[#allocation3 + $0x88] sm:$0xff] %vm167, %v7098
    %7163 = vst.msk [vmem:[#allocation3 + $0x90] sm:$0xff] %vm167, %v7099
    %7164 = vst.msk [vmem:[#allocation3 + $0x98] sm:$0xff] %vm167, %v7100
    %7165 = vst.msk [vmem:[#allocation3 + $0xa0] sm:$0xff] %vm167, %v7101
    %7166 = vst.msk [vmem:[#allocation3 + $0xa8] sm:$0xff] %vm167, %v7102
    %7167 = vst.msk [vmem:[#allocation3 + $0xb0] sm:$0xff] %vm167, %v7103
    %7168 = vst.msk [vmem:[#allocation3 + $0xb8] sm:$0xff] %vm167, %v7104
    %7169 = vst.msk [vmem:[#allocation3 + $0xc0] sm:$0xff] %vm167, %v7105
    %7170 = vst.msk [vmem:[#allocation3 + $0xc8] sm:$0xff] %vm167, %v7106
    %7171 = vst.msk [vmem:[#allocation3 + $0xd0] sm:$0xff] %vm167, %v7107
    %7172 = vst.msk [vmem:[#allocation3 + $0xd8] sm:$0xff] %vm167, %v7108
    %7173 = vst.msk [vmem:[#allocation3 + $0xe0] sm:$0xff] %vm167, %v7109
    %7174 = vst.msk [vmem:[#allocation3 + $0xe8] sm:$0xff] %vm167, %v7110
    %7175 = vst.msk [vmem:[#allocation3 + $0xf0] sm:$0xff] %vm167, %v7111
    %7176 = vst.msk [vmem:[#allocation3 + $0xf8] sm:$0xff] %vm167, %v7112
    %7177 = vst.msk [vmem:[#allocation3 + $0x100] sm:$0xff] %vm167, %v7113
    %7178 = vst.msk [vmem:[#allocation3 + $0x108] sm:$0xff] %vm167, %v7114
    %7179 = vst.msk [vmem:[#allocation3 + $0x110] sm:$0xff] %vm167, %v7115
    %7180 = vst.msk [vmem:[#allocation3 + $0x118] sm:$0xff] %vm167, %v7116
    %7181 = vst.msk [vmem:[#allocation3 + $0x120] sm:$0xff] %vm167, %v7117
    %7182 = vst.msk [vmem:[#allocation3 + $0x128] sm:$0xff] %vm167, %v7118
    %7183 = vst.msk [vmem:[#allocation3 + $0x130] sm:$0xff] %vm167, %v7119
    %7184 = vst.msk [vmem:[#allocation3 + $0x138] sm:$0xff] %vm167, %v7120
    %7185 = vst.msk [vmem:[#allocation3 + $0x140] sm:$0xff] %vm167, %v7121
    %7186 = vst.msk [vmem:[#allocation3 + $0x148] sm:$0xff] %vm167, %v7122
    %7187 = vst.msk [vmem:[#allocation3 + $0x150] sm:$0xff] %vm167, %v7123
    %7188 = vst.msk [vmem:[#allocation3 + $0x158] sm:$0xff] %vm167, %v7124
    %7189 = vst.msk [vmem:[#allocation3 + $0x160] sm:$0xff] %vm167, %v7125
    %7190 = vst.msk [vmem:[#allocation3 + $0x168] sm:$0xff] %vm167, %v7126
    %7191 = vst.msk [vmem:[#allocation3 + $0x170] sm:$0xff] %vm167, %v7127
    %7192 = vst.msk [vmem:[#allocation3 + $0x178] sm:$0xff] %vm167, %v7128
    %7193 = vst.msk [vmem:[#allocation3 + $0x180] sm:$0xff] %vm167, %v7129
    %7194 = vst.msk [vmem:[#allocation3 + $0x188] sm:$0xff] %vm167, %v7130
    %7195 = vst.msk [vmem:[#allocation3 + $0x190] sm:$0xff] %vm167, %v7131
    %7196 = vst.msk [vmem:[#allocation3 + $0x198] sm:$0xff] %vm167, %v7132
    %7197 = vst.msk [vmem:[#allocation3 + $0x1a0] sm:$0xff] %vm167, %v7133
    %7198 = vst.msk [vmem:[#allocation3 + $0x1a8] sm:$0xff] %vm167, %v7134
    %7199 = vst.msk [vmem:[#allocation3 + $0x1b0] sm:$0xff] %vm167, %v7135
    %7200 = vst.msk [vmem:[#allocation3 + $0x1b8] sm:$0xff] %vm167, %v7136
    %7201 = vst.msk [vmem:[#allocation3 + $0x1c0] sm:$0xff] %vm167, %v7137
    %7202 = vst.msk [vmem:[#allocation3 + $0x1c8] sm:$0xff] %vm167, %v7138
    %7203 = vst.msk [vmem:[#allocation3 + $0x1d0] sm:$0xff] %vm167, %v7139
    %7204 = vst.msk [vmem:[#allocation3 + $0x1d8] sm:$0xff] %vm167, %v7140
    %7205 = vst.msk [vmem:[#allocation3 + $0x1e0] sm:$0xff] %vm167, %v7141
    %7206 = vst.msk [vmem:[#allocation3 + $0x1e8] sm:$0xff] %vm167, %v7142
    %7207 = vst.msk [vmem:[#allocation3 + $0x1f0] sm:$0xff] %vm167, %v7143
    %7208 = vst.msk [vmem:[#allocation3 + $0x1f8] sm:$0xff] %vm167, %v7144
    // Predicated region
    $region22: #{resblock_pallas.1} parent=1 // pred_check
      _
    $region23: #{resblock_pallas.1} parent=1 // pred_check_branch
      %7210 = sbr.rel (0) target = $region25
    $region24: #{resblock_pallas.1} parent=1 // pred_region
      %s7212 = ssub.s32 8192, 8192
      %7213 = vsyncadd [#allocation4], %s7212
      %s7214 = sshll.u32 [#allocation3], 4
      %s7215 = int_to_ptr.vmem [resolvable:$true] %s7214
      %7220 = dma.vmem_to_hbm [thread:$0]  %s7215, 8192, %s5, [#allocation4], 128, 128, 8
    $region25: #{resblock_pallas.1} parent=1 // pred_fallthru
      _
    // Predicated region
    $region26: #{resblock_pallas.1} parent=1 // pred_check
      _
    $region27: #{resblock_pallas.1} parent=1 // pred_check_branch
      %7222 = sbr.rel (0) target = $region29
    $region28: #{resblock_pallas.1} parent=1 // pred_region
      %7223 = dma.done [#allocation4], 8192
    $region29: #{resblock_pallas.1} parent=1 // pred_fallthru
      _
    %7224 = vsyncpa [#allocation4], 1

</llo_original>
